<compile_context>
chip_gen: v7x
topology: tpu7x:2x2x1
jax: 0.10.0
libtpu: 0.0.40
codegen_flags: <defaults>
</compile_context>

<pallas_src>
import functools

import jax
import jax.numpy as jnp
from jax.experimental import pallas as pl
from jax.experimental.pallas import tpu as pltpu

_VMEM_LIMIT = 48 * 1024 * 1024  # safe on v5e/v6e (128 MiB) and v7x (64 MiB)


# ----------------------------------------------------------------------------
# helpers
# ----------------------------------------------------------------------------
def _largest_divisor_leq(n, cap):
    cap = int(max(1, min(cap, n)))
    for t in range(cap, 0, -1):
        if n % t == 0:
            return t
    return 1


# ----------------------------------------------------------------------------
# Pallas kernels
# ----------------------------------------------------------------------------
def _make_dws_kernel(stride, dilation, Wo, relu6_out, has_res):
    """Fused: depthwise 3x3 (BN-folded) + bias + ReLU6 -> 1x1 matmul (bf16 MXU, BN-folded)
    + bias (+ ReLU6) (+ residual add)."""
    s, d = stride, dilation
    n_slabs = 3 * s

    def kernel(*refs):
        slab_refs = refs[:n_slabs]                       # each (TR, Wq, Cin) bf16
        dww_ref, dwb_ref, pww_ref, pwb_ref = refs[n_slabs:n_slabs + 4]
        if has_res:
            res_ref, o_ref = refs[n_slabs + 4:]
        else:
            (o_ref,) = refs[n_slabs + 4:]

        TR, _, Cin = slab_refs[0].shape
        Cout = o_ref.shape[-1]

        # depthwise 3x3: 9 unit-stride taps, f32 accumulation on the VPU
        acc = jnp.zeros((TR, Wo, Cin), jnp.float32)
        for dy in range(3):
            for dx in range(3):
                q = (dx * d) % s                        # column phase
                off = (dx * d) // s                     # column offset inside the phase
                tap = slab_refs[dy * s + q][:, off:off + Wo, :].astype(jnp.float32)
                acc = acc + tap * dww_ref[dy * 3 + dx]  # (1,1,Cin) broadcast
        h = jnp.clip(acc + dwb_ref[...], 0.0, 6.0)      # BN bias + ReLU6, (TR, Wo, Cin) f32

        # pointwise 1x1 conv as MXU matmul (bf16 operands, f32 accumulate)
        hb = h.reshape(TR * Wo, Cin).astype(jnp.bfloat16)
        y = jnp.dot(hb, pww_ref[...], preferred_element_type=jnp.float32)   # (TR*Wo, Cout)
        y = y + pwb_ref[...]
        if relu6_out:
            y = jnp.clip(y, 0.0, 6.0)
        y = y.reshape(TR, Wo, Cout)
        if has_res:
            y = y + res_ref[...]
        o_ref[...] = y.astype(o_ref.dtype)

    return kernel


def _make_pw_kernel(relu6):
    """1x1 conv (matmul) + folded-BN bias (+ ReLU6)."""
    def kernel(x_ref, w_ref, b_ref, o_ref):
        y = jnp.dot(x_ref[...], w_ref[...], preferred_element_type=jnp.float32)
        y = y + b_ref[...]
        if relu6:
            y = jnp.clip(y, 0.0, 6.0)
        o_ref[...] = y.astype(o_ref.dtype)
    return kernel


# ----------------------------------------------------------------------------
# wrappers
# ----------------------------------------------------------------------------
def dws_block_call(x, prm, *, stride, dilation, pad, relu6_out,
                   residual=None, out_dtype=jnp.float32):
    """One fused convbn_dws block.  x: (N, H, W, Cin) NHWC -> (N, Ho, Wo, Cout)."""
    N, H, W, Cin = x.shape
    Cout = prm['pw_w'].shape[1]
    s, d = stride, dilation
    p = d if d > 1 else pad
    Ho = (H + 2 * p - 2 * d - 1) // s + 1
    Wo = (W + 2 * p - 2 * d - 1) // s + 1

    # pad spatially; pad the right edge so the width divides the column phases.
    Wp = W + 2 * p
    extra_w = (-Wp) % s
    Wp += extra_w
    Wq = Wp // s
    xp = jnp.pad(x, ((0, 0), (p, p), (p, p + extra_w), (0, 0))).astype(jnp.bfloat16)

    # 3*s slabs: row tap dy (row stride applied here) x column phase q.
    NR = N * Ho
    slabs = []
    for dy in range(3):
        rows = xp[:, dy * d: dy * d + (Ho - 1) * s + 1: s, :, :]   # (N, Ho, Wp, Cin)
        for q in range(s):
            slabs.append(rows[:, :, q::s, :].reshape(NR, Wq, Cin))  # (NR, Wq, Cin)

    # tile the row (N*Ho) dimension; keep double-buffered blocks small enough for v7x.
    row_bytes = 3 * Wp * Cin * 2 + Wo * Cout * 4 * (2 if residual is not None else 1)
    TR = _largest_divisor_leq(NR, max(1, (4 * 1024 * 1024) // max(row_bytes, 1)))
    n_tiles = NR // TR

    dw_w = prm['dw_w'].reshape(9, 1, 1, Cin).astype(jnp.float32)   # BN scale already folded in
    dw_b = prm['dw_b'].reshape(1, 1, Cin).astype(jnp.float32)
    pw_w = prm['pw_w'].astype(jnp.bfloat16)                        # BN scale already folded in
    pw_b = prm['pw_b'].reshape(1, Cout).astype(jnp.float32)

    slab_spec = pl.BlockSpec((TR, Wq, Cin), lambda i: (i, 0, 0))
    out_spec = pl.BlockSpec((TR, Wo, Cout), lambda i: (i, 0, 0))
    inputs = slabs + [dw_w, dw_b, pw_w, pw_b]
    in_specs = [slab_spec] * len(slabs) + [
        pl.BlockSpec((9, 1, 1, Cin), lambda i: (0, 0, 0, 0)),
        pl.BlockSpec((1, 1, Cin), lambda i: (0, 0, 0)),
        pl.BlockSpec((Cin, Cout), lambda i: (0, 0)),
        pl.BlockSpec((1, Cout), lambda i: (0, 0)),
    ]
    if residual is not None:
        assert residual.shape == (N, Ho, Wo, Cout), residual.shape
        inputs.append(residual.reshape(NR, Wo, Cout).astype(jnp.float32))
        in_specs.append(out_spec)

    y = pl.pallas_call(
        _make_dws_kernel(s, d, Wo, relu6_out, residual is not None),
        out_shape=jax.ShapeDtypeStruct((NR, Wo, Cout), out_dtype),
        grid=(n_tiles,),
        in_specs=in_specs,
        out_specs=out_spec,
        compiler_params=pltpu.CompilerParams(
            dimension_semantics=("parallel",),
            vmem_limit_bytes=_VMEM_LIMIT),
    )(*inputs)
    return y.reshape(N, Ho, Wo, Cout)


def pw_call(xm, w, b, relu6=False, tm=1024):
    """1x1 conv + folded BN as an M-tiled matmul.  xm: (M, Cin), w: (Cin, Cout), b: (Cout,)."""
    M, Cin = xm.shape
    Cout = w.shape[1]
    TM = min(tm, M)
    return pl.pallas_call(
        _make_pw_kernel(relu6),
        out_shape=jax.ShapeDtypeStruct((M, Cout), jnp.float32),
        grid=(pl.cdiv(M, TM),),
        in_specs=[pl.BlockSpec((TM, Cin), lambda i: (i, 0)),
                  pl.BlockSpec((Cin, Cout), lambda i: (0, 0)),
                  pl.BlockSpec((1, Cout), lambda i: (0, 0))],
        out_specs=pl.BlockSpec((TM, Cout), lambda i: (i, 0)),
        compiler_params=pltpu.CompilerParams(
            dimension_semantics=("parallel",),
            vmem_limit_bytes=_VMEM_LIMIT),
    )(xm.astype(jnp.bfloat16), w.astype(jnp.bfloat16),
      b.reshape(1, Cout).astype(jnp.float32))


# ----------------------------------------------------------------------------
# MobileV1_Residual forward (Pallas path)
# ----------------------------------------------------------------------------
def mobilev1_residual_forward(params, x_nchw, *, stride, pad, dilation):
    x = jnp.transpose(x_nchw, (0, 2, 3, 1)).astype(jnp.float32)          # NHWC
    # conv1: dw(stride, dilation) + BN + ReLU6 + pw + BN + ReLU6   (bf16 intermediate)
    out = dws_block_call(x, params['conv1'], stride=stride, dilation=dilation, pad=pad,
                         relu6_out=True, out_dtype=jnp.bfloat16)
    # residual branch
    if params['down'] is not None:
        xs = x[:, ::stride, ::stride, :]
        N, Hs, Ws, Ci = xs.shape
        res = pw_call(xs.reshape(N * Hs * Ws, Ci), params['down']['w'], params['down']['b'])
        res = res.reshape(N, Hs, Ws, -1)
    else:
        res = x
    # conv2: dw(1, dilation) + BN + ReLU6 + pw + BN  (no second ReLU6), fused `out += x`
    out = dws_block_call(out, params['conv2'], stride=1, dilation=dilation, pad=pad,
                         relu6_out=False, residual=res, out_dtype=jnp.float32)
    return jnp.transpose(out, (0, 3, 1, 2))                              # back to NCHW


# ----------------------------------------------------------------------------
# parameter init (deterministic synthetic weights, inference-folded BatchNorm)
# ----------------------------------------------------------------------------
class KeyGen:
    def __init__(self, key):
        self.key = key

    def __call__(self):
        self.key, sub = jax.random.split(self.key)
        return sub


def _init_bn(kg, c, eps=1e-5):
    gamma = 1.0 + 0.1 * jax.random.normal(kg(), (c,), jnp.float32)
    beta = 0.05 * jax.random.normal(kg(), (c,), jnp.float32)
    scale = gamma / jnp.sqrt(1.0 + eps)          # running_mean=0, running_var=1
    return scale, beta


def init_convbn_dws(kg, inp, oup):
    dw_w = 0.25 * jax.random.normal(kg(), (3, 3, inp), jnp.float32)
    s1, b1 = _init_bn(kg, inp)
    pw_w = (1.0 / (inp ** 0.5)) * jax.random.normal(kg(), (inp, oup), jnp.float32)
    s2, b2 = _init_bn(kg, oup)
    return {'dw_w': dw_w * s1,            # BN1 scale folded into depthwise weights
            'dw_b': b1,
            'pw_w': pw_w * s2[None, :],   # BN2 scale folded into pointwise weights
            'pw_b': b2}


def init_mobilev1_residual(key, inplanes, planes, stride):
    kg = KeyGen(key)
    prm = {'conv1': init_convbn_dws(kg, inplanes, planes),
           'conv2': init_convbn_dws(kg, planes, planes)}
    if stride != 1 or inplanes != planes:
        w = (1.0 / (inplanes ** 0.5)) * jax.random.normal(kg(), (inplanes, planes), jnp.float32)
        s, b = _init_bn(kg, planes)
        prm['down'] = {'w': w * s[None, :], 'b': b}   # Conv2d(1x1, stride) + BN, folded
    else:
        prm['down'] = None
    return prm


# ----------------------------------------------------------------------------
# pure-JAX reference (same folded params, same bf16 rounding points as the kernels)
# ----------------------------------------------------------------------------
def _ref_convbn_dws(x, prm, stride, dilation, pad, second_relu):
    p = dilation if dilation > 1 else pad
    C = x.shape[-1]
    xq = x.astype(jnp.bfloat16).astype(jnp.float32)
    h = jax.lax.conv_general_dilated(
        xq, prm['dw_w'].reshape(3, 3, 1, C),
        window_strides=(stride, stride), padding=((p, p), (p, p)),
        rhs_dilation=(dilation, dilation),
        dimension_numbers=('NHWC', 'HWIO', 'NHWC'),
        feature_group_count=C, precision=jax.lax.Precision.HIGHEST)
    h = jnp.clip(h + prm['dw_b'], 0.0, 6.0)
    hq = h.astype(jnp.bfloat16).astype(jnp.float32)
    wq = prm['pw_w'].astype(jnp.bfloat16).astype(jnp.float32)
    y = jnp.einsum('nhwc,co->nhwo', hq, wq, precision=jax.lax.Precision.HIGHEST) + prm['pw_b']
    if second_relu:
        y = jnp.clip(y, 0.0, 6.0)
    return y


def ref_forward(params, x_nchw, stride, pad, dilation):
    x = jnp.transpose(x_nchw, (0, 2, 3, 1)).astype(jnp.float32)
    out = _ref_convbn_dws(x, params['conv1'], stride, dilation, pad, True)
    out = _ref_convbn_dws(out, params['conv2'], 1, dilation, pad, False)
    if params['down'] is not None:
        xs = x[:, ::stride, ::stride, :]
        xq = xs.astype(jnp.bfloat16).astype(jnp.float32)
        wq = params['down']['w'].astype(jnp.bfloat16).astype(jnp.float32)
        res = jnp.einsum('nhwc,co->nhwo', xq, wq,
                         precision=jax.lax.Precision.HIGHEST) + params['down']['b']
    else:
        res = x
    return jnp.transpose(out + res, (0, 3, 1, 2))


# ----------------------------------------------------------------------------
if __name__ == "__main__":
    key = jax.random.PRNGKey(0)
    N, H, W = 2, 16, 16
    cases = [
        dict(inplanes=32, planes=32, stride=1, pad=1, dilation=1),   # identity residual
        dict(inplanes=32, planes=64, stride=2, pad=1, dilation=1),   # strided + downsample
        dict(inplanes=32, planes=32, stride=1, pad=1, dilation=2),   # dilated
    ]
    for cfg in cases:
        key, kp, kx = jax.random.split(key, 3)
        prm = init_mobilev1_residual(kp, cfg['inplanes'], cfg['planes'], cfg['stride'])
        x = jax.random.normal(kx, (N, cfg['inplanes'], H, W), jnp.float32)   # NCHW input

        fwd = jax.jit(functools.partial(
            mobilev1_residual_forward,
            stride=cfg['stride'], pad=cfg['pad'], dilation=cfg['dilation']))
        out = jax.block_until_ready(fwd(prm, x))

        p_eff = cfg['dilation'] if cfg['dilation'] > 1 else cfg['pad']
        Ho = (H + 2 * p_eff - 2 * cfg['dilation'] - 1) // cfg['stride'] + 1
        Wo = (W + 2 * p_eff - 2 * cfg['dilation'] - 1) // cfg['stride'] + 1
        assert out.shape == (N, cfg['planes'], Ho, Wo), out.shape
        assert bool(jnp.all(jnp.isfinite(out)))

        ref = ref_forward(prm, x, cfg['stride'], cfg['pad'], cfg['dilation'])
        max_err = float(jnp.max(jnp.abs(out - ref)))
        assert jnp.allclose(out, ref, atol=5e-2, rtol=5e-2), max_err

    print("KERNEL_OK")
</pallas_src>

<mosaic_0001>
module attributes {stable_mosaic.version = 11 : i64} {
  func.func @kernel(%arg0: i32, %arg1: memref<32x18x32xbf16, #tpu.memory_space<vmem>>, %arg2: memref<32x18x32xbf16, #tpu.memory_space<vmem>>, %arg3: memref<32x18x32xbf16, #tpu.memory_space<vmem>>, %arg4: memref<9x1x1x32xf32, #tpu.memory_space<vmem>>, %arg5: memref<1x1x32xf32, #tpu.memory_space<vmem>>, %arg6: memref<32x32xbf16, #tpu.memory_space<vmem>>, %arg7: memref<1x32xf32, #tpu.memory_space<vmem>>, %arg8: memref<32x16x32xbf16, #tpu.memory_space<vmem>>) attributes {dimension_semantics = [#tpu.dimension_semantics<parallel>], iteration_bounds = array<i64: 1>, scalar_prefetch = 0 : i64, scratch_operands = 0 : i64, tpu.core_type = #tpu.core_type<tc>, window_params = [{transform_indices = @transform_0, window_bounds = array<i64: 32, 18, 32>}, {transform_indices = @transform_1, window_bounds = array<i64: 32, 18, 32>}, {transform_indices = @transform_2, window_bounds = array<i64: 32, 18, 32>}, {pipeline_mode = #tpu.pipeline_mode<synchronous>, transform_indices = @transform_3, window_bounds = array<i64: 9, 1, 1, 32>}, {pipeline_mode = #tpu.pipeline_mode<synchronous>, transform_indices = @transform_4, window_bounds = array<i64: 1, 1, 32>}, {pipeline_mode = #tpu.pipeline_mode<synchronous>, transform_indices = @transform_5, window_bounds = array<i64: 32, 32>}, {pipeline_mode = #tpu.pipeline_mode<synchronous>, transform_indices = @transform_6, window_bounds = array<i64: 1, 32>}, {transform_indices = @transform_7, window_bounds = array<i64: 32, 16, 32>}]} {
    %cst = arith.constant 0.000000e+00 : f32
    %0 = vector.broadcast %cst : f32 to vector<32x16x32xf32>
    %c0 = arith.constant 0 : index
    %c0_0 = arith.constant 0 : index
    %c0_1 = arith.constant 0 : index
    %1 = vector.load %arg1[%c0, %c0_0, %c0_1] : memref<32x18x32xbf16, #tpu.memory_space<vmem>>, vector<32x16x32xbf16>
    %2 = arith.extf %1 : vector<32x16x32xbf16> to vector<32x16x32xf32>
    %c0_2 = arith.constant 0 : index
    %c0_3 = arith.constant 0 : index
    %c0_4 = arith.constant 0 : index
    %c0_5 = arith.constant 0 : index
    %3 = vector.load %arg4[%c0_2, %c0_3, %c0_4, %c0_5] : memref<9x1x1x32xf32, #tpu.memory_space<vmem>>, vector<1x1x1x32xf32>
    %4 = vector.shape_cast %3 : vector<1x1x1x32xf32> to vector<1x1x32xf32>
    %5 = vector.broadcast %4 : vector<1x1x32xf32> to vector<32x16x32xf32>
    %6 = arith.mulf %2, %5 : vector<32x16x32xf32>
    %7 = arith.addf %0, %6 : vector<32x16x32xf32>
    %c0_6 = arith.constant 0 : index
    %c1 = arith.constant 1 : index
    %c0_7 = arith.constant 0 : index
    %8 = vector.load %arg1[%c0_6, %c1, %c0_7] : memref<32x18x32xbf16, #tpu.memory_space<vmem>>, vector<32x16x32xbf16>
    %9 = arith.extf %8 : vector<32x16x32xbf16> to vector<32x16x32xf32>
    %c1_8 = arith.constant 1 : index
    %c0_9 = arith.constant 0 : index
    %c0_10 = arith.constant 0 : index
    %c0_11 = arith.constant 0 : index
    %10 = vector.load %arg4[%c1_8, %c0_9, %c0_10, %c0_11] : memref<9x1x1x32xf32, #tpu.memory_space<vmem>>, vector<1x1x1x32xf32>
    %11 = vector.shape_cast %10 : vector<1x1x1x32xf32> to vector<1x1x32xf32>
    %12 = vector.broadcast %11 : vector<1x1x32xf32> to vector<32x16x32xf32>
    %13 = arith.mulf %9, %12 : vector<32x16x32xf32>
    %14 = arith.addf %7, %13 : vector<32x16x32xf32>
    %c0_12 = arith.constant 0 : index
    %c2 = arith.constant 2 : index
    %c0_13 = arith.constant 0 : index
    %15 = vector.load %arg1[%c0_12, %c2, %c0_13] : memref<32x18x32xbf16, #tpu.memory_space<vmem>>, vector<32x16x32xbf16>
    %16 = arith.extf %15 : vector<32x16x32xbf16> to vector<32x16x32xf32>
    %c2_14 = arith.constant 2 : index
    %c0_15 = arith.constant 0 : index
    %c0_16 = arith.constant 0 : index
    %c0_17 = arith.constant 0 : index
    %17 = vector.load %arg4[%c2_14, %c0_15, %c0_16, %c0_17] : memref<9x1x1x32xf32, #tpu.memory_space<vmem>>, vector<1x1x1x32xf32>
    %18 = vector.shape_cast %17 : vector<1x1x1x32xf32> to vector<1x1x32xf32>
    %19 = vector.broadcast %18 : vector<1x1x32xf32> to vector<32x16x32xf32>
    %20 = arith.mulf %16, %19 : vector<32x16x32xf32>
    %21 = arith.addf %14, %20 : vector<32x16x32xf32>
    %c0_18 = arith.constant 0 : index
    %c0_19 = arith.constant 0 : index
    %c0_20 = arith.constant 0 : index
    %22 = vector.load %arg2[%c0_18, %c0_19, %c0_20] : memref<32x18x32xbf16, #tpu.memory_space<vmem>>, vector<32x16x32xbf16>
    %23 = arith.extf %22 : vector<32x16x32xbf16> to vector<32x16x32xf32>
    %c3 = arith.constant 3 : index
    %c0_21 = arith.constant 0 : index
    %c0_22 = arith.constant 0 : index
    %c0_23 = arith.constant 0 : index
    %24 = vector.load %arg4[%c3, %c0_21, %c0_22, %c0_23] : memref<9x1x1x32xf32, #tpu.memory_space<vmem>>, vector<1x1x1x32xf32>
    %25 = vector.shape_cast %24 : vector<1x1x1x32xf32> to vector<1x1x32xf32>
    %26 = vector.broadcast %25 : vector<1x1x32xf32> to vector<32x16x32xf32>
    %27 = arith.mulf %23, %26 : vector<32x16x32xf32>
    %28 = arith.addf %21, %27 : vector<32x16x32xf32>
    %c0_24 = arith.constant 0 : index
    %c1_25 = arith.constant 1 : index
    %c0_26 = arith.constant 0 : index
    %29 = vector.load %arg2[%c0_24, %c1_25, %c0_26] : memref<32x18x32xbf16, #tpu.memory_space<vmem>>, vector<32x16x32xbf16>
    %30 = arith.extf %29 : vector<32x16x32xbf16> to vector<32x16x32xf32>
    %c4 = arith.constant 4 : index
    %c0_27 = arith.constant 0 : index
    %c0_28 = arith.constant 0 : index
    %c0_29 = arith.constant 0 : index
    %31 = vector.load %arg4[%c4, %c0_27, %c0_28, %c0_29] : memref<9x1x1x32xf32, #tpu.memory_space<vmem>>, vector<1x1x1x32xf32>
    %32 = vector.shape_cast %31 : vector<1x1x1x32xf32> to vector<1x1x32xf32>
    %33 = vector.broadcast %32 : vector<1x1x32xf32> to vector<32x16x32xf32>
    %34 = arith.mulf %30, %33 : vector<32x16x32xf32>
    %35 = arith.addf %28, %34 : vector<32x16x32xf32>
    %c0_30 = arith.constant 0 : index
    %c2_31 = arith.constant 2 : index
    %c0_32 = arith.constant 0 : index
    %36 = vector.load %arg2[%c0_30, %c2_31, %c0_32] : memref<32x18x32xbf16, #tpu.memory_space<vmem>>, vector<32x16x32xbf16>
    %37 = arith.extf %36 : vector<32x16x32xbf16> to vector<32x16x32xf32>
    %c5 = arith.constant 5 : index
    %c0_33 = arith.constant 0 : index
    %c0_34 = arith.constant 0 : index
    %c0_35 = arith.constant 0 : index
    %38 = vector.load %arg4[%c5, %c0_33, %c0_34, %c0_35] : memref<9x1x1x32xf32, #tpu.memory_space<vmem>>, vector<1x1x1x32xf32>
    %39 = vector.shape_cast %38 : vector<1x1x1x32xf32> to vector<1x1x32xf32>
    %40 = vector.broadcast %39 : vector<1x1x32xf32> to vector<32x16x32xf32>
    %41 = arith.mulf %37, %40 : vector<32x16x32xf32>
    %42 = arith.addf %35, %41 : vector<32x16x32xf32>
    %c0_36 = arith.constant 0 : index
    %c0_37 = arith.constant 0 : index
    %c0_38 = arith.constant 0 : index
    %43 = vector.load %arg3[%c0_36, %c0_37, %c0_38] : memref<32x18x32xbf16, #tpu.memory_space<vmem>>, vector<32x16x32xbf16>
    %44 = arith.extf %43 : vector<32x16x32xbf16> to vector<32x16x32xf32>
    %c6 = arith.constant 6 : index
    %c0_39 = arith.constant 0 : index
    %c0_40 = arith.constant 0 : index
    %c0_41 = arith.constant 0 : index
    %45 = vector.load %arg4[%c6, %c0_39, %c0_40, %c0_41] : memref<9x1x1x32xf32, #tpu.memory_space<vmem>>, vector<1x1x1x32xf32>
    %46 = vector.shape_cast %45 : vector<1x1x1x32xf32> to vector<1x1x32xf32>
    %47 = vector.broadcast %46 : vector<1x1x32xf32> to vector<32x16x32xf32>
    %48 = arith.mulf %44, %47 : vector<32x16x32xf32>
    %49 = arith.addf %42, %48 : vector<32x16x32xf32>
    %c0_42 = arith.constant 0 : index
    %c1_43 = arith.constant 1 : index
    %c0_44 = arith.constant 0 : index
    %50 = vector.load %arg3[%c0_42, %c1_43, %c0_44] : memref<32x18x32xbf16, #tpu.memory_space<vmem>>, vector<32x16x32xbf16>
    %51 = arith.extf %50 : vector<32x16x32xbf16> to vector<32x16x32xf32>
    %c7 = arith.constant 7 : index
    %c0_45 = arith.constant 0 : index
    %c0_46 = arith.constant 0 : index
    %c0_47 = arith.constant 0 : index
    %52 = vector.load %arg4[%c7, %c0_45, %c0_46, %c0_47] : memref<9x1x1x32xf32, #tpu.memory_space<vmem>>, vector<1x1x1x32xf32>
    %53 = vector.shape_cast %52 : vector<1x1x1x32xf32> to vector<1x1x32xf32>
    %54 = vector.broadcast %53 : vector<1x1x32xf32> to vector<32x16x32xf32>
    %55 = arith.mulf %51, %54 : vector<32x16x32xf32>
    %56 = arith.addf %49, %55 : vector<32x16x32xf32>
    %c0_48 = arith.constant 0 : index
    %c2_49 = arith.constant 2 : index
    %c0_50 = arith.constant 0 : index
    %57 = vector.load %arg3[%c0_48, %c2_49, %c0_50] : memref<32x18x32xbf16, #tpu.memory_space<vmem>>, vector<32x16x32xbf16>
    %58 = arith.extf %57 : vector<32x16x32xbf16> to vector<32x16x32xf32>
    %c8 = arith.constant 8 : index
    %c0_51 = arith.constant 0 : index
    %c0_52 = arith.constant 0 : index
    %c0_53 = arith.constant 0 : index
    %59 = vector.load %arg4[%c8, %c0_51, %c0_52, %c0_53] : memref<9x1x1x32xf32, #tpu.memory_space<vmem>>, vector<1x1x1x32xf32>
    %60 = vector.shape_cast %59 : vector<1x1x1x32xf32> to vector<1x1x32xf32>
    %61 = vector.broadcast %60 : vector<1x1x32xf32> to vector<32x16x32xf32>
    %62 = arith.mulf %58, %61 : vector<32x16x32xf32>
    %63 = arith.addf %56, %62 : vector<32x16x32xf32>
    %c0_54 = arith.constant 0 : index
    %c0_55 = arith.constant 0 : index
    %c0_56 = arith.constant 0 : index
    %64 = vector.load %arg5[%c0_54, %c0_55, %c0_56] : memref<1x1x32xf32, #tpu.memory_space<vmem>>, vector<1x1x32xf32>
    %65 = vector.broadcast %64 : vector<1x1x32xf32> to vector<32x16x32xf32>
    %66 = arith.addf %63, %65 : vector<32x16x32xf32>
    %cst_57 = arith.constant 0.000000e+00 : f32
    %cst_58 = arith.constant 6.000000e+00 : f32
    %67 = vector.broadcast %cst_57 : f32 to vector<32x16x32xf32>
    %68 = arith.maximumf %67, %66 : vector<32x16x32xf32>
    %69 = vector.broadcast %cst_58 : f32 to vector<32x16x32xf32>
    %70 = arith.minimumf %69, %68 : vector<32x16x32xf32>
    %71 = vector.shape_cast %70 : vector<32x16x32xf32> to vector<512x32xf32>
    %72 = arith.truncf %71 : vector<512x32xf32> to vector<512x32xbf16>
    %c0_59 = arith.constant 0 : index
    %c0_60 = arith.constant 0 : index
    %73 = vector.load %arg6[%c0_59, %c0_60] : memref<32x32xbf16, #tpu.memory_space<vmem>>, vector<32x32xbf16>
    %cst_61 = arith.constant dense<0.000000e+00> : vector<512x32xf32>
    %74 = tpu.matmul %72, %73, %cst_61 {dimension_numbers = #tpu.dot_dimension_numbers<[1], [0], [0], [1], [0, 0, 1, 1], [], []>} : vector<512x32xbf16>, vector<32x32xbf16>, vector<512x32xf32> -> vector<512x32xf32>
    %c0_62 = arith.constant 0 : index
    %c0_63 = arith.constant 0 : index
    %75 = vector.load %arg7[%c0_62, %c0_63] : memref<1x32xf32, #tpu.memory_space<vmem>>, vector<1x32xf32>
    %76 = vector.broadcast %75 : vector<1x32xf32> to vector<512x32xf32>
    %77 = arith.addf %74, %76 : vector<512x32xf32>
    %cst_64 = arith.constant 0.000000e+00 : f32
    %cst_65 = arith.constant 6.000000e+00 : f32
    %78 = vector.broadcast %cst_64 : f32 to vector<512x32xf32>
    %79 = arith.maximumf %78, %77 : vector<512x32xf32>
    %80 = vector.broadcast %cst_65 : f32 to vector<512x32xf32>
    %81 = arith.minimumf %80, %79 : vector<512x32xf32>
    %82 = vector.shape_cast %81 : vector<512x32xf32> to vector<32x16x32xf32>
    %83 = arith.truncf %82 : vector<32x16x32xf32> to vector<32x16x32xbf16>
    %c0_66 = arith.constant 0 : index
    %c0_67 = arith.constant 0 : index
    %c0_68 = arith.constant 0 : index
    %84 = vector.load %arg8[%c0_66, %c0_67, %c0_68] : memref<32x16x32xbf16, #tpu.memory_space<vmem>>, vector<32x16x32xbf16>
    tpu.vector_store %arg8[%c0_66, %c0_67, %c0_68], %83 {strides = array<i32>} : memref<32x16x32xbf16, #tpu.memory_space<vmem>>, vector<32x16x32xbf16>,
    return
  }
  func.func @transform_0(%arg0: i32) -> (i32, i32, i32) {
    %c0_i32 = arith.constant 0 : i32
    %c0_i32_0 = arith.constant 0 : i32
    %c0_i32_1 = arith.constant 0 : i32
    return %arg0, %c0_i32, %c0_i32_0 : i32, i32, i32
  }
  func.func @transform_1(%arg0: i32) -> (i32, i32, i32) {
    %c0_i32 = arith.constant 0 : i32
    %c0_i32_0 = arith.constant 0 : i32
    %c0_i32_1 = arith.constant 0 : i32
    return %arg0, %c0_i32, %c0_i32_0 : i32, i32, i32
  }
  func.func @transform_2(%arg0: i32) -> (i32, i32, i32) {
    %c0_i32 = arith.constant 0 : i32
    %c0_i32_0 = arith.constant 0 : i32
    %c0_i32_1 = arith.constant 0 : i32
    return %arg0, %c0_i32, %c0_i32_0 : i32, i32, i32
  }
  func.func @transform_3(%arg0: i32) -> (i32, i32, i32, i32) {
    %c0_i32 = arith.constant 0 : i32
    %c0_i32_0 = arith.constant 0 : i32
    %c0_i32_1 = arith.constant 0 : i32
    %c0_i32_2 = arith.constant 0 : i32
    %c0_i32_3 = arith.constant 0 : i32
    return %c0_i32, %c0_i32_0, %c0_i32_1, %c0_i32_2 : i32, i32, i32, i32
  }
  func.func @transform_4(%arg0: i32) -> (i32, i32, i32) {
    %c0_i32 = arith.constant 0 : i32
    %c0_i32_0 = arith.constant 0 : i32
    %c0_i32_1 = arith.constant 0 : i32
    %c0_i32_2 = arith.constant 0 : i32
    return %c0_i32, %c0_i32_0, %c0_i32_1 : i32, i32, i32
  }
  func.func @transform_5(%arg0: i32) -> (i32, i32) {
    %c0_i32 = arith.constant 0 : i32
    %c0_i32_0 = arith.constant 0 : i32
    %c0_i32_1 = arith.constant 0 : i32
    return %c0_i32, %c0_i32_0 : i32, i32
  }
  func.func @transform_6(%arg0: i32) -> (i32, i32) {
    %c0_i32 = arith.constant 0 : i32
    %c0_i32_0 = arith.constant 0 : i32
    %c0_i32_1 = arith.constant 0 : i32
    return %c0_i32, %c0_i32_0 : i32, i32
  }
  func.func @transform_7(%arg0: i32) -> (i32, i32, i32) {
    %c0_i32 = arith.constant 0 : i32
    %c0_i32_0 = arith.constant 0 : i32
    %c0_i32_1 = arith.constant 0 : i32
    return %arg0, %c0_i32, %c0_i32_0 : i32, i32, i32
  }
}

module attributes {stable_mosaic.version = 11 : i64} {
  func.func @kernel(%arg0: i32, %arg1: memref<32x18x32xbf16, #tpu.memory_space<vmem>>, %arg2: memref<32x18x32xbf16, #tpu.memory_space<vmem>>, %arg3: memref<32x18x32xbf16, #tpu.memory_space<vmem>>, %arg4: memref<9x1x1x32xf32, #tpu.memory_space<vmem>>, %arg5: memref<1x1x32xf32, #tpu.memory_space<vmem>>, %arg6: memref<32x32xbf16, #tpu.memory_space<vmem>>, %arg7: memref<1x32xf32, #tpu.memory_space<vmem>>, %arg8: memref<32x16x32xf32, #tpu.memory_space<vmem>>, %arg9: memref<32x16x32xf32, #tpu.memory_space<vmem>>) attributes {dimension_semantics = [#tpu.dimension_semantics<parallel>], iteration_bounds = array<i64: 1>, scalar_prefetch = 0 : i64, scratch_operands = 0 : i64, tpu.core_type = #tpu.core_type<tc>, window_params = [{transform_indices = @transform_0, window_bounds = array<i64: 32, 18, 32>}, {transform_indices = @transform_1, window_bounds = array<i64: 32, 18, 32>}, {transform_indices = @transform_2, window_bounds = array<i64: 32, 18, 32>}, {pipeline_mode = #tpu.pipeline_mode<synchronous>, transform_indices = @transform_3, window_bounds = array<i64: 9, 1, 1, 32>}, {pipeline_mode = #tpu.pipeline_mode<synchronous>, transform_indices = @transform_4, window_bounds = array<i64: 1, 1, 32>}, {pipeline_mode = #tpu.pipeline_mode<synchronous>, transform_indices = @transform_5, window_bounds = array<i64: 32, 32>}, {pipeline_mode = #tpu.pipeline_mode<synchronous>, transform_indices = @transform_6, window_bounds = array<i64: 1, 32>}, {transform_indices = @transform_7, window_bounds = array<i64: 32, 16, 32>}, {transform_indices = @transform_8, window_bounds = array<i64: 32, 16, 32>}]} {
    %cst = arith.constant 0.000000e+00 : f32
    %0 = vector.broadcast %cst : f32 to vector<32x16x32xf32>
    %c0 = arith.constant 0 : index
    %c0_0 = arith.constant 0 : index
    %c0_1 = arith.constant 0 : index
    %1 = vector.load %arg1[%c0, %c0_0, %c0_1] : memref<32x18x32xbf16, #tpu.memory_space<vmem>>, vector<32x16x32xbf16>
    %2 = arith.extf %1 : vector<32x16x32xbf16> to vector<32x16x32xf32>
    %c0_2 = arith.constant 0 : index
    %c0_3 = arith.constant 0 : index
    %c0_4 = arith.constant 0 : index
    %c0_5 = arith.constant 0 : index
    %3 = vector.load %arg4[%c0_2, %c0_3, %c0_4, %c0_5] : memref<9x1x1x32xf32, #tpu.memory_space<vmem>>, vector<1x1x1x32xf32>
    %4 = vector.shape_cast %3 : vector<1x1x1x32xf32> to vector<1x1x32xf32>
    %5 = vector.broadcast %4 : vector<1x1x32xf32> to vector<32x16x32xf32>
    %6 = arith.mulf %2, %5 : vector<32x16x32xf32>
    %7 = arith.addf %0, %6 : vector<32x16x32xf32>
    %c0_6 = arith.constant 0 : index
    %c1 = arith.constant 1 : index
    %c0_7 = arith.constant 0 : index
    %8 = vector.load %arg1[%c0_6, %c1, %c0_7] : memref<32x18x32xbf16, #tpu.memory_space<vmem>>, vector<32x16x32xbf16>
    %9 = arith.extf %8 : vector<32x16x32xbf16> to vector<32x16x32xf32>
    %c1_8 = arith.constant 1 : index
    %c0_9 = arith.constant 0 : index
    %c0_10 = arith.constant 0 : index
    %c0_11 = arith.constant 0 : index
    %10 = vector.load %arg4[%c1_8, %c0_9, %c0_10, %c0_11] : memref<9x1x1x32xf32, #tpu.memory_space<vmem>>, vector<1x1x1x32xf32>
    %11 = vector.shape_cast %10 : vector<1x1x1x32xf32> to vector<1x1x32xf32>
    %12 = vector.broadcast %11 : vector<1x1x32xf32> to vector<32x16x32xf32>
    %13 = arith.mulf %9, %12 : vector<32x16x32xf32>
    %14 = arith.addf %7, %13 : vector<32x16x32xf32>
    %c0_12 = arith.constant 0 : index
    %c2 = arith.constant 2 : index
    %c0_13 = arith.constant 0 : index
    %15 = vector.load %arg1[%c0_12, %c2, %c0_13] : memref<32x18x32xbf16, #tpu.memory_space<vmem>>, vector<32x16x32xbf16>
    %16 = arith.extf %15 : vector<32x16x32xbf16> to vector<32x16x32xf32>
    %c2_14 = arith.constant 2 : index
    %c0_15 = arith.constant 0 : index
    %c0_16 = arith.constant 0 : index
    %c0_17 = arith.constant 0 : index
    %17 = vector.load %arg4[%c2_14, %c0_15, %c0_16, %c0_17] : memref<9x1x1x32xf32, #tpu.memory_space<vmem>>, vector<1x1x1x32xf32>
    %18 = vector.shape_cast %17 : vector<1x1x1x32xf32> to vector<1x1x32xf32>
    %19 = vector.broadcast %18 : vector<1x1x32xf32> to vector<32x16x32xf32>
    %20 = arith.mulf %16, %19 : vector<32x16x32xf32>
    %21 = arith.addf %14, %20 : vector<32x16x32xf32>
    %c0_18 = arith.constant 0 : index
    %c0_19 = arith.constant 0 : index
    %c0_20 = arith.constant 0 : index
    %22 = vector.load %arg2[%c0_18, %c0_19, %c0_20] : memref<32x18x32xbf16, #tpu.memory_space<vmem>>, vector<32x16x32xbf16>
    %23 = arith.extf %22 : vector<32x16x32xbf16> to vector<32x16x32xf32>
    %c3 = arith.constant 3 : index
    %c0_21 = arith.constant 0 : index
    %c0_22 = arith.constant 0 : index
    %c0_23 = arith.constant 0 : index
    %24 = vector.load %arg4[%c3, %c0_21, %c0_22, %c0_23] : memref<9x1x1x32xf32, #tpu.memory_space<vmem>>, vector<1x1x1x32xf32>
    %25 = vector.shape_cast %24 : vector<1x1x1x32xf32> to vector<1x1x32xf32>
    %26 = vector.broadcast %25 : vector<1x1x32xf32> to vector<32x16x32xf32>
    %27 = arith.mulf %23, %26 : vector<32x16x32xf32>
    %28 = arith.addf %21, %27 : vector<32x16x32xf32>
    %c0_24 = arith.constant 0 : index
    %c1_25 = arith.constant 1 : index
    %c0_26 = arith.constant 0 : index
    %29 = vector.load %arg2[%c0_24, %c1_25, %c0_26] : memref<32x18x32xbf16, #tpu.memory_space<vmem>>, vector<32x16x32xbf16>
    %30 = arith.extf %29 : vector<32x16x32xbf16> to vector<32x16x32xf32>
    %c4 = arith.constant 4 : index
    %c0_27 = arith.constant 0 : index
    %c0_28 = arith.constant 0 : index
    %c0_29 = arith.constant 0 : index
    %31 = vector.load %arg4[%c4, %c0_27, %c0_28, %c0_29] : memref<9x1x1x32xf32, #tpu.memory_space<vmem>>, vector<1x1x1x32xf32>
    %32 = vector.shape_cast %31 : vector<1x1x1x32xf32> to vector<1x1x32xf32>
    %33 = vector.broadcast %32 : vector<1x1x32xf32> to vector<32x16x32xf32>
    %34 = arith.mulf %30, %33 : vector<32x16x32xf32>
    %35 = arith.addf %28, %34 : vector<32x16x32xf32>
    %c0_30 = arith.constant 0 : index
    %c2_31 = arith.constant 2 : index
    %c0_32 = arith.constant 0 : index
    %36 = vector.load %arg2[%c0_30, %c2_31, %c0_32] : memref<32x18x32xbf16, #tpu.memory_space<vmem>>, vector<32x16x32xbf16>
    %37 = arith.extf %36 : vector<32x16x32xbf16> to vector<32x16x32xf32>
    %c5 = arith.constant 5 : index
    %c0_33 = arith.constant 0 : index
    %c0_34 = arith.constant 0 : index
    %c0_35 = arith.constant 0 : index
    %38 = vector.load %arg4[%c5, %c0_33, %c0_34, %c0_35] : memref<9x1x1x32xf32, #tpu.memory_space<vmem>>, vector<1x1x1x32xf32>
    %39 = vector.shape_cast %38 : vector<1x1x1x32xf32> to vector<1x1x32xf32>
    %40 = vector.broadcast %39 : vector<1x1x32xf32> to vector<32x16x32xf32>
    %41 = arith.mulf %37, %40 : vector<32x16x32xf32>
    %42 = arith.addf %35, %41 : vector<32x16x32xf32>
    %c0_36 = arith.constant 0 : index
    %c0_37 = arith.constant 0 : index
    %c0_38 = arith.constant 0 : index
    %43 = vector.load %arg3[%c0_36, %c0_37, %c0_38] : memref<32x18x32xbf16, #tpu.memory_space<vmem>>, vector<32x16x32xbf16>
    %44 = arith.extf %43 : vector<32x16x32xbf16> to vector<32x16x32xf32>
    %c6 = arith.constant 6 : index
    %c0_39 = arith.constant 0 : index
    %c0_40 = arith.constant 0 : index
    %c0_41 = arith.constant 0 : index
    %45 = vector.load %arg4[%c6, %c0_39, %c0_40, %c0_41] : memref<9x1x1x32xf32, #tpu.memory_space<vmem>>, vector<1x1x1x32xf32>
    %46 = vector.shape_cast %45 : vector<1x1x1x32xf32> to vector<1x1x32xf32>
    %47 = vector.broadcast %46 : vector<1x1x32xf32> to vector<32x16x32xf32>
    %48 = arith.mulf %44, %47 : vector<32x16x32xf32>
    %49 = arith.addf %42, %48 : vector<32x16x32xf32>
    %c0_42 = arith.constant 0 : index
    %c1_43 = arith.constant 1 : index
    %c0_44 = arith.constant 0 : index
    %50 = vector.load %arg3[%c0_42, %c1_43, %c0_44] : memref<32x18x32xbf16, #tpu.memory_space<vmem>>, vector<32x16x32xbf16>
    %51 = arith.extf %50 : vector<32x16x32xbf16> to vector<32x16x32xf32>
    %c7 = arith.constant 7 : index
    %c0_45 = arith.constant 0 : index
    %c0_46 = arith.constant 0 : index
    %c0_47 = arith.constant 0 : index
    %52 = vector.load %arg4[%c7, %c0_45, %c0_46, %c0_47] : memref<9x1x1x32xf32, #tpu.memory_space<vmem>>, vector<1x1x1x32xf32>
    %53 = vector.shape_cast %52 : vector<1x1x1x32xf32> to vector<1x1x32xf32>
    %54 = vector.broadcast %53 : vector<1x1x32xf32> to vector<32x16x32xf32>
    %55 = arith.mulf %51, %54 : vector<32x16x32xf32>
    %56 = arith.addf %49, %55 : vector<32x16x32xf32>
    %c0_48 = arith.constant 0 : index
    %c2_49 = arith.constant 2 : index
    %c0_50 = arith.constant 0 : index
    %57 = vector.load %arg3[%c0_48, %c2_49, %c0_50] : memref<32x18x32xbf16, #tpu.memory_space<vmem>>, vector<32x16x32xbf16>
    %58 = arith.extf %57 : vector<32x16x32xbf16> to vector<32x16x32xf32>
    %c8 = arith.constant 8 : index
    %c0_51 = arith.constant 0 : index
    %c0_52 = arith.constant 0 : index
    %c0_53 = arith.constant 0 : index
    %59 = vector.load %arg4[%c8, %c0_51, %c0_52, %c0_53] : memref<9x1x1x32xf32, #tpu.memory_space<vmem>>, vector<1x1x1x32xf32>
    %60 = vector.shape_cast %59 : vector<1x1x1x32xf32> to vector<1x1x32xf32>
    %61 = vector.broadcast %60 : vector<1x1x32xf32> to vector<32x16x32xf32>
    %62 = arith.mulf %58, %61 : vector<32x16x32xf32>
    %63 = arith.addf %56, %62 : vector<32x16x32xf32>
    %c0_54 = arith.constant 0 : index
    %c0_55 = arith.constant 0 : index
    %c0_56 = arith.constant 0 : index
    %64 = vector.load %arg5[%c0_54, %c0_55, %c0_56] : memref<1x1x32xf32, #tpu.memory_space<vmem>>, vector<1x1x32xf32>
    %65 = vector.broadcast %64 : vector<1x1x32xf32> to vector<32x16x32xf32>
    %66 = arith.addf %63, %65 : vector<32x16x32xf32>
    %cst_57 = arith.constant 0.000000e+00 : f32
    %cst_58 = arith.constant 6.000000e+00 : f32
    %67 = vector.broadcast %cst_57 : f32 to vector<32x16x32xf32>
    %68 = arith.maximumf %67, %66 : vector<32x16x32xf32>
    %69 = vector.broadcast %cst_58 : f32 to vector<32x16x32xf32>
    %70 = arith.minimumf %69, %68 : vector<32x16x32xf32>
    %71 = vector.shape_cast %70 : vector<32x16x32xf32> to vector<512x32xf32>
    %72 = arith.truncf %71 : vector<512x32xf32> to vector<512x32xbf16>
    %c0_59 = arith.constant 0 : index
    %c0_60 = arith.constant 0 : index
    %73 = vector.load %arg6[%c0_59, %c0_60] : memref<32x32xbf16, #tpu.memory_space<vmem>>, vector<32x32xbf16>
    %cst_61 = arith.constant dense<0.000000e+00> : vector<512x32xf32>
    %74 = tpu.matmul %72, %73, %cst_61 {dimension_numbers = #tpu.dot_dimension_numbers<[1], [0], [0], [1], [0, 0, 1, 1], [], []>} : vector<512x32xbf16>, vector<32x32xbf16>, vector<512x32xf32> -> vector<512x32xf32>
    %c0_62 = arith.constant 0 : index
    %c0_63 = arith.constant 0 : index
    %75 = vector.load %arg7[%c0_62, %c0_63] : memref<1x32xf32, #tpu.memory_space<vmem>>, vector<1x32xf32>
    %76 = vector.broadcast %75 : vector<1x32xf32> to vector<512x32xf32>
    %77 = arith.addf %74, %76 : vector<512x32xf32>
    %78 = vector.shape_cast %77 : vector<512x32xf32> to vector<32x16x32xf32>
    %c0_64 = arith.constant 0 : index
    %c0_65 = arith.constant 0 : index
    %c0_66 = arith.constant 0 : index
    %79 = vector.load %arg8[%c0_64, %c0_65, %c0_66] : memref<32x16x32xf32, #tpu.memory_space<vmem>>, vector<32x16x32xf32>
    %80 = arith.addf %78, %79 : vector<32x16x32xf32>
    %c0_67 = arith.constant 0 : index
    %c0_68 = arith.constant 0 : index
    %c0_69 = arith.constant 0 : index
    %81 = vector.load %arg9[%c0_67, %c0_68, %c0_69] : memref<32x16x32xf32, #tpu.memory_space<vmem>>, vector<32x16x32xf32>
    tpu.vector_store %arg9[%c0_67, %c0_68, %c0_69], %80 {strides = array<i32>} : memref<32x16x32xf32, #tpu.memory_space<vmem>>, vector<32x16x32xf32>,
    return
  }
  func.func @transform_0(%arg0: i32) -> (i32, i32, i32) {
    %c0_i32 = arith.constant 0 : i32
    %c0_i32_0 = arith.constant 0 : i32
    %c0_i32_1 = arith.constant 0 : i32
    return %arg0, %c0_i32, %c0_i32_0 : i32, i32, i32
  }
  func.func @transform_1(%arg0: i32) -> (i32, i32, i32) {
    %c0_i32 = arith.constant 0 : i32
    %c0_i32_0 = arith.constant 0 : i32
    %c0_i32_1 = arith.constant 0 : i32
    return %arg0, %c0_i32, %c0_i32_0 : i32, i32, i32
  }
  func.func @transform_2(%arg0: i32) -> (i32, i32, i32) {
    %c0_i32 = arith.constant 0 : i32
    %c0_i32_0 = arith.constant 0 : i32
    %c0_i32_1 = arith.constant 0 : i32
    return %arg0, %c0_i32, %c0_i32_0 : i32, i32, i32
  }
  func.func @transform_3(%arg0: i32) -> (i32, i32, i32, i32) {
    %c0_i32 = arith.constant 0 : i32
    %c0_i32_0 = arith.constant 0 : i32
    %c0_i32_1 = arith.constant 0 : i32
    %c0_i32_2 = arith.constant 0 : i32
    %c0_i32_3 = arith.constant 0 : i32
    return %c0_i32, %c0_i32_0, %c0_i32_1, %c0_i32_2 : i32, i32, i32, i32
  }
  func.func @transform_4(%arg0: i32) -> (i32, i32, i32) {
    %c0_i32 = arith.constant 0 : i32
    %c0_i32_0 = arith.constant 0 : i32
    %c0_i32_1 = arith.constant 0 : i32
    %c0_i32_2 = arith.constant 0 : i32
    return %c0_i32, %c0_i32_0, %c0_i32_1 : i32, i32, i32
  }
  func.func @transform_5(%arg0: i32) -> (i32, i32) {
    %c0_i32 = arith.constant 0 : i32
    %c0_i32_0 = arith.constant 0 : i32
    %c0_i32_1 = arith.constant 0 : i32
    return %c0_i32, %c0_i32_0 : i32, i32
  }
  func.func @transform_6(%arg0: i32) -> (i32, i32) {
    %c0_i32 = arith.constant 0 : i32
    %c0_i32_0 = arith.constant 0 : i32
    %c0_i32_1 = arith.constant 0 : i32
    return %c0_i32, %c0_i32_0 : i32, i32
  }
  func.func @transform_7(%arg0: i32) -> (i32, i32, i32) {
    %c0_i32 = arith.constant 0 : i32
    %c0_i32_0 = arith.constant 0 : i32
    %c0_i32_1 = arith.constant 0 : i32
    return %arg0, %c0_i32, %c0_i32_0 : i32, i32, i32
  }
  func.func @transform_8(%arg0: i32) -> (i32, i32, i32) {
    %c0_i32 = arith.constant 0 : i32
    %c0_i32_0 = arith.constant 0 : i32
    %c0_i32_1 = arith.constant 0 : i32
    return %arg0, %c0_i32, %c0_i32_0 : i32, i32, i32
  }
}

</mosaic_0001>

<llo_original>
// kernel: mobilev1_residual_forward.3
$region0: #{mobilev1_residual_forward.3}
  #allocation0 [shape = 'u32[]', space=smem, size = 0x4, offset = 0x4, fixed_abs, tag = 'smem constant byte address 0x4 - core index']
  #allocation1 [shape = 'u32[144,128]{1,0:T(1,128)}', space=vmem, size = 0x12000, scoped, tag = 'internal scratch']
  %s0 = inlined_call_operand.vmem [shape: bf16[32,18,32], index: 0, kind: input, shape index: {}]
  %s1 = inlined_call_operand.vmem [shape: bf16[32,18,32], index: 1, kind: input, shape index: {}]
  %s2 = inlined_call_operand.vmem [shape: bf16[32,18,32], index: 2, kind: input, shape index: {}]
  %s3 = inlined_call_operand.vmem [shape: f32[9,1,1,32], index: 3, kind: input, shape index: {}]
  %s4 = inlined_call_operand.vmem [shape: f32[1,1,32], index: 4, kind: input, shape index: {}]
  %s5 = inlined_call_operand.vmem [shape: bf16[32,32], index: 5, kind: input, shape index: {}]
  %s6 = inlined_call_operand.vmem [shape: f32[1,32], index: 6, kind: input, shape index: {}]
  %s7 = inlined_call_operand.vmem [shape: f32[32,16,32], index: 7, kind: input, shape index: {}]
  %s8 = inlined_call_operand.hbm [shape: f32[32,16,32], index: 8, kind: output, shape index: {}]
  %s9 = sld [smem:[#allocation0]]
  $region42: #{mobilev1_residual_forward.3} parent=0
    _
  %s11 = ssub.s32 1, %s9
  %s12 = scalar_select 0, %s11, %s9
  $region1: #{mobilev1_residual_forward.3} parent=0
    #allocation2 [shape = 'u8[262144]{0}', space=vmem, size = 0x40000, scoped, tag = 'output window, operand 0, single buffered']
    #allocation3 [shape = 's32[1]{0}', space=sflag, size = 0x4, scoped, tag = 'scoped memory for mobilev1_residual_forward.3']
    %13 = vsyncpa [#allocation3], 0
    // Predicated region
    $region2: #{mobilev1_residual_forward.3} parent=1 // pred_check
      _
    $region3: #{mobilev1_residual_forward.3} parent=1 // pred_check_branch
      %15 = sbr.rel (0) target = $region5
    $region4: #{mobilev1_residual_forward.3} parent=1 // pred_region
      _
    $region5: #{mobilev1_residual_forward.3} parent=1 // pred_fallthru
      _
    // Predicated region
    $region6: #{mobilev1_residual_forward.3} parent=1 // pred_check
      _
    $region7: #{mobilev1_residual_forward.3} parent=1 // pred_check_branch
      %17 = sbr.rel (0) target = $region9
    $region8: #{mobilev1_residual_forward.3} parent=1 // pred_region
      _
    $region9: #{mobilev1_residual_forward.3} parent=1 // pred_fallthru
      _
    // Predicated region
    $region10: #{mobilev1_residual_forward.3} parent=1 // pred_check
      _
    $region11: #{mobilev1_residual_forward.3} parent=1 // pred_check_branch
      %19 = sbr.rel (0) target = $region13
    $region12: #{mobilev1_residual_forward.3} parent=1 // pred_region
      _
    $region13: #{mobilev1_residual_forward.3} parent=1 // pred_fallthru
      _
    // Predicated region
    $region14: #{mobilev1_residual_forward.3} parent=1 // pred_check
      _
    $region15: #{mobilev1_residual_forward.3} parent=1 // pred_check_branch
      %21 = sbr.rel (0) target = $region17
    $region16: #{mobilev1_residual_forward.3} parent=1 // pred_region
      _
    $region17: #{mobilev1_residual_forward.3} parent=1 // pred_fallthru
      _
    // Predicated region
    $region18: #{mobilev1_residual_forward.3} parent=1 // pred_check
      _
    $region19: #{mobilev1_residual_forward.3} parent=1 // pred_check_branch
      %23 = sbr.rel (0) target = $region21
    $region20: #{mobilev1_residual_forward.3} parent=1 // pred_region
      _
    $region21: #{mobilev1_residual_forward.3} parent=1 // pred_fallthru
      _
    // Predicated region
    $region22: #{mobilev1_residual_forward.3} parent=1 // pred_check
      _
    $region23: #{mobilev1_residual_forward.3} parent=1 // pred_check_branch
      %25 = sbr.rel (0) target = $region25
    $region24: #{mobilev1_residual_forward.3} parent=1 // pred_region
      _
    $region25: #{mobilev1_residual_forward.3} parent=1 // pred_fallthru
      _
    // Predicated region
    $region26: #{mobilev1_residual_forward.3} parent=1 // pred_check
      _
    $region27: #{mobilev1_residual_forward.3} parent=1 // pred_check_branch
      %27 = sbr.rel (0) target = $region29
    $region28: #{mobilev1_residual_forward.3} parent=1 // pred_region
      _
    $region29: #{mobilev1_residual_forward.3} parent=1 // pred_fallthru
      _
    // Predicated region
    $region30: #{mobilev1_residual_forward.3} parent=1 // pred_check
      _
    $region31: #{mobilev1_residual_forward.3} parent=1 // pred_check_branch
      %29 = sbr.rel (0) target = $region33
    $region32: #{mobilev1_residual_forward.3} parent=1 // pred_region
      _
    $region33: #{mobilev1_residual_forward.3} parent=1 // pred_fallthru
      _
    %v31 = vld [vmem:[%s0] sm:$0xf]
    %v32 = vld [vmem:[%s0 + $0x4] sm:$0xf]
    %v33 = vld [vmem:[%s0 + $0xc] sm:$0xf]
    %v34 = vld [vmem:[%s0 + $0x10] sm:$0xf]
    %v35 = vld [vmem:[%s0 + $0x18] sm:$0xf]
    %v36 = vld [vmem:[%s0 + $0x1c] sm:$0xf]
    %v37 = vld [vmem:[%s0 + $0x24] sm:$0xf]
    %v38 = vld [vmem:[%s0 + $0x28] sm:$0xf]
    %v39 = vld [vmem:[%s0 + $0x30] sm:$0xf]
    %v40 = vld [vmem:[%s0 + $0x34] sm:$0xf]
    %v41 = vld [vmem:[%s0 + $0x3c] sm:$0xf]
    %v42 = vld [vmem:[%s0 + $0x40] sm:$0xf]
    %v43 = vld [vmem:[%s0 + $0x48] sm:$0xf]
    %v44 = vld [vmem:[%s0 + $0x4c] sm:$0xf]
    %v45 = vld [vmem:[%s0 + $0x54] sm:$0xf]
    %v46 = vld [vmem:[%s0 + $0x58] sm:$0xf]
    %v47 = vld [vmem:[%s0 + $0x60] sm:$0xf]
    %v48 = vld [vmem:[%s0 + $0x64] sm:$0xf]
    %v49 = vld [vmem:[%s0 + $0x6c] sm:$0xf]
    %v50 = vld [vmem:[%s0 + $0x70] sm:$0xf]
    %v51 = vld [vmem:[%s0 + $0x78] sm:$0xf]
    %v52 = vld [vmem:[%s0 + $0x7c] sm:$0xf]
    %v53 = vld [vmem:[%s0 + $0x84] sm:$0xf]
    %v54 = vld [vmem:[%s0 + $0x88] sm:$0xf]
    %v55 = vld [vmem:[%s0 + $0x90] sm:$0xf]
    %v56 = vld [vmem:[%s0 + $0x94] sm:$0xf]
    %v57 = vld [vmem:[%s0 + $0x9c] sm:$0xf]
    %v58 = vld [vmem:[%s0 + $0xa0] sm:$0xf]
    %v59 = vld [vmem:[%s0 + $0xa8] sm:$0xf]
    %v60 = vld [vmem:[%s0 + $0xac] sm:$0xf]
    %v61 = vld [vmem:[%s0 + $0xb4] sm:$0xf]
    %v62 = vld [vmem:[%s0 + $0xb8] sm:$0xf]
    %v63 = vld [vmem:[%s0 + $0xc0] sm:$0xf]
    %v64 = vld [vmem:[%s0 + $0xc4] sm:$0xf]
    %v65 = vld [vmem:[%s0 + $0xcc] sm:$0xf]
    %v66 = vld [vmem:[%s0 + $0xd0] sm:$0xf]
    %v67 = vld [vmem:[%s0 + $0xd8] sm:$0xf]
    %v68 = vld [vmem:[%s0 + $0xdc] sm:$0xf]
    %v69 = vld [vmem:[%s0 + $0xe4] sm:$0xf]
    %v70 = vld [vmem:[%s0 + $0xe8] sm:$0xf]
    %v71 = vld [vmem:[%s0 + $0xf0] sm:$0xf]
    %v72 = vld [vmem:[%s0 + $0xf4] sm:$0xf]
    %v73 = vld [vmem:[%s0 + $0xfc] sm:$0xf]
    %v74 = vld [vmem:[%s0 + $0x100] sm:$0xf]
    %v75 = vld [vmem:[%s0 + $0x108] sm:$0xf]
    %v76 = vld [vmem:[%s0 + $0x10c] sm:$0xf]
    %v77 = vld [vmem:[%s0 + $0x114] sm:$0xf]
    %v78 = vld [vmem:[%s0 + $0x118] sm:$0xf]
    %v79 = vld [vmem:[%s0 + $0x120] sm:$0xf]
    %v80 = vld [vmem:[%s0 + $0x124] sm:$0xf]
    %v81 = vld [vmem:[%s0 + $0x12c] sm:$0xf]
    %v82 = vld [vmem:[%s0 + $0x130] sm:$0xf]
    %v83 = vld [vmem:[%s0 + $0x138] sm:$0xf]
    %v84 = vld [vmem:[%s0 + $0x13c] sm:$0xf]
    %v85 = vld [vmem:[%s0 + $0x144] sm:$0xf]
    %v86 = vld [vmem:[%s0 + $0x148] sm:$0xf]
    %v87 = vld [vmem:[%s0 + $0x150] sm:$0xf]
    %v88 = vld [vmem:[%s0 + $0x154] sm:$0xf]
    %v89 = vld [vmem:[%s0 + $0x15c] sm:$0xf]
    %v90 = vld [vmem:[%s0 + $0x160] sm:$0xf]
    %v91 = vld [vmem:[%s0 + $0x168] sm:$0xf]
    %v92 = vld [vmem:[%s0 + $0x16c] sm:$0xf]
    %v93 = vld [vmem:[%s0 + $0x174] sm:$0xf]
    %v94 = vld [vmem:[%s0 + $0x178] sm:$0xf]
    %v95 = vunpack.c.l.bf16 %v31
    %v96 = vunpack.c.l.bf16 %v32
    %v97 = vunpack.c.l.bf16 %v33
    %v98 = vunpack.c.l.bf16 %v34
    %v99 = vunpack.c.l.bf16 %v35
    %v100 = vunpack.c.l.bf16 %v36
    %v101 = vunpack.c.l.bf16 %v37
    %v102 = vunpack.c.l.bf16 %v38
    %v103 = vunpack.c.l.bf16 %v39
    %v104 = vunpack.c.l.bf16 %v40
    %v105 = vunpack.c.l.bf16 %v41
    %v106 = vunpack.c.l.bf16 %v42
    %v107 = vunpack.c.l.bf16 %v43
    %v108 = vunpack.c.l.bf16 %v44
    %v109 = vunpack.c.l.bf16 %v45
    %v110 = vunpack.c.l.bf16 %v46
    %v111 = vunpack.c.l.bf16 %v47
    %v112 = vunpack.c.l.bf16 %v48
    %v113 = vunpack.c.l.bf16 %v49
    %v114 = vunpack.c.l.bf16 %v50
    %v115 = vunpack.c.l.bf16 %v51
    %v116 = vunpack.c.l.bf16 %v52
    %v117 = vunpack.c.l.bf16 %v53
    %v118 = vunpack.c.l.bf16 %v54
    %v119 = vunpack.c.l.bf16 %v55
    %v120 = vunpack.c.l.bf16 %v56
    %v121 = vunpack.c.l.bf16 %v57
    %v122 = vunpack.c.l.bf16 %v58
    %v123 = vunpack.c.l.bf16 %v59
    %v124 = vunpack.c.l.bf16 %v60
    %v125 = vunpack.c.l.bf16 %v61
    %v126 = vunpack.c.l.bf16 %v62
    %v127 = vunpack.c.l.bf16 %v63
    %v128 = vunpack.c.l.bf16 %v64
    %v129 = vunpack.c.l.bf16 %v65
    %v130 = vunpack.c.l.bf16 %v66
    %v131 = vunpack.c.l.bf16 %v67
    %v132 = vunpack.c.l.bf16 %v68
    %v133 = vunpack.c.l.bf16 %v69
    %v134 = vunpack.c.l.bf16 %v70
    %v135 = vunpack.c.l.bf16 %v71
    %v136 = vunpack.c.l.bf16 %v72
    %v137 = vunpack.c.l.bf16 %v73
    %v138 = vunpack.c.l.bf16 %v74
    %v139 = vunpack.c.l.bf16 %v75
    %v140 = vunpack.c.l.bf16 %v76
    %v141 = vunpack.c.l.bf16 %v77
    %v142 = vunpack.c.l.bf16 %v78
    %v143 = vunpack.c.l.bf16 %v79
    %v144 = vunpack.c.l.bf16 %v80
    %v145 = vunpack.c.l.bf16 %v81
    %v146 = vunpack.c.l.bf16 %v82
    %v147 = vunpack.c.l.bf16 %v83
    %v148 = vunpack.c.l.bf16 %v84
    %v149 = vunpack.c.l.bf16 %v85
    %v150 = vunpack.c.l.bf16 %v86
    %v151 = vunpack.c.l.bf16 %v87
    %v152 = vunpack.c.l.bf16 %v88
    %v153 = vunpack.c.l.bf16 %v89
    %v154 = vunpack.c.l.bf16 %v90
    %v155 = vunpack.c.l.bf16 %v91
    %v156 = vunpack.c.l.bf16 %v92
    %v157 = vunpack.c.l.bf16 %v93
    %v158 = vunpack.c.l.bf16 %v94
    %v159 = vld [vmem:[%s3] sm:$0x1]
    %v161 = vlaneseq
    %v162 = vshrl.u32 %v161, 7
    %v163 = vsub.s32 0, %v162
    %v164 = vrot.slane %v159, %v163
    %v166 = vmul.f32 %v95, %v164
    %v167 = vmul.f32 %v96, %v164
    %v168 = vmul.f32 %v97, %v164
    %v169 = vmul.f32 %v98, %v164
    %v170 = vmul.f32 %v99, %v164
    %v171 = vmul.f32 %v100, %v164
    %v172 = vmul.f32 %v101, %v164
    %v173 = vmul.f32 %v102, %v164
    %v174 = vmul.f32 %v103, %v164
    %v175 = vmul.f32 %v104, %v164
    %v176 = vmul.f32 %v105, %v164
    %v177 = vmul.f32 %v106, %v164
    %v178 = vmul.f32 %v107, %v164
    %v179 = vmul.f32 %v108, %v164
    %v180 = vmul.f32 %v109, %v164
    %v181 = vmul.f32 %v110, %v164
    %v182 = vmul.f32 %v111, %v164
    %v183 = vmul.f32 %v112, %v164
    %v184 = vmul.f32 %v113, %v164
    %v185 = vmul.f32 %v114, %v164
    %v186 = vmul.f32 %v115, %v164
    %v187 = vmul.f32 %v116, %v164
    %v188 = vmul.f32 %v117, %v164
    %v189 = vmul.f32 %v118, %v164
    %v190 = vmul.f32 %v119, %v164
    %v191 = vmul.f32 %v120, %v164
    %v192 = vmul.f32 %v121, %v164
    %v193 = vmul.f32 %v122, %v164
    %v194 = vmul.f32 %v123, %v164
    %v195 = vmul.f32 %v124, %v164
    %v196 = vmul.f32 %v125, %v164
    %v197 = vmul.f32 %v126, %v164
    %v198 = vmul.f32 %v127, %v164
    %v199 = vmul.f32 %v128, %v164
    %v200 = vmul.f32 %v129, %v164
    %v201 = vmul.f32 %v130, %v164
    %v202 = vmul.f32 %v131, %v164
    %v203 = vmul.f32 %v132, %v164
    %v204 = vmul.f32 %v133, %v164
    %v205 = vmul.f32 %v134, %v164
    %v206 = vmul.f32 %v135, %v164
    %v207 = vmul.f32 %v136, %v164
    %v208 = vmul.f32 %v137, %v164
    %v209 = vmul.f32 %v138, %v164
    %v210 = vmul.f32 %v139, %v164
    %v211 = vmul.f32 %v140, %v164
    %v212 = vmul.f32 %v141, %v164
    %v213 = vmul.f32 %v142, %v164
    %v214 = vmul.f32 %v143, %v164
    %v215 = vmul.f32 %v144, %v164
    %v216 = vmul.f32 %v145, %v164
    %v217 = vmul.f32 %v146, %v164
    %v218 = vmul.f32 %v147, %v164
    %v219 = vmul.f32 %v148, %v164
    %v220 = vmul.f32 %v149, %v164
    %v221 = vmul.f32 %v150, %v164
    %v222 = vmul.f32 %v151, %v164
    %v223 = vmul.f32 %v152, %v164
    %v224 = vmul.f32 %v153, %v164
    %v225 = vmul.f32 %v154, %v164
    %v226 = vmul.f32 %v155, %v164
    %v227 = vmul.f32 %v156, %v164
    %v228 = vmul.f32 %v157, %v164
    %v229 = vmul.f32 %v158, %v164
    %v230 = vadd.f32 %v166, 0.0
    %v231 = vadd.f32 %v167, 0.0
    %v232 = vadd.f32 %v168, 0.0
    %v233 = vadd.f32 %v169, 0.0
    %v234 = vadd.f32 %v170, 0.0
    %v235 = vadd.f32 %v171, 0.0
    %v236 = vadd.f32 %v172, 0.0
    %v237 = vadd.f32 %v173, 0.0
    %v238 = vadd.f32 %v174, 0.0
    %v239 = vadd.f32 %v175, 0.0
    %v240 = vadd.f32 %v176, 0.0
    %v241 = vadd.f32 %v177, 0.0
    %v242 = vadd.f32 %v178, 0.0
    %v243 = vadd.f32 %v179, 0.0
    %v244 = vadd.f32 %v180, 0.0
    %v245 = vadd.f32 %v181, 0.0
    %v246 = vadd.f32 %v182, 0.0
    %v247 = vadd.f32 %v183, 0.0
    %v248 = vadd.f32 %v184, 0.0
    %v249 = vadd.f32 %v185, 0.0
    %v250 = vadd.f32 %v186, 0.0
    %v251 = vadd.f32 %v187, 0.0
    %v252 = vadd.f32 %v188, 0.0
    %v253 = vadd.f32 %v189, 0.0
    %v254 = vadd.f32 %v190, 0.0
    %v255 = vadd.f32 %v191, 0.0
    %v256 = vadd.f32 %v192, 0.0
    %v257 = vadd.f32 %v193, 0.0
    %v258 = vadd.f32 %v194, 0.0
    %v259 = vadd.f32 %v195, 0.0
    %v260 = vadd.f32 %v196, 0.0
    %v261 = vadd.f32 %v197, 0.0
    %v262 = vadd.f32 %v198, 0.0
    %v263 = vadd.f32 %v199, 0.0
    %v264 = vadd.f32 %v200, 0.0
    %v265 = vadd.f32 %v201, 0.0
    %v266 = vadd.f32 %v202, 0.0
    %v267 = vadd.f32 %v203, 0.0
    %v268 = vadd.f32 %v204, 0.0
    %v269 = vadd.f32 %v205, 0.0
    %v270 = vadd.f32 %v206, 0.0
    %v271 = vadd.f32 %v207, 0.0
    %v272 = vadd.f32 %v208, 0.0
    %v273 = vadd.f32 %v209, 0.0
    %v274 = vadd.f32 %v210, 0.0
    %v275 = vadd.f32 %v211, 0.0
    %v276 = vadd.f32 %v212, 0.0
    %v277 = vadd.f32 %v213, 0.0
    %v278 = vadd.f32 %v214, 0.0
    %v279 = vadd.f32 %v215, 0.0
    %v280 = vadd.f32 %v216, 0.0
    %v281 = vadd.f32 %v217, 0.0
    %v282 = vadd.f32 %v218, 0.0
    %v283 = vadd.f32 %v219, 0.0
    %v284 = vadd.f32 %v220, 0.0
    %v285 = vadd.f32 %v221, 0.0
    %v286 = vadd.f32 %v222, 0.0
    %v287 = vadd.f32 %v223, 0.0
    %v288 = vadd.f32 %v224, 0.0
    %v289 = vadd.f32 %v225, 0.0
    %v290 = vadd.f32 %v226, 0.0
    %v291 = vadd.f32 %v227, 0.0
    %v292 = vadd.f32 %v228, 0.0
    %v293 = vadd.f32 %v229, 0.0
    %v294 = vld [vmem:[%s0 + $0x8] sm:$0x1]
    %v295 = vld [vmem:[%s0 + $0x14] sm:$0x1]
    %v296 = vld [vmem:[%s0 + $0x20] sm:$0x1]
    %v297 = vld [vmem:[%s0 + $0x2c] sm:$0x1]
    %v298 = vld [vmem:[%s0 + $0x38] sm:$0x1]
    %v299 = vld [vmem:[%s0 + $0x44] sm:$0x1]
    %v300 = vld [vmem:[%s0 + $0x50] sm:$0x1]
    %v301 = vld [vmem:[%s0 + $0x5c] sm:$0x1]
    %v302 = vld [vmem:[%s0 + $0x68] sm:$0x1]
    %v303 = vld [vmem:[%s0 + $0x74] sm:$0x1]
    %v304 = vld [vmem:[%s0 + $0x80] sm:$0x1]
    %v305 = vld [vmem:[%s0 + $0x8c] sm:$0x1]
    %v306 = vld [vmem:[%s0 + $0x98] sm:$0x1]
    %v307 = vld [vmem:[%s0 + $0xa4] sm:$0x1]
    %v308 = vld [vmem:[%s0 + $0xb0] sm:$0x1]
    %v309 = vld [vmem:[%s0 + $0xbc] sm:$0x1]
    %v310 = vld [vmem:[%s0 + $0xc8] sm:$0x1]
    %v311 = vld [vmem:[%s0 + $0xd4] sm:$0x1]
    %v312 = vld [vmem:[%s0 + $0xe0] sm:$0x1]
    %v313 = vld [vmem:[%s0 + $0xec] sm:$0x1]
    %v314 = vld [vmem:[%s0 + $0xf8] sm:$0x1]
    %v315 = vld [vmem:[%s0 + $0x104] sm:$0x1]
    %v316 = vld [vmem:[%s0 + $0x110] sm:$0x1]
    %v317 = vld [vmem:[%s0 + $0x11c] sm:$0x1]
    %v318 = vld [vmem:[%s0 + $0x128] sm:$0x1]
    %v319 = vld [vmem:[%s0 + $0x134] sm:$0x1]
    %v320 = vld [vmem:[%s0 + $0x140] sm:$0x1]
    %v321 = vld [vmem:[%s0 + $0x14c] sm:$0x1]
    %v322 = vld [vmem:[%s0 + $0x158] sm:$0x1]
    %v323 = vld [vmem:[%s0 + $0x164] sm:$0x1]
    %v324 = vld [vmem:[%s0 + $0x170] sm:$0x1]
    %v325 = vld [vmem:[%s0 + $0x17c] sm:$0x1]
    %v326 = vunpack.c.l.bf16 %v294
    %v327 = vunpack.c.l.bf16 %v295
    %v328 = vunpack.c.l.bf16 %v296
    %v329 = vunpack.c.l.bf16 %v297
    %v330 = vunpack.c.l.bf16 %v298
    %v331 = vunpack.c.l.bf16 %v299
    %v332 = vunpack.c.l.bf16 %v300
    %v333 = vunpack.c.l.bf16 %v301
    %v334 = vunpack.c.l.bf16 %v302
    %v335 = vunpack.c.l.bf16 %v303
    %v336 = vunpack.c.l.bf16 %v304
    %v337 = vunpack.c.l.bf16 %v305
    %v338 = vunpack.c.l.bf16 %v306
    %v339 = vunpack.c.l.bf16 %v307
    %v340 = vunpack.c.l.bf16 %v308
    %v341 = vunpack.c.l.bf16 %v309
    %v342 = vunpack.c.l.bf16 %v310
    %v343 = vunpack.c.l.bf16 %v311
    %v344 = vunpack.c.l.bf16 %v312
    %v345 = vunpack.c.l.bf16 %v313
    %v346 = vunpack.c.l.bf16 %v314
    %v347 = vunpack.c.l.bf16 %v315
    %v348 = vunpack.c.l.bf16 %v316
    %v349 = vunpack.c.l.bf16 %v317
    %v350 = vunpack.c.l.bf16 %v318
    %v351 = vunpack.c.l.bf16 %v319
    %v352 = vunpack.c.l.bf16 %v320
    %v353 = vunpack.c.l.bf16 %v321
    %v354 = vunpack.c.l.bf16 %v322
    %v355 = vunpack.c.l.bf16 %v323
    %v356 = vunpack.c.l.bf16 %v324
    %v357 = vunpack.c.l.bf16 %v325
    %s358 = scalar_lea.vmem %s3, 1
    %v359 = vld [vmem:[%s358] sm:$0x1]
    %v361 = vlaneseq
    %v362 = vshrl.u32 %v361, 7
    %v363 = vsub.s32 0, %v362
    %v364 = vrot.slane %v359, %v363
    %v366 = vmul.f32 %v95, %v364
    %v367 = vmul.f32 %v96, %v364
    %v368 = vmul.f32 %v326, %v364
    %v369 = vmul.f32 %v97, %v364
    %v370 = vmul.f32 %v98, %v364
    %v371 = vmul.f32 %v327, %v364
    %v372 = vmul.f32 %v99, %v364
    %v373 = vmul.f32 %v100, %v364
    %v374 = vmul.f32 %v328, %v364
    %v375 = vmul.f32 %v101, %v364
    %v376 = vmul.f32 %v102, %v364
    %v377 = vmul.f32 %v329, %v364
    %v378 = vmul.f32 %v103, %v364
    %v379 = vmul.f32 %v104, %v364
    %v380 = vmul.f32 %v330, %v364
    %v381 = vmul.f32 %v105, %v364
    %v382 = vmul.f32 %v106, %v364
    %v383 = vmul.f32 %v331, %v364
    %v384 = vmul.f32 %v107, %v364
    %v385 = vmul.f32 %v108, %v364
    %v386 = vmul.f32 %v332, %v364
    %v387 = vmul.f32 %v109, %v364
    %v388 = vmul.f32 %v110, %v364
    %v389 = vmul.f32 %v333, %v364
    %v390 = vmul.f32 %v111, %v364
    %v391 = vmul.f32 %v112, %v364
    %v392 = vmul.f32 %v334, %v364
    %v393 = vmul.f32 %v113, %v364
    %v394 = vmul.f32 %v114, %v364
    %v395 = vmul.f32 %v335, %v364
    %v396 = vmul.f32 %v115, %v364
    %v397 = vmul.f32 %v116, %v364
    %v398 = vmul.f32 %v336, %v364
    %v399 = vmul.f32 %v117, %v364
    %v400 = vmul.f32 %v118, %v364
    %v401 = vmul.f32 %v337, %v364
    %v402 = vmul.f32 %v119, %v364
    %v403 = vmul.f32 %v120, %v364
    %v404 = vmul.f32 %v338, %v364
    %v405 = vmul.f32 %v121, %v364
    %v406 = vmul.f32 %v122, %v364
    %v407 = vmul.f32 %v339, %v364
    %v408 = vmul.f32 %v123, %v364
    %v409 = vmul.f32 %v124, %v364
    %v410 = vmul.f32 %v340, %v364
    %v411 = vmul.f32 %v125, %v364
    %v412 = vmul.f32 %v126, %v364
    %v413 = vmul.f32 %v341, %v364
    %v414 = vmul.f32 %v127, %v364
    %v415 = vmul.f32 %v128, %v364
    %v416 = vmul.f32 %v342, %v364
    %v417 = vmul.f32 %v129, %v364
    %v418 = vmul.f32 %v130, %v364
    %v419 = vmul.f32 %v343, %v364
    %v420 = vmul.f32 %v131, %v364
    %v421 = vmul.f32 %v132, %v364
    %v422 = vmul.f32 %v344, %v364
    %v423 = vmul.f32 %v133, %v364
    %v424 = vmul.f32 %v134, %v364
    %v425 = vmul.f32 %v345, %v364
    %v426 = vmul.f32 %v135, %v364
    %v427 = vmul.f32 %v136, %v364
    %v428 = vmul.f32 %v346, %v364
    %v429 = vmul.f32 %v137, %v364
    %v430 = vmul.f32 %v138, %v364
    %v431 = vmul.f32 %v347, %v364
    %v432 = vmul.f32 %v139, %v364
    %v433 = vmul.f32 %v140, %v364
    %v434 = vmul.f32 %v348, %v364
    %v435 = vmul.f32 %v141, %v364
    %v436 = vmul.f32 %v142, %v364
    %v437 = vmul.f32 %v349, %v364
    %v438 = vmul.f32 %v143, %v364
    %v439 = vmul.f32 %v144, %v364
    %v440 = vmul.f32 %v350, %v364
    %v441 = vmul.f32 %v145, %v364
    %v442 = vmul.f32 %v146, %v364
    %v443 = vmul.f32 %v351, %v364
    %v444 = vmul.f32 %v147, %v364
    %v445 = vmul.f32 %v148, %v364
    %v446 = vmul.f32 %v352, %v364
    %v447 = vmul.f32 %v149, %v364
    %v448 = vmul.f32 %v150, %v364
    %v449 = vmul.f32 %v353, %v364
    %v450 = vmul.f32 %v151, %v364
    %v451 = vmul.f32 %v152, %v364
    %v452 = vmul.f32 %v354, %v364
    %v453 = vmul.f32 %v153, %v364
    %v454 = vmul.f32 %v154, %v364
    %v455 = vmul.f32 %v355, %v364
    %v456 = vmul.f32 %v155, %v364
    %v457 = vmul.f32 %v156, %v364
    %v458 = vmul.f32 %v356, %v364
    %v459 = vmul.f32 %v157, %v364
    %v460 = vmul.f32 %v158, %v364
    %v461 = vmul.f32 %v357, %v364
    %vm558 = vcmask 1046528
    %v559 = vrot.slane %v366, 1
    %v560 = vrot.slane %v367, 1
    %v561 = vsel %vm558, %v559, %v560
    %v562 = vrot.slane %v368, 1
    %v563 = vsel %vm558, %v560, %v562
    %v564 = vrot.slane %v369, 1
    %v565 = vrot.slane %v370, 1
    %v566 = vsel %vm558, %v564, %v565
    %v567 = vrot.slane %v371, 1
    %v568 = vsel %vm558, %v565, %v567
    %v569 = vrot.slane %v372, 1
    %v570 = vrot.slane %v373, 1
    %v571 = vsel %vm558, %v569, %v570
    %v572 = vrot.slane %v374, 1
    %v573 = vsel %vm558, %v570, %v572
    %v574 = vrot.slane %v375, 1
    %v575 = vrot.slane %v376, 1
    %v576 = vsel %vm558, %v574, %v575
    %v577 = vrot.slane %v377, 1
    %v578 = vsel %vm558, %v575, %v577
    %v579 = vrot.slane %v378, 1
    %v580 = vrot.slane %v379, 1
    %v581 = vsel %vm558, %v579, %v580
    %v582 = vrot.slane %v380, 1
    %v583 = vsel %vm558, %v580, %v582
    %v584 = vrot.slane %v381, 1
    %v585 = vrot.slane %v382, 1
    %v586 = vsel %vm558, %v584, %v585
    %v587 = vrot.slane %v383, 1
    %v588 = vsel %vm558, %v585, %v587
    %v589 = vrot.slane %v384, 1
    %v590 = vrot.slane %v385, 1
    %v591 = vsel %vm558, %v589, %v590
    %v592 = vrot.slane %v386, 1
    %v593 = vsel %vm558, %v590, %v592
    %v594 = vrot.slane %v387, 1
    %v595 = vrot.slane %v388, 1
    %v596 = vsel %vm558, %v594, %v595
    %v597 = vrot.slane %v389, 1
    %v598 = vsel %vm558, %v595, %v597
    %v599 = vrot.slane %v390, 1
    %v600 = vrot.slane %v391, 1
    %v601 = vsel %vm558, %v599, %v600
    %v602 = vrot.slane %v392, 1
    %v603 = vsel %vm558, %v600, %v602
    %v604 = vrot.slane %v393, 1
    %v605 = vrot.slane %v394, 1
    %v606 = vsel %vm558, %v604, %v605
    %v607 = vrot.slane %v395, 1
    %v608 = vsel %vm558, %v605, %v607
    %v609 = vrot.slane %v396, 1
    %v610 = vrot.slane %v397, 1
    %v611 = vsel %vm558, %v609, %v610
    %v612 = vrot.slane %v398, 1
    %v613 = vsel %vm558, %v610, %v612
    %v614 = vrot.slane %v399, 1
    %v615 = vrot.slane %v400, 1
    %v616 = vsel %vm558, %v614, %v615
    %v617 = vrot.slane %v401, 1
    %v618 = vsel %vm558, %v615, %v617
    %v619 = vrot.slane %v402, 1
    %v620 = vrot.slane %v403, 1
    %v621 = vsel %vm558, %v619, %v620
    %v622 = vrot.slane %v404, 1
    %v623 = vsel %vm558, %v620, %v622
    %v624 = vrot.slane %v405, 1
    %v625 = vrot.slane %v406, 1
    %v626 = vsel %vm558, %v624, %v625
    %v627 = vrot.slane %v407, 1
    %v628 = vsel %vm558, %v625, %v627
    %v629 = vrot.slane %v408, 1
    %v630 = vrot.slane %v409, 1
    %v631 = vsel %vm558, %v629, %v630
    %v632 = vrot.slane %v410, 1
    %v633 = vsel %vm558, %v630, %v632
    %v634 = vrot.slane %v411, 1
    %v635 = vrot.slane %v412, 1
    %v636 = vsel %vm558, %v634, %v635
    %v637 = vrot.slane %v413, 1
    %v638 = vsel %vm558, %v635, %v637
    %v639 = vrot.slane %v414, 1
    %v640 = vrot.slane %v415, 1
    %v641 = vsel %vm558, %v639, %v640
    %v642 = vrot.slane %v416, 1
    %v643 = vsel %vm558, %v640, %v642
    %v644 = vrot.slane %v417, 1
    %v645 = vrot.slane %v418, 1
    %v646 = vsel %vm558, %v644, %v645
    %v647 = vrot.slane %v419, 1
    %v648 = vsel %vm558, %v645, %v647
    %v649 = vrot.slane %v420, 1
    %v650 = vrot.slane %v421, 1
    %v651 = vsel %vm558, %v649, %v650
    %v652 = vrot.slane %v422, 1
    %v653 = vsel %vm558, %v650, %v652
    %v654 = vrot.slane %v423, 1
    %v655 = vrot.slane %v424, 1
    %v656 = vsel %vm558, %v654, %v655
    %v657 = vrot.slane %v425, 1
    %v658 = vsel %vm558, %v655, %v657
    %v659 = vrot.slane %v426, 1
    %v660 = vrot.slane %v427, 1
    %v661 = vsel %vm558, %v659, %v660
    %v662 = vrot.slane %v428, 1
    %v663 = vsel %vm558, %v660, %v662
    %v664 = vrot.slane %v429, 1
    %v665 = vrot.slane %v430, 1
    %v666 = vsel %vm558, %v664, %v665
    %v667 = vrot.slane %v431, 1
    %v668 = vsel %vm558, %v665, %v667
    %v669 = vrot.slane %v432, 1
    %v670 = vrot.slane %v433, 1
    %v671 = vsel %vm558, %v669, %v670
    %v672 = vrot.slane %v434, 1
    %v673 = vsel %vm558, %v670, %v672
    %v674 = vrot.slane %v435, 1
    %v675 = vrot.slane %v436, 1
    %v676 = vsel %vm558, %v674, %v675
    %v677 = vrot.slane %v437, 1
    %v678 = vsel %vm558, %v675, %v677
    %v679 = vrot.slane %v438, 1
    %v680 = vrot.slane %v439, 1
    %v681 = vsel %vm558, %v679, %v680
    %v682 = vrot.slane %v440, 1
    %v683 = vsel %vm558, %v680, %v682
    %v684 = vrot.slane %v441, 1
    %v685 = vrot.slane %v442, 1
    %v686 = vsel %vm558, %v684, %v685
    %v687 = vrot.slane %v443, 1
    %v688 = vsel %vm558, %v685, %v687
    %v689 = vrot.slane %v444, 1
    %v690 = vrot.slane %v445, 1
    %v691 = vsel %vm558, %v689, %v690
    %v692 = vrot.slane %v446, 1
    %v693 = vsel %vm558, %v690, %v692
    %v694 = vrot.slane %v447, 1
    %v695 = vrot.slane %v448, 1
    %v696 = vsel %vm558, %v694, %v695
    %v697 = vrot.slane %v449, 1
    %v698 = vsel %vm558, %v695, %v697
    %v699 = vrot.slane %v450, 1
    %v700 = vrot.slane %v451, 1
    %v701 = vsel %vm558, %v699, %v700
    %v702 = vrot.slane %v452, 1
    %v703 = vsel %vm558, %v700, %v702
    %v704 = vrot.slane %v453, 1
    %v705 = vrot.slane %v454, 1
    %v706 = vsel %vm558, %v704, %v705
    %v707 = vrot.slane %v455, 1
    %v708 = vsel %vm558, %v705, %v707
    %v709 = vrot.slane %v456, 1
    %v710 = vrot.slane %v457, 1
    %v711 = vsel %vm558, %v709, %v710
    %v712 = vrot.slane %v458, 1
    %v713 = vsel %vm558, %v710, %v712
    %v714 = vrot.slane %v459, 1
    %v715 = vrot.slane %v460, 1
    %v716 = vsel %vm558, %v714, %v715
    %v717 = vrot.slane %v461, 1
    %v718 = vsel %vm558, %v715, %v717
    %v783 = vadd.f32 %v230, %v561
    %v784 = vadd.f32 %v231, %v563
    %v785 = vadd.f32 %v232, %v566
    %v786 = vadd.f32 %v233, %v568
    %v787 = vadd.f32 %v234, %v571
    %v788 = vadd.f32 %v235, %v573
    %v789 = vadd.f32 %v236, %v576
    %v790 = vadd.f32 %v237, %v578
    %v791 = vadd.f32 %v238, %v581
    %v792 = vadd.f32 %v239, %v583
    %v793 = vadd.f32 %v240, %v586
    %v794 = vadd.f32 %v241, %v588
    %v795 = vadd.f32 %v242, %v591
    %v796 = vadd.f32 %v243, %v593
    %v797 = vadd.f32 %v244, %v596
    %v798 = vadd.f32 %v245, %v598
    %v799 = vadd.f32 %v246, %v601
    %v800 = vadd.f32 %v247, %v603
    %v801 = vadd.f32 %v248, %v606
    %v802 = vadd.f32 %v249, %v608
    %v803 = vadd.f32 %v250, %v611
    %v804 = vadd.f32 %v251, %v613
    %v805 = vadd.f32 %v252, %v616
    %v806 = vadd.f32 %v253, %v618
    %v807 = vadd.f32 %v254, %v621
    %v808 = vadd.f32 %v255, %v623
    %v809 = vadd.f32 %v256, %v626
    %v810 = vadd.f32 %v257, %v628
    %v811 = vadd.f32 %v258, %v631
    %v812 = vadd.f32 %v259, %v633
    %v813 = vadd.f32 %v260, %v636
    %v814 = vadd.f32 %v261, %v638
    %v815 = vadd.f32 %v262, %v641
    %v816 = vadd.f32 %v263, %v643
    %v817 = vadd.f32 %v264, %v646
    %v818 = vadd.f32 %v265, %v648
    %v819 = vadd.f32 %v266, %v651
    %v820 = vadd.f32 %v267, %v653
    %v821 = vadd.f32 %v268, %v656
    %v822 = vadd.f32 %v269, %v658
    %v823 = vadd.f32 %v270, %v661
    %v824 = vadd.f32 %v271, %v663
    %v825 = vadd.f32 %v272, %v666
    %v826 = vadd.f32 %v273, %v668
    %v827 = vadd.f32 %v274, %v671
    %v828 = vadd.f32 %v275, %v673
    %v829 = vadd.f32 %v276, %v676
    %v830 = vadd.f32 %v277, %v678
    %v831 = vadd.f32 %v278, %v681
    %v832 = vadd.f32 %v279, %v683
    %v833 = vadd.f32 %v280, %v686
    %v834 = vadd.f32 %v281, %v688
    %v835 = vadd.f32 %v282, %v691
    %v836 = vadd.f32 %v283, %v693
    %v837 = vadd.f32 %v284, %v696
    %v838 = vadd.f32 %v285, %v698
    %v839 = vadd.f32 %v286, %v701
    %v840 = vadd.f32 %v287, %v703
    %v841 = vadd.f32 %v288, %v706
    %v842 = vadd.f32 %v289, %v708
    %v843 = vadd.f32 %v290, %v711
    %v844 = vadd.f32 %v291, %v713
    %v845 = vadd.f32 %v292, %v716
    %v846 = vadd.f32 %v293, %v718
    %v847 = vld [vmem:[%s0] sm:$0xe]
    %v848 = vld [vmem:[%s0 + $0xc] sm:$0xe]
    %v849 = vld [vmem:[%s0 + $0x18] sm:$0xe]
    %v850 = vld [vmem:[%s0 + $0x24] sm:$0xe]
    %v851 = vld [vmem:[%s0 + $0x30] sm:$0xe]
    %v852 = vld [vmem:[%s0 + $0x3c] sm:$0xe]
    %v853 = vld [vmem:[%s0 + $0x48] sm:$0xe]
    %v854 = vld [vmem:[%s0 + $0x54] sm:$0xe]
    %v855 = vld [vmem:[%s0 + $0x60] sm:$0xe]
    %v856 = vld [vmem:[%s0 + $0x6c] sm:$0xe]
    %v857 = vld [vmem:[%s0 + $0x78] sm:$0xe]
    %v858 = vld [vmem:[%s0 + $0x84] sm:$0xe]
    %v859 = vld [vmem:[%s0 + $0x90] sm:$0xe]
    %v860 = vld [vmem:[%s0 + $0x9c] sm:$0xe]
    %v861 = vld [vmem:[%s0 + $0xa8] sm:$0xe]
    %v862 = vld [vmem:[%s0 + $0xb4] sm:$0xe]
    %v863 = vld [vmem:[%s0 + $0xc0] sm:$0xe]
    %v864 = vld [vmem:[%s0 + $0xcc] sm:$0xe]
    %v865 = vld [vmem:[%s0 + $0xd8] sm:$0xe]
    %v866 = vld [vmem:[%s0 + $0xe4] sm:$0xe]
    %v867 = vld [vmem:[%s0 + $0xf0] sm:$0xe]
    %v868 = vld [vmem:[%s0 + $0xfc] sm:$0xe]
    %v869 = vld [vmem:[%s0 + $0x108] sm:$0xe]
    %v870 = vld [vmem:[%s0 + $0x114] sm:$0xe]
    %v871 = vld [vmem:[%s0 + $0x120] sm:$0xe]
    %v872 = vld [vmem:[%s0 + $0x12c] sm:$0xe]
    %v873 = vld [vmem:[%s0 + $0x138] sm:$0xe]
    %v874 = vld [vmem:[%s0 + $0x144] sm:$0xe]
    %v875 = vld [vmem:[%s0 + $0x150] sm:$0xe]
    %v876 = vld [vmem:[%s0 + $0x15c] sm:$0xe]
    %v877 = vld [vmem:[%s0 + $0x168] sm:$0xe]
    %v878 = vld [vmem:[%s0 + $0x174] sm:$0xe]
    %v879 = vunpack.c.l.bf16 %v847
    %v880 = vunpack.c.l.bf16 %v848
    %v881 = vunpack.c.l.bf16 %v849
    %v882 = vunpack.c.l.bf16 %v850
    %v883 = vunpack.c.l.bf16 %v851
    %v884 = vunpack.c.l.bf16 %v852
    %v885 = vunpack.c.l.bf16 %v853
    %v886 = vunpack.c.l.bf16 %v854
    %v887 = vunpack.c.l.bf16 %v855
    %v888 = vunpack.c.l.bf16 %v856
    %v889 = vunpack.c.l.bf16 %v857
    %v890 = vunpack.c.l.bf16 %v858
    %v891 = vunpack.c.l.bf16 %v859
    %v892 = vunpack.c.l.bf16 %v860
    %v893 = vunpack.c.l.bf16 %v861
    %v894 = vunpack.c.l.bf16 %v862
    %v895 = vunpack.c.l.bf16 %v863
    %v896 = vunpack.c.l.bf16 %v864
    %v897 = vunpack.c.l.bf16 %v865
    %v898 = vunpack.c.l.bf16 %v866
    %v899 = vunpack.c.l.bf16 %v867
    %v900 = vunpack.c.l.bf16 %v868
    %v901 = vunpack.c.l.bf16 %v869
    %v902 = vunpack.c.l.bf16 %v870
    %v903 = vunpack.c.l.bf16 %v871
    %v904 = vunpack.c.l.bf16 %v872
    %v905 = vunpack.c.l.bf16 %v873
    %v906 = vunpack.c.l.bf16 %v874
    %v907 = vunpack.c.l.bf16 %v875
    %v908 = vunpack.c.l.bf16 %v876
    %v909 = vunpack.c.l.bf16 %v877
    %v910 = vunpack.c.l.bf16 %v878
    %s911 = scalar_lea.vmem %s3, 2
    %v912 = vld [vmem:[%s911] sm:$0x1]
    %v914 = vlaneseq
    %v915 = vshrl.u32 %v914, 7
    %v916 = vsub.s32 0, %v915
    %v917 = vrot.slane %v912, %v916
    %v919 = vmul.f32 %v879, %v917
    %v920 = vmul.f32 %v96, %v917
    %v921 = vmul.f32 %v326, %v917
    %v922 = vmul.f32 %v880, %v917
    %v923 = vmul.f32 %v98, %v917
    %v924 = vmul.f32 %v327, %v917
    %v925 = vmul.f32 %v881, %v917
    %v926 = vmul.f32 %v100, %v917
    %v927 = vmul.f32 %v328, %v917
    %v928 = vmul.f32 %v882, %v917
    %v929 = vmul.f32 %v102, %v917
    %v930 = vmul.f32 %v329, %v917
    %v931 = vmul.f32 %v883, %v917
    %v932 = vmul.f32 %v104, %v917
    %v933 = vmul.f32 %v330, %v917
    %v934 = vmul.f32 %v884, %v917
    %v935 = vmul.f32 %v106, %v917
    %v936 = vmul.f32 %v331, %v917
    %v937 = vmul.f32 %v885, %v917
    %v938 = vmul.f32 %v108, %v917
    %v939 = vmul.f32 %v332, %v917
    %v940 = vmul.f32 %v886, %v917
    %v941 = vmul.f32 %v110, %v917
    %v942 = vmul.f32 %v333, %v917
    %v943 = vmul.f32 %v887, %v917
    %v944 = vmul.f32 %v112, %v917
    %v945 = vmul.f32 %v334, %v917
    %v946 = vmul.f32 %v888, %v917
    %v947 = vmul.f32 %v114, %v917
    %v948 = vmul.f32 %v335, %v917
    %v949 = vmul.f32 %v889, %v917
    %v950 = vmul.f32 %v116, %v917
    %v951 = vmul.f32 %v336, %v917
    %v952 = vmul.f32 %v890, %v917
    %v953 = vmul.f32 %v118, %v917
    %v954 = vmul.f32 %v337, %v917
    %v955 = vmul.f32 %v891, %v917
    %v956 = vmul.f32 %v120, %v917
    %v957 = vmul.f32 %v338, %v917
    %v958 = vmul.f32 %v892, %v917
    %v959 = vmul.f32 %v122, %v917
    %v960 = vmul.f32 %v339, %v917
    %v961 = vmul.f32 %v893, %v917
    %v962 = vmul.f32 %v124, %v917
    %v963 = vmul.f32 %v340, %v917
    %v964 = vmul.f32 %v894, %v917
    %v965 = vmul.f32 %v126, %v917
    %v966 = vmul.f32 %v341, %v917
    %v967 = vmul.f32 %v895, %v917
    %v968 = vmul.f32 %v128, %v917
    %v969 = vmul.f32 %v342, %v917
    %v970 = vmul.f32 %v896, %v917
    %v971 = vmul.f32 %v130, %v917
    %v972 = vmul.f32 %v343, %v917
    %v973 = vmul.f32 %v897, %v917
    %v974 = vmul.f32 %v132, %v917
    %v975 = vmul.f32 %v344, %v917
    %v976 = vmul.f32 %v898, %v917
    %v977 = vmul.f32 %v134, %v917
    %v978 = vmul.f32 %v345, %v917
    %v979 = vmul.f32 %v899, %v917
    %v980 = vmul.f32 %v136, %v917
    %v981 = vmul.f32 %v346, %v917
    %v982 = vmul.f32 %v900, %v917
    %v983 = vmul.f32 %v138, %v917
    %v984 = vmul.f32 %v347, %v917
    %v985 = vmul.f32 %v901, %v917
    %v986 = vmul.f32 %v140, %v917
    %v987 = vmul.f32 %v348, %v917
    %v988 = vmul.f32 %v902, %v917
    %v989 = vmul.f32 %v142, %v917
    %v990 = vmul.f32 %v349, %v917
    %v991 = vmul.f32 %v903, %v917
    %v992 = vmul.f32 %v144, %v917
    %v993 = vmul.f32 %v350, %v917
    %v994 = vmul.f32 %v904, %v917
    %v995 = vmul.f32 %v146, %v917
    %v996 = vmul.f32 %v351, %v917
    %v997 = vmul.f32 %v905, %v917
    %v998 = vmul.f32 %v148, %v917
    %v999 = vmul.f32 %v352, %v917
    %v1000 = vmul.f32 %v906, %v917
    %v1001 = vmul.f32 %v150, %v917
    %v1002 = vmul.f32 %v353, %v917
    %v1003 = vmul.f32 %v907, %v917
    %v1004 = vmul.f32 %v152, %v917
    %v1005 = vmul.f32 %v354, %v917
    %v1006 = vmul.f32 %v908, %v917
    %v1007 = vmul.f32 %v154, %v917
    %v1008 = vmul.f32 %v355, %v917
    %v1009 = vmul.f32 %v909, %v917
    %v1010 = vmul.f32 %v156, %v917
    %v1011 = vmul.f32 %v356, %v917
    %v1012 = vmul.f32 %v910, %v917
    %v1013 = vmul.f32 %v158, %v917
    %v1014 = vmul.f32 %v357, %v917
    %vm1111 = vcmask 1045504
    %v1112 = vrot.slane %v919, 2
    %v1113 = vrot.slane %v920, 2
    %v1114 = vsel %vm1111, %v1112, %v1113
    %v1115 = vrot.slane %v921, 2
    %v1116 = vsel %vm1111, %v1113, %v1115
    %v1117 = vrot.slane %v922, 2
    %v1118 = vrot.slane %v923, 2
    %v1119 = vsel %vm1111, %v1117, %v1118
    %v1120 = vrot.slane %v924, 2
    %v1121 = vsel %vm1111, %v1118, %v1120
    %v1122 = vrot.slane %v925, 2
    %v1123 = vrot.slane %v926, 2
    %v1124 = vsel %vm1111, %v1122, %v1123
    %v1125 = vrot.slane %v927, 2
    %v1126 = vsel %vm1111, %v1123, %v1125
    %v1127 = vrot.slane %v928, 2
    %v1128 = vrot.slane %v929, 2
    %v1129 = vsel %vm1111, %v1127, %v1128
    %v1130 = vrot.slane %v930, 2
    %v1131 = vsel %vm1111, %v1128, %v1130
    %v1132 = vrot.slane %v931, 2
    %v1133 = vrot.slane %v932, 2
    %v1134 = vsel %vm1111, %v1132, %v1133
    %v1135 = vrot.slane %v933, 2
    %v1136 = vsel %vm1111, %v1133, %v1135
    %v1137 = vrot.slane %v934, 2
    %v1138 = vrot.slane %v935, 2
    %v1139 = vsel %vm1111, %v1137, %v1138
    %v1140 = vrot.slane %v936, 2
    %v1141 = vsel %vm1111, %v1138, %v1140
    %v1142 = vrot.slane %v937, 2
    %v1143 = vrot.slane %v938, 2
    %v1144 = vsel %vm1111, %v1142, %v1143
    %v1145 = vrot.slane %v939, 2
    %v1146 = vsel %vm1111, %v1143, %v1145
    %v1147 = vrot.slane %v940, 2
    %v1148 = vrot.slane %v941, 2
    %v1149 = vsel %vm1111, %v1147, %v1148
    %v1150 = vrot.slane %v942, 2
    %v1151 = vsel %vm1111, %v1148, %v1150
    %v1152 = vrot.slane %v943, 2
    %v1153 = vrot.slane %v944, 2
    %v1154 = vsel %vm1111, %v1152, %v1153
    %v1155 = vrot.slane %v945, 2
    %v1156 = vsel %vm1111, %v1153, %v1155
    %v1157 = vrot.slane %v946, 2
    %v1158 = vrot.slane %v947, 2
    %v1159 = vsel %vm1111, %v1157, %v1158
    %v1160 = vrot.slane %v948, 2
    %v1161 = vsel %vm1111, %v1158, %v1160
    %v1162 = vrot.slane %v949, 2
    %v1163 = vrot.slane %v950, 2
    %v1164 = vsel %vm1111, %v1162, %v1163
    %v1165 = vrot.slane %v951, 2
    %v1166 = vsel %vm1111, %v1163, %v1165
    %v1167 = vrot.slane %v952, 2
    %v1168 = vrot.slane %v953, 2
    %v1169 = vsel %vm1111, %v1167, %v1168
    %v1170 = vrot.slane %v954, 2
    %v1171 = vsel %vm1111, %v1168, %v1170
    %v1172 = vrot.slane %v955, 2
    %v1173 = vrot.slane %v956, 2
    %v1174 = vsel %vm1111, %v1172, %v1173
    %v1175 = vrot.slane %v957, 2
    %v1176 = vsel %vm1111, %v1173, %v1175
    %v1177 = vrot.slane %v958, 2
    %v1178 = vrot.slane %v959, 2
    %v1179 = vsel %vm1111, %v1177, %v1178
    %v1180 = vrot.slane %v960, 2
    %v1181 = vsel %vm1111, %v1178, %v1180
    %v1182 = vrot.slane %v961, 2
    %v1183 = vrot.slane %v962, 2
    %v1184 = vsel %vm1111, %v1182, %v1183
    %v1185 = vrot.slane %v963, 2
    %v1186 = vsel %vm1111, %v1183, %v1185
    %v1187 = vrot.slane %v964, 2
    %v1188 = vrot.slane %v965, 2
    %v1189 = vsel %vm1111, %v1187, %v1188
    %v1190 = vrot.slane %v966, 2
    %v1191 = vsel %vm1111, %v1188, %v1190
    %v1192 = vrot.slane %v967, 2
    %v1193 = vrot.slane %v968, 2
    %v1194 = vsel %vm1111, %v1192, %v1193
    %v1195 = vrot.slane %v969, 2
    %v1196 = vsel %vm1111, %v1193, %v1195
    %v1197 = vrot.slane %v970, 2
    %v1198 = vrot.slane %v971, 2
    %v1199 = vsel %vm1111, %v1197, %v1198
    %v1200 = vrot.slane %v972, 2
    %v1201 = vsel %vm1111, %v1198, %v1200
    %v1202 = vrot.slane %v973, 2
    %v1203 = vrot.slane %v974, 2
    %v1204 = vsel %vm1111, %v1202, %v1203
    %v1205 = vrot.slane %v975, 2
    %v1206 = vsel %vm1111, %v1203, %v1205
    %v1207 = vrot.slane %v976, 2
    %v1208 = vrot.slane %v977, 2
    %v1209 = vsel %vm1111, %v1207, %v1208
    %v1210 = vrot.slane %v978, 2
    %v1211 = vsel %vm1111, %v1208, %v1210
    %v1212 = vrot.slane %v979, 2
    %v1213 = vrot.slane %v980, 2
    %v1214 = vsel %vm1111, %v1212, %v1213
    %v1215 = vrot.slane %v981, 2
    %v1216 = vsel %vm1111, %v1213, %v1215
    %v1217 = vrot.slane %v982, 2
    %v1218 = vrot.slane %v983, 2
    %v1219 = vsel %vm1111, %v1217, %v1218
    %v1220 = vrot.slane %v984, 2
    %v1221 = vsel %vm1111, %v1218, %v1220
    %v1222 = vrot.slane %v985, 2
    %v1223 = vrot.slane %v986, 2
    %v1224 = vsel %vm1111, %v1222, %v1223
    %v1225 = vrot.slane %v987, 2
    %v1226 = vsel %vm1111, %v1223, %v1225
    %v1227 = vrot.slane %v988, 2
    %v1228 = vrot.slane %v989, 2
    %v1229 = vsel %vm1111, %v1227, %v1228
    %v1230 = vrot.slane %v990, 2
    %v1231 = vsel %vm1111, %v1228, %v1230
    %v1232 = vrot.slane %v991, 2
    %v1233 = vrot.slane %v992, 2
    %v1234 = vsel %vm1111, %v1232, %v1233
    %v1235 = vrot.slane %v993, 2
    %v1236 = vsel %vm1111, %v1233, %v1235
    %v1237 = vrot.slane %v994, 2
    %v1238 = vrot.slane %v995, 2
    %v1239 = vsel %vm1111, %v1237, %v1238
    %v1240 = vrot.slane %v996, 2
    %v1241 = vsel %vm1111, %v1238, %v1240
    %v1242 = vrot.slane %v997, 2
    %v1243 = vrot.slane %v998, 2
    %v1244 = vsel %vm1111, %v1242, %v1243
    %v1245 = vrot.slane %v999, 2
    %v1246 = vsel %vm1111, %v1243, %v1245
    %v1247 = vrot.slane %v1000, 2
    %v1248 = vrot.slane %v1001, 2
    %v1249 = vsel %vm1111, %v1247, %v1248
    %v1250 = vrot.slane %v1002, 2
    %v1251 = vsel %vm1111, %v1248, %v1250
    %v1252 = vrot.slane %v1003, 2
    %v1253 = vrot.slane %v1004, 2
    %v1254 = vsel %vm1111, %v1252, %v1253
    %v1255 = vrot.slane %v1005, 2
    %v1256 = vsel %vm1111, %v1253, %v1255
    %v1257 = vrot.slane %v1006, 2
    %v1258 = vrot.slane %v1007, 2
    %v1259 = vsel %vm1111, %v1257, %v1258
    %v1260 = vrot.slane %v1008, 2
    %v1261 = vsel %vm1111, %v1258, %v1260
    %v1262 = vrot.slane %v1009, 2
    %v1263 = vrot.slane %v1010, 2
    %v1264 = vsel %vm1111, %v1262, %v1263
    %v1265 = vrot.slane %v1011, 2
    %v1266 = vsel %vm1111, %v1263, %v1265
    %v1267 = vrot.slane %v1012, 2
    %v1268 = vrot.slane %v1013, 2
    %v1269 = vsel %vm1111, %v1267, %v1268
    %v1270 = vrot.slane %v1014, 2
    %v1271 = vsel %vm1111, %v1268, %v1270
    %v1336 = vadd.f32 %v783, %v1114
    %v1337 = vadd.f32 %v784, %v1116
    %v1338 = vadd.f32 %v785, %v1119
    %v1339 = vadd.f32 %v786, %v1121
    %v1340 = vadd.f32 %v787, %v1124
    %v1341 = vadd.f32 %v788, %v1126
    %v1342 = vadd.f32 %v789, %v1129
    %v1343 = vadd.f32 %v790, %v1131
    %v1344 = vadd.f32 %v791, %v1134
    %v1345 = vadd.f32 %v792, %v1136
    %v1346 = vadd.f32 %v793, %v1139
    %v1347 = vadd.f32 %v794, %v1141
    %v1348 = vadd.f32 %v795, %v1144
    %v1349 = vadd.f32 %v796, %v1146
    %v1350 = vadd.f32 %v797, %v1149
    %v1351 = vadd.f32 %v798, %v1151
    %v1352 = vadd.f32 %v799, %v1154
    %v1353 = vadd.f32 %v800, %v1156
    %v1354 = vadd.f32 %v801, %v1159
    %v1355 = vadd.f32 %v802, %v1161
    %v1356 = vadd.f32 %v803, %v1164
    %v1357 = vadd.f32 %v804, %v1166
    %v1358 = vadd.f32 %v805, %v1169
    %v1359 = vadd.f32 %v806, %v1171
    %v1360 = vadd.f32 %v807, %v1174
    %v1361 = vadd.f32 %v808, %v1176
    %v1362 = vadd.f32 %v809, %v1179
    %v1363 = vadd.f32 %v810, %v1181
    %v1364 = vadd.f32 %v811, %v1184
    %v1365 = vadd.f32 %v812, %v1186
    %v1366 = vadd.f32 %v813, %v1189
    %v1367 = vadd.f32 %v814, %v1191
    %v1368 = vadd.f32 %v815, %v1194
    %v1369 = vadd.f32 %v816, %v1196
    %v1370 = vadd.f32 %v817, %v1199
    %v1371 = vadd.f32 %v818, %v1201
    %v1372 = vadd.f32 %v819, %v1204
    %v1373 = vadd.f32 %v820, %v1206
    %v1374 = vadd.f32 %v821, %v1209
    %v1375 = vadd.f32 %v822, %v1211
    %v1376 = vadd.f32 %v823, %v1214
    %v1377 = vadd.f32 %v824, %v1216
    %v1378 = vadd.f32 %v825, %v1219
    %v1379 = vadd.f32 %v826, %v1221
    %v1380 = vadd.f32 %v827, %v1224
    %v1381 = vadd.f32 %v828, %v1226
    %v1382 = vadd.f32 %v829, %v1229
    %v1383 = vadd.f32 %v830, %v1231
    %v1384 = vadd.f32 %v831, %v1234
    %v1385 = vadd.f32 %v832, %v1236
    %v1386 = vadd.f32 %v833, %v1239
    %v1387 = vadd.f32 %v834, %v1241
    %v1388 = vadd.f32 %v835, %v1244
    %v1389 = vadd.f32 %v836, %v1246
    %v1390 = vadd.f32 %v837, %v1249
    %v1391 = vadd.f32 %v838, %v1251
    %v1392 = vadd.f32 %v839, %v1254
    %v1393 = vadd.f32 %v840, %v1256
    %v1394 = vadd.f32 %v841, %v1259
    %v1395 = vadd.f32 %v842, %v1261
    %v1396 = vadd.f32 %v843, %v1264
    %v1397 = vadd.f32 %v844, %v1266
    %v1398 = vadd.f32 %v845, %v1269
    %v1399 = vadd.f32 %v846, %v1271
    %v1400 = vld [vmem:[%s1] sm:$0xf]
    %v1401 = vld [vmem:[%s1 + $0x4] sm:$0xf]
    %v1402 = vld [vmem:[%s1 + $0xc] sm:$0xf]
    %v1403 = vld [vmem:[%s1 + $0x10] sm:$0xf]
    %v1404 = vld [vmem:[%s1 + $0x18] sm:$0xf]
    %v1405 = vld [vmem:[%s1 + $0x1c] sm:$0xf]
    %v1406 = vld [vmem:[%s1 + $0x24] sm:$0xf]
    %v1407 = vld [vmem:[%s1 + $0x28] sm:$0xf]
    %v1408 = vld [vmem:[%s1 + $0x30] sm:$0xf]
    %v1409 = vld [vmem:[%s1 + $0x34] sm:$0xf]
    %v1410 = vld [vmem:[%s1 + $0x3c] sm:$0xf]
    %v1411 = vld [vmem:[%s1 + $0x40] sm:$0xf]
    %v1412 = vld [vmem:[%s1 + $0x48] sm:$0xf]
    %v1413 = vld [vmem:[%s1 + $0x4c] sm:$0xf]
    %v1414 = vld [vmem:[%s1 + $0x54] sm:$0xf]
    %v1415 = vld [vmem:[%s1 + $0x58] sm:$0xf]
    %v1416 = vld [vmem:[%s1 + $0x60] sm:$0xf]
    %v1417 = vld [vmem:[%s1 + $0x64] sm:$0xf]
    %v1418 = vld [vmem:[%s1 + $0x6c] sm:$0xf]
    %v1419 = vld [vmem:[%s1 + $0x70] sm:$0xf]
    %v1420 = vld [vmem:[%s1 + $0x78] sm:$0xf]
    %v1421 = vld [vmem:[%s1 + $0x7c] sm:$0xf]
    %v1422 = vld [vmem:[%s1 + $0x84] sm:$0xf]
    %v1423 = vld [vmem:[%s1 + $0x88] sm:$0xf]
    %v1424 = vld [vmem:[%s1 + $0x90] sm:$0xf]
    %v1425 = vld [vmem:[%s1 + $0x94] sm:$0xf]
    %v1426 = vld [vmem:[%s1 + $0x9c] sm:$0xf]
    %v1427 = vld [vmem:[%s1 + $0xa0] sm:$0xf]
    %v1428 = vld [vmem:[%s1 + $0xa8] sm:$0xf]
    %v1429 = vld [vmem:[%s1 + $0xac] sm:$0xf]
    %v1430 = vld [vmem:[%s1 + $0xb4] sm:$0xf]
    %v1431 = vld [vmem:[%s1 + $0xb8] sm:$0xf]
    %v1432 = vld [vmem:[%s1 + $0xc0] sm:$0xf]
    %v1433 = vld [vmem:[%s1 + $0xc4] sm:$0xf]
    %v1434 = vld [vmem:[%s1 + $0xcc] sm:$0xf]
    %v1435 = vld [vmem:[%s1 + $0xd0] sm:$0xf]
    %v1436 = vld [vmem:[%s1 + $0xd8] sm:$0xf]
    %v1437 = vld [vmem:[%s1 + $0xdc] sm:$0xf]
    %v1438 = vld [vmem:[%s1 + $0xe4] sm:$0xf]
    %v1439 = vld [vmem:[%s1 + $0xe8] sm:$0xf]
    %v1440 = vld [vmem:[%s1 + $0xf0] sm:$0xf]
    %v1441 = vld [vmem:[%s1 + $0xf4] sm:$0xf]
    %v1442 = vld [vmem:[%s1 + $0xfc] sm:$0xf]
    %v1443 = vld [vmem:[%s1 + $0x100] sm:$0xf]
    %v1444 = vld [vmem:[%s1 + $0x108] sm:$0xf]
    %v1445 = vld [vmem:[%s1 + $0x10c] sm:$0xf]
    %v1446 = vld [vmem:[%s1 + $0x114] sm:$0xf]
    %v1447 = vld [vmem:[%s1 + $0x118] sm:$0xf]
    %v1448 = vld [vmem:[%s1 + $0x120] sm:$0xf]
    %v1449 = vld [vmem:[%s1 + $0x124] sm:$0xf]
    %v1450 = vld [vmem:[%s1 + $0x12c] sm:$0xf]
    %v1451 = vld [vmem:[%s1 + $0x130] sm:$0xf]
    %v1452 = vld [vmem:[%s1 + $0x138] sm:$0xf]
    %v1453 = vld [vmem:[%s1 + $0x13c] sm:$0xf]
    %v1454 = vld [vmem:[%s1 + $0x144] sm:$0xf]
    %v1455 = vld [vmem:[%s1 + $0x148] sm:$0xf]
    %v1456 = vld [vmem:[%s1 + $0x150] sm:$0xf]
    %v1457 = vld [vmem:[%s1 + $0x154] sm:$0xf]
    %v1458 = vld [vmem:[%s1 + $0x15c] sm:$0xf]
    %v1459 = vld [vmem:[%s1 + $0x160] sm:$0xf]
    %v1460 = vld [vmem:[%s1 + $0x168] sm:$0xf]
    %v1461 = vld [vmem:[%s1 + $0x16c] sm:$0xf]
    %v1462 = vld [vmem:[%s1 + $0x174] sm:$0xf]
    %v1463 = vld [vmem:[%s1 + $0x178] sm:$0xf]
    %v1464 = vunpack.c.l.bf16 %v1400
    %v1465 = vunpack.c.l.bf16 %v1401
    %v1466 = vunpack.c.l.bf16 %v1402
    %v1467 = vunpack.c.l.bf16 %v1403
    %v1468 = vunpack.c.l.bf16 %v1404
    %v1469 = vunpack.c.l.bf16 %v1405
    %v1470 = vunpack.c.l.bf16 %v1406
    %v1471 = vunpack.c.l.bf16 %v1407
    %v1472 = vunpack.c.l.bf16 %v1408
    %v1473 = vunpack.c.l.bf16 %v1409
    %v1474 = vunpack.c.l.bf16 %v1410
    %v1475 = vunpack.c.l.bf16 %v1411
    %v1476 = vunpack.c.l.bf16 %v1412
    %v1477 = vunpack.c.l.bf16 %v1413
    %v1478 = vunpack.c.l.bf16 %v1414
    %v1479 = vunpack.c.l.bf16 %v1415
    %v1480 = vunpack.c.l.bf16 %v1416
    %v1481 = vunpack.c.l.bf16 %v1417
    %v1482 = vunpack.c.l.bf16 %v1418
    %v1483 = vunpack.c.l.bf16 %v1419
    %v1484 = vunpack.c.l.bf16 %v1420
    %v1485 = vunpack.c.l.bf16 %v1421
    %v1486 = vunpack.c.l.bf16 %v1422
    %v1487 = vunpack.c.l.bf16 %v1423
    %v1488 = vunpack.c.l.bf16 %v1424
    %v1489 = vunpack.c.l.bf16 %v1425
    %v1490 = vunpack.c.l.bf16 %v1426
    %v1491 = vunpack.c.l.bf16 %v1427
    %v1492 = vunpack.c.l.bf16 %v1428
    %v1493 = vunpack.c.l.bf16 %v1429
    %v1494 = vunpack.c.l.bf16 %v1430
    %v1495 = vunpack.c.l.bf16 %v1431
    %v1496 = vunpack.c.l.bf16 %v1432
    %v1497 = vunpack.c.l.bf16 %v1433
    %v1498 = vunpack.c.l.bf16 %v1434
    %v1499 = vunpack.c.l.bf16 %v1435
    %v1500 = vunpack.c.l.bf16 %v1436
    %v1501 = vunpack.c.l.bf16 %v1437
    %v1502 = vunpack.c.l.bf16 %v1438
    %v1503 = vunpack.c.l.bf16 %v1439
    %v1504 = vunpack.c.l.bf16 %v1440
    %v1505 = vunpack.c.l.bf16 %v1441
    %v1506 = vunpack.c.l.bf16 %v1442
    %v1507 = vunpack.c.l.bf16 %v1443
    %v1508 = vunpack.c.l.bf16 %v1444
    %v1509 = vunpack.c.l.bf16 %v1445
    %v1510 = vunpack.c.l.bf16 %v1446
    %v1511 = vunpack.c.l.bf16 %v1447
    %v1512 = vunpack.c.l.bf16 %v1448
    %v1513 = vunpack.c.l.bf16 %v1449
    %v1514 = vunpack.c.l.bf16 %v1450
    %v1515 = vunpack.c.l.bf16 %v1451
    %v1516 = vunpack.c.l.bf16 %v1452
    %v1517 = vunpack.c.l.bf16 %v1453
    %v1518 = vunpack.c.l.bf16 %v1454
    %v1519 = vunpack.c.l.bf16 %v1455
    %v1520 = vunpack.c.l.bf16 %v1456
    %v1521 = vunpack.c.l.bf16 %v1457
    %v1522 = vunpack.c.l.bf16 %v1458
    %v1523 = vunpack.c.l.bf16 %v1459
    %v1524 = vunpack.c.l.bf16 %v1460
    %v1525 = vunpack.c.l.bf16 %v1461
    %v1526 = vunpack.c.l.bf16 %v1462
    %v1527 = vunpack.c.l.bf16 %v1463
    %s1528 = scalar_lea.vmem %s3, 3
    %v1529 = vld [vmem:[%s1528] sm:$0x1]
    %v1531 = vlaneseq
    %v1532 = vshrl.u32 %v1531, 7
    %v1533 = vsub.s32 0, %v1532
    %v1534 = vrot.slane %v1529, %v1533
    %v1536 = vmul.f32 %v1464, %v1534
    %v1537 = vmul.f32 %v1465, %v1534
    %v1538 = vmul.f32 %v1466, %v1534
    %v1539 = vmul.f32 %v1467, %v1534
    %v1540 = vmul.f32 %v1468, %v1534
    %v1541 = vmul.f32 %v1469, %v1534
    %v1542 = vmul.f32 %v1470, %v1534
    %v1543 = vmul.f32 %v1471, %v1534
    %v1544 = vmul.f32 %v1472, %v1534
    %v1545 = vmul.f32 %v1473, %v1534
    %v1546 = vmul.f32 %v1474, %v1534
    %v1547 = vmul.f32 %v1475, %v1534
    %v1548 = vmul.f32 %v1476, %v1534
    %v1549 = vmul.f32 %v1477, %v1534
    %v1550 = vmul.f32 %v1478, %v1534
    %v1551 = vmul.f32 %v1479, %v1534
    %v1552 = vmul.f32 %v1480, %v1534
    %v1553 = vmul.f32 %v1481, %v1534
    %v1554 = vmul.f32 %v1482, %v1534
    %v1555 = vmul.f32 %v1483, %v1534
    %v1556 = vmul.f32 %v1484, %v1534
    %v1557 = vmul.f32 %v1485, %v1534
    %v1558 = vmul.f32 %v1486, %v1534
    %v1559 = vmul.f32 %v1487, %v1534
    %v1560 = vmul.f32 %v1488, %v1534
    %v1561 = vmul.f32 %v1489, %v1534
    %v1562 = vmul.f32 %v1490, %v1534
    %v1563 = vmul.f32 %v1491, %v1534
    %v1564 = vmul.f32 %v1492, %v1534
    %v1565 = vmul.f32 %v1493, %v1534
    %v1566 = vmul.f32 %v1494, %v1534
    %v1567 = vmul.f32 %v1495, %v1534
    %v1568 = vmul.f32 %v1496, %v1534
    %v1569 = vmul.f32 %v1497, %v1534
    %v1570 = vmul.f32 %v1498, %v1534
    %v1571 = vmul.f32 %v1499, %v1534
    %v1572 = vmul.f32 %v1500, %v1534
    %v1573 = vmul.f32 %v1501, %v1534
    %v1574 = vmul.f32 %v1502, %v1534
    %v1575 = vmul.f32 %v1503, %v1534
    %v1576 = vmul.f32 %v1504, %v1534
    %v1577 = vmul.f32 %v1505, %v1534
    %v1578 = vmul.f32 %v1506, %v1534
    %v1579 = vmul.f32 %v1507, %v1534
    %v1580 = vmul.f32 %v1508, %v1534
    %v1581 = vmul.f32 %v1509, %v1534
    %v1582 = vmul.f32 %v1510, %v1534
    %v1583 = vmul.f32 %v1511, %v1534
    %v1584 = vmul.f32 %v1512, %v1534
    %v1585 = vmul.f32 %v1513, %v1534
    %v1586 = vmul.f32 %v1514, %v1534
    %v1587 = vmul.f32 %v1515, %v1534
    %v1588 = vmul.f32 %v1516, %v1534
    %v1589 = vmul.f32 %v1517, %v1534
    %v1590 = vmul.f32 %v1518, %v1534
    %v1591 = vmul.f32 %v1519, %v1534
    %v1592 = vmul.f32 %v1520, %v1534
    %v1593 = vmul.f32 %v1521, %v1534
    %v1594 = vmul.f32 %v1522, %v1534
    %v1595 = vmul.f32 %v1523, %v1534
    %v1596 = vmul.f32 %v1524, %v1534
    %v1597 = vmul.f32 %v1525, %v1534
    %v1598 = vmul.f32 %v1526, %v1534
    %v1599 = vmul.f32 %v1527, %v1534
    %v1600 = vadd.f32 %v1336, %v1536
    %v1601 = vadd.f32 %v1337, %v1537
    %v1602 = vadd.f32 %v1338, %v1538
    %v1603 = vadd.f32 %v1339, %v1539
    %v1604 = vadd.f32 %v1340, %v1540
    %v1605 = vadd.f32 %v1341, %v1541
    %v1606 = vadd.f32 %v1342, %v1542
    %v1607 = vadd.f32 %v1343, %v1543
    %v1608 = vadd.f32 %v1344, %v1544
    %v1609 = vadd.f32 %v1345, %v1545
    %v1610 = vadd.f32 %v1346, %v1546
    %v1611 = vadd.f32 %v1347, %v1547
    %v1612 = vadd.f32 %v1348, %v1548
    %v1613 = vadd.f32 %v1349, %v1549
    %v1614 = vadd.f32 %v1350, %v1550
    %v1615 = vadd.f32 %v1351, %v1551
    %v1616 = vadd.f32 %v1352, %v1552
    %v1617 = vadd.f32 %v1353, %v1553
    %v1618 = vadd.f32 %v1354, %v1554
    %v1619 = vadd.f32 %v1355, %v1555
    %v1620 = vadd.f32 %v1356, %v1556
    %v1621 = vadd.f32 %v1357, %v1557
    %v1622 = vadd.f32 %v1358, %v1558
    %v1623 = vadd.f32 %v1359, %v1559
    %v1624 = vadd.f32 %v1360, %v1560
    %v1625 = vadd.f32 %v1361, %v1561
    %v1626 = vadd.f32 %v1362, %v1562
    %v1627 = vadd.f32 %v1363, %v1563
    %v1628 = vadd.f32 %v1364, %v1564
    %v1629 = vadd.f32 %v1365, %v1565
    %v1630 = vadd.f32 %v1366, %v1566
    %v1631 = vadd.f32 %v1367, %v1567
    %v1632 = vadd.f32 %v1368, %v1568
    %v1633 = vadd.f32 %v1369, %v1569
    %v1634 = vadd.f32 %v1370, %v1570
    %v1635 = vadd.f32 %v1371, %v1571
    %v1636 = vadd.f32 %v1372, %v1572
    %v1637 = vadd.f32 %v1373, %v1573
    %v1638 = vadd.f32 %v1374, %v1574
    %v1639 = vadd.f32 %v1375, %v1575
    %v1640 = vadd.f32 %v1376, %v1576
    %v1641 = vadd.f32 %v1377, %v1577
    %v1642 = vadd.f32 %v1378, %v1578
    %v1643 = vadd.f32 %v1379, %v1579
    %v1644 = vadd.f32 %v1380, %v1580
    %v1645 = vadd.f32 %v1381, %v1581
    %v1646 = vadd.f32 %v1382, %v1582
    %v1647 = vadd.f32 %v1383, %v1583
    %v1648 = vadd.f32 %v1384, %v1584
    %v1649 = vadd.f32 %v1385, %v1585
    %v1650 = vadd.f32 %v1386, %v1586
    %v1651 = vadd.f32 %v1387, %v1587
    %v1652 = vadd.f32 %v1388, %v1588
    %v1653 = vadd.f32 %v1389, %v1589
    %v1654 = vadd.f32 %v1390, %v1590
    %v1655 = vadd.f32 %v1391, %v1591
    %v1656 = vadd.f32 %v1392, %v1592
    %v1657 = vadd.f32 %v1393, %v1593
    %v1658 = vadd.f32 %v1394, %v1594
    %v1659 = vadd.f32 %v1395, %v1595
    %v1660 = vadd.f32 %v1396, %v1596
    %v1661 = vadd.f32 %v1397, %v1597
    %v1662 = vadd.f32 %v1398, %v1598
    %v1663 = vadd.f32 %v1399, %v1599
    %v1664 = vld [vmem:[%s1 + $0x8] sm:$0x1]
    %v1665 = vld [vmem:[%s1 + $0x14] sm:$0x1]
    %v1666 = vld [vmem:[%s1 + $0x20] sm:$0x1]
    %v1667 = vld [vmem:[%s1 + $0x2c] sm:$0x1]
    %v1668 = vld [vmem:[%s1 + $0x38] sm:$0x1]
    %v1669 = vld [vmem:[%s1 + $0x44] sm:$0x1]
    %v1670 = vld [vmem:[%s1 + $0x50] sm:$0x1]
    %v1671 = vld [vmem:[%s1 + $0x5c] sm:$0x1]
    %v1672 = vld [vmem:[%s1 + $0x68] sm:$0x1]
    %v1673 = vld [vmem:[%s1 + $0x74] sm:$0x1]
    %v1674 = vld [vmem:[%s1 + $0x80] sm:$0x1]
    %v1675 = vld [vmem:[%s1 + $0x8c] sm:$0x1]
    %v1676 = vld [vmem:[%s1 + $0x98] sm:$0x1]
    %v1677 = vld [vmem:[%s1 + $0xa4] sm:$0x1]
    %v1678 = vld [vmem:[%s1 + $0xb0] sm:$0x1]
    %v1679 = vld [vmem:[%s1 + $0xbc] sm:$0x1]
    %v1680 = vld [vmem:[%s1 + $0xc8] sm:$0x1]
    %v1681 = vld [vmem:[%s1 + $0xd4] sm:$0x1]
    %v1682 = vld [vmem:[%s1 + $0xe0] sm:$0x1]
    %v1683 = vld [vmem:[%s1 + $0xec] sm:$0x1]
    %v1684 = vld [vmem:[%s1 + $0xf8] sm:$0x1]
    %v1685 = vld [vmem:[%s1 + $0x104] sm:$0x1]
    %v1686 = vld [vmem:[%s1 + $0x110] sm:$0x1]
    %v1687 = vld [vmem:[%s1 + $0x11c] sm:$0x1]
    %v1688 = vld [vmem:[%s1 + $0x128] sm:$0x1]
    %v1689 = vld [vmem:[%s1 + $0x134] sm:$0x1]
    %v1690 = vld [vmem:[%s1 + $0x140] sm:$0x1]
    %v1691 = vld [vmem:[%s1 + $0x14c] sm:$0x1]
    %v1692 = vld [vmem:[%s1 + $0x158] sm:$0x1]
    %v1693 = vld [vmem:[%s1 + $0x164] sm:$0x1]
    %v1694 = vld [vmem:[%s1 + $0x170] sm:$0x1]
    %v1695 = vld [vmem:[%s1 + $0x17c] sm:$0x1]
    %v1696 = vunpack.c.l.bf16 %v1664
    %v1697 = vunpack.c.l.bf16 %v1665
    %v1698 = vunpack.c.l.bf16 %v1666
    %v1699 = vunpack.c.l.bf16 %v1667
    %v1700 = vunpack.c.l.bf16 %v1668
    %v1701 = vunpack.c.l.bf16 %v1669
    %v1702 = vunpack.c.l.bf16 %v1670
    %v1703 = vunpack.c.l.bf16 %v1671
    %v1704 = vunpack.c.l.bf16 %v1672
    %v1705 = vunpack.c.l.bf16 %v1673
    %v1706 = vunpack.c.l.bf16 %v1674
    %v1707 = vunpack.c.l.bf16 %v1675
    %v1708 = vunpack.c.l.bf16 %v1676
    %v1709 = vunpack.c.l.bf16 %v1677
    %v1710 = vunpack.c.l.bf16 %v1678
    %v1711 = vunpack.c.l.bf16 %v1679
    %v1712 = vunpack.c.l.bf16 %v1680
    %v1713 = vunpack.c.l.bf16 %v1681
    %v1714 = vunpack.c.l.bf16 %v1682
    %v1715 = vunpack.c.l.bf16 %v1683
    %v1716 = vunpack.c.l.bf16 %v1684
    %v1717 = vunpack.c.l.bf16 %v1685
    %v1718 = vunpack.c.l.bf16 %v1686
    %v1719 = vunpack.c.l.bf16 %v1687
    %v1720 = vunpack.c.l.bf16 %v1688
    %v1721 = vunpack.c.l.bf16 %v1689
    %v1722 = vunpack.c.l.bf16 %v1690
    %v1723 = vunpack.c.l.bf16 %v1691
    %v1724 = vunpack.c.l.bf16 %v1692
    %v1725 = vunpack.c.l.bf16 %v1693
    %v1726 = vunpack.c.l.bf16 %v1694
    %v1727 = vunpack.c.l.bf16 %v1695
    %s1728 = scalar_lea.vmem %s3, 4
    %v1729 = vld [vmem:[%s1728] sm:$0x1]
    %v1731 = vlaneseq
    %v1732 = vshrl.u32 %v1731, 7
    %v1733 = vsub.s32 0, %v1732
    %v1734 = vrot.slane %v1729, %v1733
    %v1736 = vmul.f32 %v1464, %v1734
    %v1737 = vmul.f32 %v1465, %v1734
    %v1738 = vmul.f32 %v1696, %v1734
    %v1739 = vmul.f32 %v1466, %v1734
    %v1740 = vmul.f32 %v1467, %v1734
    %v1741 = vmul.f32 %v1697, %v1734
    %v1742 = vmul.f32 %v1468, %v1734
    %v1743 = vmul.f32 %v1469, %v1734
    %v1744 = vmul.f32 %v1698, %v1734
    %v1745 = vmul.f32 %v1470, %v1734
    %v1746 = vmul.f32 %v1471, %v1734
    %v1747 = vmul.f32 %v1699, %v1734
    %v1748 = vmul.f32 %v1472, %v1734
    %v1749 = vmul.f32 %v1473, %v1734
    %v1750 = vmul.f32 %v1700, %v1734
    %v1751 = vmul.f32 %v1474, %v1734
    %v1752 = vmul.f32 %v1475, %v1734
    %v1753 = vmul.f32 %v1701, %v1734
    %v1754 = vmul.f32 %v1476, %v1734
    %v1755 = vmul.f32 %v1477, %v1734
    %v1756 = vmul.f32 %v1702, %v1734
    %v1757 = vmul.f32 %v1478, %v1734
    %v1758 = vmul.f32 %v1479, %v1734
    %v1759 = vmul.f32 %v1703, %v1734
    %v1760 = vmul.f32 %v1480, %v1734
    %v1761 = vmul.f32 %v1481, %v1734
    %v1762 = vmul.f32 %v1704, %v1734
    %v1763 = vmul.f32 %v1482, %v1734
    %v1764 = vmul.f32 %v1483, %v1734
    %v1765 = vmul.f32 %v1705, %v1734
    %v1766 = vmul.f32 %v1484, %v1734
    %v1767 = vmul.f32 %v1485, %v1734
    %v1768 = vmul.f32 %v1706, %v1734
    %v1769 = vmul.f32 %v1486, %v1734
    %v1770 = vmul.f32 %v1487, %v1734
    %v1771 = vmul.f32 %v1707, %v1734
    %v1772 = vmul.f32 %v1488, %v1734
    %v1773 = vmul.f32 %v1489, %v1734
    %v1774 = vmul.f32 %v1708, %v1734
    %v1775 = vmul.f32 %v1490, %v1734
    %v1776 = vmul.f32 %v1491, %v1734
    %v1777 = vmul.f32 %v1709, %v1734
    %v1778 = vmul.f32 %v1492, %v1734
    %v1779 = vmul.f32 %v1493, %v1734
    %v1780 = vmul.f32 %v1710, %v1734
    %v1781 = vmul.f32 %v1494, %v1734
    %v1782 = vmul.f32 %v1495, %v1734
    %v1783 = vmul.f32 %v1711, %v1734
    %v1784 = vmul.f32 %v1496, %v1734
    %v1785 = vmul.f32 %v1497, %v1734
    %v1786 = vmul.f32 %v1712, %v1734
    %v1787 = vmul.f32 %v1498, %v1734
    %v1788 = vmul.f32 %v1499, %v1734
    %v1789 = vmul.f32 %v1713, %v1734
    %v1790 = vmul.f32 %v1500, %v1734
    %v1791 = vmul.f32 %v1501, %v1734
    %v1792 = vmul.f32 %v1714, %v1734
    %v1793 = vmul.f32 %v1502, %v1734
    %v1794 = vmul.f32 %v1503, %v1734
    %v1795 = vmul.f32 %v1715, %v1734
    %v1796 = vmul.f32 %v1504, %v1734
    %v1797 = vmul.f32 %v1505, %v1734
    %v1798 = vmul.f32 %v1716, %v1734
    %v1799 = vmul.f32 %v1506, %v1734
    %v1800 = vmul.f32 %v1507, %v1734
    %v1801 = vmul.f32 %v1717, %v1734
    %v1802 = vmul.f32 %v1508, %v1734
    %v1803 = vmul.f32 %v1509, %v1734
    %v1804 = vmul.f32 %v1718, %v1734
    %v1805 = vmul.f32 %v1510, %v1734
    %v1806 = vmul.f32 %v1511, %v1734
    %v1807 = vmul.f32 %v1719, %v1734
    %v1808 = vmul.f32 %v1512, %v1734
    %v1809 = vmul.f32 %v1513, %v1734
    %v1810 = vmul.f32 %v1720, %v1734
    %v1811 = vmul.f32 %v1514, %v1734
    %v1812 = vmul.f32 %v1515, %v1734
    %v1813 = vmul.f32 %v1721, %v1734
    %v1814 = vmul.f32 %v1516, %v1734
    %v1815 = vmul.f32 %v1517, %v1734
    %v1816 = vmul.f32 %v1722, %v1734
    %v1817 = vmul.f32 %v1518, %v1734
    %v1818 = vmul.f32 %v1519, %v1734
    %v1819 = vmul.f32 %v1723, %v1734
    %v1820 = vmul.f32 %v1520, %v1734
    %v1821 = vmul.f32 %v1521, %v1734
    %v1822 = vmul.f32 %v1724, %v1734
    %v1823 = vmul.f32 %v1522, %v1734
    %v1824 = vmul.f32 %v1523, %v1734
    %v1825 = vmul.f32 %v1725, %v1734
    %v1826 = vmul.f32 %v1524, %v1734
    %v1827 = vmul.f32 %v1525, %v1734
    %v1828 = vmul.f32 %v1726, %v1734
    %v1829 = vmul.f32 %v1526, %v1734
    %v1830 = vmul.f32 %v1527, %v1734
    %v1831 = vmul.f32 %v1727, %v1734
    %v1928 = vrot.slane %v1736, 1
    %v1929 = vrot.slane %v1737, 1
    %v1930 = vsel %vm558, %v1928, %v1929
    %v1931 = vrot.slane %v1738, 1
    %v1932 = vsel %vm558, %v1929, %v1931
    %v1933 = vrot.slane %v1739, 1
    %v1934 = vrot.slane %v1740, 1
    %v1935 = vsel %vm558, %v1933, %v1934
    %v1936 = vrot.slane %v1741, 1
    %v1937 = vsel %vm558, %v1934, %v1936
    %v1938 = vrot.slane %v1742, 1
    %v1939 = vrot.slane %v1743, 1
    %v1940 = vsel %vm558, %v1938, %v1939
    %v1941 = vrot.slane %v1744, 1
    %v1942 = vsel %vm558, %v1939, %v1941
    %v1943 = vrot.slane %v1745, 1
    %v1944 = vrot.slane %v1746, 1
    %v1945 = vsel %vm558, %v1943, %v1944
    %v1946 = vrot.slane %v1747, 1
    %v1947 = vsel %vm558, %v1944, %v1946
    %v1948 = vrot.slane %v1748, 1
    %v1949 = vrot.slane %v1749, 1
    %v1950 = vsel %vm558, %v1948, %v1949
    %v1951 = vrot.slane %v1750, 1
    %v1952 = vsel %vm558, %v1949, %v1951
    %v1953 = vrot.slane %v1751, 1
    %v1954 = vrot.slane %v1752, 1
    %v1955 = vsel %vm558, %v1953, %v1954
    %v1956 = vrot.slane %v1753, 1
    %v1957 = vsel %vm558, %v1954, %v1956
    %v1958 = vrot.slane %v1754, 1
    %v1959 = vrot.slane %v1755, 1
    %v1960 = vsel %vm558, %v1958, %v1959
    %v1961 = vrot.slane %v1756, 1
    %v1962 = vsel %vm558, %v1959, %v1961
    %v1963 = vrot.slane %v1757, 1
    %v1964 = vrot.slane %v1758, 1
    %v1965 = vsel %vm558, %v1963, %v1964
    %v1966 = vrot.slane %v1759, 1
    %v1967 = vsel %vm558, %v1964, %v1966
    %v1968 = vrot.slane %v1760, 1
    %v1969 = vrot.slane %v1761, 1
    %v1970 = vsel %vm558, %v1968, %v1969
    %v1971 = vrot.slane %v1762, 1
    %v1972 = vsel %vm558, %v1969, %v1971
    %v1973 = vrot.slane %v1763, 1
    %v1974 = vrot.slane %v1764, 1
    %v1975 = vsel %vm558, %v1973, %v1974
    %v1976 = vrot.slane %v1765, 1
    %v1977 = vsel %vm558, %v1974, %v1976
    %v1978 = vrot.slane %v1766, 1
    %v1979 = vrot.slane %v1767, 1
    %v1980 = vsel %vm558, %v1978, %v1979
    %v1981 = vrot.slane %v1768, 1
    %v1982 = vsel %vm558, %v1979, %v1981
    %v1983 = vrot.slane %v1769, 1
    %v1984 = vrot.slane %v1770, 1
    %v1985 = vsel %vm558, %v1983, %v1984
    %v1986 = vrot.slane %v1771, 1
    %v1987 = vsel %vm558, %v1984, %v1986
    %v1988 = vrot.slane %v1772, 1
    %v1989 = vrot.slane %v1773, 1
    %v1990 = vsel %vm558, %v1988, %v1989
    %v1991 = vrot.slane %v1774, 1
    %v1992 = vsel %vm558, %v1989, %v1991
    %v1993 = vrot.slane %v1775, 1
    %v1994 = vrot.slane %v1776, 1
    %v1995 = vsel %vm558, %v1993, %v1994
    %v1996 = vrot.slane %v1777, 1
    %v1997 = vsel %vm558, %v1994, %v1996
    %v1998 = vrot.slane %v1778, 1
    %v1999 = vrot.slane %v1779, 1
    %v2000 = vsel %vm558, %v1998, %v1999
    %v2001 = vrot.slane %v1780, 1
    %v2002 = vsel %vm558, %v1999, %v2001
    %v2003 = vrot.slane %v1781, 1
    %v2004 = vrot.slane %v1782, 1
    %v2005 = vsel %vm558, %v2003, %v2004
    %v2006 = vrot.slane %v1783, 1
    %v2007 = vsel %vm558, %v2004, %v2006
    %v2008 = vrot.slane %v1784, 1
    %v2009 = vrot.slane %v1785, 1
    %v2010 = vsel %vm558, %v2008, %v2009
    %v2011 = vrot.slane %v1786, 1
    %v2012 = vsel %vm558, %v2009, %v2011
    %v2013 = vrot.slane %v1787, 1
    %v2014 = vrot.slane %v1788, 1
    %v2015 = vsel %vm558, %v2013, %v2014
    %v2016 = vrot.slane %v1789, 1
    %v2017 = vsel %vm558, %v2014, %v2016
    %v2018 = vrot.slane %v1790, 1
    %v2019 = vrot.slane %v1791, 1
    %v2020 = vsel %vm558, %v2018, %v2019
    %v2021 = vrot.slane %v1792, 1
    %v2022 = vsel %vm558, %v2019, %v2021
    %v2023 = vrot.slane %v1793, 1
    %v2024 = vrot.slane %v1794, 1
    %v2025 = vsel %vm558, %v2023, %v2024
    %v2026 = vrot.slane %v1795, 1
    %v2027 = vsel %vm558, %v2024, %v2026
    %v2028 = vrot.slane %v1796, 1
    %v2029 = vrot.slane %v1797, 1
    %v2030 = vsel %vm558, %v2028, %v2029
    %v2031 = vrot.slane %v1798, 1
    %v2032 = vsel %vm558, %v2029, %v2031
    %v2033 = vrot.slane %v1799, 1
    %v2034 = vrot.slane %v1800, 1
    %v2035 = vsel %vm558, %v2033, %v2034
    %v2036 = vrot.slane %v1801, 1
    %v2037 = vsel %vm558, %v2034, %v2036
    %v2038 = vrot.slane %v1802, 1
    %v2039 = vrot.slane %v1803, 1
    %v2040 = vsel %vm558, %v2038, %v2039
    %v2041 = vrot.slane %v1804, 1
    %v2042 = vsel %vm558, %v2039, %v2041
    %v2043 = vrot.slane %v1805, 1
    %v2044 = vrot.slane %v1806, 1
    %v2045 = vsel %vm558, %v2043, %v2044
    %v2046 = vrot.slane %v1807, 1
    %v2047 = vsel %vm558, %v2044, %v2046
    %v2048 = vrot.slane %v1808, 1
    %v2049 = vrot.slane %v1809, 1
    %v2050 = vsel %vm558, %v2048, %v2049
    %v2051 = vrot.slane %v1810, 1
    %v2052 = vsel %vm558, %v2049, %v2051
    %v2053 = vrot.slane %v1811, 1
    %v2054 = vrot.slane %v1812, 1
    %v2055 = vsel %vm558, %v2053, %v2054
    %v2056 = vrot.slane %v1813, 1
    %v2057 = vsel %vm558, %v2054, %v2056
    %v2058 = vrot.slane %v1814, 1
    %v2059 = vrot.slane %v1815, 1
    %v2060 = vsel %vm558, %v2058, %v2059
    %v2061 = vrot.slane %v1816, 1
    %v2062 = vsel %vm558, %v2059, %v2061
    %v2063 = vrot.slane %v1817, 1
    %v2064 = vrot.slane %v1818, 1
    %v2065 = vsel %vm558, %v2063, %v2064
    %v2066 = vrot.slane %v1819, 1
    %v2067 = vsel %vm558, %v2064, %v2066
    %v2068 = vrot.slane %v1820, 1
    %v2069 = vrot.slane %v1821, 1
    %v2070 = vsel %vm558, %v2068, %v2069
    %v2071 = vrot.slane %v1822, 1
    %v2072 = vsel %vm558, %v2069, %v2071
    %v2073 = vrot.slane %v1823, 1
    %v2074 = vrot.slane %v1824, 1
    %v2075 = vsel %vm558, %v2073, %v2074
    %v2076 = vrot.slane %v1825, 1
    %v2077 = vsel %vm558, %v2074, %v2076
    %v2078 = vrot.slane %v1826, 1
    %v2079 = vrot.slane %v1827, 1
    %v2080 = vsel %vm558, %v2078, %v2079
    %v2081 = vrot.slane %v1828, 1
    %v2082 = vsel %vm558, %v2079, %v2081
    %v2083 = vrot.slane %v1829, 1
    %v2084 = vrot.slane %v1830, 1
    %v2085 = vsel %vm558, %v2083, %v2084
    %v2086 = vrot.slane %v1831, 1
    %v2087 = vsel %vm558, %v2084, %v2086
    %v2152 = vadd.f32 %v1600, %v1930
    %v2153 = vadd.f32 %v1601, %v1932
    %v2154 = vadd.f32 %v1602, %v1935
    %v2155 = vadd.f32 %v1603, %v1937
    %v2156 = vadd.f32 %v1604, %v1940
    %v2157 = vadd.f32 %v1605, %v1942
    %v2158 = vadd.f32 %v1606, %v1945
    %v2159 = vadd.f32 %v1607, %v1947
    %v2160 = vadd.f32 %v1608, %v1950
    %v2161 = vadd.f32 %v1609, %v1952
    %v2162 = vadd.f32 %v1610, %v1955
    %v2163 = vadd.f32 %v1611, %v1957
    %v2164 = vadd.f32 %v1612, %v1960
    %v2165 = vadd.f32 %v1613, %v1962
    %v2166 = vadd.f32 %v1614, %v1965
    %v2167 = vadd.f32 %v1615, %v1967
    %v2168 = vadd.f32 %v1616, %v1970
    %v2169 = vadd.f32 %v1617, %v1972
    %v2170 = vadd.f32 %v1618, %v1975
    %v2171 = vadd.f32 %v1619, %v1977
    %v2172 = vadd.f32 %v1620, %v1980
    %v2173 = vadd.f32 %v1621, %v1982
    %v2174 = vadd.f32 %v1622, %v1985
    %v2175 = vadd.f32 %v1623, %v1987
    %v2176 = vadd.f32 %v1624, %v1990
    %v2177 = vadd.f32 %v1625, %v1992
    %v2178 = vadd.f32 %v1626, %v1995
    %v2179 = vadd.f32 %v1627, %v1997
    %v2180 = vadd.f32 %v1628, %v2000
    %v2181 = vadd.f32 %v1629, %v2002
    %v2182 = vadd.f32 %v1630, %v2005
    %v2183 = vadd.f32 %v1631, %v2007
    %v2184 = vadd.f32 %v1632, %v2010
    %v2185 = vadd.f32 %v1633, %v2012
    %v2186 = vadd.f32 %v1634, %v2015
    %v2187 = vadd.f32 %v1635, %v2017
    %v2188 = vadd.f32 %v1636, %v2020
    %v2189 = vadd.f32 %v1637, %v2022
    %v2190 = vadd.f32 %v1638, %v2025
    %v2191 = vadd.f32 %v1639, %v2027
    %v2192 = vadd.f32 %v1640, %v2030
    %v2193 = vadd.f32 %v1641, %v2032
    %v2194 = vadd.f32 %v1642, %v2035
    %v2195 = vadd.f32 %v1643, %v2037
    %v2196 = vadd.f32 %v1644, %v2040
    %v2197 = vadd.f32 %v1645, %v2042
    %v2198 = vadd.f32 %v1646, %v2045
    %v2199 = vadd.f32 %v1647, %v2047
    %v2200 = vadd.f32 %v1648, %v2050
    %v2201 = vadd.f32 %v1649, %v2052
    %v2202 = vadd.f32 %v1650, %v2055
    %v2203 = vadd.f32 %v1651, %v2057
    %v2204 = vadd.f32 %v1652, %v2060
    %v2205 = vadd.f32 %v1653, %v2062
    %v2206 = vadd.f32 %v1654, %v2065
    %v2207 = vadd.f32 %v1655, %v2067
    %v2208 = vadd.f32 %v1656, %v2070
    %v2209 = vadd.f32 %v1657, %v2072
    %v2210 = vadd.f32 %v1658, %v2075
    %v2211 = vadd.f32 %v1659, %v2077
    %v2212 = vadd.f32 %v1660, %v2080
    %v2213 = vadd.f32 %v1661, %v2082
    %v2214 = vadd.f32 %v1662, %v2085
    %v2215 = vadd.f32 %v1663, %v2087
    %v2216 = vld [vmem:[%s1] sm:$0xe]
    %v2217 = vld [vmem:[%s1 + $0xc] sm:$0xe]
    %v2218 = vld [vmem:[%s1 + $0x18] sm:$0xe]
    %v2219 = vld [vmem:[%s1 + $0x24] sm:$0xe]
    %v2220 = vld [vmem:[%s1 + $0x30] sm:$0xe]
    %v2221 = vld [vmem:[%s1 + $0x3c] sm:$0xe]
    %v2222 = vld [vmem:[%s1 + $0x48] sm:$0xe]
    %v2223 = vld [vmem:[%s1 + $0x54] sm:$0xe]
    %v2224 = vld [vmem:[%s1 + $0x60] sm:$0xe]
    %v2225 = vld [vmem:[%s1 + $0x6c] sm:$0xe]
    %v2226 = vld [vmem:[%s1 + $0x78] sm:$0xe]
    %v2227 = vld [vmem:[%s1 + $0x84] sm:$0xe]
    %v2228 = vld [vmem:[%s1 + $0x90] sm:$0xe]
    %v2229 = vld [vmem:[%s1 + $0x9c] sm:$0xe]
    %v2230 = vld [vmem:[%s1 + $0xa8] sm:$0xe]
    %v2231 = vld [vmem:[%s1 + $0xb4] sm:$0xe]
    %v2232 = vld [vmem:[%s1 + $0xc0] sm:$0xe]
    %v2233 = vld [vmem:[%s1 + $0xcc] sm:$0xe]
    %v2234 = vld [vmem:[%s1 + $0xd8] sm:$0xe]
    %v2235 = vld [vmem:[%s1 + $0xe4] sm:$0xe]
    %v2236 = vld [vmem:[%s1 + $0xf0] sm:$0xe]
    %v2237 = vld [vmem:[%s1 + $0xfc] sm:$0xe]
    %v2238 = vld [vmem:[%s1 + $0x108] sm:$0xe]
    %v2239 = vld [vmem:[%s1 + $0x114] sm:$0xe]
    %v2240 = vld [vmem:[%s1 + $0x120] sm:$0xe]
    %v2241 = vld [vmem:[%s1 + $0x12c] sm:$0xe]
    %v2242 = vld [vmem:[%s1 + $0x138] sm:$0xe]
    %v2243 = vld [vmem:[%s1 + $0x144] sm:$0xe]
    %v2244 = vld [vmem:[%s1 + $0x150] sm:$0xe]
    %v2245 = vld [vmem:[%s1 + $0x15c] sm:$0xe]
    %v2246 = vld [vmem:[%s1 + $0x168] sm:$0xe]
    %v2247 = vld [vmem:[%s1 + $0x174] sm:$0xe]
    %v2248 = vunpack.c.l.bf16 %v2216
    %v2249 = vunpack.c.l.bf16 %v2217
    %v2250 = vunpack.c.l.bf16 %v2218
    %v2251 = vunpack.c.l.bf16 %v2219
    %v2252 = vunpack.c.l.bf16 %v2220
    %v2253 = vunpack.c.l.bf16 %v2221
    %v2254 = vunpack.c.l.bf16 %v2222
    %v2255 = vunpack.c.l.bf16 %v2223
    %v2256 = vunpack.c.l.bf16 %v2224
    %v2257 = vunpack.c.l.bf16 %v2225
    %v2258 = vunpack.c.l.bf16 %v2226
    %v2259 = vunpack.c.l.bf16 %v2227
    %v2260 = vunpack.c.l.bf16 %v2228
    %v2261 = vunpack.c.l.bf16 %v2229
    %v2262 = vunpack.c.l.bf16 %v2230
    %v2263 = vunpack.c.l.bf16 %v2231
    %v2264 = vunpack.c.l.bf16 %v2232
    %v2265 = vunpack.c.l.bf16 %v2233
    %v2266 = vunpack.c.l.bf16 %v2234
    %v2267 = vunpack.c.l.bf16 %v2235
    %v2268 = vunpack.c.l.bf16 %v2236
    %v2269 = vunpack.c.l.bf16 %v2237
    %v2270 = vunpack.c.l.bf16 %v2238
    %v2271 = vunpack.c.l.bf16 %v2239
    %v2272 = vunpack.c.l.bf16 %v2240
    %v2273 = vunpack.c.l.bf16 %v2241
    %v2274 = vunpack.c.l.bf16 %v2242
    %v2275 = vunpack.c.l.bf16 %v2243
    %v2276 = vunpack.c.l.bf16 %v2244
    %v2277 = vunpack.c.l.bf16 %v2245
    %v2278 = vunpack.c.l.bf16 %v2246
    %v2279 = vunpack.c.l.bf16 %v2247
    %s2280 = scalar_lea.vmem %s3, 5
    %v2281 = vld [vmem:[%s2280] sm:$0x1]
    %v2283 = vlaneseq
    %v2284 = vshrl.u32 %v2283, 7
    %v2285 = vsub.s32 0, %v2284
    %v2286 = vrot.slane %v2281, %v2285
    %v2288 = vmul.f32 %v2248, %v2286
    %v2289 = vmul.f32 %v1465, %v2286
    %v2290 = vmul.f32 %v1696, %v2286
    %v2291 = vmul.f32 %v2249, %v2286
    %v2292 = vmul.f32 %v1467, %v2286
    %v2293 = vmul.f32 %v1697, %v2286
    %v2294 = vmul.f32 %v2250, %v2286
    %v2295 = vmul.f32 %v1469, %v2286
    %v2296 = vmul.f32 %v1698, %v2286
    %v2297 = vmul.f32 %v2251, %v2286
    %v2298 = vmul.f32 %v1471, %v2286
    %v2299 = vmul.f32 %v1699, %v2286
    %v2300 = vmul.f32 %v2252, %v2286
    %v2301 = vmul.f32 %v1473, %v2286
    %v2302 = vmul.f32 %v1700, %v2286
    %v2303 = vmul.f32 %v2253, %v2286
    %v2304 = vmul.f32 %v1475, %v2286
    %v2305 = vmul.f32 %v1701, %v2286
    %v2306 = vmul.f32 %v2254, %v2286
    %v2307 = vmul.f32 %v1477, %v2286
    %v2308 = vmul.f32 %v1702, %v2286
    %v2309 = vmul.f32 %v2255, %v2286
    %v2310 = vmul.f32 %v1479, %v2286
    %v2311 = vmul.f32 %v1703, %v2286
    %v2312 = vmul.f32 %v2256, %v2286
    %v2313 = vmul.f32 %v1481, %v2286
    %v2314 = vmul.f32 %v1704, %v2286
    %v2315 = vmul.f32 %v2257, %v2286
    %v2316 = vmul.f32 %v1483, %v2286
    %v2317 = vmul.f32 %v1705, %v2286
    %v2318 = vmul.f32 %v2258, %v2286
    %v2319 = vmul.f32 %v1485, %v2286
    %v2320 = vmul.f32 %v1706, %v2286
    %v2321 = vmul.f32 %v2259, %v2286
    %v2322 = vmul.f32 %v1487, %v2286
    %v2323 = vmul.f32 %v1707, %v2286
    %v2324 = vmul.f32 %v2260, %v2286
    %v2325 = vmul.f32 %v1489, %v2286
    %v2326 = vmul.f32 %v1708, %v2286
    %v2327 = vmul.f32 %v2261, %v2286
    %v2328 = vmul.f32 %v1491, %v2286
    %v2329 = vmul.f32 %v1709, %v2286
    %v2330 = vmul.f32 %v2262, %v2286
    %v2331 = vmul.f32 %v1493, %v2286
    %v2332 = vmul.f32 %v1710, %v2286
    %v2333 = vmul.f32 %v2263, %v2286
    %v2334 = vmul.f32 %v1495, %v2286
    %v2335 = vmul.f32 %v1711, %v2286
    %v2336 = vmul.f32 %v2264, %v2286
    %v2337 = vmul.f32 %v1497, %v2286
    %v2338 = vmul.f32 %v1712, %v2286
    %v2339 = vmul.f32 %v2265, %v2286
    %v2340 = vmul.f32 %v1499, %v2286
    %v2341 = vmul.f32 %v1713, %v2286
    %v2342 = vmul.f32 %v2266, %v2286
    %v2343 = vmul.f32 %v1501, %v2286
    %v2344 = vmul.f32 %v1714, %v2286
    %v2345 = vmul.f32 %v2267, %v2286
    %v2346 = vmul.f32 %v1503, %v2286
    %v2347 = vmul.f32 %v1715, %v2286
    %v2348 = vmul.f32 %v2268, %v2286
    %v2349 = vmul.f32 %v1505, %v2286
    %v2350 = vmul.f32 %v1716, %v2286
    %v2351 = vmul.f32 %v2269, %v2286
    %v2352 = vmul.f32 %v1507, %v2286
    %v2353 = vmul.f32 %v1717, %v2286
    %v2354 = vmul.f32 %v2270, %v2286
    %v2355 = vmul.f32 %v1509, %v2286
    %v2356 = vmul.f32 %v1718, %v2286
    %v2357 = vmul.f32 %v2271, %v2286
    %v2358 = vmul.f32 %v1511, %v2286
    %v2359 = vmul.f32 %v1719, %v2286
    %v2360 = vmul.f32 %v2272, %v2286
    %v2361 = vmul.f32 %v1513, %v2286
    %v2362 = vmul.f32 %v1720, %v2286
    %v2363 = vmul.f32 %v2273, %v2286
    %v2364 = vmul.f32 %v1515, %v2286
    %v2365 = vmul.f32 %v1721, %v2286
    %v2366 = vmul.f32 %v2274, %v2286
    %v2367 = vmul.f32 %v1517, %v2286
    %v2368 = vmul.f32 %v1722, %v2286
    %v2369 = vmul.f32 %v2275, %v2286
    %v2370 = vmul.f32 %v1519, %v2286
    %v2371 = vmul.f32 %v1723, %v2286
    %v2372 = vmul.f32 %v2276, %v2286
    %v2373 = vmul.f32 %v1521, %v2286
    %v2374 = vmul.f32 %v1724, %v2286
    %v2375 = vmul.f32 %v2277, %v2286
    %v2376 = vmul.f32 %v1523, %v2286
    %v2377 = vmul.f32 %v1725, %v2286
    %v2378 = vmul.f32 %v2278, %v2286
    %v2379 = vmul.f32 %v1525, %v2286
    %v2380 = vmul.f32 %v1726, %v2286
    %v2381 = vmul.f32 %v2279, %v2286
    %v2382 = vmul.f32 %v1527, %v2286
    %v2383 = vmul.f32 %v1727, %v2286
    %v2480 = vrot.slane %v2288, 2
    %v2481 = vrot.slane %v2289, 2
    %v2482 = vsel %vm1111, %v2480, %v2481
    %v2483 = vrot.slane %v2290, 2
    %v2484 = vsel %vm1111, %v2481, %v2483
    %v2485 = vrot.slane %v2291, 2
    %v2486 = vrot.slane %v2292, 2
    %v2487 = vsel %vm1111, %v2485, %v2486
    %v2488 = vrot.slane %v2293, 2
    %v2489 = vsel %vm1111, %v2486, %v2488
    %v2490 = vrot.slane %v2294, 2
    %v2491 = vrot.slane %v2295, 2
    %v2492 = vsel %vm1111, %v2490, %v2491
    %v2493 = vrot.slane %v2296, 2
    %v2494 = vsel %vm1111, %v2491, %v2493
    %v2495 = vrot.slane %v2297, 2
    %v2496 = vrot.slane %v2298, 2
    %v2497 = vsel %vm1111, %v2495, %v2496
    %v2498 = vrot.slane %v2299, 2
    %v2499 = vsel %vm1111, %v2496, %v2498
    %v2500 = vrot.slane %v2300, 2
    %v2501 = vrot.slane %v2301, 2
    %v2502 = vsel %vm1111, %v2500, %v2501
    %v2503 = vrot.slane %v2302, 2
    %v2504 = vsel %vm1111, %v2501, %v2503
    %v2505 = vrot.slane %v2303, 2
    %v2506 = vrot.slane %v2304, 2
    %v2507 = vsel %vm1111, %v2505, %v2506
    %v2508 = vrot.slane %v2305, 2
    %v2509 = vsel %vm1111, %v2506, %v2508
    %v2510 = vrot.slane %v2306, 2
    %v2511 = vrot.slane %v2307, 2
    %v2512 = vsel %vm1111, %v2510, %v2511
    %v2513 = vrot.slane %v2308, 2
    %v2514 = vsel %vm1111, %v2511, %v2513
    %v2515 = vrot.slane %v2309, 2
    %v2516 = vrot.slane %v2310, 2
    %v2517 = vsel %vm1111, %v2515, %v2516
    %v2518 = vrot.slane %v2311, 2
    %v2519 = vsel %vm1111, %v2516, %v2518
    %v2520 = vrot.slane %v2312, 2
    %v2521 = vrot.slane %v2313, 2
    %v2522 = vsel %vm1111, %v2520, %v2521
    %v2523 = vrot.slane %v2314, 2
    %v2524 = vsel %vm1111, %v2521, %v2523
    %v2525 = vrot.slane %v2315, 2
    %v2526 = vrot.slane %v2316, 2
    %v2527 = vsel %vm1111, %v2525, %v2526
    %v2528 = vrot.slane %v2317, 2
    %v2529 = vsel %vm1111, %v2526, %v2528
    %v2530 = vrot.slane %v2318, 2
    %v2531 = vrot.slane %v2319, 2
    %v2532 = vsel %vm1111, %v2530, %v2531
    %v2533 = vrot.slane %v2320, 2
    %v2534 = vsel %vm1111, %v2531, %v2533
    %v2535 = vrot.slane %v2321, 2
    %v2536 = vrot.slane %v2322, 2
    %v2537 = vsel %vm1111, %v2535, %v2536
    %v2538 = vrot.slane %v2323, 2
    %v2539 = vsel %vm1111, %v2536, %v2538
    %v2540 = vrot.slane %v2324, 2
    %v2541 = vrot.slane %v2325, 2
    %v2542 = vsel %vm1111, %v2540, %v2541
    %v2543 = vrot.slane %v2326, 2
    %v2544 = vsel %vm1111, %v2541, %v2543
    %v2545 = vrot.slane %v2327, 2
    %v2546 = vrot.slane %v2328, 2
    %v2547 = vsel %vm1111, %v2545, %v2546
    %v2548 = vrot.slane %v2329, 2
    %v2549 = vsel %vm1111, %v2546, %v2548
    %v2550 = vrot.slane %v2330, 2
    %v2551 = vrot.slane %v2331, 2
    %v2552 = vsel %vm1111, %v2550, %v2551
    %v2553 = vrot.slane %v2332, 2
    %v2554 = vsel %vm1111, %v2551, %v2553
    %v2555 = vrot.slane %v2333, 2
    %v2556 = vrot.slane %v2334, 2
    %v2557 = vsel %vm1111, %v2555, %v2556
    %v2558 = vrot.slane %v2335, 2
    %v2559 = vsel %vm1111, %v2556, %v2558
    %v2560 = vrot.slane %v2336, 2
    %v2561 = vrot.slane %v2337, 2
    %v2562 = vsel %vm1111, %v2560, %v2561
    %v2563 = vrot.slane %v2338, 2
    %v2564 = vsel %vm1111, %v2561, %v2563
    %v2565 = vrot.slane %v2339, 2
    %v2566 = vrot.slane %v2340, 2
    %v2567 = vsel %vm1111, %v2565, %v2566
    %v2568 = vrot.slane %v2341, 2
    %v2569 = vsel %vm1111, %v2566, %v2568
    %v2570 = vrot.slane %v2342, 2
    %v2571 = vrot.slane %v2343, 2
    %v2572 = vsel %vm1111, %v2570, %v2571
    %v2573 = vrot.slane %v2344, 2
    %v2574 = vsel %vm1111, %v2571, %v2573
    %v2575 = vrot.slane %v2345, 2
    %v2576 = vrot.slane %v2346, 2
    %v2577 = vsel %vm1111, %v2575, %v2576
    %v2578 = vrot.slane %v2347, 2
    %v2579 = vsel %vm1111, %v2576, %v2578
    %v2580 = vrot.slane %v2348, 2
    %v2581 = vrot.slane %v2349, 2
    %v2582 = vsel %vm1111, %v2580, %v2581
    %v2583 = vrot.slane %v2350, 2
    %v2584 = vsel %vm1111, %v2581, %v2583
    %v2585 = vrot.slane %v2351, 2
    %v2586 = vrot.slane %v2352, 2
    %v2587 = vsel %vm1111, %v2585, %v2586
    %v2588 = vrot.slane %v2353, 2
    %v2589 = vsel %vm1111, %v2586, %v2588
    %v2590 = vrot.slane %v2354, 2
    %v2591 = vrot.slane %v2355, 2
    %v2592 = vsel %vm1111, %v2590, %v2591
    %v2593 = vrot.slane %v2356, 2
    %v2594 = vsel %vm1111, %v2591, %v2593
    %v2595 = vrot.slane %v2357, 2
    %v2596 = vrot.slane %v2358, 2
    %v2597 = vsel %vm1111, %v2595, %v2596
    %v2598 = vrot.slane %v2359, 2
    %v2599 = vsel %vm1111, %v2596, %v2598
    %v2600 = vrot.slane %v2360, 2
    %v2601 = vrot.slane %v2361, 2
    %v2602 = vsel %vm1111, %v2600, %v2601
    %v2603 = vrot.slane %v2362, 2
    %v2604 = vsel %vm1111, %v2601, %v2603
    %v2605 = vrot.slane %v2363, 2
    %v2606 = vrot.slane %v2364, 2
    %v2607 = vsel %vm1111, %v2605, %v2606
    %v2608 = vrot.slane %v2365, 2
    %v2609 = vsel %vm1111, %v2606, %v2608
    %v2610 = vrot.slane %v2366, 2
    %v2611 = vrot.slane %v2367, 2
    %v2612 = vsel %vm1111, %v2610, %v2611
    %v2613 = vrot.slane %v2368, 2
    %v2614 = vsel %vm1111, %v2611, %v2613
    %v2615 = vrot.slane %v2369, 2
    %v2616 = vrot.slane %v2370, 2
    %v2617 = vsel %vm1111, %v2615, %v2616
    %v2618 = vrot.slane %v2371, 2
    %v2619 = vsel %vm1111, %v2616, %v2618
    %v2620 = vrot.slane %v2372, 2
    %v2621 = vrot.slane %v2373, 2
    %v2622 = vsel %vm1111, %v2620, %v2621
    %v2623 = vrot.slane %v2374, 2
    %v2624 = vsel %vm1111, %v2621, %v2623
    %v2625 = vrot.slane %v2375, 2
    %v2626 = vrot.slane %v2376, 2
    %v2627 = vsel %vm1111, %v2625, %v2626
    %v2628 = vrot.slane %v2377, 2
    %v2629 = vsel %vm1111, %v2626, %v2628
    %v2630 = vrot.slane %v2378, 2
    %v2631 = vrot.slane %v2379, 2
    %v2632 = vsel %vm1111, %v2630, %v2631
    %v2633 = vrot.slane %v2380, 2
    %v2634 = vsel %vm1111, %v2631, %v2633
    %v2635 = vrot.slane %v2381, 2
    %v2636 = vrot.slane %v2382, 2
    %v2637 = vsel %vm1111, %v2635, %v2636
    %v2638 = vrot.slane %v2383, 2
    %v2639 = vsel %vm1111, %v2636, %v2638
    %v2704 = vadd.f32 %v2152, %v2482
    %v2705 = vadd.f32 %v2153, %v2484
    %v2706 = vadd.f32 %v2154, %v2487
    %v2707 = vadd.f32 %v2155, %v2489
    %v2708 = vadd.f32 %v2156, %v2492
    %v2709 = vadd.f32 %v2157, %v2494
    %v2710 = vadd.f32 %v2158, %v2497
    %v2711 = vadd.f32 %v2159, %v2499
    %v2712 = vadd.f32 %v2160, %v2502
    %v2713 = vadd.f32 %v2161, %v2504
    %v2714 = vadd.f32 %v2162, %v2507
    %v2715 = vadd.f32 %v2163, %v2509
    %v2716 = vadd.f32 %v2164, %v2512
    %v2717 = vadd.f32 %v2165, %v2514
    %v2718 = vadd.f32 %v2166, %v2517
    %v2719 = vadd.f32 %v2167, %v2519
    %v2720 = vadd.f32 %v2168, %v2522
    %v2721 = vadd.f32 %v2169, %v2524
    %v2722 = vadd.f32 %v2170, %v2527
    %v2723 = vadd.f32 %v2171, %v2529
    %v2724 = vadd.f32 %v2172, %v2532
    %v2725 = vadd.f32 %v2173, %v2534
    %v2726 = vadd.f32 %v2174, %v2537
    %v2727 = vadd.f32 %v2175, %v2539
    %v2728 = vadd.f32 %v2176, %v2542
    %v2729 = vadd.f32 %v2177, %v2544
    %v2730 = vadd.f32 %v2178, %v2547
    %v2731 = vadd.f32 %v2179, %v2549
    %v2732 = vadd.f32 %v2180, %v2552
    %v2733 = vadd.f32 %v2181, %v2554
    %v2734 = vadd.f32 %v2182, %v2557
    %v2735 = vadd.f32 %v2183, %v2559
    %v2736 = vadd.f32 %v2184, %v2562
    %v2737 = vadd.f32 %v2185, %v2564
    %v2738 = vadd.f32 %v2186, %v2567
    %v2739 = vadd.f32 %v2187, %v2569
    %v2740 = vadd.f32 %v2188, %v2572
    %v2741 = vadd.f32 %v2189, %v2574
    %v2742 = vadd.f32 %v2190, %v2577
    %v2743 = vadd.f32 %v2191, %v2579
    %v2744 = vadd.f32 %v2192, %v2582
    %v2745 = vadd.f32 %v2193, %v2584
    %v2746 = vadd.f32 %v2194, %v2587
    %v2747 = vadd.f32 %v2195, %v2589
    %v2748 = vadd.f32 %v2196, %v2592
    %v2749 = vadd.f32 %v2197, %v2594
    %v2750 = vadd.f32 %v2198, %v2597
    %v2751 = vadd.f32 %v2199, %v2599
    %v2752 = vadd.f32 %v2200, %v2602
    %v2753 = vadd.f32 %v2201, %v2604
    %v2754 = vadd.f32 %v2202, %v2607
    %v2755 = vadd.f32 %v2203, %v2609
    %v2756 = vadd.f32 %v2204, %v2612
    %v2757 = vadd.f32 %v2205, %v2614
    %v2758 = vadd.f32 %v2206, %v2617
    %v2759 = vadd.f32 %v2207, %v2619
    %v2760 = vadd.f32 %v2208, %v2622
    %v2761 = vadd.f32 %v2209, %v2624
    %v2762 = vadd.f32 %v2210, %v2627
    %v2763 = vadd.f32 %v2211, %v2629
    %v2764 = vadd.f32 %v2212, %v2632
    %v2765 = vadd.f32 %v2213, %v2634
    %v2766 = vadd.f32 %v2214, %v2637
    %v2767 = vadd.f32 %v2215, %v2639
    %v2768 = vld [vmem:[%s2] sm:$0xf]
    %v2769 = vld [vmem:[%s2 + $0x4] sm:$0xf]
    %v2770 = vld [vmem:[%s2 + $0xc] sm:$0xf]
    %v2771 = vld [vmem:[%s2 + $0x10] sm:$0xf]
    %v2772 = vld [vmem:[%s2 + $0x18] sm:$0xf]
    %v2773 = vld [vmem:[%s2 + $0x1c] sm:$0xf]
    %v2774 = vld [vmem:[%s2 + $0x24] sm:$0xf]
    %v2775 = vld [vmem:[%s2 + $0x28] sm:$0xf]
    %v2776 = vld [vmem:[%s2 + $0x30] sm:$0xf]
    %v2777 = vld [vmem:[%s2 + $0x34] sm:$0xf]
    %v2778 = vld [vmem:[%s2 + $0x3c] sm:$0xf]
    %v2779 = vld [vmem:[%s2 + $0x40] sm:$0xf]
    %v2780 = vld [vmem:[%s2 + $0x48] sm:$0xf]
    %v2781 = vld [vmem:[%s2 + $0x4c] sm:$0xf]
    %v2782 = vld [vmem:[%s2 + $0x54] sm:$0xf]
    %v2783 = vld [vmem:[%s2 + $0x58] sm:$0xf]
    %v2784 = vld [vmem:[%s2 + $0x60] sm:$0xf]
    %v2785 = vld [vmem:[%s2 + $0x64] sm:$0xf]
    %v2786 = vld [vmem:[%s2 + $0x6c] sm:$0xf]
    %v2787 = vld [vmem:[%s2 + $0x70] sm:$0xf]
    %v2788 = vld [vmem:[%s2 + $0x78] sm:$0xf]
    %v2789 = vld [vmem:[%s2 + $0x7c] sm:$0xf]
    %v2790 = vld [vmem:[%s2 + $0x84] sm:$0xf]
    %v2791 = vld [vmem:[%s2 + $0x88] sm:$0xf]
    %v2792 = vld [vmem:[%s2 + $0x90] sm:$0xf]
    %v2793 = vld [vmem:[%s2 + $0x94] sm:$0xf]
    %v2794 = vld [vmem:[%s2 + $0x9c] sm:$0xf]
    %v2795 = vld [vmem:[%s2 + $0xa0] sm:$0xf]
    %v2796 = vld [vmem:[%s2 + $0xa8] sm:$0xf]
    %v2797 = vld [vmem:[%s2 + $0xac] sm:$0xf]
    %v2798 = vld [vmem:[%s2 + $0xb4] sm:$0xf]
    %v2799 = vld [vmem:[%s2 + $0xb8] sm:$0xf]
    %v2800 = vld [vmem:[%s2 + $0xc0] sm:$0xf]
    %v2801 = vld [vmem:[%s2 + $0xc4] sm:$0xf]
    %v2802 = vld [vmem:[%s2 + $0xcc] sm:$0xf]
    %v2803 = vld [vmem:[%s2 + $0xd0] sm:$0xf]
    %v2804 = vld [vmem:[%s2 + $0xd8] sm:$0xf]
    %v2805 = vld [vmem:[%s2 + $0xdc] sm:$0xf]
    %v2806 = vld [vmem:[%s2 + $0xe4] sm:$0xf]
    %v2807 = vld [vmem:[%s2 + $0xe8] sm:$0xf]
    %v2808 = vld [vmem:[%s2 + $0xf0] sm:$0xf]
    %v2809 = vld [vmem:[%s2 + $0xf4] sm:$0xf]
    %v2810 = vld [vmem:[%s2 + $0xfc] sm:$0xf]
    %v2811 = vld [vmem:[%s2 + $0x100] sm:$0xf]
    %v2812 = vld [vmem:[%s2 + $0x108] sm:$0xf]
    %v2813 = vld [vmem:[%s2 + $0x10c] sm:$0xf]
    %v2814 = vld [vmem:[%s2 + $0x114] sm:$0xf]
    %v2815 = vld [vmem:[%s2 + $0x118] sm:$0xf]
    %v2816 = vld [vmem:[%s2 + $0x120] sm:$0xf]
    %v2817 = vld [vmem:[%s2 + $0x124] sm:$0xf]
    %v2818 = vld [vmem:[%s2 + $0x12c] sm:$0xf]
    %v2819 = vld [vmem:[%s2 + $0x130] sm:$0xf]
    %v2820 = vld [vmem:[%s2 + $0x138] sm:$0xf]
    %v2821 = vld [vmem:[%s2 + $0x13c] sm:$0xf]
    %v2822 = vld [vmem:[%s2 + $0x144] sm:$0xf]
    %v2823 = vld [vmem:[%s2 + $0x148] sm:$0xf]
    %v2824 = vld [vmem:[%s2 + $0x150] sm:$0xf]
    %v2825 = vld [vmem:[%s2 + $0x154] sm:$0xf]
    %v2826 = vld [vmem:[%s2 + $0x15c] sm:$0xf]
    %v2827 = vld [vmem:[%s2 + $0x160] sm:$0xf]
    %v2828 = vld [vmem:[%s2 + $0x168] sm:$0xf]
    %v2829 = vld [vmem:[%s2 + $0x16c] sm:$0xf]
    %v2830 = vld [vmem:[%s2 + $0x174] sm:$0xf]
    %v2831 = vld [vmem:[%s2 + $0x178] sm:$0xf]
    %v2832 = vunpack.c.l.bf16 %v2768
    %v2833 = vunpack.c.l.bf16 %v2769
    %v2834 = vunpack.c.l.bf16 %v2770
    %v2835 = vunpack.c.l.bf16 %v2771
    %v2836 = vunpack.c.l.bf16 %v2772
    %v2837 = vunpack.c.l.bf16 %v2773
    %v2838 = vunpack.c.l.bf16 %v2774
    %v2839 = vunpack.c.l.bf16 %v2775
    %v2840 = vunpack.c.l.bf16 %v2776
    %v2841 = vunpack.c.l.bf16 %v2777
    %v2842 = vunpack.c.l.bf16 %v2778
    %v2843 = vunpack.c.l.bf16 %v2779
    %v2844 = vunpack.c.l.bf16 %v2780
    %v2845 = vunpack.c.l.bf16 %v2781
    %v2846 = vunpack.c.l.bf16 %v2782
    %v2847 = vunpack.c.l.bf16 %v2783
    %v2848 = vunpack.c.l.bf16 %v2784
    %v2849 = vunpack.c.l.bf16 %v2785
    %v2850 = vunpack.c.l.bf16 %v2786
    %v2851 = vunpack.c.l.bf16 %v2787
    %v2852 = vunpack.c.l.bf16 %v2788
    %v2853 = vunpack.c.l.bf16 %v2789
    %v2854 = vunpack.c.l.bf16 %v2790
    %v2855 = vunpack.c.l.bf16 %v2791
    %v2856 = vunpack.c.l.bf16 %v2792
    %v2857 = vunpack.c.l.bf16 %v2793
    %v2858 = vunpack.c.l.bf16 %v2794
    %v2859 = vunpack.c.l.bf16 %v2795
    %v2860 = vunpack.c.l.bf16 %v2796
    %v2861 = vunpack.c.l.bf16 %v2797
    %v2862 = vunpack.c.l.bf16 %v2798
    %v2863 = vunpack.c.l.bf16 %v2799
    %v2864 = vunpack.c.l.bf16 %v2800
    %v2865 = vunpack.c.l.bf16 %v2801
    %v2866 = vunpack.c.l.bf16 %v2802
    %v2867 = vunpack.c.l.bf16 %v2803
    %v2868 = vunpack.c.l.bf16 %v2804
    %v2869 = vunpack.c.l.bf16 %v2805
    %v2870 = vunpack.c.l.bf16 %v2806
    %v2871 = vunpack.c.l.bf16 %v2807
    %v2872 = vunpack.c.l.bf16 %v2808
    %v2873 = vunpack.c.l.bf16 %v2809
    %v2874 = vunpack.c.l.bf16 %v2810
    %v2875 = vunpack.c.l.bf16 %v2811
    %v2876 = vunpack.c.l.bf16 %v2812
    %v2877 = vunpack.c.l.bf16 %v2813
    %v2878 = vunpack.c.l.bf16 %v2814
    %v2879 = vunpack.c.l.bf16 %v2815
    %v2880 = vunpack.c.l.bf16 %v2816
    %v2881 = vunpack.c.l.bf16 %v2817
    %v2882 = vunpack.c.l.bf16 %v2818
    %v2883 = vunpack.c.l.bf16 %v2819
    %v2884 = vunpack.c.l.bf16 %v2820
    %v2885 = vunpack.c.l.bf16 %v2821
    %v2886 = vunpack.c.l.bf16 %v2822
    %v2887 = vunpack.c.l.bf16 %v2823
    %v2888 = vunpack.c.l.bf16 %v2824
    %v2889 = vunpack.c.l.bf16 %v2825
    %v2890 = vunpack.c.l.bf16 %v2826
    %v2891 = vunpack.c.l.bf16 %v2827
    %v2892 = vunpack.c.l.bf16 %v2828
    %v2893 = vunpack.c.l.bf16 %v2829
    %v2894 = vunpack.c.l.bf16 %v2830
    %v2895 = vunpack.c.l.bf16 %v2831
    %s2896 = scalar_lea.vmem %s3, 6
    %v2897 = vld [vmem:[%s2896] sm:$0x1]
    %v2899 = vlaneseq
    %v2900 = vshrl.u32 %v2899, 7
    %v2901 = vsub.s32 0, %v2900
    %v2902 = vrot.slane %v2897, %v2901
    %v2904 = vmul.f32 %v2832, %v2902
    %v2905 = vmul.f32 %v2833, %v2902
    %v2906 = vmul.f32 %v2834, %v2902
    %v2907 = vmul.f32 %v2835, %v2902
    %v2908 = vmul.f32 %v2836, %v2902
    %v2909 = vmul.f32 %v2837, %v2902
    %v2910 = vmul.f32 %v2838, %v2902
    %v2911 = vmul.f32 %v2839, %v2902
    %v2912 = vmul.f32 %v2840, %v2902
    %v2913 = vmul.f32 %v2841, %v2902
    %v2914 = vmul.f32 %v2842, %v2902
    %v2915 = vmul.f32 %v2843, %v2902
    %v2916 = vmul.f32 %v2844, %v2902
    %v2917 = vmul.f32 %v2845, %v2902
    %v2918 = vmul.f32 %v2846, %v2902
    %v2919 = vmul.f32 %v2847, %v2902
    %v2920 = vmul.f32 %v2848, %v2902
    %v2921 = vmul.f32 %v2849, %v2902
    %v2922 = vmul.f32 %v2850, %v2902
    %v2923 = vmul.f32 %v2851, %v2902
    %v2924 = vmul.f32 %v2852, %v2902
    %v2925 = vmul.f32 %v2853, %v2902
    %v2926 = vmul.f32 %v2854, %v2902
    %v2927 = vmul.f32 %v2855, %v2902
    %v2928 = vmul.f32 %v2856, %v2902
    %v2929 = vmul.f32 %v2857, %v2902
    %v2930 = vmul.f32 %v2858, %v2902
    %v2931 = vmul.f32 %v2859, %v2902
    %v2932 = vmul.f32 %v2860, %v2902
    %v2933 = vmul.f32 %v2861, %v2902
    %v2934 = vmul.f32 %v2862, %v2902
    %v2935 = vmul.f32 %v2863, %v2902
    %v2936 = vmul.f32 %v2864, %v2902
    %v2937 = vmul.f32 %v2865, %v2902
    %v2938 = vmul.f32 %v2866, %v2902
    %v2939 = vmul.f32 %v2867, %v2902
    %v2940 = vmul.f32 %v2868, %v2902
    %v2941 = vmul.f32 %v2869, %v2902
    %v2942 = vmul.f32 %v2870, %v2902
    %v2943 = vmul.f32 %v2871, %v2902
    %v2944 = vmul.f32 %v2872, %v2902
    %v2945 = vmul.f32 %v2873, %v2902
    %v2946 = vmul.f32 %v2874, %v2902
    %v2947 = vmul.f32 %v2875, %v2902
    %v2948 = vmul.f32 %v2876, %v2902
    %v2949 = vmul.f32 %v2877, %v2902
    %v2950 = vmul.f32 %v2878, %v2902
    %v2951 = vmul.f32 %v2879, %v2902
    %v2952 = vmul.f32 %v2880, %v2902
    %v2953 = vmul.f32 %v2881, %v2902
    %v2954 = vmul.f32 %v2882, %v2902
    %v2955 = vmul.f32 %v2883, %v2902
    %v2956 = vmul.f32 %v2884, %v2902
    %v2957 = vmul.f32 %v2885, %v2902
    %v2958 = vmul.f32 %v2886, %v2902
    %v2959 = vmul.f32 %v2887, %v2902
    %v2960 = vmul.f32 %v2888, %v2902
    %v2961 = vmul.f32 %v2889, %v2902
    %v2962 = vmul.f32 %v2890, %v2902
    %v2963 = vmul.f32 %v2891, %v2902
    %v2964 = vmul.f32 %v2892, %v2902
    %v2965 = vmul.f32 %v2893, %v2902
    %v2966 = vmul.f32 %v2894, %v2902
    %v2967 = vmul.f32 %v2895, %v2902
    %v2968 = vadd.f32 %v2704, %v2904
    %v2969 = vadd.f32 %v2705, %v2905
    %v2970 = vadd.f32 %v2706, %v2906
    %v2971 = vadd.f32 %v2707, %v2907
    %v2972 = vadd.f32 %v2708, %v2908
    %v2973 = vadd.f32 %v2709, %v2909
    %v2974 = vadd.f32 %v2710, %v2910
    %v2975 = vadd.f32 %v2711, %v2911
    %v2976 = vadd.f32 %v2712, %v2912
    %v2977 = vadd.f32 %v2713, %v2913
    %v2978 = vadd.f32 %v2714, %v2914
    %v2979 = vadd.f32 %v2715, %v2915
    %v2980 = vadd.f32 %v2716, %v2916
    %v2981 = vadd.f32 %v2717, %v2917
    %v2982 = vadd.f32 %v2718, %v2918
    %v2983 = vadd.f32 %v2719, %v2919
    %v2984 = vadd.f32 %v2720, %v2920
    %v2985 = vadd.f32 %v2721, %v2921
    %v2986 = vadd.f32 %v2722, %v2922
    %v2987 = vadd.f32 %v2723, %v2923
    %v2988 = vadd.f32 %v2724, %v2924
    %v2989 = vadd.f32 %v2725, %v2925
    %v2990 = vadd.f32 %v2726, %v2926
    %v2991 = vadd.f32 %v2727, %v2927
    %v2992 = vadd.f32 %v2728, %v2928
    %v2993 = vadd.f32 %v2729, %v2929
    %v2994 = vadd.f32 %v2730, %v2930
    %v2995 = vadd.f32 %v2731, %v2931
    %v2996 = vadd.f32 %v2732, %v2932
    %v2997 = vadd.f32 %v2733, %v2933
    %v2998 = vadd.f32 %v2734, %v2934
    %v2999 = vadd.f32 %v2735, %v2935
    %v3000 = vadd.f32 %v2736, %v2936
    %v3001 = vadd.f32 %v2737, %v2937
    %v3002 = vadd.f32 %v2738, %v2938
    %v3003 = vadd.f32 %v2739, %v2939
    %v3004 = vadd.f32 %v2740, %v2940
    %v3005 = vadd.f32 %v2741, %v2941
    %v3006 = vadd.f32 %v2742, %v2942
    %v3007 = vadd.f32 %v2743, %v2943
    %v3008 = vadd.f32 %v2744, %v2944
    %v3009 = vadd.f32 %v2745, %v2945
    %v3010 = vadd.f32 %v2746, %v2946
    %v3011 = vadd.f32 %v2747, %v2947
    %v3012 = vadd.f32 %v2748, %v2948
    %v3013 = vadd.f32 %v2749, %v2949
    %v3014 = vadd.f32 %v2750, %v2950
    %v3015 = vadd.f32 %v2751, %v2951
    %v3016 = vadd.f32 %v2752, %v2952
    %v3017 = vadd.f32 %v2753, %v2953
    %v3018 = vadd.f32 %v2754, %v2954
    %v3019 = vadd.f32 %v2755, %v2955
    %v3020 = vadd.f32 %v2756, %v2956
    %v3021 = vadd.f32 %v2757, %v2957
    %v3022 = vadd.f32 %v2758, %v2958
    %v3023 = vadd.f32 %v2759, %v2959
    %v3024 = vadd.f32 %v2760, %v2960
    %v3025 = vadd.f32 %v2761, %v2961
    %v3026 = vadd.f32 %v2762, %v2962
    %v3027 = vadd.f32 %v2763, %v2963
    %v3028 = vadd.f32 %v2764, %v2964
    %v3029 = vadd.f32 %v2765, %v2965
    %v3030 = vadd.f32 %v2766, %v2966
    %v3031 = vadd.f32 %v2767, %v2967
    %v3032 = vld [vmem:[%s2 + $0x8] sm:$0x1]
    %v3033 = vld [vmem:[%s2 + $0x14] sm:$0x1]
    %v3034 = vld [vmem:[%s2 + $0x20] sm:$0x1]
    %v3035 = vld [vmem:[%s2 + $0x2c] sm:$0x1]
    %v3036 = vld [vmem:[%s2 + $0x38] sm:$0x1]
    %v3037 = vld [vmem:[%s2 + $0x44] sm:$0x1]
    %v3038 = vld [vmem:[%s2 + $0x50] sm:$0x1]
    %v3039 = vld [vmem:[%s2 + $0x5c] sm:$0x1]
    %v3040 = vld [vmem:[%s2 + $0x68] sm:$0x1]
    %v3041 = vld [vmem:[%s2 + $0x74] sm:$0x1]
    %v3042 = vld [vmem:[%s2 + $0x80] sm:$0x1]
    %v3043 = vld [vmem:[%s2 + $0x8c] sm:$0x1]
    %v3044 = vld [vmem:[%s2 + $0x98] sm:$0x1]
    %v3045 = vld [vmem:[%s2 + $0xa4] sm:$0x1]
    %v3046 = vld [vmem:[%s2 + $0xb0] sm:$0x1]
    %v3047 = vld [vmem:[%s2 + $0xbc] sm:$0x1]
    %v3048 = vld [vmem:[%s2 + $0xc8] sm:$0x1]
    %v3049 = vld [vmem:[%s2 + $0xd4] sm:$0x1]
    %v3050 = vld [vmem:[%s2 + $0xe0] sm:$0x1]
    %v3051 = vld [vmem:[%s2 + $0xec] sm:$0x1]
    %v3052 = vld [vmem:[%s2 + $0xf8] sm:$0x1]
    %v3053 = vld [vmem:[%s2 + $0x104] sm:$0x1]
    %v3054 = vld [vmem:[%s2 + $0x110] sm:$0x1]
    %v3055 = vld [vmem:[%s2 + $0x11c] sm:$0x1]
    %v3056 = vld [vmem:[%s2 + $0x128] sm:$0x1]
    %v3057 = vld [vmem:[%s2 + $0x134] sm:$0x1]
    %v3058 = vld [vmem:[%s2 + $0x140] sm:$0x1]
    %v3059 = vld [vmem:[%s2 + $0x14c] sm:$0x1]
    %v3060 = vld [vmem:[%s2 + $0x158] sm:$0x1]
    %v3061 = vld [vmem:[%s2 + $0x164] sm:$0x1]
    %v3062 = vld [vmem:[%s2 + $0x170] sm:$0x1]
    %v3063 = vld [vmem:[%s2 + $0x17c] sm:$0x1]
    %v3064 = vunpack.c.l.bf16 %v3032
    %v3065 = vunpack.c.l.bf16 %v3033
    %v3066 = vunpack.c.l.bf16 %v3034
    %v3067 = vunpack.c.l.bf16 %v3035
    %v3068 = vunpack.c.l.bf16 %v3036
    %v3069 = vunpack.c.l.bf16 %v3037
    %v3070 = vunpack.c.l.bf16 %v3038
    %v3071 = vunpack.c.l.bf16 %v3039
    %v3072 = vunpack.c.l.bf16 %v3040
    %v3073 = vunpack.c.l.bf16 %v3041
    %v3074 = vunpack.c.l.bf16 %v3042
    %v3075 = vunpack.c.l.bf16 %v3043
    %v3076 = vunpack.c.l.bf16 %v3044
    %v3077 = vunpack.c.l.bf16 %v3045
    %v3078 = vunpack.c.l.bf16 %v3046
    %v3079 = vunpack.c.l.bf16 %v3047
    %v3080 = vunpack.c.l.bf16 %v3048
    %v3081 = vunpack.c.l.bf16 %v3049
    %v3082 = vunpack.c.l.bf16 %v3050
    %v3083 = vunpack.c.l.bf16 %v3051
    %v3084 = vunpack.c.l.bf16 %v3052
    %v3085 = vunpack.c.l.bf16 %v3053
    %v3086 = vunpack.c.l.bf16 %v3054
    %v3087 = vunpack.c.l.bf16 %v3055
    %v3088 = vunpack.c.l.bf16 %v3056
    %v3089 = vunpack.c.l.bf16 %v3057
    %v3090 = vunpack.c.l.bf16 %v3058
    %v3091 = vunpack.c.l.bf16 %v3059
    %v3092 = vunpack.c.l.bf16 %v3060
    %v3093 = vunpack.c.l.bf16 %v3061
    %v3094 = vunpack.c.l.bf16 %v3062
    %v3095 = vunpack.c.l.bf16 %v3063
    %s3096 = scalar_lea.vmem %s3, 7
    %v3097 = vld [vmem:[%s3096] sm:$0x1]
    %v3099 = vlaneseq
    %v3100 = vshrl.u32 %v3099, 7
    %v3101 = vsub.s32 0, %v3100
    %v3102 = vrot.slane %v3097, %v3101
    %v3104 = vmul.f32 %v2832, %v3102
    %v3105 = vmul.f32 %v2833, %v3102
    %v3106 = vmul.f32 %v3064, %v3102
    %v3107 = vmul.f32 %v2834, %v3102
    %v3108 = vmul.f32 %v2835, %v3102
    %v3109 = vmul.f32 %v3065, %v3102
    %v3110 = vmul.f32 %v2836, %v3102
    %v3111 = vmul.f32 %v2837, %v3102
    %v3112 = vmul.f32 %v3066, %v3102
    %v3113 = vmul.f32 %v2838, %v3102
    %v3114 = vmul.f32 %v2839, %v3102
    %v3115 = vmul.f32 %v3067, %v3102
    %v3116 = vmul.f32 %v2840, %v3102
    %v3117 = vmul.f32 %v2841, %v3102
    %v3118 = vmul.f32 %v3068, %v3102
    %v3119 = vmul.f32 %v2842, %v3102
    %v3120 = vmul.f32 %v2843, %v3102
    %v3121 = vmul.f32 %v3069, %v3102
    %v3122 = vmul.f32 %v2844, %v3102
    %v3123 = vmul.f32 %v2845, %v3102
    %v3124 = vmul.f32 %v3070, %v3102
    %v3125 = vmul.f32 %v2846, %v3102
    %v3126 = vmul.f32 %v2847, %v3102
    %v3127 = vmul.f32 %v3071, %v3102
    %v3128 = vmul.f32 %v2848, %v3102
    %v3129 = vmul.f32 %v2849, %v3102
    %v3130 = vmul.f32 %v3072, %v3102
    %v3131 = vmul.f32 %v2850, %v3102
    %v3132 = vmul.f32 %v2851, %v3102
    %v3133 = vmul.f32 %v3073, %v3102
    %v3134 = vmul.f32 %v2852, %v3102
    %v3135 = vmul.f32 %v2853, %v3102
    %v3136 = vmul.f32 %v3074, %v3102
    %v3137 = vmul.f32 %v2854, %v3102
    %v3138 = vmul.f32 %v2855, %v3102
    %v3139 = vmul.f32 %v3075, %v3102
    %v3140 = vmul.f32 %v2856, %v3102
    %v3141 = vmul.f32 %v2857, %v3102
    %v3142 = vmul.f32 %v3076, %v3102
    %v3143 = vmul.f32 %v2858, %v3102
    %v3144 = vmul.f32 %v2859, %v3102
    %v3145 = vmul.f32 %v3077, %v3102
    %v3146 = vmul.f32 %v2860, %v3102
    %v3147 = vmul.f32 %v2861, %v3102
    %v3148 = vmul.f32 %v3078, %v3102
    %v3149 = vmul.f32 %v2862, %v3102
    %v3150 = vmul.f32 %v2863, %v3102
    %v3151 = vmul.f32 %v3079, %v3102
    %v3152 = vmul.f32 %v2864, %v3102
    %v3153 = vmul.f32 %v2865, %v3102
    %v3154 = vmul.f32 %v3080, %v3102
    %v3155 = vmul.f32 %v2866, %v3102
    %v3156 = vmul.f32 %v2867, %v3102
    %v3157 = vmul.f32 %v3081, %v3102
    %v3158 = vmul.f32 %v2868, %v3102
    %v3159 = vmul.f32 %v2869, %v3102
    %v3160 = vmul.f32 %v3082, %v3102
    %v3161 = vmul.f32 %v2870, %v3102
    %v3162 = vmul.f32 %v2871, %v3102
    %v3163 = vmul.f32 %v3083, %v3102
    %v3164 = vmul.f32 %v2872, %v3102
    %v3165 = vmul.f32 %v2873, %v3102
    %v3166 = vmul.f32 %v3084, %v3102
    %v3167 = vmul.f32 %v2874, %v3102
    %v3168 = vmul.f32 %v2875, %v3102
    %v3169 = vmul.f32 %v3085, %v3102
    %v3170 = vmul.f32 %v2876, %v3102
    %v3171 = vmul.f32 %v2877, %v3102
    %v3172 = vmul.f32 %v3086, %v3102
    %v3173 = vmul.f32 %v2878, %v3102
    %v3174 = vmul.f32 %v2879, %v3102
    %v3175 = vmul.f32 %v3087, %v3102
    %v3176 = vmul.f32 %v2880, %v3102
    %v3177 = vmul.f32 %v2881, %v3102
    %v3178 = vmul.f32 %v3088, %v3102
    %v3179 = vmul.f32 %v2882, %v3102
    %v3180 = vmul.f32 %v2883, %v3102
    %v3181 = vmul.f32 %v3089, %v3102
    %v3182 = vmul.f32 %v2884, %v3102
    %v3183 = vmul.f32 %v2885, %v3102
    %v3184 = vmul.f32 %v3090, %v3102
    %v3185 = vmul.f32 %v2886, %v3102
    %v3186 = vmul.f32 %v2887, %v3102
    %v3187 = vmul.f32 %v3091, %v3102
    %v3188 = vmul.f32 %v2888, %v3102
    %v3189 = vmul.f32 %v2889, %v3102
    %v3190 = vmul.f32 %v3092, %v3102
    %v3191 = vmul.f32 %v2890, %v3102
    %v3192 = vmul.f32 %v2891, %v3102
    %v3193 = vmul.f32 %v3093, %v3102
    %v3194 = vmul.f32 %v2892, %v3102
    %v3195 = vmul.f32 %v2893, %v3102
    %v3196 = vmul.f32 %v3094, %v3102
    %v3197 = vmul.f32 %v2894, %v3102
    %v3198 = vmul.f32 %v2895, %v3102
    %v3199 = vmul.f32 %v3095, %v3102
    %v3296 = vrot.slane %v3104, 1
    %v3297 = vrot.slane %v3105, 1
    %v3298 = vsel %vm558, %v3296, %v3297
    %v3299 = vrot.slane %v3106, 1
    %v3300 = vsel %vm558, %v3297, %v3299
    %v3301 = vrot.slane %v3107, 1
    %v3302 = vrot.slane %v3108, 1
    %v3303 = vsel %vm558, %v3301, %v3302
    %v3304 = vrot.slane %v3109, 1
    %v3305 = vsel %vm558, %v3302, %v3304
    %v3306 = vrot.slane %v3110, 1
    %v3307 = vrot.slane %v3111, 1
    %v3308 = vsel %vm558, %v3306, %v3307
    %v3309 = vrot.slane %v3112, 1
    %v3310 = vsel %vm558, %v3307, %v3309
    %v3311 = vrot.slane %v3113, 1
    %v3312 = vrot.slane %v3114, 1
    %v3313 = vsel %vm558, %v3311, %v3312
    %v3314 = vrot.slane %v3115, 1
    %v3315 = vsel %vm558, %v3312, %v3314
    %v3316 = vrot.slane %v3116, 1
    %v3317 = vrot.slane %v3117, 1
    %v3318 = vsel %vm558, %v3316, %v3317
    %v3319 = vrot.slane %v3118, 1
    %v3320 = vsel %vm558, %v3317, %v3319
    %v3321 = vrot.slane %v3119, 1
    %v3322 = vrot.slane %v3120, 1
    %v3323 = vsel %vm558, %v3321, %v3322
    %v3324 = vrot.slane %v3121, 1
    %v3325 = vsel %vm558, %v3322, %v3324
    %v3326 = vrot.slane %v3122, 1
    %v3327 = vrot.slane %v3123, 1
    %v3328 = vsel %vm558, %v3326, %v3327
    %v3329 = vrot.slane %v3124, 1
    %v3330 = vsel %vm558, %v3327, %v3329
    %v3331 = vrot.slane %v3125, 1
    %v3332 = vrot.slane %v3126, 1
    %v3333 = vsel %vm558, %v3331, %v3332
    %v3334 = vrot.slane %v3127, 1
    %v3335 = vsel %vm558, %v3332, %v3334
    %v3336 = vrot.slane %v3128, 1
    %v3337 = vrot.slane %v3129, 1
    %v3338 = vsel %vm558, %v3336, %v3337
    %v3339 = vrot.slane %v3130, 1
    %v3340 = vsel %vm558, %v3337, %v3339
    %v3341 = vrot.slane %v3131, 1
    %v3342 = vrot.slane %v3132, 1
    %v3343 = vsel %vm558, %v3341, %v3342
    %v3344 = vrot.slane %v3133, 1
    %v3345 = vsel %vm558, %v3342, %v3344
    %v3346 = vrot.slane %v3134, 1
    %v3347 = vrot.slane %v3135, 1
    %v3348 = vsel %vm558, %v3346, %v3347
    %v3349 = vrot.slane %v3136, 1
    %v3350 = vsel %vm558, %v3347, %v3349
    %v3351 = vrot.slane %v3137, 1
    %v3352 = vrot.slane %v3138, 1
    %v3353 = vsel %vm558, %v3351, %v3352
    %v3354 = vrot.slane %v3139, 1
    %v3355 = vsel %vm558, %v3352, %v3354
    %v3356 = vrot.slane %v3140, 1
    %v3357 = vrot.slane %v3141, 1
    %v3358 = vsel %vm558, %v3356, %v3357
    %v3359 = vrot.slane %v3142, 1
    %v3360 = vsel %vm558, %v3357, %v3359
    %v3361 = vrot.slane %v3143, 1
    %v3362 = vrot.slane %v3144, 1
    %v3363 = vsel %vm558, %v3361, %v3362
    %v3364 = vrot.slane %v3145, 1
    %v3365 = vsel %vm558, %v3362, %v3364
    %v3366 = vrot.slane %v3146, 1
    %v3367 = vrot.slane %v3147, 1
    %v3368 = vsel %vm558, %v3366, %v3367
    %v3369 = vrot.slane %v3148, 1
    %v3370 = vsel %vm558, %v3367, %v3369
    %v3371 = vrot.slane %v3149, 1
    %v3372 = vrot.slane %v3150, 1
    %v3373 = vsel %vm558, %v3371, %v3372
    %v3374 = vrot.slane %v3151, 1
    %v3375 = vsel %vm558, %v3372, %v3374
    %v3376 = vrot.slane %v3152, 1
    %v3377 = vrot.slane %v3153, 1
    %v3378 = vsel %vm558, %v3376, %v3377
    %v3379 = vrot.slane %v3154, 1
    %v3380 = vsel %vm558, %v3377, %v3379
    %v3381 = vrot.slane %v3155, 1
    %v3382 = vrot.slane %v3156, 1
    %v3383 = vsel %vm558, %v3381, %v3382
    %v3384 = vrot.slane %v3157, 1
    %v3385 = vsel %vm558, %v3382, %v3384
    %v3386 = vrot.slane %v3158, 1
    %v3387 = vrot.slane %v3159, 1
    %v3388 = vsel %vm558, %v3386, %v3387
    %v3389 = vrot.slane %v3160, 1
    %v3390 = vsel %vm558, %v3387, %v3389
    %v3391 = vrot.slane %v3161, 1
    %v3392 = vrot.slane %v3162, 1
    %v3393 = vsel %vm558, %v3391, %v3392
    %v3394 = vrot.slane %v3163, 1
    %v3395 = vsel %vm558, %v3392, %v3394
    %v3396 = vrot.slane %v3164, 1
    %v3397 = vrot.slane %v3165, 1
    %v3398 = vsel %vm558, %v3396, %v3397
    %v3399 = vrot.slane %v3166, 1
    %v3400 = vsel %vm558, %v3397, %v3399
    %v3401 = vrot.slane %v3167, 1
    %v3402 = vrot.slane %v3168, 1
    %v3403 = vsel %vm558, %v3401, %v3402
    %v3404 = vrot.slane %v3169, 1
    %v3405 = vsel %vm558, %v3402, %v3404
    %v3406 = vrot.slane %v3170, 1
    %v3407 = vrot.slane %v3171, 1
    %v3408 = vsel %vm558, %v3406, %v3407
    %v3409 = vrot.slane %v3172, 1
    %v3410 = vsel %vm558, %v3407, %v3409
    %v3411 = vrot.slane %v3173, 1
    %v3412 = vrot.slane %v3174, 1
    %v3413 = vsel %vm558, %v3411, %v3412
    %v3414 = vrot.slane %v3175, 1
    %v3415 = vsel %vm558, %v3412, %v3414
    %v3416 = vrot.slane %v3176, 1
    %v3417 = vrot.slane %v3177, 1
    %v3418 = vsel %vm558, %v3416, %v3417
    %v3419 = vrot.slane %v3178, 1
    %v3420 = vsel %vm558, %v3417, %v3419
    %v3421 = vrot.slane %v3179, 1
    %v3422 = vrot.slane %v3180, 1
    %v3423 = vsel %vm558, %v3421, %v3422
    %v3424 = vrot.slane %v3181, 1
    %v3425 = vsel %vm558, %v3422, %v3424
    %v3426 = vrot.slane %v3182, 1
    %v3427 = vrot.slane %v3183, 1
    %v3428 = vsel %vm558, %v3426, %v3427
    %v3429 = vrot.slane %v3184, 1
    %v3430 = vsel %vm558, %v3427, %v3429
    %v3431 = vrot.slane %v3185, 1
    %v3432 = vrot.slane %v3186, 1
    %v3433 = vsel %vm558, %v3431, %v3432
    %v3434 = vrot.slane %v3187, 1
    %v3435 = vsel %vm558, %v3432, %v3434
    %v3436 = vrot.slane %v3188, 1
    %v3437 = vrot.slane %v3189, 1
    %v3438 = vsel %vm558, %v3436, %v3437
    %v3439 = vrot.slane %v3190, 1
    %v3440 = vsel %vm558, %v3437, %v3439
    %v3441 = vrot.slane %v3191, 1
    %v3442 = vrot.slane %v3192, 1
    %v3443 = vsel %vm558, %v3441, %v3442
    %v3444 = vrot.slane %v3193, 1
    %v3445 = vsel %vm558, %v3442, %v3444
    %v3446 = vrot.slane %v3194, 1
    %v3447 = vrot.slane %v3195, 1
    %v3448 = vsel %vm558, %v3446, %v3447
    %v3449 = vrot.slane %v3196, 1
    %v3450 = vsel %vm558, %v3447, %v3449
    %v3451 = vrot.slane %v3197, 1
    %v3452 = vrot.slane %v3198, 1
    %v3453 = vsel %vm558, %v3451, %v3452
    %v3454 = vrot.slane %v3199, 1
    %v3455 = vsel %vm558, %v3452, %v3454
    %v3520 = vadd.f32 %v2968, %v3298
    %v3521 = vadd.f32 %v2969, %v3300
    %v3522 = vadd.f32 %v2970, %v3303
    %v3523 = vadd.f32 %v2971, %v3305
    %v3524 = vadd.f32 %v2972, %v3308
    %v3525 = vadd.f32 %v2973, %v3310
    %v3526 = vadd.f32 %v2974, %v3313
    %v3527 = vadd.f32 %v2975, %v3315
    %v3528 = vadd.f32 %v2976, %v3318
    %v3529 = vadd.f32 %v2977, %v3320
    %v3530 = vadd.f32 %v2978, %v3323
    %v3531 = vadd.f32 %v2979, %v3325
    %v3532 = vadd.f32 %v2980, %v3328
    %v3533 = vadd.f32 %v2981, %v3330
    %v3534 = vadd.f32 %v2982, %v3333
    %v3535 = vadd.f32 %v2983, %v3335
    %v3536 = vadd.f32 %v2984, %v3338
    %v3537 = vadd.f32 %v2985, %v3340
    %v3538 = vadd.f32 %v2986, %v3343
    %v3539 = vadd.f32 %v2987, %v3345
    %v3540 = vadd.f32 %v2988, %v3348
    %v3541 = vadd.f32 %v2989, %v3350
    %v3542 = vadd.f32 %v2990, %v3353
    %v3543 = vadd.f32 %v2991, %v3355
    %v3544 = vadd.f32 %v2992, %v3358
    %v3545 = vadd.f32 %v2993, %v3360
    %v3546 = vadd.f32 %v2994, %v3363
    %v3547 = vadd.f32 %v2995, %v3365
    %v3548 = vadd.f32 %v2996, %v3368
    %v3549 = vadd.f32 %v2997, %v3370
    %v3550 = vadd.f32 %v2998, %v3373
    %v3551 = vadd.f32 %v2999, %v3375
    %v3552 = vadd.f32 %v3000, %v3378
    %v3553 = vadd.f32 %v3001, %v3380
    %v3554 = vadd.f32 %v3002, %v3383
    %v3555 = vadd.f32 %v3003, %v3385
    %v3556 = vadd.f32 %v3004, %v3388
    %v3557 = vadd.f32 %v3005, %v3390
    %v3558 = vadd.f32 %v3006, %v3393
    %v3559 = vadd.f32 %v3007, %v3395
    %v3560 = vadd.f32 %v3008, %v3398
    %v3561 = vadd.f32 %v3009, %v3400
    %v3562 = vadd.f32 %v3010, %v3403
    %v3563 = vadd.f32 %v3011, %v3405
    %v3564 = vadd.f32 %v3012, %v3408
    %v3565 = vadd.f32 %v3013, %v3410
    %v3566 = vadd.f32 %v3014, %v3413
    %v3567 = vadd.f32 %v3015, %v3415
    %v3568 = vadd.f32 %v3016, %v3418
    %v3569 = vadd.f32 %v3017, %v3420
    %v3570 = vadd.f32 %v3018, %v3423
    %v3571 = vadd.f32 %v3019, %v3425
    %v3572 = vadd.f32 %v3020, %v3428
    %v3573 = vadd.f32 %v3021, %v3430
    %v3574 = vadd.f32 %v3022, %v3433
    %v3575 = vadd.f32 %v3023, %v3435
    %v3576 = vadd.f32 %v3024, %v3438
    %v3577 = vadd.f32 %v3025, %v3440
    %v3578 = vadd.f32 %v3026, %v3443
    %v3579 = vadd.f32 %v3027, %v3445
    %v3580 = vadd.f32 %v3028, %v3448
    %v3581 = vadd.f32 %v3029, %v3450
    %v3582 = vadd.f32 %v3030, %v3453
    %v3583 = vadd.f32 %v3031, %v3455
    %v3584 = vld [vmem:[%s2] sm:$0xe]
    %v3585 = vld [vmem:[%s2 + $0xc] sm:$0xe]
    %v3586 = vld [vmem:[%s2 + $0x18] sm:$0xe]
    %v3587 = vld [vmem:[%s2 + $0x24] sm:$0xe]
    %v3588 = vld [vmem:[%s2 + $0x30] sm:$0xe]
    %v3589 = vld [vmem:[%s2 + $0x3c] sm:$0xe]
    %v3590 = vld [vmem:[%s2 + $0x48] sm:$0xe]
    %v3591 = vld [vmem:[%s2 + $0x54] sm:$0xe]
    %v3592 = vld [vmem:[%s2 + $0x60] sm:$0xe]
    %v3593 = vld [vmem:[%s2 + $0x6c] sm:$0xe]
    %v3594 = vld [vmem:[%s2 + $0x78] sm:$0xe]
    %v3595 = vld [vmem:[%s2 + $0x84] sm:$0xe]
    %v3596 = vld [vmem:[%s2 + $0x90] sm:$0xe]
    %v3597 = vld [vmem:[%s2 + $0x9c] sm:$0xe]
    %v3598 = vld [vmem:[%s2 + $0xa8] sm:$0xe]
    %v3599 = vld [vmem:[%s2 + $0xb4] sm:$0xe]
    %v3600 = vld [vmem:[%s2 + $0xc0] sm:$0xe]
    %v3601 = vld [vmem:[%s2 + $0xcc] sm:$0xe]
    %v3602 = vld [vmem:[%s2 + $0xd8] sm:$0xe]
    %v3603 = vld [vmem:[%s2 + $0xe4] sm:$0xe]
    %v3604 = vld [vmem:[%s2 + $0xf0] sm:$0xe]
    %v3605 = vld [vmem:[%s2 + $0xfc] sm:$0xe]
    %v3606 = vld [vmem:[%s2 + $0x108] sm:$0xe]
    %v3607 = vld [vmem:[%s2 + $0x114] sm:$0xe]
    %v3608 = vld [vmem:[%s2 + $0x120] sm:$0xe]
    %v3609 = vld [vmem:[%s2 + $0x12c] sm:$0xe]
    %v3610 = vld [vmem:[%s2 + $0x138] sm:$0xe]
    %v3611 = vld [vmem:[%s2 + $0x144] sm:$0xe]
    %v3612 = vld [vmem:[%s2 + $0x150] sm:$0xe]
    %v3613 = vld [vmem:[%s2 + $0x15c] sm:$0xe]
    %v3614 = vld [vmem:[%s2 + $0x168] sm:$0xe]
    %v3615 = vld [vmem:[%s2 + $0x174] sm:$0xe]
    %v3616 = vunpack.c.l.bf16 %v3584
    %v3617 = vunpack.c.l.bf16 %v3585
    %v3618 = vunpack.c.l.bf16 %v3586
    %v3619 = vunpack.c.l.bf16 %v3587
    %v3620 = vunpack.c.l.bf16 %v3588
    %v3621 = vunpack.c.l.bf16 %v3589
    %v3622 = vunpack.c.l.bf16 %v3590
    %v3623 = vunpack.c.l.bf16 %v3591
    %v3624 = vunpack.c.l.bf16 %v3592
    %v3625 = vunpack.c.l.bf16 %v3593
    %v3626 = vunpack.c.l.bf16 %v3594
    %v3627 = vunpack.c.l.bf16 %v3595
    %v3628 = vunpack.c.l.bf16 %v3596
    %v3629 = vunpack.c.l.bf16 %v3597
    %v3630 = vunpack.c.l.bf16 %v3598
    %v3631 = vunpack.c.l.bf16 %v3599
    %v3632 = vunpack.c.l.bf16 %v3600
    %v3633 = vunpack.c.l.bf16 %v3601
    %v3634 = vunpack.c.l.bf16 %v3602
    %v3635 = vunpack.c.l.bf16 %v3603
    %v3636 = vunpack.c.l.bf16 %v3604
    %v3637 = vunpack.c.l.bf16 %v3605
    %v3638 = vunpack.c.l.bf16 %v3606
    %v3639 = vunpack.c.l.bf16 %v3607
    %v3640 = vunpack.c.l.bf16 %v3608
    %v3641 = vunpack.c.l.bf16 %v3609
    %v3642 = vunpack.c.l.bf16 %v3610
    %v3643 = vunpack.c.l.bf16 %v3611
    %v3644 = vunpack.c.l.bf16 %v3612
    %v3645 = vunpack.c.l.bf16 %v3613
    %v3646 = vunpack.c.l.bf16 %v3614
    %v3647 = vunpack.c.l.bf16 %v3615
    %s3648 = scalar_lea.vmem %s3, 8
    %v3649 = vld [vmem:[%s3648] sm:$0x1]
    %v3651 = vlaneseq
    %v3652 = vshrl.u32 %v3651, 7
    %v3653 = vsub.s32 0, %v3652
    %v3654 = vrot.slane %v3649, %v3653
    %v3656 = vmul.f32 %v3616, %v3654
    %v3657 = vmul.f32 %v2833, %v3654
    %v3658 = vmul.f32 %v3064, %v3654
    %v3659 = vmul.f32 %v3617, %v3654
    %v3660 = vmul.f32 %v2835, %v3654
    %v3661 = vmul.f32 %v3065, %v3654
    %v3662 = vmul.f32 %v3618, %v3654
    %v3663 = vmul.f32 %v2837, %v3654
    %v3664 = vmul.f32 %v3066, %v3654
    %v3665 = vmul.f32 %v3619, %v3654
    %v3666 = vmul.f32 %v2839, %v3654
    %v3667 = vmul.f32 %v3067, %v3654
    %v3668 = vmul.f32 %v3620, %v3654
    %v3669 = vmul.f32 %v2841, %v3654
    %v3670 = vmul.f32 %v3068, %v3654
    %v3671 = vmul.f32 %v3621, %v3654
    %v3672 = vmul.f32 %v2843, %v3654
    %v3673 = vmul.f32 %v3069, %v3654
    %v3674 = vmul.f32 %v3622, %v3654
    %v3675 = vmul.f32 %v2845, %v3654
    %v3676 = vmul.f32 %v3070, %v3654
    %v3677 = vmul.f32 %v3623, %v3654
    %v3678 = vmul.f32 %v2847, %v3654
    %v3679 = vmul.f32 %v3071, %v3654
    %v3680 = vmul.f32 %v3624, %v3654
    %v3681 = vmul.f32 %v2849, %v3654
    %v3682 = vmul.f32 %v3072, %v3654
    %v3683 = vmul.f32 %v3625, %v3654
    %v3684 = vmul.f32 %v2851, %v3654
    %v3685 = vmul.f32 %v3073, %v3654
    %v3686 = vmul.f32 %v3626, %v3654
    %v3687 = vmul.f32 %v2853, %v3654
    %v3688 = vmul.f32 %v3074, %v3654
    %v3689 = vmul.f32 %v3627, %v3654
    %v3690 = vmul.f32 %v2855, %v3654
    %v3691 = vmul.f32 %v3075, %v3654
    %v3692 = vmul.f32 %v3628, %v3654
    %v3693 = vmul.f32 %v2857, %v3654
    %v3694 = vmul.f32 %v3076, %v3654
    %v3695 = vmul.f32 %v3629, %v3654
    %v3696 = vmul.f32 %v2859, %v3654
    %v3697 = vmul.f32 %v3077, %v3654
    %v3698 = vmul.f32 %v3630, %v3654
    %v3699 = vmul.f32 %v2861, %v3654
    %v3700 = vmul.f32 %v3078, %v3654
    %v3701 = vmul.f32 %v3631, %v3654
    %v3702 = vmul.f32 %v2863, %v3654
    %v3703 = vmul.f32 %v3079, %v3654
    %v3704 = vmul.f32 %v3632, %v3654
    %v3705 = vmul.f32 %v2865, %v3654
    %v3706 = vmul.f32 %v3080, %v3654
    %v3707 = vmul.f32 %v3633, %v3654
    %v3708 = vmul.f32 %v2867, %v3654
    %v3709 = vmul.f32 %v3081, %v3654
    %v3710 = vmul.f32 %v3634, %v3654
    %v3711 = vmul.f32 %v2869, %v3654
    %v3712 = vmul.f32 %v3082, %v3654
    %v3713 = vmul.f32 %v3635, %v3654
    %v3714 = vmul.f32 %v2871, %v3654
    %v3715 = vmul.f32 %v3083, %v3654
    %v3716 = vmul.f32 %v3636, %v3654
    %v3717 = vmul.f32 %v2873, %v3654
    %v3718 = vmul.f32 %v3084, %v3654
    %v3719 = vmul.f32 %v3637, %v3654
    %v3720 = vmul.f32 %v2875, %v3654
    %v3721 = vmul.f32 %v3085, %v3654
    %v3722 = vmul.f32 %v3638, %v3654
    %v3723 = vmul.f32 %v2877, %v3654
    %v3724 = vmul.f32 %v3086, %v3654
    %v3725 = vmul.f32 %v3639, %v3654
    %v3726 = vmul.f32 %v2879, %v3654
    %v3727 = vmul.f32 %v3087, %v3654
    %v3728 = vmul.f32 %v3640, %v3654
    %v3729 = vmul.f32 %v2881, %v3654
    %v3730 = vmul.f32 %v3088, %v3654
    %v3731 = vmul.f32 %v3641, %v3654
    %v3732 = vmul.f32 %v2883, %v3654
    %v3733 = vmul.f32 %v3089, %v3654
    %v3734 = vmul.f32 %v3642, %v3654
    %v3735 = vmul.f32 %v2885, %v3654
    %v3736 = vmul.f32 %v3090, %v3654
    %v3737 = vmul.f32 %v3643, %v3654
    %v3738 = vmul.f32 %v2887, %v3654
    %v3739 = vmul.f32 %v3091, %v3654
    %v3740 = vmul.f32 %v3644, %v3654
    %v3741 = vmul.f32 %v2889, %v3654
    %v3742 = vmul.f32 %v3092, %v3654
    %v3743 = vmul.f32 %v3645, %v3654
    %v3744 = vmul.f32 %v2891, %v3654
    %v3745 = vmul.f32 %v3093, %v3654
    %v3746 = vmul.f32 %v3646, %v3654
    %v3747 = vmul.f32 %v2893, %v3654
    %v3748 = vmul.f32 %v3094, %v3654
    %v3749 = vmul.f32 %v3647, %v3654
    %v3750 = vmul.f32 %v2895, %v3654
    %v3751 = vmul.f32 %v3095, %v3654
    %v3848 = vrot.slane %v3656, 2
    %v3849 = vrot.slane %v3657, 2
    %v3850 = vsel %vm1111, %v3848, %v3849
    %v3851 = vrot.slane %v3658, 2
    %v3852 = vsel %vm1111, %v3849, %v3851
    %v3853 = vrot.slane %v3659, 2
    %v3854 = vrot.slane %v3660, 2
    %v3855 = vsel %vm1111, %v3853, %v3854
    %v3856 = vrot.slane %v3661, 2
    %v3857 = vsel %vm1111, %v3854, %v3856
    %v3858 = vrot.slane %v3662, 2
    %v3859 = vrot.slane %v3663, 2
    %v3860 = vsel %vm1111, %v3858, %v3859
    %v3861 = vrot.slane %v3664, 2
    %v3862 = vsel %vm1111, %v3859, %v3861
    %v3863 = vrot.slane %v3665, 2
    %v3864 = vrot.slane %v3666, 2
    %v3865 = vsel %vm1111, %v3863, %v3864
    %v3866 = vrot.slane %v3667, 2
    %v3867 = vsel %vm1111, %v3864, %v3866
    %v3868 = vrot.slane %v3668, 2
    %v3869 = vrot.slane %v3669, 2
    %v3870 = vsel %vm1111, %v3868, %v3869
    %v3871 = vrot.slane %v3670, 2
    %v3872 = vsel %vm1111, %v3869, %v3871
    %v3873 = vrot.slane %v3671, 2
    %v3874 = vrot.slane %v3672, 2
    %v3875 = vsel %vm1111, %v3873, %v3874
    %v3876 = vrot.slane %v3673, 2
    %v3877 = vsel %vm1111, %v3874, %v3876
    %v3878 = vrot.slane %v3674, 2
    %v3879 = vrot.slane %v3675, 2
    %v3880 = vsel %vm1111, %v3878, %v3879
    %v3881 = vrot.slane %v3676, 2
    %v3882 = vsel %vm1111, %v3879, %v3881
    %v3883 = vrot.slane %v3677, 2
    %v3884 = vrot.slane %v3678, 2
    %v3885 = vsel %vm1111, %v3883, %v3884
    %v3886 = vrot.slane %v3679, 2
    %v3887 = vsel %vm1111, %v3884, %v3886
    %v3888 = vrot.slane %v3680, 2
    %v3889 = vrot.slane %v3681, 2
    %v3890 = vsel %vm1111, %v3888, %v3889
    %v3891 = vrot.slane %v3682, 2
    %v3892 = vsel %vm1111, %v3889, %v3891
    %v3893 = vrot.slane %v3683, 2
    %v3894 = vrot.slane %v3684, 2
    %v3895 = vsel %vm1111, %v3893, %v3894
    %v3896 = vrot.slane %v3685, 2
    %v3897 = vsel %vm1111, %v3894, %v3896
    %v3898 = vrot.slane %v3686, 2
    %v3899 = vrot.slane %v3687, 2
    %v3900 = vsel %vm1111, %v3898, %v3899
    %v3901 = vrot.slane %v3688, 2
    %v3902 = vsel %vm1111, %v3899, %v3901
    %v3903 = vrot.slane %v3689, 2
    %v3904 = vrot.slane %v3690, 2
    %v3905 = vsel %vm1111, %v3903, %v3904
    %v3906 = vrot.slane %v3691, 2
    %v3907 = vsel %vm1111, %v3904, %v3906
    %v3908 = vrot.slane %v3692, 2
    %v3909 = vrot.slane %v3693, 2
    %v3910 = vsel %vm1111, %v3908, %v3909
    %v3911 = vrot.slane %v3694, 2
    %v3912 = vsel %vm1111, %v3909, %v3911
    %v3913 = vrot.slane %v3695, 2
    %v3914 = vrot.slane %v3696, 2
    %v3915 = vsel %vm1111, %v3913, %v3914
    %v3916 = vrot.slane %v3697, 2
    %v3917 = vsel %vm1111, %v3914, %v3916
    %v3918 = vrot.slane %v3698, 2
    %v3919 = vrot.slane %v3699, 2
    %v3920 = vsel %vm1111, %v3918, %v3919
    %v3921 = vrot.slane %v3700, 2
    %v3922 = vsel %vm1111, %v3919, %v3921
    %v3923 = vrot.slane %v3701, 2
    %v3924 = vrot.slane %v3702, 2
    %v3925 = vsel %vm1111, %v3923, %v3924
    %v3926 = vrot.slane %v3703, 2
    %v3927 = vsel %vm1111, %v3924, %v3926
    %v3928 = vrot.slane %v3704, 2
    %v3929 = vrot.slane %v3705, 2
    %v3930 = vsel %vm1111, %v3928, %v3929
    %v3931 = vrot.slane %v3706, 2
    %v3932 = vsel %vm1111, %v3929, %v3931
    %v3933 = vrot.slane %v3707, 2
    %v3934 = vrot.slane %v3708, 2
    %v3935 = vsel %vm1111, %v3933, %v3934
    %v3936 = vrot.slane %v3709, 2
    %v3937 = vsel %vm1111, %v3934, %v3936
    %v3938 = vrot.slane %v3710, 2
    %v3939 = vrot.slane %v3711, 2
    %v3940 = vsel %vm1111, %v3938, %v3939
    %v3941 = vrot.slane %v3712, 2
    %v3942 = vsel %vm1111, %v3939, %v3941
    %v3943 = vrot.slane %v3713, 2
    %v3944 = vrot.slane %v3714, 2
    %v3945 = vsel %vm1111, %v3943, %v3944
    %v3946 = vrot.slane %v3715, 2
    %v3947 = vsel %vm1111, %v3944, %v3946
    %v3948 = vrot.slane %v3716, 2
    %v3949 = vrot.slane %v3717, 2
    %v3950 = vsel %vm1111, %v3948, %v3949
    %v3951 = vrot.slane %v3718, 2
    %v3952 = vsel %vm1111, %v3949, %v3951
    %v3953 = vrot.slane %v3719, 2
    %v3954 = vrot.slane %v3720, 2
    %v3955 = vsel %vm1111, %v3953, %v3954
    %v3956 = vrot.slane %v3721, 2
    %v3957 = vsel %vm1111, %v3954, %v3956
    %v3958 = vrot.slane %v3722, 2
    %v3959 = vrot.slane %v3723, 2
    %v3960 = vsel %vm1111, %v3958, %v3959
    %v3961 = vrot.slane %v3724, 2
    %v3962 = vsel %vm1111, %v3959, %v3961
    %v3963 = vrot.slane %v3725, 2
    %v3964 = vrot.slane %v3726, 2
    %v3965 = vsel %vm1111, %v3963, %v3964
    %v3966 = vrot.slane %v3727, 2
    %v3967 = vsel %vm1111, %v3964, %v3966
    %v3968 = vrot.slane %v3728, 2
    %v3969 = vrot.slane %v3729, 2
    %v3970 = vsel %vm1111, %v3968, %v3969
    %v3971 = vrot.slane %v3730, 2
    %v3972 = vsel %vm1111, %v3969, %v3971
    %v3973 = vrot.slane %v3731, 2
    %v3974 = vrot.slane %v3732, 2
    %v3975 = vsel %vm1111, %v3973, %v3974
    %v3976 = vrot.slane %v3733, 2
    %v3977 = vsel %vm1111, %v3974, %v3976
    %v3978 = vrot.slane %v3734, 2
    %v3979 = vrot.slane %v3735, 2
    %v3980 = vsel %vm1111, %v3978, %v3979
    %v3981 = vrot.slane %v3736, 2
    %v3982 = vsel %vm1111, %v3979, %v3981
    %v3983 = vrot.slane %v3737, 2
    %v3984 = vrot.slane %v3738, 2
    %v3985 = vsel %vm1111, %v3983, %v3984
    %v3986 = vrot.slane %v3739, 2
    %v3987 = vsel %vm1111, %v3984, %v3986
    %v3988 = vrot.slane %v3740, 2
    %v3989 = vrot.slane %v3741, 2
    %v3990 = vsel %vm1111, %v3988, %v3989
    %v3991 = vrot.slane %v3742, 2
    %v3992 = vsel %vm1111, %v3989, %v3991
    %v3993 = vrot.slane %v3743, 2
    %v3994 = vrot.slane %v3744, 2
    %v3995 = vsel %vm1111, %v3993, %v3994
    %v3996 = vrot.slane %v3745, 2
    %v3997 = vsel %vm1111, %v3994, %v3996
    %v3998 = vrot.slane %v3746, 2
    %v3999 = vrot.slane %v3747, 2
    %v4000 = vsel %vm1111, %v3998, %v3999
    %v4001 = vrot.slane %v3748, 2
    %v4002 = vsel %vm1111, %v3999, %v4001
    %v4003 = vrot.slane %v3749, 2
    %v4004 = vrot.slane %v3750, 2
    %v4005 = vsel %vm1111, %v4003, %v4004
    %v4006 = vrot.slane %v3751, 2
    %v4007 = vsel %vm1111, %v4004, %v4006
    %v4072 = vadd.f32 %v3520, %v3850
    %v4073 = vadd.f32 %v3521, %v3852
    %v4074 = vadd.f32 %v3522, %v3855
    %v4075 = vadd.f32 %v3523, %v3857
    %v4076 = vadd.f32 %v3524, %v3860
    %v4077 = vadd.f32 %v3525, %v3862
    %v4078 = vadd.f32 %v3526, %v3865
    %v4079 = vadd.f32 %v3527, %v3867
    %v4080 = vadd.f32 %v3528, %v3870
    %v4081 = vadd.f32 %v3529, %v3872
    %v4082 = vadd.f32 %v3530, %v3875
    %v4083 = vadd.f32 %v3531, %v3877
    %v4084 = vadd.f32 %v3532, %v3880
    %v4085 = vadd.f32 %v3533, %v3882
    %v4086 = vadd.f32 %v3534, %v3885
    %v4087 = vadd.f32 %v3535, %v3887
    %v4088 = vadd.f32 %v3536, %v3890
    %v4089 = vadd.f32 %v3537, %v3892
    %v4090 = vadd.f32 %v3538, %v3895
    %v4091 = vadd.f32 %v3539, %v3897
    %v4092 = vadd.f32 %v3540, %v3900
    %v4093 = vadd.f32 %v3541, %v3902
    %v4094 = vadd.f32 %v3542, %v3905
    %v4095 = vadd.f32 %v3543, %v3907
    %v4096 = vadd.f32 %v3544, %v3910
    %v4097 = vadd.f32 %v3545, %v3912
    %v4098 = vadd.f32 %v3546, %v3915
    %v4099 = vadd.f32 %v3547, %v3917
    %v4100 = vadd.f32 %v3548, %v3920
    %v4101 = vadd.f32 %v3549, %v3922
    %v4102 = vadd.f32 %v3550, %v3925
    %v4103 = vadd.f32 %v3551, %v3927
    %v4104 = vadd.f32 %v3552, %v3930
    %v4105 = vadd.f32 %v3553, %v3932
    %v4106 = vadd.f32 %v3554, %v3935
    %v4107 = vadd.f32 %v3555, %v3937
    %v4108 = vadd.f32 %v3556, %v3940
    %v4109 = vadd.f32 %v3557, %v3942
    %v4110 = vadd.f32 %v3558, %v3945
    %v4111 = vadd.f32 %v3559, %v3947
    %v4112 = vadd.f32 %v3560, %v3950
    %v4113 = vadd.f32 %v3561, %v3952
    %v4114 = vadd.f32 %v3562, %v3955
    %v4115 = vadd.f32 %v3563, %v3957
    %v4116 = vadd.f32 %v3564, %v3960
    %v4117 = vadd.f32 %v3565, %v3962
    %v4118 = vadd.f32 %v3566, %v3965
    %v4119 = vadd.f32 %v3567, %v3967
    %v4120 = vadd.f32 %v3568, %v3970
    %v4121 = vadd.f32 %v3569, %v3972
    %v4122 = vadd.f32 %v3570, %v3975
    %v4123 = vadd.f32 %v3571, %v3977
    %v4124 = vadd.f32 %v3572, %v3980
    %v4125 = vadd.f32 %v3573, %v3982
    %v4126 = vadd.f32 %v3574, %v3985
    %v4127 = vadd.f32 %v3575, %v3987
    %v4128 = vadd.f32 %v3576, %v3990
    %v4129 = vadd.f32 %v3577, %v3992
    %v4130 = vadd.f32 %v3578, %v3995
    %v4131 = vadd.f32 %v3579, %v3997
    %v4132 = vadd.f32 %v3580, %v4000
    %v4133 = vadd.f32 %v3581, %v4002
    %v4134 = vadd.f32 %v3582, %v4005
    %v4135 = vadd.f32 %v3583, %v4007
    %v4136 = vld [vmem:[%s4] sm:$0x1]
    %v4138 = vlaneseq
    %v4139 = vshrl.u32 %v4138, 7
    %v4140 = vsub.s32 0, %v4139
    %v4141 = vrot.slane %v4136, %v4140
    %v4143 = vadd.f32 %v4072, %v4141
    %v4144 = vadd.f32 %v4073, %v4141
    %v4145 = vadd.f32 %v4074, %v4141
    %v4146 = vadd.f32 %v4075, %v4141
    %v4147 = vadd.f32 %v4076, %v4141
    %v4148 = vadd.f32 %v4077, %v4141
    %v4149 = vadd.f32 %v4078, %v4141
    %v4150 = vadd.f32 %v4079, %v4141
    %v4151 = vadd.f32 %v4080, %v4141
    %v4152 = vadd.f32 %v4081, %v4141
    %v4153 = vadd.f32 %v4082, %v4141
    %v4154 = vadd.f32 %v4083, %v4141
    %v4155 = vadd.f32 %v4084, %v4141
    %v4156 = vadd.f32 %v4085, %v4141
    %v4157 = vadd.f32 %v4086, %v4141
    %v4158 = vadd.f32 %v4087, %v4141
    %v4159 = vadd.f32 %v4088, %v4141
    %v4160 = vadd.f32 %v4089, %v4141
    %v4161 = vadd.f32 %v4090, %v4141
    %v4162 = vadd.f32 %v4091, %v4141
    %v4163 = vadd.f32 %v4092, %v4141
    %v4164 = vadd.f32 %v4093, %v4141
    %v4165 = vadd.f32 %v4094, %v4141
    %v4166 = vadd.f32 %v4095, %v4141
    %v4167 = vadd.f32 %v4096, %v4141
    %v4168 = vadd.f32 %v4097, %v4141
    %v4169 = vadd.f32 %v4098, %v4141
    %v4170 = vadd.f32 %v4099, %v4141
    %v4171 = vadd.f32 %v4100, %v4141
    %v4172 = vadd.f32 %v4101, %v4141
    %v4173 = vadd.f32 %v4102, %v4141
    %v4174 = vadd.f32 %v4103, %v4141
    %v4175 = vadd.f32 %v4104, %v4141
    %v4176 = vadd.f32 %v4105, %v4141
    %v4177 = vadd.f32 %v4106, %v4141
    %v4178 = vadd.f32 %v4107, %v4141
    %v4179 = vadd.f32 %v4108, %v4141
    %v4180 = vadd.f32 %v4109, %v4141
    %v4181 = vadd.f32 %v4110, %v4141
    %v4182 = vadd.f32 %v4111, %v4141
    %v4183 = vadd.f32 %v4112, %v4141
    %v4184 = vadd.f32 %v4113, %v4141
    %v4185 = vadd.f32 %v4114, %v4141
    %v4186 = vadd.f32 %v4115, %v4141
    %v4187 = vadd.f32 %v4116, %v4141
    %v4188 = vadd.f32 %v4117, %v4141
    %v4189 = vadd.f32 %v4118, %v4141
    %v4190 = vadd.f32 %v4119, %v4141
    %v4191 = vadd.f32 %v4120, %v4141
    %v4192 = vadd.f32 %v4121, %v4141
    %v4193 = vadd.f32 %v4122, %v4141
    %v4194 = vadd.f32 %v4123, %v4141
    %v4195 = vadd.f32 %v4124, %v4141
    %v4196 = vadd.f32 %v4125, %v4141
    %v4197 = vadd.f32 %v4126, %v4141
    %v4198 = vadd.f32 %v4127, %v4141
    %v4199 = vadd.f32 %v4128, %v4141
    %v4200 = vadd.f32 %v4129, %v4141
    %v4201 = vadd.f32 %v4130, %v4141
    %v4202 = vadd.f32 %v4131, %v4141
    %v4203 = vadd.f32 %v4132, %v4141
    %v4204 = vadd.f32 %v4133, %v4141
    %v4205 = vadd.f32 %v4134, %v4141
    %v4206 = vadd.f32 %v4135, %v4141
    %v4207 = vmax.f32 %v4143, 0.0
    %v4208 = vmax.f32 %v4144, 0.0
    %v4209 = vmax.f32 %v4145, 0.0
    %v4210 = vmax.f32 %v4146, 0.0
    %v4211 = vmax.f32 %v4147, 0.0
    %v4212 = vmax.f32 %v4148, 0.0
    %v4213 = vmax.f32 %v4149, 0.0
    %v4214 = vmax.f32 %v4150, 0.0
    %v4215 = vmax.f32 %v4151, 0.0
    %v4216 = vmax.f32 %v4152, 0.0
    %v4217 = vmax.f32 %v4153, 0.0
    %v4218 = vmax.f32 %v4154, 0.0
    %v4219 = vmax.f32 %v4155, 0.0
    %v4220 = vmax.f32 %v4156, 0.0
    %v4221 = vmax.f32 %v4157, 0.0
    %v4222 = vmax.f32 %v4158, 0.0
    %v4223 = vmax.f32 %v4159, 0.0
    %v4224 = vmax.f32 %v4160, 0.0
    %v4225 = vmax.f32 %v4161, 0.0
    %v4226 = vmax.f32 %v4162, 0.0
    %v4227 = vmax.f32 %v4163, 0.0
    %v4228 = vmax.f32 %v4164, 0.0
    %v4229 = vmax.f32 %v4165, 0.0
    %v4230 = vmax.f32 %v4166, 0.0
    %v4231 = vmax.f32 %v4167, 0.0
    %v4232 = vmax.f32 %v4168, 0.0
    %v4233 = vmax.f32 %v4169, 0.0
    %v4234 = vmax.f32 %v4170, 0.0
    %v4235 = vmax.f32 %v4171, 0.0
    %v4236 = vmax.f32 %v4172, 0.0
    %v4237 = vmax.f32 %v4173, 0.0
    %v4238 = vmax.f32 %v4174, 0.0
    %v4239 = vmax.f32 %v4175, 0.0
    %v4240 = vmax.f32 %v4176, 0.0
    %v4241 = vmax.f32 %v4177, 0.0
    %v4242 = vmax.f32 %v4178, 0.0
    %v4243 = vmax.f32 %v4179, 0.0
    %v4244 = vmax.f32 %v4180, 0.0
    %v4245 = vmax.f32 %v4181, 0.0
    %v4246 = vmax.f32 %v4182, 0.0
    %v4247 = vmax.f32 %v4183, 0.0
    %v4248 = vmax.f32 %v4184, 0.0
    %v4249 = vmax.f32 %v4185, 0.0
    %v4250 = vmax.f32 %v4186, 0.0
    %v4251 = vmax.f32 %v4187, 0.0
    %v4252 = vmax.f32 %v4188, 0.0
    %v4253 = vmax.f32 %v4189, 0.0
    %v4254 = vmax.f32 %v4190, 0.0
    %v4255 = vmax.f32 %v4191, 0.0
    %v4256 = vmax.f32 %v4192, 0.0
    %v4257 = vmax.f32 %v4193, 0.0
    %v4258 = vmax.f32 %v4194, 0.0
    %v4259 = vmax.f32 %v4195, 0.0
    %v4260 = vmax.f32 %v4196, 0.0
    %v4261 = vmax.f32 %v4197, 0.0
    %v4262 = vmax.f32 %v4198, 0.0
    %v4263 = vmax.f32 %v4199, 0.0
    %v4264 = vmax.f32 %v4200, 0.0
    %v4265 = vmax.f32 %v4201, 0.0
    %v4266 = vmax.f32 %v4202, 0.0
    %v4267 = vmax.f32 %v4203, 0.0
    %v4268 = vmax.f32 %v4204, 0.0
    %v4269 = vmax.f32 %v4205, 0.0
    %v4270 = vmax.f32 %v4206, 0.0
    %v4271 = vmin.f32 %v4207, 6.0
    %v4272 = vmin.f32 %v4208, 6.0
    %v4273 = vmin.f32 %v4209, 6.0
    %v4274 = vmin.f32 %v4210, 6.0
    %v4275 = vmin.f32 %v4211, 6.0
    %v4276 = vmin.f32 %v4212, 6.0
    %v4277 = vmin.f32 %v4213, 6.0
    %v4278 = vmin.f32 %v4214, 6.0
    %v4279 = vmin.f32 %v4215, 6.0
    %v4280 = vmin.f32 %v4216, 6.0
    %v4281 = vmin.f32 %v4217, 6.0
    %v4282 = vmin.f32 %v4218, 6.0
    %v4283 = vmin.f32 %v4219, 6.0
    %v4284 = vmin.f32 %v4220, 6.0
    %v4285 = vmin.f32 %v4221, 6.0
    %v4286 = vmin.f32 %v4222, 6.0
    %v4287 = vmin.f32 %v4223, 6.0
    %v4288 = vmin.f32 %v4224, 6.0
    %v4289 = vmin.f32 %v4225, 6.0
    %v4290 = vmin.f32 %v4226, 6.0
    %v4291 = vmin.f32 %v4227, 6.0
    %v4292 = vmin.f32 %v4228, 6.0
    %v4293 = vmin.f32 %v4229, 6.0
    %v4294 = vmin.f32 %v4230, 6.0
    %v4295 = vmin.f32 %v4231, 6.0
    %v4296 = vmin.f32 %v4232, 6.0
    %v4297 = vmin.f32 %v4233, 6.0
    %v4298 = vmin.f32 %v4234, 6.0
    %v4299 = vmin.f32 %v4235, 6.0
    %v4300 = vmin.f32 %v4236, 6.0
    %v4301 = vmin.f32 %v4237, 6.0
    %v4302 = vmin.f32 %v4238, 6.0
    %v4303 = vmin.f32 %v4239, 6.0
    %v4304 = vmin.f32 %v4240, 6.0
    %v4305 = vmin.f32 %v4241, 6.0
    %v4306 = vmin.f32 %v4242, 6.0
    %v4307 = vmin.f32 %v4243, 6.0
    %v4308 = vmin.f32 %v4244, 6.0
    %v4309 = vmin.f32 %v4245, 6.0
    %v4310 = vmin.f32 %v4246, 6.0
    %v4311 = vmin.f32 %v4247, 6.0
    %v4312 = vmin.f32 %v4248, 6.0
    %v4313 = vmin.f32 %v4249, 6.0
    %v4314 = vmin.f32 %v4250, 6.0
    %v4315 = vmin.f32 %v4251, 6.0
    %v4316 = vmin.f32 %v4252, 6.0
    %v4317 = vmin.f32 %v4253, 6.0
    %v4318 = vmin.f32 %v4254, 6.0
    %v4319 = vmin.f32 %v4255, 6.0
    %v4320 = vmin.f32 %v4256, 6.0
    %v4321 = vmin.f32 %v4257, 6.0
    %v4322 = vmin.f32 %v4258, 6.0
    %v4323 = vmin.f32 %v4259, 6.0
    %v4324 = vmin.f32 %v4260, 6.0
    %v4325 = vmin.f32 %v4261, 6.0
    %v4326 = vmin.f32 %v4262, 6.0
    %v4327 = vmin.f32 %v4263, 6.0
    %v4328 = vmin.f32 %v4264, 6.0
    %v4329 = vmin.f32 %v4265, 6.0
    %v4330 = vmin.f32 %v4266, 6.0
    %v4331 = vmin.f32 %v4267, 6.0
    %v4332 = vmin.f32 %v4268, 6.0
    %v4333 = vmin.f32 %v4269, 6.0
    %v4334 = vmin.f32 %v4270, 6.0
    %v4335 = vpack.c.bf16 %v4272, %v4271
    %v4336 = vpack.c.bf16 %v4274, %v4273
    %v4337 = vpack.c.bf16 %v4276, %v4275
    %v4338 = vpack.c.bf16 %v4278, %v4277
    %v4339 = vpack.c.bf16 %v4280, %v4279
    %v4340 = vpack.c.bf16 %v4282, %v4281
    %v4341 = vpack.c.bf16 %v4284, %v4283
    %v4342 = vpack.c.bf16 %v4286, %v4285
    %v4343 = vpack.c.bf16 %v4288, %v4287
    %v4344 = vpack.c.bf16 %v4290, %v4289
    %v4345 = vpack.c.bf16 %v4292, %v4291
    %v4346 = vpack.c.bf16 %v4294, %v4293
    %v4347 = vpack.c.bf16 %v4296, %v4295
    %v4348 = vpack.c.bf16 %v4298, %v4297
    %v4349 = vpack.c.bf16 %v4300, %v4299
    %v4350 = vpack.c.bf16 %v4302, %v4301
    %v4351 = vpack.c.bf16 %v4304, %v4303
    %v4352 = vpack.c.bf16 %v4306, %v4305
    %v4353 = vpack.c.bf16 %v4308, %v4307
    %v4354 = vpack.c.bf16 %v4310, %v4309
    %v4355 = vpack.c.bf16 %v4312, %v4311
    %v4356 = vpack.c.bf16 %v4314, %v4313
    %v4357 = vpack.c.bf16 %v4316, %v4315
    %v4358 = vpack.c.bf16 %v4318, %v4317
    %v4359 = vpack.c.bf16 %v4320, %v4319
    %v4360 = vpack.c.bf16 %v4322, %v4321
    %v4361 = vpack.c.bf16 %v4324, %v4323
    %v4362 = vpack.c.bf16 %v4326, %v4325
    %v4363 = vpack.c.bf16 %v4328, %v4327
    %v4364 = vpack.c.bf16 %v4330, %v4329
    %v4365 = vpack.c.bf16 %v4332, %v4331
    %v4366 = vpack.c.bf16 %v4334, %v4333
    %v4367 = vld [vmem:[%s5] sm:$0xf]
    %v4368 = vld [vmem:[%s5 + $0x4] sm:$0xf]
    %v4369 = vld [vmem:[%s5 + $0x8] sm:$0xf]
    %v4370 = vld [vmem:[%s5 + $0xc] sm:$0xf]
    %v4371 = vld [vmem:[%s6] sm:$0x1]
    %v4373 = vlaneseq
    %v4374 = vshrl.u32 %v4373, 7
    %v4375 = vsub.s32 0, %v4374
    %v4376 = vrot.slane %v4371, %v4375
    %v4382 = vunpack.c.l.b16 %v4367
    %v4383 = vunpack.c.l.b16 %v4368
    %v4384 = vunpack.c.l.b16 %v4369
    %v4385 = vunpack.c.l.b16 %v4370
    %v4386 = vpack.c.b16 %v4383, %v4382
    %v4387 = vpack.c.b16 %v4385, %v4384
    %vm4390 = vcmask 261120
    %v4392 = vsel %vm4390, %v4335, 0
    %v4395 = vsel %vm4390, %v4336, 0
    %v4398 = vsel %vm4390, %v4337, 0
    %v4401 = vsel %vm4390, %v4338, 0
    %v4404 = vsel %vm4390, %v4339, 0
    %v4407 = vsel %vm4390, %v4340, 0
    %v4410 = vsel %vm4390, %v4341, 0
    %v4413 = vsel %vm4390, %v4342, 0
    %v4416 = vsel %vm4390, %v4343, 0
    %v4419 = vsel %vm4390, %v4344, 0
    %v4422 = vsel %vm4390, %v4345, 0
    %v4425 = vsel %vm4390, %v4346, 0
    %v4428 = vsel %vm4390, %v4347, 0
    %v4431 = vsel %vm4390, %v4348, 0
    %v4434 = vsel %vm4390, %v4349, 0
    %v4437 = vsel %vm4390, %v4350, 0
    %v4440 = vsel %vm4390, %v4351, 0
    %v4443 = vsel %vm4390, %v4352, 0
    %v4446 = vsel %vm4390, %v4353, 0
    %v4449 = vsel %vm4390, %v4354, 0
    %v4452 = vsel %vm4390, %v4355, 0
    %v4455 = vsel %vm4390, %v4356, 0
    %v4458 = vsel %vm4390, %v4357, 0
    %v4461 = vsel %vm4390, %v4358, 0
    %v4464 = vsel %vm4390, %v4359, 0
    %v4467 = vsel %vm4390, %v4360, 0
    %v4470 = vsel %vm4390, %v4361, 0
    %v4473 = vsel %vm4390, %v4362, 0
    %v4476 = vsel %vm4390, %v4363, 0
    %v4479 = vsel %vm4390, %v4364, 0
    %v4482 = vsel %vm4390, %v4365, 0
    %v4485 = vsel %vm4390, %v4366, 0
    %4487 = vmatprep.subr.bf16.mxu0 0
    %4488 = vmatpush1.bf16.msra.mxu0 %v4386
    %4489 = vmatprep.subr.bf16.mxu0 0
    %4490 = vmatpush1.bf16.msra.mxu0 %v4387
    %4491 = vmatprep.subr.bf16.mxu0 0
    %4492 = vmatpush1.bf16.msra.mxu0 0
    %4493 = vmatprep.subr.bf16.mxu0 0
    %4494 = vmatpush1.bf16.msra.mxu0 0
    %4495 = vmatprep.subr.bf16.mxu0 0
    %4496 = vmatpush1.bf16.msra.mxu0 0
    %4497 = vmatprep.subr.bf16.mxu0 0
    %4498 = vmatpush1.bf16.msra.mxu0 0
    %4499 = vmatprep.subr.bf16.mxu0 0
    %4500 = vmatpush1.bf16.msra.mxu0 0
    %4501 = vmatprep.subr.bf16.mxu0 0
    %4502 = vmatpush1.bf16.msra.mxu0 0
    %4503 = vmatprep.subr.bf16.mxu0 0
    %4504 = vmatpush1.bf16.msra.mxu0 0
    %4505 = vmatprep.subr.bf16.mxu0 0
    %4506 = vmatpush1.bf16.msra.mxu0 0
    %4507 = vmatprep.subr.bf16.mxu0 0
    %4508 = vmatpush1.bf16.msra.mxu0 0
    %4509 = vmatprep.subr.bf16.mxu0 0
    %4510 = vmatpush1.bf16.msra.mxu0 0
    %4511 = vmatprep.subr.bf16.mxu0 0
    %4512 = vmatpush1.bf16.msra.mxu0 0
    %4513 = vmatprep.subr.bf16.mxu0 0
    %4514 = vmatpush1.bf16.msra.mxu0 0
    %4515 = vmatprep.subr.bf16.mxu0 0
    %4516 = vmatpush1.bf16.msra.mxu0 0
    %4517 = vmatprep.subr.bf16.mxu0 0
    %4518 = vmatpush1.bf16.msra.mxu0 0
    %4519 = vmatprep.mubr.bf16.mxu0 0
    %4520 = vmatmul.mubr.bf16.gmra.mrb[0].mxu0 %v4392
    %v4521 = vpop.f32.mrb[0].mxu0
    %v4522 = vadd.f32 %v4376, %v4521
    %v4523 = vpop.f32.mrb[0].mxu0
    %v4524 = vpop.f32.mrb[0].mxu0
    %v4525 = vadd.f32 %v4376, %v4524
    %v4526 = vpop.f32.mrb[0].mxu0
    %4527 = vmatprep.mubr.bf16.mxu0 0
    %4528 = vmatmul.mubr.bf16.gmra.mrb[0].mxu0 %v4395
    %v4529 = vpop.f32.mrb[0].mxu0
    %v4530 = vadd.f32 %v4376, %v4529
    %v4531 = vpop.f32.mrb[0].mxu0
    %v4532 = vpop.f32.mrb[0].mxu0
    %v4533 = vadd.f32 %v4376, %v4532
    %v4534 = vpop.f32.mrb[0].mxu0
    %4535 = vmatprep.mubr.bf16.mxu0 0
    %4536 = vmatmul.mubr.bf16.gmra.mrb[0].mxu0 %v4398
    %v4537 = vpop.f32.mrb[0].mxu0
    %v4538 = vadd.f32 %v4376, %v4537
    %v4539 = vpop.f32.mrb[0].mxu0
    %v4540 = vpop.f32.mrb[0].mxu0
    %v4541 = vadd.f32 %v4376, %v4540
    %v4542 = vpop.f32.mrb[0].mxu0
    %4543 = vmatprep.mubr.bf16.mxu0 0
    %4544 = vmatmul.mubr.bf16.gmra.mrb[0].mxu0 %v4401
    %v4545 = vpop.f32.mrb[0].mxu0
    %v4546 = vadd.f32 %v4376, %v4545
    %v4547 = vpop.f32.mrb[0].mxu0
    %v4548 = vpop.f32.mrb[0].mxu0
    %v4549 = vadd.f32 %v4376, %v4548
    %v4550 = vpop.f32.mrb[0].mxu0
    %4551 = vmatprep.mubr.bf16.mxu0 0
    %4552 = vmatmul.mubr.bf16.gmra.mrb[0].mxu0 %v4404
    %v4553 = vpop.f32.mrb[0].mxu0
    %v4554 = vadd.f32 %v4376, %v4553
    %v4555 = vpop.f32.mrb[0].mxu0
    %v4556 = vpop.f32.mrb[0].mxu0
    %v4557 = vadd.f32 %v4376, %v4556
    %v4558 = vpop.f32.mrb[0].mxu0
    %4559 = vmatprep.mubr.bf16.mxu0 0
    %4560 = vmatmul.mubr.bf16.gmra.mrb[0].mxu0 %v4407
    %v4561 = vpop.f32.mrb[0].mxu0
    %v4562 = vadd.f32 %v4376, %v4561
    %v4563 = vpop.f32.mrb[0].mxu0
    %v4564 = vpop.f32.mrb[0].mxu0
    %v4565 = vadd.f32 %v4376, %v4564
    %v4566 = vpop.f32.mrb[0].mxu0
    %4567 = vmatprep.mubr.bf16.mxu0 0
    %4568 = vmatmul.mubr.bf16.gmra.mrb[0].mxu0 %v4410
    %v4569 = vpop.f32.mrb[0].mxu0
    %v4570 = vadd.f32 %v4376, %v4569
    %v4571 = vpop.f32.mrb[0].mxu0
    %v4572 = vpop.f32.mrb[0].mxu0
    %v4573 = vadd.f32 %v4376, %v4572
    %v4574 = vpop.f32.mrb[0].mxu0
    %4575 = vmatprep.mubr.bf16.mxu0 0
    %4576 = vmatmul.mubr.bf16.gmra.mrb[0].mxu0 %v4413
    %v4577 = vpop.f32.mrb[0].mxu0
    %v4578 = vadd.f32 %v4376, %v4577
    %v4579 = vpop.f32.mrb[0].mxu0
    %v4580 = vpop.f32.mrb[0].mxu0
    %v4581 = vadd.f32 %v4376, %v4580
    %v4582 = vpop.f32.mrb[0].mxu0
    %4583 = vmatprep.mubr.bf16.mxu0 0
    %4584 = vmatmul.mubr.bf16.gmra.mrb[0].mxu0 %v4416
    %v4585 = vpop.f32.mrb[0].mxu0
    %v4586 = vadd.f32 %v4376, %v4585
    %v4587 = vpop.f32.mrb[0].mxu0
    %v4588 = vpop.f32.mrb[0].mxu0
    %v4589 = vadd.f32 %v4376, %v4588
    %v4590 = vpop.f32.mrb[0].mxu0
    %4591 = vmatprep.mubr.bf16.mxu0 0
    %4592 = vmatmul.mubr.bf16.gmra.mrb[0].mxu0 %v4419
    %v4593 = vpop.f32.mrb[0].mxu0
    %v4594 = vadd.f32 %v4376, %v4593
    %v4595 = vpop.f32.mrb[0].mxu0
    %v4596 = vpop.f32.mrb[0].mxu0
    %v4597 = vadd.f32 %v4376, %v4596
    %v4598 = vpop.f32.mrb[0].mxu0
    %4599 = vmatprep.mubr.bf16.mxu0 0
    %4600 = vmatmul.mubr.bf16.gmra.mrb[0].mxu0 %v4422
    %v4601 = vpop.f32.mrb[0].mxu0
    %v4602 = vadd.f32 %v4376, %v4601
    %v4603 = vpop.f32.mrb[0].mxu0
    %v4604 = vpop.f32.mrb[0].mxu0
    %v4605 = vadd.f32 %v4376, %v4604
    %v4606 = vpop.f32.mrb[0].mxu0
    %4607 = vmatprep.mubr.bf16.mxu0 0
    %4608 = vmatmul.mubr.bf16.gmra.mrb[0].mxu0 %v4425
    %v4609 = vpop.f32.mrb[0].mxu0
    %v4610 = vadd.f32 %v4376, %v4609
    %v4611 = vpop.f32.mrb[0].mxu0
    %v4612 = vpop.f32.mrb[0].mxu0
    %v4613 = vadd.f32 %v4376, %v4612
    %v4614 = vpop.f32.mrb[0].mxu0
    %4615 = vmatprep.mubr.bf16.mxu0 0
    %4616 = vmatmul.mubr.bf16.gmra.mrb[0].mxu0 %v4428
    %v4617 = vpop.f32.mrb[0].mxu0
    %v4618 = vadd.f32 %v4376, %v4617
    %v4619 = vpop.f32.mrb[0].mxu0
    %v4620 = vpop.f32.mrb[0].mxu0
    %v4621 = vadd.f32 %v4376, %v4620
    %v4622 = vpop.f32.mrb[0].mxu0
    %4623 = vmatprep.mubr.bf16.mxu0 0
    %4624 = vmatmul.mubr.bf16.gmra.mrb[0].mxu0 %v4431
    %v4625 = vpop.f32.mrb[0].mxu0
    %v4626 = vadd.f32 %v4376, %v4625
    %v4627 = vpop.f32.mrb[0].mxu0
    %v4628 = vpop.f32.mrb[0].mxu0
    %v4629 = vadd.f32 %v4376, %v4628
    %v4630 = vpop.f32.mrb[0].mxu0
    %4631 = vmatprep.mubr.bf16.mxu0 0
    %4632 = vmatmul.mubr.bf16.gmra.mrb[0].mxu0 %v4434
    %v4633 = vpop.f32.mrb[0].mxu0
    %v4634 = vadd.f32 %v4376, %v4633
    %v4635 = vpop.f32.mrb[0].mxu0
    %v4636 = vpop.f32.mrb[0].mxu0
    %v4637 = vadd.f32 %v4376, %v4636
    %v4638 = vpop.f32.mrb[0].mxu0
    %4639 = vmatprep.mubr.bf16.mxu0 0
    %4640 = vmatmul.mubr.bf16.gmra.mrb[0].mxu0 %v4437
    %v4641 = vpop.f32.mrb[0].mxu0
    %v4642 = vadd.f32 %v4376, %v4641
    %v4643 = vpop.f32.mrb[0].mxu0
    %v4644 = vpop.f32.mrb[0].mxu0
    %v4645 = vadd.f32 %v4376, %v4644
    %v4646 = vpop.f32.mrb[0].mxu0
    %4647 = vmatprep.mubr.bf16.mxu0 0
    %4648 = vmatmul.mubr.bf16.gmra.mrb[0].mxu0 %v4440
    %v4649 = vpop.f32.mrb[0].mxu0
    %v4650 = vadd.f32 %v4376, %v4649
    %v4651 = vpop.f32.mrb[0].mxu0
    %v4652 = vpop.f32.mrb[0].mxu0
    %v4653 = vadd.f32 %v4376, %v4652
    %v4654 = vpop.f32.mrb[0].mxu0
    %4655 = vmatprep.mubr.bf16.mxu0 0
    %4656 = vmatmul.mubr.bf16.gmra.mrb[0].mxu0 %v4443
    %v4657 = vpop.f32.mrb[0].mxu0
    %v4658 = vadd.f32 %v4376, %v4657
    %v4659 = vpop.f32.mrb[0].mxu0
    %v4660 = vpop.f32.mrb[0].mxu0
    %v4661 = vadd.f32 %v4376, %v4660
    %v4662 = vpop.f32.mrb[0].mxu0
    %4663 = vmatprep.mubr.bf16.mxu0 0
    %4664 = vmatmul.mubr.bf16.gmra.mrb[0].mxu0 %v4446
    %v4665 = vpop.f32.mrb[0].mxu0
    %v4666 = vadd.f32 %v4376, %v4665
    %v4667 = vpop.f32.mrb[0].mxu0
    %v4668 = vpop.f32.mrb[0].mxu0
    %v4669 = vadd.f32 %v4376, %v4668
    %v4670 = vpop.f32.mrb[0].mxu0
    %4671 = vmatprep.mubr.bf16.mxu0 0
    %4672 = vmatmul.mubr.bf16.gmra.mrb[0].mxu0 %v4449
    %v4673 = vpop.f32.mrb[0].mxu0
    %v4674 = vadd.f32 %v4376, %v4673
    %v4675 = vpop.f32.mrb[0].mxu0
    %v4676 = vpop.f32.mrb[0].mxu0
    %v4677 = vadd.f32 %v4376, %v4676
    %v4678 = vpop.f32.mrb[0].mxu0
    %4679 = vmatprep.mubr.bf16.mxu0 0
    %4680 = vmatmul.mubr.bf16.gmra.mrb[0].mxu0 %v4452
    %v4681 = vpop.f32.mrb[0].mxu0
    %v4682 = vadd.f32 %v4376, %v4681
    %v4683 = vpop.f32.mrb[0].mxu0
    %v4684 = vpop.f32.mrb[0].mxu0
    %v4685 = vadd.f32 %v4376, %v4684
    %v4686 = vpop.f32.mrb[0].mxu0
    %4687 = vmatprep.mubr.bf16.mxu0 0
    %4688 = vmatmul.mubr.bf16.gmra.mrb[0].mxu0 %v4455
    %v4689 = vpop.f32.mrb[0].mxu0
    %v4690 = vadd.f32 %v4376, %v4689
    %v4691 = vpop.f32.mrb[0].mxu0
    %v4692 = vpop.f32.mrb[0].mxu0
    %v4693 = vadd.f32 %v4376, %v4692
    %v4694 = vpop.f32.mrb[0].mxu0
    %4695 = vmatprep.mubr.bf16.mxu0 0
    %4696 = vmatmul.mubr.bf16.gmra.mrb[0].mxu0 %v4458
    %v4697 = vpop.f32.mrb[0].mxu0
    %v4698 = vadd.f32 %v4376, %v4697
    %v4699 = vpop.f32.mrb[0].mxu0
    %v4700 = vpop.f32.mrb[0].mxu0
    %v4701 = vadd.f32 %v4376, %v4700
    %v4702 = vpop.f32.mrb[0].mxu0
    %4703 = vmatprep.mubr.bf16.mxu0 0
    %4704 = vmatmul.mubr.bf16.gmra.mrb[0].mxu0 %v4461
    %v4705 = vpop.f32.mrb[0].mxu0
    %v4706 = vadd.f32 %v4376, %v4705
    %v4707 = vpop.f32.mrb[0].mxu0
    %v4708 = vpop.f32.mrb[0].mxu0
    %v4709 = vadd.f32 %v4376, %v4708
    %v4710 = vpop.f32.mrb[0].mxu0
    %4711 = vmatprep.mubr.bf16.mxu0 0
    %4712 = vmatmul.mubr.bf16.gmra.mrb[0].mxu0 %v4464
    %v4713 = vpop.f32.mrb[0].mxu0
    %v4714 = vadd.f32 %v4376, %v4713
    %v4715 = vpop.f32.mrb[0].mxu0
    %v4716 = vpop.f32.mrb[0].mxu0
    %v4717 = vadd.f32 %v4376, %v4716
    %v4718 = vpop.f32.mrb[0].mxu0
    %4719 = vmatprep.mubr.bf16.mxu0 0
    %4720 = vmatmul.mubr.bf16.gmra.mrb[0].mxu0 %v4467
    %v4721 = vpop.f32.mrb[0].mxu0
    %v4722 = vadd.f32 %v4376, %v4721
    %v4723 = vpop.f32.mrb[0].mxu0
    %v4724 = vpop.f32.mrb[0].mxu0
    %v4725 = vadd.f32 %v4376, %v4724
    %v4726 = vpop.f32.mrb[0].mxu0
    %4727 = vmatprep.mubr.bf16.mxu0 0
    %4728 = vmatmul.mubr.bf16.gmra.mrb[0].mxu0 %v4470
    %v4729 = vpop.f32.mrb[0].mxu0
    %v4730 = vadd.f32 %v4376, %v4729
    %v4731 = vpop.f32.mrb[0].mxu0
    %v4732 = vpop.f32.mrb[0].mxu0
    %v4733 = vadd.f32 %v4376, %v4732
    %v4734 = vpop.f32.mrb[0].mxu0
    %4735 = vmatprep.mubr.bf16.mxu0 0
    %4736 = vmatmul.mubr.bf16.gmra.mrb[0].mxu0 %v4473
    %v4737 = vpop.f32.mrb[0].mxu0
    %v4738 = vadd.f32 %v4376, %v4737
    %v4739 = vpop.f32.mrb[0].mxu0
    %v4740 = vpop.f32.mrb[0].mxu0
    %v4741 = vadd.f32 %v4376, %v4740
    %v4742 = vpop.f32.mrb[0].mxu0
    %4743 = vmatprep.mubr.bf16.mxu0 0
    %4744 = vmatmul.mubr.bf16.gmra.mrb[0].mxu0 %v4476
    %v4745 = vpop.f32.mrb[0].mxu0
    %v4746 = vadd.f32 %v4376, %v4745
    %v4747 = vpop.f32.mrb[0].mxu0
    %v4748 = vpop.f32.mrb[0].mxu0
    %v4749 = vadd.f32 %v4376, %v4748
    %v4750 = vpop.f32.mrb[0].mxu0
    %4751 = vmatprep.mubr.bf16.mxu0 0
    %4752 = vmatmul.mubr.bf16.gmra.mrb[0].mxu0 %v4479
    %v4753 = vpop.f32.mrb[0].mxu0
    %v4754 = vadd.f32 %v4376, %v4753
    %v4755 = vpop.f32.mrb[0].mxu0
    %v4756 = vpop.f32.mrb[0].mxu0
    %v4757 = vadd.f32 %v4376, %v4756
    %v4758 = vpop.f32.mrb[0].mxu0
    %4759 = vmatprep.mubr.bf16.mxu0 0
    %4760 = vmatmul.mubr.bf16.gmra.mrb[0].mxu0 %v4482
    %v4761 = vpop.f32.mrb[0].mxu0
    %v4762 = vadd.f32 %v4376, %v4761
    %v4763 = vpop.f32.mrb[0].mxu0
    %v4764 = vpop.f32.mrb[0].mxu0
    %v4765 = vadd.f32 %v4376, %v4764
    %v4766 = vpop.f32.mrb[0].mxu0
    %4767 = vmatprep.mubr.bf16.mxu0 0
    %4768 = vmatmul.mubr.bf16.gmra.mrb[0].mxu0 %v4485
    %v4769 = vpop.f32.mrb[0].mxu0
    %v4770 = vadd.f32 %v4376, %v4769
    %v4771 = vpop.f32.mrb[0].mxu0
    %v4772 = vpop.f32.mrb[0].mxu0
    %v4773 = vadd.f32 %v4376, %v4772
    %v4774 = vpop.f32.mrb[0].mxu0
    %4775 = vdwg.mxu0
    %v4776 = vld [vmem:[%s7] sm:$0xff]
    %v4777 = vld [vmem:[%s7 + $0x8] sm:$0xff]
    %v4778 = vld [vmem:[%s7 + $0x10] sm:$0xff]
    %v4779 = vld [vmem:[%s7 + $0x18] sm:$0xff]
    %v4780 = vld [vmem:[%s7 + $0x20] sm:$0xff]
    %v4781 = vld [vmem:[%s7 + $0x28] sm:$0xff]
    %v4782 = vld [vmem:[%s7 + $0x30] sm:$0xff]
    %v4783 = vld [vmem:[%s7 + $0x38] sm:$0xff]
    %v4784 = vld [vmem:[%s7 + $0x40] sm:$0xff]
    %v4785 = vld [vmem:[%s7 + $0x48] sm:$0xff]
    %v4786 = vld [vmem:[%s7 + $0x50] sm:$0xff]
    %v4787 = vld [vmem:[%s7 + $0x58] sm:$0xff]
    %v4788 = vld [vmem:[%s7 + $0x60] sm:$0xff]
    %v4789 = vld [vmem:[%s7 + $0x68] sm:$0xff]
    %v4790 = vld [vmem:[%s7 + $0x70] sm:$0xff]
    %v4791 = vld [vmem:[%s7 + $0x78] sm:$0xff]
    %v4792 = vld [vmem:[%s7 + $0x80] sm:$0xff]
    %v4793 = vld [vmem:[%s7 + $0x88] sm:$0xff]
    %v4794 = vld [vmem:[%s7 + $0x90] sm:$0xff]
    %v4795 = vld [vmem:[%s7 + $0x98] sm:$0xff]
    %v4796 = vld [vmem:[%s7 + $0xa0] sm:$0xff]
    %v4797 = vld [vmem:[%s7 + $0xa8] sm:$0xff]
    %v4798 = vld [vmem:[%s7 + $0xb0] sm:$0xff]
    %v4799 = vld [vmem:[%s7 + $0xb8] sm:$0xff]
    %v4800 = vld [vmem:[%s7 + $0xc0] sm:$0xff]
    %v4801 = vld [vmem:[%s7 + $0xc8] sm:$0xff]
    %v4802 = vld [vmem:[%s7 + $0xd0] sm:$0xff]
    %v4803 = vld [vmem:[%s7 + $0xd8] sm:$0xff]
    %v4804 = vld [vmem:[%s7 + $0xe0] sm:$0xff]
    %v4805 = vld [vmem:[%s7 + $0xe8] sm:$0xff]
    %v4806 = vld [vmem:[%s7 + $0xf0] sm:$0xff]
    %v4807 = vld [vmem:[%s7 + $0xf8] sm:$0xff]
    %v4808 = vld [vmem:[%s7 + $0x100] sm:$0xff]
    %v4809 = vld [vmem:[%s7 + $0x108] sm:$0xff]
    %v4810 = vld [vmem:[%s7 + $0x110] sm:$0xff]
    %v4811 = vld [vmem:[%s7 + $0x118] sm:$0xff]
    %v4812 = vld [vmem:[%s7 + $0x120] sm:$0xff]
    %v4813 = vld [vmem:[%s7 + $0x128] sm:$0xff]
    %v4814 = vld [vmem:[%s7 + $0x130] sm:$0xff]
    %v4815 = vld [vmem:[%s7 + $0x138] sm:$0xff]
    %v4816 = vld [vmem:[%s7 + $0x140] sm:$0xff]
    %v4817 = vld [vmem:[%s7 + $0x148] sm:$0xff]
    %v4818 = vld [vmem:[%s7 + $0x150] sm:$0xff]
    %v4819 = vld [vmem:[%s7 + $0x158] sm:$0xff]
    %v4820 = vld [vmem:[%s7 + $0x160] sm:$0xff]
    %v4821 = vld [vmem:[%s7 + $0x168] sm:$0xff]
    %v4822 = vld [vmem:[%s7 + $0x170] sm:$0xff]
    %v4823 = vld [vmem:[%s7 + $0x178] sm:$0xff]
    %v4824 = vld [vmem:[%s7 + $0x180] sm:$0xff]
    %v4825 = vld [vmem:[%s7 + $0x188] sm:$0xff]
    %v4826 = vld [vmem:[%s7 + $0x190] sm:$0xff]
    %v4827 = vld [vmem:[%s7 + $0x198] sm:$0xff]
    %v4828 = vld [vmem:[%s7 + $0x1a0] sm:$0xff]
    %v4829 = vld [vmem:[%s7 + $0x1a8] sm:$0xff]
    %v4830 = vld [vmem:[%s7 + $0x1b0] sm:$0xff]
    %v4831 = vld [vmem:[%s7 + $0x1b8] sm:$0xff]
    %v4832 = vld [vmem:[%s7 + $0x1c0] sm:$0xff]
    %v4833 = vld [vmem:[%s7 + $0x1c8] sm:$0xff]
    %v4834 = vld [vmem:[%s7 + $0x1d0] sm:$0xff]
    %v4835 = vld [vmem:[%s7 + $0x1d8] sm:$0xff]
    %v4836 = vld [vmem:[%s7 + $0x1e0] sm:$0xff]
    %v4837 = vld [vmem:[%s7 + $0x1e8] sm:$0xff]
    %v4838 = vld [vmem:[%s7 + $0x1f0] sm:$0xff]
    %v4839 = vld [vmem:[%s7 + $0x1f8] sm:$0xff]
    %v4840 = vadd.f32 %v4522, %v4776
    %v4841 = vadd.f32 %v4525, %v4777
    %v4842 = vadd.f32 %v4530, %v4778
    %v4843 = vadd.f32 %v4533, %v4779
    %v4844 = vadd.f32 %v4538, %v4780
    %v4845 = vadd.f32 %v4541, %v4781
    %v4846 = vadd.f32 %v4546, %v4782
    %v4847 = vadd.f32 %v4549, %v4783
    %v4848 = vadd.f32 %v4554, %v4784
    %v4849 = vadd.f32 %v4557, %v4785
    %v4850 = vadd.f32 %v4562, %v4786
    %v4851 = vadd.f32 %v4565, %v4787
    %v4852 = vadd.f32 %v4570, %v4788
    %v4853 = vadd.f32 %v4573, %v4789
    %v4854 = vadd.f32 %v4578, %v4790
    %v4855 = vadd.f32 %v4581, %v4791
    %v4856 = vadd.f32 %v4586, %v4792
    %v4857 = vadd.f32 %v4589, %v4793
    %v4858 = vadd.f32 %v4594, %v4794
    %v4859 = vadd.f32 %v4597, %v4795
    %v4860 = vadd.f32 %v4602, %v4796
    %v4861 = vadd.f32 %v4605, %v4797
    %v4862 = vadd.f32 %v4610, %v4798
    %v4863 = vadd.f32 %v4613, %v4799
    %v4864 = vadd.f32 %v4618, %v4800
    %v4865 = vadd.f32 %v4621, %v4801
    %v4866 = vadd.f32 %v4626, %v4802
    %v4867 = vadd.f32 %v4629, %v4803
    %v4868 = vadd.f32 %v4634, %v4804
    %v4869 = vadd.f32 %v4637, %v4805
    %v4870 = vadd.f32 %v4642, %v4806
    %v4871 = vadd.f32 %v4645, %v4807
    %v4872 = vadd.f32 %v4650, %v4808
    %v4873 = vadd.f32 %v4653, %v4809
    %v4874 = vadd.f32 %v4658, %v4810
    %v4875 = vadd.f32 %v4661, %v4811
    %v4876 = vadd.f32 %v4666, %v4812
    %v4877 = vadd.f32 %v4669, %v4813
    %v4878 = vadd.f32 %v4674, %v4814
    %v4879 = vadd.f32 %v4677, %v4815
    %v4880 = vadd.f32 %v4682, %v4816
    %v4881 = vadd.f32 %v4685, %v4817
    %v4882 = vadd.f32 %v4690, %v4818
    %v4883 = vadd.f32 %v4693, %v4819
    %v4884 = vadd.f32 %v4698, %v4820
    %v4885 = vadd.f32 %v4701, %v4821
    %v4886 = vadd.f32 %v4706, %v4822
    %v4887 = vadd.f32 %v4709, %v4823
    %v4888 = vadd.f32 %v4714, %v4824
    %v4889 = vadd.f32 %v4717, %v4825
    %v4890 = vadd.f32 %v4722, %v4826
    %v4891 = vadd.f32 %v4725, %v4827
    %v4892 = vadd.f32 %v4730, %v4828
    %v4893 = vadd.f32 %v4733, %v4829
    %v4894 = vadd.f32 %v4738, %v4830
    %v4895 = vadd.f32 %v4741, %v4831
    %v4896 = vadd.f32 %v4746, %v4832
    %v4897 = vadd.f32 %v4749, %v4833
    %v4898 = vadd.f32 %v4754, %v4834
    %v4899 = vadd.f32 %v4757, %v4835
    %v4900 = vadd.f32 %v4762, %v4836
    %v4901 = vadd.f32 %v4765, %v4837
    %v4902 = vadd.f32 %v4770, %v4838
    %v4903 = vadd.f32 %v4773, %v4839
    %4904 = vst.msk [vmem:[#allocation2] sm:$0xff] %vm4390, %v4840
    %4905 = vst.msk [vmem:[#allocation2 + $0x8] sm:$0xff] %vm4390, %v4841
    %4906 = vst.msk [vmem:[#allocation2 + $0x10] sm:$0xff] %vm4390, %v4842
    %4907 = vst.msk [vmem:[#allocation2 + $0x18] sm:$0xff] %vm4390, %v4843
    %4908 = vst.msk [vmem:[#allocation2 + $0x20] sm:$0xff] %vm4390, %v4844
    %4909 = vst.msk [vmem:[#allocation2 + $0x28] sm:$0xff] %vm4390, %v4845
    %4910 = vst.msk [vmem:[#allocation2 + $0x30] sm:$0xff] %vm4390, %v4846
    %4911 = vst.msk [vmem:[#allocation2 + $0x38] sm:$0xff] %vm4390, %v4847
    %4912 = vst.msk [vmem:[#allocation2 + $0x40] sm:$0xff] %vm4390, %v4848
    %4913 = vst.msk [vmem:[#allocation2 + $0x48] sm:$0xff] %vm4390, %v4849
    %4914 = vst.msk [vmem:[#allocation2 + $0x50] sm:$0xff] %vm4390, %v4850
    %4915 = vst.msk [vmem:[#allocation2 + $0x58] sm:$0xff] %vm4390, %v4851
    %4916 = vst.msk [vmem:[#allocation2 + $0x60] sm:$0xff] %vm4390, %v4852
    %4917 = vst.msk [vmem:[#allocation2 + $0x68] sm:$0xff] %vm4390, %v4853
    %4918 = vst.msk [vmem:[#allocation2 + $0x70] sm:$0xff] %vm4390, %v4854
    %4919 = vst.msk [vmem:[#allocation2 + $0x78] sm:$0xff] %vm4390, %v4855
    %4920 = vst.msk [vmem:[#allocation2 + $0x80] sm:$0xff] %vm4390, %v4856
    %4921 = vst.msk [vmem:[#allocation2 + $0x88] sm:$0xff] %vm4390, %v4857
    %4922 = vst.msk [vmem:[#allocation2 + $0x90] sm:$0xff] %vm4390, %v4858
    %4923 = vst.msk [vmem:[#allocation2 + $0x98] sm:$0xff] %vm4390, %v4859
    %4924 = vst.msk [vmem:[#allocation2 + $0xa0] sm:$0xff] %vm4390, %v4860
    %4925 = vst.msk [vmem:[#allocation2 + $0xa8] sm:$0xff] %vm4390, %v4861
    %4926 = vst.msk [vmem:[#allocation2 + $0xb0] sm:$0xff] %vm4390, %v4862
    %4927 = vst.msk [vmem:[#allocation2 + $0xb8] sm:$0xff] %vm4390, %v4863
    %4928 = vst.msk [vmem:[#allocation2 + $0xc0] sm:$0xff] %vm4390, %v4864
    %4929 = vst.msk [vmem:[#allocation2 + $0xc8] sm:$0xff] %vm4390, %v4865
    %4930 = vst.msk [vmem:[#allocation2 + $0xd0] sm:$0xff] %vm4390, %v4866
    %4931 = vst.msk [vmem:[#allocation2 + $0xd8] sm:$0xff] %vm4390, %v4867
    %4932 = vst.msk [vmem:[#allocation2 + $0xe0] sm:$0xff] %vm4390, %v4868
    %4933 = vst.msk [vmem:[#allocation2 + $0xe8] sm:$0xff] %vm4390, %v4869
    %4934 = vst.msk [vmem:[#allocation2 + $0xf0] sm:$0xff] %vm4390, %v4870
    %4935 = vst.msk [vmem:[#allocation2 + $0xf8] sm:$0xff] %vm4390, %v4871
    %4936 = vst.msk [vmem:[#allocation2 + $0x100] sm:$0xff] %vm4390, %v4872
    %4937 = vst.msk [vmem:[#allocation2 + $0x108] sm:$0xff] %vm4390, %v4873
    %4938 = vst.msk [vmem:[#allocation2 + $0x110] sm:$0xff] %vm4390, %v4874
    %4939 = vst.msk [vmem:[#allocation2 + $0x118] sm:$0xff] %vm4390, %v4875
    %4940 = vst.msk [vmem:[#allocation2 + $0x120] sm:$0xff] %vm4390, %v4876
    %4941 = vst.msk [vmem:[#allocation2 + $0x128] sm:$0xff] %vm4390, %v4877
    %4942 = vst.msk [vmem:[#allocation2 + $0x130] sm:$0xff] %vm4390, %v4878
    %4943 = vst.msk [vmem:[#allocation2 + $0x138] sm:$0xff] %vm4390, %v4879
    %4944 = vst.msk [vmem:[#allocation2 + $0x140] sm:$0xff] %vm4390, %v4880
    %4945 = vst.msk [vmem:[#allocation2 + $0x148] sm:$0xff] %vm4390, %v4881
    %4946 = vst.msk [vmem:[#allocation2 + $0x150] sm:$0xff] %vm4390, %v4882
    %4947 = vst.msk [vmem:[#allocation2 + $0x158] sm:$0xff] %vm4390, %v4883
    %4948 = vst.msk [vmem:[#allocation2 + $0x160] sm:$0xff] %vm4390, %v4884
    %4949 = vst.msk [vmem:[#allocation2 + $0x168] sm:$0xff] %vm4390, %v4885
    %4950 = vst.msk [vmem:[#allocation2 + $0x170] sm:$0xff] %vm4390, %v4886
    %4951 = vst.msk [vmem:[#allocation2 + $0x178] sm:$0xff] %vm4390, %v4887
    %4952 = vst.msk [vmem:[#allocation2 + $0x180] sm:$0xff] %vm4390, %v4888
    %4953 = vst.msk [vmem:[#allocation2 + $0x188] sm:$0xff] %vm4390, %v4889
    %4954 = vst.msk [vmem:[#allocation2 + $0x190] sm:$0xff] %vm4390, %v4890
    %4955 = vst.msk [vmem:[#allocation2 + $0x198] sm:$0xff] %vm4390, %v4891
    %4956 = vst.msk [vmem:[#allocation2 + $0x1a0] sm:$0xff] %vm4390, %v4892
    %4957 = vst.msk [vmem:[#allocation2 + $0x1a8] sm:$0xff] %vm4390, %v4893
    %4958 = vst.msk [vmem:[#allocation2 + $0x1b0] sm:$0xff] %vm4390, %v4894
    %4959 = vst.msk [vmem:[#allocation2 + $0x1b8] sm:$0xff] %vm4390, %v4895
    %4960 = vst.msk [vmem:[#allocation2 + $0x1c0] sm:$0xff] %vm4390, %v4896
    %4961 = vst.msk [vmem:[#allocation2 + $0x1c8] sm:$0xff] %vm4390, %v4897
    %4962 = vst.msk [vmem:[#allocation2 + $0x1d0] sm:$0xff] %vm4390, %v4898
    %4963 = vst.msk [vmem:[#allocation2 + $0x1d8] sm:$0xff] %vm4390, %v4899
    %4964 = vst.msk [vmem:[#allocation2 + $0x1e0] sm:$0xff] %vm4390, %v4900
    %4965 = vst.msk [vmem:[#allocation2 + $0x1e8] sm:$0xff] %vm4390, %v4901
    %4966 = vst.msk [vmem:[#allocation2 + $0x1f0] sm:$0xff] %vm4390, %v4902
    %4967 = vst.msk [vmem:[#allocation2 + $0x1f8] sm:$0xff] %vm4390, %v4903
    // Predicated region
    $region34: #{mobilev1_residual_forward.3} parent=1 // pred_check
      _
    $region35: #{mobilev1_residual_forward.3} parent=1 // pred_check_branch
      %4969 = sbr.rel (0) target = $region37
    $region36: #{mobilev1_residual_forward.3} parent=1 // pred_region
      %s4971 = ssub.s32 8192, 8192
      %4972 = vsyncadd [#allocation3], %s4971
      %s4973 = sshll.u32 [#allocation2], 4
      %s4974 = int_to_ptr.vmem [resolvable:$true] %s4973
      %4979 = dma.vmem_to_hbm [thread:$0]  %s4974, 8192, %s8, [#allocation3], 128, 128, 8
    $region37: #{mobilev1_residual_forward.3} parent=1 // pred_fallthru
      _
    // Predicated region
    $region38: #{mobilev1_residual_forward.3} parent=1 // pred_check
      _
    $region39: #{mobilev1_residual_forward.3} parent=1 // pred_check_branch
      %4981 = sbr.rel (0) target = $region41
    $region40: #{mobilev1_residual_forward.3} parent=1 // pred_region
      %4982 = dma.done [#allocation3], 8192
    $region41: #{mobilev1_residual_forward.3} parent=1 // pred_fallthru
      _
    %4983 = vsyncpa [#allocation3], 1

// kernel: mobilev1_residual_forward.2
$region0: #{mobilev1_residual_forward.2}
  #allocation0 [shape = 'u32[]', space=smem, size = 0x4, offset = 0x4, fixed_abs, tag = 'smem constant byte address 0x4 - core index']
  #allocation1 [shape = 'u32[144,128]{1,0:T(1,128)}', space=vmem, size = 0x12000, scoped, tag = 'internal scratch']
  %s0 = inlined_call_operand.vmem [shape: bf16[32,18,32], index: 0, kind: input, shape index: {}]
  %s1 = inlined_call_operand.vmem [shape: bf16[32,18,32], index: 1, kind: input, shape index: {}]
  %s2 = inlined_call_operand.vmem [shape: bf16[32,18,32], index: 2, kind: input, shape index: {}]
  %s3 = inlined_call_operand.vmem [shape: f32[9,1,1,32], index: 3, kind: input, shape index: {}]
  %s4 = inlined_call_operand.vmem [shape: f32[1,1,32], index: 4, kind: input, shape index: {}]
  %s5 = inlined_call_operand.vmem [shape: bf16[32,32], index: 5, kind: input, shape index: {}]
  %s6 = inlined_call_operand.vmem [shape: f32[1,32], index: 6, kind: input, shape index: {}]
  %s7 = inlined_call_operand.vmem [shape: bf16[32,16,32], index: 7, kind: output, shape index: {}]
  %s8 = sld [smem:[#allocation0]]
  $region38: #{mobilev1_residual_forward.2} parent=0
    _
  %s10 = ssub.s32 1, %s8
  %s11 = scalar_select 0, %s10, %s8
  // Predicated region
  $region2: #{mobilev1_residual_forward.2} parent=0 // pred_check
    _
  $region3: #{mobilev1_residual_forward.2} parent=0 // pred_check_branch
    %13 = sbr.rel (0) target = $region5
  $region4: #{mobilev1_residual_forward.2} parent=0 // pred_region
    _
  $region5: #{mobilev1_residual_forward.2} parent=0 // pred_fallthru
    _
  // Predicated region
  $region6: #{mobilev1_residual_forward.2} parent=0 // pred_check
    _
  $region7: #{mobilev1_residual_forward.2} parent=0 // pred_check_branch
    %15 = sbr.rel (0) target = $region9
  $region8: #{mobilev1_residual_forward.2} parent=0 // pred_region
    _
  $region9: #{mobilev1_residual_forward.2} parent=0 // pred_fallthru
    _
  // Predicated region
  $region10: #{mobilev1_residual_forward.2} parent=0 // pred_check
    _
  $region11: #{mobilev1_residual_forward.2} parent=0 // pred_check_branch
    %17 = sbr.rel (0) target = $region13
  $region12: #{mobilev1_residual_forward.2} parent=0 // pred_region
    _
  $region13: #{mobilev1_residual_forward.2} parent=0 // pred_fallthru
    _
  // Predicated region
  $region14: #{mobilev1_residual_forward.2} parent=0 // pred_check
    _
  $region15: #{mobilev1_residual_forward.2} parent=0 // pred_check_branch
    %19 = sbr.rel (0) target = $region17
  $region16: #{mobilev1_residual_forward.2} parent=0 // pred_region
    _
  $region17: #{mobilev1_residual_forward.2} parent=0 // pred_fallthru
    _
  // Predicated region
  $region18: #{mobilev1_residual_forward.2} parent=0 // pred_check
    _
  $region19: #{mobilev1_residual_forward.2} parent=0 // pred_check_branch
    %21 = sbr.rel (0) target = $region21
  $region20: #{mobilev1_residual_forward.2} parent=0 // pred_region
    _
  $region21: #{mobilev1_residual_forward.2} parent=0 // pred_fallthru
    _
  // Predicated region
  $region22: #{mobilev1_residual_forward.2} parent=0 // pred_check
    _
  $region23: #{mobilev1_residual_forward.2} parent=0 // pred_check_branch
    %23 = sbr.rel (0) target = $region25
  $region24: #{mobilev1_residual_forward.2} parent=0 // pred_region
    _
  $region25: #{mobilev1_residual_forward.2} parent=0 // pred_fallthru
    _
  // Predicated region
  $region26: #{mobilev1_residual_forward.2} parent=0 // pred_check
    _
  $region27: #{mobilev1_residual_forward.2} parent=0 // pred_check_branch
    %25 = sbr.rel (0) target = $region29
  $region28: #{mobilev1_residual_forward.2} parent=0 // pred_region
    _
  $region29: #{mobilev1_residual_forward.2} parent=0 // pred_fallthru
    _
  %v27 = vld [vmem:[%s0] sm:$0xf]
  %v28 = vld [vmem:[%s0 + $0x4] sm:$0xf]
  %v29 = vld [vmem:[%s0 + $0xc] sm:$0xf]
  %v30 = vld [vmem:[%s0 + $0x10] sm:$0xf]
  %v31 = vld [vmem:[%s0 + $0x18] sm:$0xf]
  %v32 = vld [vmem:[%s0 + $0x1c] sm:$0xf]
  %v33 = vld [vmem:[%s0 + $0x24] sm:$0xf]
  %v34 = vld [vmem:[%s0 + $0x28] sm:$0xf]
  %v35 = vld [vmem:[%s0 + $0x30] sm:$0xf]
  %v36 = vld [vmem:[%s0 + $0x34] sm:$0xf]
  %v37 = vld [vmem:[%s0 + $0x3c] sm:$0xf]
  %v38 = vld [vmem:[%s0 + $0x40] sm:$0xf]
  %v39 = vld [vmem:[%s0 + $0x48] sm:$0xf]
  %v40 = vld [vmem:[%s0 + $0x4c] sm:$0xf]
  %v41 = vld [vmem:[%s0 + $0x54] sm:$0xf]
  %v42 = vld [vmem:[%s0 + $0x58] sm:$0xf]
  %v43 = vld [vmem:[%s0 + $0x60] sm:$0xf]
  %v44 = vld [vmem:[%s0 + $0x64] sm:$0xf]
  %v45 = vld [vmem:[%s0 + $0x6c] sm:$0xf]
  %v46 = vld [vmem:[%s0 + $0x70] sm:$0xf]
  %v47 = vld [vmem:[%s0 + $0x78] sm:$0xf]
  %v48 = vld [vmem:[%s0 + $0x7c] sm:$0xf]
  %v49 = vld [vmem:[%s0 + $0x84] sm:$0xf]
  %v50 = vld [vmem:[%s0 + $0x88] sm:$0xf]
  %v51 = vld [vmem:[%s0 + $0x90] sm:$0xf]
  %v52 = vld [vmem:[%s0 + $0x94] sm:$0xf]
  %v53 = vld [vmem:[%s0 + $0x9c] sm:$0xf]
  %v54 = vld [vmem:[%s0 + $0xa0] sm:$0xf]
  %v55 = vld [vmem:[%s0 + $0xa8] sm:$0xf]
  %v56 = vld [vmem:[%s0 + $0xac] sm:$0xf]
  %v57 = vld [vmem:[%s0 + $0xb4] sm:$0xf]
  %v58 = vld [vmem:[%s0 + $0xb8] sm:$0xf]
  %v59 = vld [vmem:[%s0 + $0xc0] sm:$0xf]
  %v60 = vld [vmem:[%s0 + $0xc4] sm:$0xf]
  %v61 = vld [vmem:[%s0 + $0xcc] sm:$0xf]
  %v62 = vld [vmem:[%s0 + $0xd0] sm:$0xf]
  %v63 = vld [vmem:[%s0 + $0xd8] sm:$0xf]
  %v64 = vld [vmem:[%s0 + $0xdc] sm:$0xf]
  %v65 = vld [vmem:[%s0 + $0xe4] sm:$0xf]
  %v66 = vld [vmem:[%s0 + $0xe8] sm:$0xf]
  %v67 = vld [vmem:[%s0 + $0xf0] sm:$0xf]
  %v68 = vld [vmem:[%s0 + $0xf4] sm:$0xf]
  %v69 = vld [vmem:[%s0 + $0xfc] sm:$0xf]
  %v70 = vld [vmem:[%s0 + $0x100] sm:$0xf]
  %v71 = vld [vmem:[%s0 + $0x108] sm:$0xf]
  %v72 = vld [vmem:[%s0 + $0x10c] sm:$0xf]
  %v73 = vld [vmem:[%s0 + $0x114] sm:$0xf]
  %v74 = vld [vmem:[%s0 + $0x118] sm:$0xf]
  %v75 = vld [vmem:[%s0 + $0x120] sm:$0xf]
  %v76 = vld [vmem:[%s0 + $0x124] sm:$0xf]
  %v77 = vld [vmem:[%s0 + $0x12c] sm:$0xf]
  %v78 = vld [vmem:[%s0 + $0x130] sm:$0xf]
  %v79 = vld [vmem:[%s0 + $0x138] sm:$0xf]
  %v80 = vld [vmem:[%s0 + $0x13c] sm:$0xf]
  %v81 = vld [vmem:[%s0 + $0x144] sm:$0xf]
  %v82 = vld [vmem:[%s0 + $0x148] sm:$0xf]
  %v83 = vld [vmem:[%s0 + $0x150] sm:$0xf]
  %v84 = vld [vmem:[%s0 + $0x154] sm:$0xf]
  %v85 = vld [vmem:[%s0 + $0x15c] sm:$0xf]
  %v86 = vld [vmem:[%s0 + $0x160] sm:$0xf]
  %v87 = vld [vmem:[%s0 + $0x168] sm:$0xf]
  %v88 = vld [vmem:[%s0 + $0x16c] sm:$0xf]
  %v89 = vld [vmem:[%s0 + $0x174] sm:$0xf]
  %v90 = vld [vmem:[%s0 + $0x178] sm:$0xf]
  %v91 = vunpack.c.l.bf16 %v27
  %v92 = vunpack.c.l.bf16 %v28
  %v93 = vunpack.c.l.bf16 %v29
  %v94 = vunpack.c.l.bf16 %v30
  %v95 = vunpack.c.l.bf16 %v31
  %v96 = vunpack.c.l.bf16 %v32
  %v97 = vunpack.c.l.bf16 %v33
  %v98 = vunpack.c.l.bf16 %v34
  %v99 = vunpack.c.l.bf16 %v35
  %v100 = vunpack.c.l.bf16 %v36
  %v101 = vunpack.c.l.bf16 %v37
  %v102 = vunpack.c.l.bf16 %v38
  %v103 = vunpack.c.l.bf16 %v39
  %v104 = vunpack.c.l.bf16 %v40
  %v105 = vunpack.c.l.bf16 %v41
  %v106 = vunpack.c.l.bf16 %v42
  %v107 = vunpack.c.l.bf16 %v43
  %v108 = vunpack.c.l.bf16 %v44
  %v109 = vunpack.c.l.bf16 %v45
  %v110 = vunpack.c.l.bf16 %v46
  %v111 = vunpack.c.l.bf16 %v47
  %v112 = vunpack.c.l.bf16 %v48
  %v113 = vunpack.c.l.bf16 %v49
  %v114 = vunpack.c.l.bf16 %v50
  %v115 = vunpack.c.l.bf16 %v51
  %v116 = vunpack.c.l.bf16 %v52
  %v117 = vunpack.c.l.bf16 %v53
  %v118 = vunpack.c.l.bf16 %v54
  %v119 = vunpack.c.l.bf16 %v55
  %v120 = vunpack.c.l.bf16 %v56
  %v121 = vunpack.c.l.bf16 %v57
  %v122 = vunpack.c.l.bf16 %v58
  %v123 = vunpack.c.l.bf16 %v59
  %v124 = vunpack.c.l.bf16 %v60
  %v125 = vunpack.c.l.bf16 %v61
  %v126 = vunpack.c.l.bf16 %v62
  %v127 = vunpack.c.l.bf16 %v63
  %v128 = vunpack.c.l.bf16 %v64
  %v129 = vunpack.c.l.bf16 %v65
  %v130 = vunpack.c.l.bf16 %v66
  %v131 = vunpack.c.l.bf16 %v67
  %v132 = vunpack.c.l.bf16 %v68
  %v133 = vunpack.c.l.bf16 %v69
  %v134 = vunpack.c.l.bf16 %v70
  %v135 = vunpack.c.l.bf16 %v71
  %v136 = vunpack.c.l.bf16 %v72
  %v137 = vunpack.c.l.bf16 %v73
  %v138 = vunpack.c.l.bf16 %v74
  %v139 = vunpack.c.l.bf16 %v75
  %v140 = vunpack.c.l.bf16 %v76
  %v141 = vunpack.c.l.bf16 %v77
  %v142 = vunpack.c.l.bf16 %v78
  %v143 = vunpack.c.l.bf16 %v79
  %v144 = vunpack.c.l.bf16 %v80
  %v145 = vunpack.c.l.bf16 %v81
  %v146 = vunpack.c.l.bf16 %v82
  %v147 = vunpack.c.l.bf16 %v83
  %v148 = vunpack.c.l.bf16 %v84
  %v149 = vunpack.c.l.bf16 %v85
  %v150 = vunpack.c.l.bf16 %v86
  %v151 = vunpack.c.l.bf16 %v87
  %v152 = vunpack.c.l.bf16 %v88
  %v153 = vunpack.c.l.bf16 %v89
  %v154 = vunpack.c.l.bf16 %v90
  %v155 = vld [vmem:[%s3] sm:$0x1]
  %v157 = vlaneseq
  %v158 = vshrl.u32 %v157, 7
  %v159 = vsub.s32 0, %v158
  %v160 = vrot.slane %v155, %v159
  %v162 = vmul.f32 %v91, %v160
  %v163 = vmul.f32 %v92, %v160
  %v164 = vmul.f32 %v93, %v160
  %v165 = vmul.f32 %v94, %v160
  %v166 = vmul.f32 %v95, %v160
  %v167 = vmul.f32 %v96, %v160
  %v168 = vmul.f32 %v97, %v160
  %v169 = vmul.f32 %v98, %v160
  %v170 = vmul.f32 %v99, %v160
  %v171 = vmul.f32 %v100, %v160
  %v172 = vmul.f32 %v101, %v160
  %v173 = vmul.f32 %v102, %v160
  %v174 = vmul.f32 %v103, %v160
  %v175 = vmul.f32 %v104, %v160
  %v176 = vmul.f32 %v105, %v160
  %v177 = vmul.f32 %v106, %v160
  %v178 = vmul.f32 %v107, %v160
  %v179 = vmul.f32 %v108, %v160
  %v180 = vmul.f32 %v109, %v160
  %v181 = vmul.f32 %v110, %v160
  %v182 = vmul.f32 %v111, %v160
  %v183 = vmul.f32 %v112, %v160
  %v184 = vmul.f32 %v113, %v160
  %v185 = vmul.f32 %v114, %v160
  %v186 = vmul.f32 %v115, %v160
  %v187 = vmul.f32 %v116, %v160
  %v188 = vmul.f32 %v117, %v160
  %v189 = vmul.f32 %v118, %v160
  %v190 = vmul.f32 %v119, %v160
  %v191 = vmul.f32 %v120, %v160
  %v192 = vmul.f32 %v121, %v160
  %v193 = vmul.f32 %v122, %v160
  %v194 = vmul.f32 %v123, %v160
  %v195 = vmul.f32 %v124, %v160
  %v196 = vmul.f32 %v125, %v160
  %v197 = vmul.f32 %v126, %v160
  %v198 = vmul.f32 %v127, %v160
  %v199 = vmul.f32 %v128, %v160
  %v200 = vmul.f32 %v129, %v160
  %v201 = vmul.f32 %v130, %v160
  %v202 = vmul.f32 %v131, %v160
  %v203 = vmul.f32 %v132, %v160
  %v204 = vmul.f32 %v133, %v160
  %v205 = vmul.f32 %v134, %v160
  %v206 = vmul.f32 %v135, %v160
  %v207 = vmul.f32 %v136, %v160
  %v208 = vmul.f32 %v137, %v160
  %v209 = vmul.f32 %v138, %v160
  %v210 = vmul.f32 %v139, %v160
  %v211 = vmul.f32 %v140, %v160
  %v212 = vmul.f32 %v141, %v160
  %v213 = vmul.f32 %v142, %v160
  %v214 = vmul.f32 %v143, %v160
  %v215 = vmul.f32 %v144, %v160
  %v216 = vmul.f32 %v145, %v160
  %v217 = vmul.f32 %v146, %v160
  %v218 = vmul.f32 %v147, %v160
  %v219 = vmul.f32 %v148, %v160
  %v220 = vmul.f32 %v149, %v160
  %v221 = vmul.f32 %v150, %v160
  %v222 = vmul.f32 %v151, %v160
  %v223 = vmul.f32 %v152, %v160
  %v224 = vmul.f32 %v153, %v160
  %v225 = vmul.f32 %v154, %v160
  %v226 = vadd.f32 %v162, 0.0
  %v227 = vadd.f32 %v163, 0.0
  %v228 = vadd.f32 %v164, 0.0
  %v229 = vadd.f32 %v165, 0.0
  %v230 = vadd.f32 %v166, 0.0
  %v231 = vadd.f32 %v167, 0.0
  %v232 = vadd.f32 %v168, 0.0
  %v233 = vadd.f32 %v169, 0.0
  %v234 = vadd.f32 %v170, 0.0
  %v235 = vadd.f32 %v171, 0.0
  %v236 = vadd.f32 %v172, 0.0
  %v237 = vadd.f32 %v173, 0.0
  %v238 = vadd.f32 %v174, 0.0
  %v239 = vadd.f32 %v175, 0.0
  %v240 = vadd.f32 %v176, 0.0
  %v241 = vadd.f32 %v177, 0.0
  %v242 = vadd.f32 %v178, 0.0
  %v243 = vadd.f32 %v179, 0.0
  %v244 = vadd.f32 %v180, 0.0
  %v245 = vadd.f32 %v181, 0.0
  %v246 = vadd.f32 %v182, 0.0
  %v247 = vadd.f32 %v183, 0.0
  %v248 = vadd.f32 %v184, 0.0
  %v249 = vadd.f32 %v185, 0.0
  %v250 = vadd.f32 %v186, 0.0
  %v251 = vadd.f32 %v187, 0.0
  %v252 = vadd.f32 %v188, 0.0
  %v253 = vadd.f32 %v189, 0.0
  %v254 = vadd.f32 %v190, 0.0
  %v255 = vadd.f32 %v191, 0.0
  %v256 = vadd.f32 %v192, 0.0
  %v257 = vadd.f32 %v193, 0.0
  %v258 = vadd.f32 %v194, 0.0
  %v259 = vadd.f32 %v195, 0.0
  %v260 = vadd.f32 %v196, 0.0
  %v261 = vadd.f32 %v197, 0.0
  %v262 = vadd.f32 %v198, 0.0
  %v263 = vadd.f32 %v199, 0.0
  %v264 = vadd.f32 %v200, 0.0
  %v265 = vadd.f32 %v201, 0.0
  %v266 = vadd.f32 %v202, 0.0
  %v267 = vadd.f32 %v203, 0.0
  %v268 = vadd.f32 %v204, 0.0
  %v269 = vadd.f32 %v205, 0.0
  %v270 = vadd.f32 %v206, 0.0
  %v271 = vadd.f32 %v207, 0.0
  %v272 = vadd.f32 %v208, 0.0
  %v273 = vadd.f32 %v209, 0.0
  %v274 = vadd.f32 %v210, 0.0
  %v275 = vadd.f32 %v211, 0.0
  %v276 = vadd.f32 %v212, 0.0
  %v277 = vadd.f32 %v213, 0.0
  %v278 = vadd.f32 %v214, 0.0
  %v279 = vadd.f32 %v215, 0.0
  %v280 = vadd.f32 %v216, 0.0
  %v281 = vadd.f32 %v217, 0.0
  %v282 = vadd.f32 %v218, 0.0
  %v283 = vadd.f32 %v219, 0.0
  %v284 = vadd.f32 %v220, 0.0
  %v285 = vadd.f32 %v221, 0.0
  %v286 = vadd.f32 %v222, 0.0
  %v287 = vadd.f32 %v223, 0.0
  %v288 = vadd.f32 %v224, 0.0
  %v289 = vadd.f32 %v225, 0.0
  %v290 = vld [vmem:[%s0 + $0x8] sm:$0x1]
  %v291 = vld [vmem:[%s0 + $0x14] sm:$0x1]
  %v292 = vld [vmem:[%s0 + $0x20] sm:$0x1]
  %v293 = vld [vmem:[%s0 + $0x2c] sm:$0x1]
  %v294 = vld [vmem:[%s0 + $0x38] sm:$0x1]
  %v295 = vld [vmem:[%s0 + $0x44] sm:$0x1]
  %v296 = vld [vmem:[%s0 + $0x50] sm:$0x1]
  %v297 = vld [vmem:[%s0 + $0x5c] sm:$0x1]
  %v298 = vld [vmem:[%s0 + $0x68] sm:$0x1]
  %v299 = vld [vmem:[%s0 + $0x74] sm:$0x1]
  %v300 = vld [vmem:[%s0 + $0x80] sm:$0x1]
  %v301 = vld [vmem:[%s0 + $0x8c] sm:$0x1]
  %v302 = vld [vmem:[%s0 + $0x98] sm:$0x1]
  %v303 = vld [vmem:[%s0 + $0xa4] sm:$0x1]
  %v304 = vld [vmem:[%s0 + $0xb0] sm:$0x1]
  %v305 = vld [vmem:[%s0 + $0xbc] sm:$0x1]
  %v306 = vld [vmem:[%s0 + $0xc8] sm:$0x1]
  %v307 = vld [vmem:[%s0 + $0xd4] sm:$0x1]
  %v308 = vld [vmem:[%s0 + $0xe0] sm:$0x1]
  %v309 = vld [vmem:[%s0 + $0xec] sm:$0x1]
  %v310 = vld [vmem:[%s0 + $0xf8] sm:$0x1]
  %v311 = vld [vmem:[%s0 + $0x104] sm:$0x1]
  %v312 = vld [vmem:[%s0 + $0x110] sm:$0x1]
  %v313 = vld [vmem:[%s0 + $0x11c] sm:$0x1]
  %v314 = vld [vmem:[%s0 + $0x128] sm:$0x1]
  %v315 = vld [vmem:[%s0 + $0x134] sm:$0x1]
  %v316 = vld [vmem:[%s0 + $0x140] sm:$0x1]
  %v317 = vld [vmem:[%s0 + $0x14c] sm:$0x1]
  %v318 = vld [vmem:[%s0 + $0x158] sm:$0x1]
  %v319 = vld [vmem:[%s0 + $0x164] sm:$0x1]
  %v320 = vld [vmem:[%s0 + $0x170] sm:$0x1]
  %v321 = vld [vmem:[%s0 + $0x17c] sm:$0x1]
  %v322 = vunpack.c.l.bf16 %v290
  %v323 = vunpack.c.l.bf16 %v291
  %v324 = vunpack.c.l.bf16 %v292
  %v325 = vunpack.c.l.bf16 %v293
  %v326 = vunpack.c.l.bf16 %v294
  %v327 = vunpack.c.l.bf16 %v295
  %v328 = vunpack.c.l.bf16 %v296
  %v329 = vunpack.c.l.bf16 %v297
  %v330 = vunpack.c.l.bf16 %v298
  %v331 = vunpack.c.l.bf16 %v299
  %v332 = vunpack.c.l.bf16 %v300
  %v333 = vunpack.c.l.bf16 %v301
  %v334 = vunpack.c.l.bf16 %v302
  %v335 = vunpack.c.l.bf16 %v303
  %v336 = vunpack.c.l.bf16 %v304
  %v337 = vunpack.c.l.bf16 %v305
  %v338 = vunpack.c.l.bf16 %v306
  %v339 = vunpack.c.l.bf16 %v307
  %v340 = vunpack.c.l.bf16 %v308
  %v341 = vunpack.c.l.bf16 %v309
  %v342 = vunpack.c.l.bf16 %v310
  %v343 = vunpack.c.l.bf16 %v311
  %v344 = vunpack.c.l.bf16 %v312
  %v345 = vunpack.c.l.bf16 %v313
  %v346 = vunpack.c.l.bf16 %v314
  %v347 = vunpack.c.l.bf16 %v315
  %v348 = vunpack.c.l.bf16 %v316
  %v349 = vunpack.c.l.bf16 %v317
  %v350 = vunpack.c.l.bf16 %v318
  %v351 = vunpack.c.l.bf16 %v319
  %v352 = vunpack.c.l.bf16 %v320
  %v353 = vunpack.c.l.bf16 %v321
  %s354 = scalar_lea.vmem %s3, 1
  %v355 = vld [vmem:[%s354] sm:$0x1]
  %v357 = vlaneseq
  %v358 = vshrl.u32 %v357, 7
  %v359 = vsub.s32 0, %v358
  %v360 = vrot.slane %v355, %v359
  %v362 = vmul.f32 %v91, %v360
  %v363 = vmul.f32 %v92, %v360
  %v364 = vmul.f32 %v322, %v360
  %v365 = vmul.f32 %v93, %v360
  %v366 = vmul.f32 %v94, %v360
  %v367 = vmul.f32 %v323, %v360
  %v368 = vmul.f32 %v95, %v360
  %v369 = vmul.f32 %v96, %v360
  %v370 = vmul.f32 %v324, %v360
  %v371 = vmul.f32 %v97, %v360
  %v372 = vmul.f32 %v98, %v360
  %v373 = vmul.f32 %v325, %v360
  %v374 = vmul.f32 %v99, %v360
  %v375 = vmul.f32 %v100, %v360
  %v376 = vmul.f32 %v326, %v360
  %v377 = vmul.f32 %v101, %v360
  %v378 = vmul.f32 %v102, %v360
  %v379 = vmul.f32 %v327, %v360
  %v380 = vmul.f32 %v103, %v360
  %v381 = vmul.f32 %v104, %v360
  %v382 = vmul.f32 %v328, %v360
  %v383 = vmul.f32 %v105, %v360
  %v384 = vmul.f32 %v106, %v360
  %v385 = vmul.f32 %v329, %v360
  %v386 = vmul.f32 %v107, %v360
  %v387 = vmul.f32 %v108, %v360
  %v388 = vmul.f32 %v330, %v360
  %v389 = vmul.f32 %v109, %v360
  %v390 = vmul.f32 %v110, %v360
  %v391 = vmul.f32 %v331, %v360
  %v392 = vmul.f32 %v111, %v360
  %v393 = vmul.f32 %v112, %v360
  %v394 = vmul.f32 %v332, %v360
  %v395 = vmul.f32 %v113, %v360
  %v396 = vmul.f32 %v114, %v360
  %v397 = vmul.f32 %v333, %v360
  %v398 = vmul.f32 %v115, %v360
  %v399 = vmul.f32 %v116, %v360
  %v400 = vmul.f32 %v334, %v360
  %v401 = vmul.f32 %v117, %v360
  %v402 = vmul.f32 %v118, %v360
  %v403 = vmul.f32 %v335, %v360
  %v404 = vmul.f32 %v119, %v360
  %v405 = vmul.f32 %v120, %v360
  %v406 = vmul.f32 %v336, %v360
  %v407 = vmul.f32 %v121, %v360
  %v408 = vmul.f32 %v122, %v360
  %v409 = vmul.f32 %v337, %v360
  %v410 = vmul.f32 %v123, %v360
  %v411 = vmul.f32 %v124, %v360
  %v412 = vmul.f32 %v338, %v360
  %v413 = vmul.f32 %v125, %v360
  %v414 = vmul.f32 %v126, %v360
  %v415 = vmul.f32 %v339, %v360
  %v416 = vmul.f32 %v127, %v360
  %v417 = vmul.f32 %v128, %v360
  %v418 = vmul.f32 %v340, %v360
  %v419 = vmul.f32 %v129, %v360
  %v420 = vmul.f32 %v130, %v360
  %v421 = vmul.f32 %v341, %v360
  %v422 = vmul.f32 %v131, %v360
  %v423 = vmul.f32 %v132, %v360
  %v424 = vmul.f32 %v342, %v360
  %v425 = vmul.f32 %v133, %v360
  %v426 = vmul.f32 %v134, %v360
  %v427 = vmul.f32 %v343, %v360
  %v428 = vmul.f32 %v135, %v360
  %v429 = vmul.f32 %v136, %v360
  %v430 = vmul.f32 %v344, %v360
  %v431 = vmul.f32 %v137, %v360
  %v432 = vmul.f32 %v138, %v360
  %v433 = vmul.f32 %v345, %v360
  %v434 = vmul.f32 %v139, %v360
  %v435 = vmul.f32 %v140, %v360
  %v436 = vmul.f32 %v346, %v360
  %v437 = vmul.f32 %v141, %v360
  %v438 = vmul.f32 %v142, %v360
  %v439 = vmul.f32 %v347, %v360
  %v440 = vmul.f32 %v143, %v360
  %v441 = vmul.f32 %v144, %v360
  %v442 = vmul.f32 %v348, %v360
  %v443 = vmul.f32 %v145, %v360
  %v444 = vmul.f32 %v146, %v360
  %v445 = vmul.f32 %v349, %v360
  %v446 = vmul.f32 %v147, %v360
  %v447 = vmul.f32 %v148, %v360
  %v448 = vmul.f32 %v350, %v360
  %v449 = vmul.f32 %v149, %v360
  %v450 = vmul.f32 %v150, %v360
  %v451 = vmul.f32 %v351, %v360
  %v452 = vmul.f32 %v151, %v360
  %v453 = vmul.f32 %v152, %v360
  %v454 = vmul.f32 %v352, %v360
  %v455 = vmul.f32 %v153, %v360
  %v456 = vmul.f32 %v154, %v360
  %v457 = vmul.f32 %v353, %v360
  %vm554 = vcmask 1046528
  %v555 = vrot.slane %v362, 1
  %v556 = vrot.slane %v363, 1
  %v557 = vsel %vm554, %v555, %v556
  %v558 = vrot.slane %v364, 1
  %v559 = vsel %vm554, %v556, %v558
  %v560 = vrot.slane %v365, 1
  %v561 = vrot.slane %v366, 1
  %v562 = vsel %vm554, %v560, %v561
  %v563 = vrot.slane %v367, 1
  %v564 = vsel %vm554, %v561, %v563
  %v565 = vrot.slane %v368, 1
  %v566 = vrot.slane %v369, 1
  %v567 = vsel %vm554, %v565, %v566
  %v568 = vrot.slane %v370, 1
  %v569 = vsel %vm554, %v566, %v568
  %v570 = vrot.slane %v371, 1
  %v571 = vrot.slane %v372, 1
  %v572 = vsel %vm554, %v570, %v571
  %v573 = vrot.slane %v373, 1
  %v574 = vsel %vm554, %v571, %v573
  %v575 = vrot.slane %v374, 1
  %v576 = vrot.slane %v375, 1
  %v577 = vsel %vm554, %v575, %v576
  %v578 = vrot.slane %v376, 1
  %v579 = vsel %vm554, %v576, %v578
  %v580 = vrot.slane %v377, 1
  %v581 = vrot.slane %v378, 1
  %v582 = vsel %vm554, %v580, %v581
  %v583 = vrot.slane %v379, 1
  %v584 = vsel %vm554, %v581, %v583
  %v585 = vrot.slane %v380, 1
  %v586 = vrot.slane %v381, 1
  %v587 = vsel %vm554, %v585, %v586
  %v588 = vrot.slane %v382, 1
  %v589 = vsel %vm554, %v586, %v588
  %v590 = vrot.slane %v383, 1
  %v591 = vrot.slane %v384, 1
  %v592 = vsel %vm554, %v590, %v591
  %v593 = vrot.slane %v385, 1
  %v594 = vsel %vm554, %v591, %v593
  %v595 = vrot.slane %v386, 1
  %v596 = vrot.slane %v387, 1
  %v597 = vsel %vm554, %v595, %v596
  %v598 = vrot.slane %v388, 1
  %v599 = vsel %vm554, %v596, %v598
  %v600 = vrot.slane %v389, 1
  %v601 = vrot.slane %v390, 1
  %v602 = vsel %vm554, %v600, %v601
  %v603 = vrot.slane %v391, 1
  %v604 = vsel %vm554, %v601, %v603
  %v605 = vrot.slane %v392, 1
  %v606 = vrot.slane %v393, 1
  %v607 = vsel %vm554, %v605, %v606
  %v608 = vrot.slane %v394, 1
  %v609 = vsel %vm554, %v606, %v608
  %v610 = vrot.slane %v395, 1
  %v611 = vrot.slane %v396, 1
  %v612 = vsel %vm554, %v610, %v611
  %v613 = vrot.slane %v397, 1
  %v614 = vsel %vm554, %v611, %v613
  %v615 = vrot.slane %v398, 1
  %v616 = vrot.slane %v399, 1
  %v617 = vsel %vm554, %v615, %v616
  %v618 = vrot.slane %v400, 1
  %v619 = vsel %vm554, %v616, %v618
  %v620 = vrot.slane %v401, 1
  %v621 = vrot.slane %v402, 1
  %v622 = vsel %vm554, %v620, %v621
  %v623 = vrot.slane %v403, 1
  %v624 = vsel %vm554, %v621, %v623
  %v625 = vrot.slane %v404, 1
  %v626 = vrot.slane %v405, 1
  %v627 = vsel %vm554, %v625, %v626
  %v628 = vrot.slane %v406, 1
  %v629 = vsel %vm554, %v626, %v628
  %v630 = vrot.slane %v407, 1
  %v631 = vrot.slane %v408, 1
  %v632 = vsel %vm554, %v630, %v631
  %v633 = vrot.slane %v409, 1
  %v634 = vsel %vm554, %v631, %v633
  %v635 = vrot.slane %v410, 1
  %v636 = vrot.slane %v411, 1
  %v637 = vsel %vm554, %v635, %v636
  %v638 = vrot.slane %v412, 1
  %v639 = vsel %vm554, %v636, %v638
  %v640 = vrot.slane %v413, 1
  %v641 = vrot.slane %v414, 1
  %v642 = vsel %vm554, %v640, %v641
  %v643 = vrot.slane %v415, 1
  %v644 = vsel %vm554, %v641, %v643
  %v645 = vrot.slane %v416, 1
  %v646 = vrot.slane %v417, 1
  %v647 = vsel %vm554, %v645, %v646
  %v648 = vrot.slane %v418, 1
  %v649 = vsel %vm554, %v646, %v648
  %v650 = vrot.slane %v419, 1
  %v651 = vrot.slane %v420, 1
  %v652 = vsel %vm554, %v650, %v651
  %v653 = vrot.slane %v421, 1
  %v654 = vsel %vm554, %v651, %v653
  %v655 = vrot.slane %v422, 1
  %v656 = vrot.slane %v423, 1
  %v657 = vsel %vm554, %v655, %v656
  %v658 = vrot.slane %v424, 1
  %v659 = vsel %vm554, %v656, %v658
  %v660 = vrot.slane %v425, 1
  %v661 = vrot.slane %v426, 1
  %v662 = vsel %vm554, %v660, %v661
  %v663 = vrot.slane %v427, 1
  %v664 = vsel %vm554, %v661, %v663
  %v665 = vrot.slane %v428, 1
  %v666 = vrot.slane %v429, 1
  %v667 = vsel %vm554, %v665, %v666
  %v668 = vrot.slane %v430, 1
  %v669 = vsel %vm554, %v666, %v668
  %v670 = vrot.slane %v431, 1
  %v671 = vrot.slane %v432, 1
  %v672 = vsel %vm554, %v670, %v671
  %v673 = vrot.slane %v433, 1
  %v674 = vsel %vm554, %v671, %v673
  %v675 = vrot.slane %v434, 1
  %v676 = vrot.slane %v435, 1
  %v677 = vsel %vm554, %v675, %v676
  %v678 = vrot.slane %v436, 1
  %v679 = vsel %vm554, %v676, %v678
  %v680 = vrot.slane %v437, 1
  %v681 = vrot.slane %v438, 1
  %v682 = vsel %vm554, %v680, %v681
  %v683 = vrot.slane %v439, 1
  %v684 = vsel %vm554, %v681, %v683
  %v685 = vrot.slane %v440, 1
  %v686 = vrot.slane %v441, 1
  %v687 = vsel %vm554, %v685, %v686
  %v688 = vrot.slane %v442, 1
  %v689 = vsel %vm554, %v686, %v688
  %v690 = vrot.slane %v443, 1
  %v691 = vrot.slane %v444, 1
  %v692 = vsel %vm554, %v690, %v691
  %v693 = vrot.slane %v445, 1
  %v694 = vsel %vm554, %v691, %v693
  %v695 = vrot.slane %v446, 1
  %v696 = vrot.slane %v447, 1
  %v697 = vsel %vm554, %v695, %v696
  %v698 = vrot.slane %v448, 1
  %v699 = vsel %vm554, %v696, %v698
  %v700 = vrot.slane %v449, 1
  %v701 = vrot.slane %v450, 1
  %v702 = vsel %vm554, %v700, %v701
  %v703 = vrot.slane %v451, 1
  %v704 = vsel %vm554, %v701, %v703
  %v705 = vrot.slane %v452, 1
  %v706 = vrot.slane %v453, 1
  %v707 = vsel %vm554, %v705, %v706
  %v708 = vrot.slane %v454, 1
  %v709 = vsel %vm554, %v706, %v708
  %v710 = vrot.slane %v455, 1
  %v711 = vrot.slane %v456, 1
  %v712 = vsel %vm554, %v710, %v711
  %v713 = vrot.slane %v457, 1
  %v714 = vsel %vm554, %v711, %v713
  %v779 = vadd.f32 %v226, %v557
  %v780 = vadd.f32 %v227, %v559
  %v781 = vadd.f32 %v228, %v562
  %v782 = vadd.f32 %v229, %v564
  %v783 = vadd.f32 %v230, %v567
  %v784 = vadd.f32 %v231, %v569
  %v785 = vadd.f32 %v232, %v572
  %v786 = vadd.f32 %v233, %v574
  %v787 = vadd.f32 %v234, %v577
  %v788 = vadd.f32 %v235, %v579
  %v789 = vadd.f32 %v236, %v582
  %v790 = vadd.f32 %v237, %v584
  %v791 = vadd.f32 %v238, %v587
  %v792 = vadd.f32 %v239, %v589
  %v793 = vadd.f32 %v240, %v592
  %v794 = vadd.f32 %v241, %v594
  %v795 = vadd.f32 %v242, %v597
  %v796 = vadd.f32 %v243, %v599
  %v797 = vadd.f32 %v244, %v602
  %v798 = vadd.f32 %v245, %v604
  %v799 = vadd.f32 %v246, %v607
  %v800 = vadd.f32 %v247, %v609
  %v801 = vadd.f32 %v248, %v612
  %v802 = vadd.f32 %v249, %v614
  %v803 = vadd.f32 %v250, %v617
  %v804 = vadd.f32 %v251, %v619
  %v805 = vadd.f32 %v252, %v622
  %v806 = vadd.f32 %v253, %v624
  %v807 = vadd.f32 %v254, %v627
  %v808 = vadd.f32 %v255, %v629
  %v809 = vadd.f32 %v256, %v632
  %v810 = vadd.f32 %v257, %v634
  %v811 = vadd.f32 %v258, %v637
  %v812 = vadd.f32 %v259, %v639
  %v813 = vadd.f32 %v260, %v642
  %v814 = vadd.f32 %v261, %v644
  %v815 = vadd.f32 %v262, %v647
  %v816 = vadd.f32 %v263, %v649
  %v817 = vadd.f32 %v264, %v652
  %v818 = vadd.f32 %v265, %v654
  %v819 = vadd.f32 %v266, %v657
  %v820 = vadd.f32 %v267, %v659
  %v821 = vadd.f32 %v268, %v662
  %v822 = vadd.f32 %v269, %v664
  %v823 = vadd.f32 %v270, %v667
  %v824 = vadd.f32 %v271, %v669
  %v825 = vadd.f32 %v272, %v672
  %v826 = vadd.f32 %v273, %v674
  %v827 = vadd.f32 %v274, %v677
  %v828 = vadd.f32 %v275, %v679
  %v829 = vadd.f32 %v276, %v682
  %v830 = vadd.f32 %v277, %v684
  %v831 = vadd.f32 %v278, %v687
  %v832 = vadd.f32 %v279, %v689
  %v833 = vadd.f32 %v280, %v692
  %v834 = vadd.f32 %v281, %v694
  %v835 = vadd.f32 %v282, %v697
  %v836 = vadd.f32 %v283, %v699
  %v837 = vadd.f32 %v284, %v702
  %v838 = vadd.f32 %v285, %v704
  %v839 = vadd.f32 %v286, %v707
  %v840 = vadd.f32 %v287, %v709
  %v841 = vadd.f32 %v288, %v712
  %v842 = vadd.f32 %v289, %v714
  %v843 = vld [vmem:[%s0] sm:$0xe]
  %v844 = vld [vmem:[%s0 + $0xc] sm:$0xe]
  %v845 = vld [vmem:[%s0 + $0x18] sm:$0xe]
  %v846 = vld [vmem:[%s0 + $0x24] sm:$0xe]
  %v847 = vld [vmem:[%s0 + $0x30] sm:$0xe]
  %v848 = vld [vmem:[%s0 + $0x3c] sm:$0xe]
  %v849 = vld [vmem:[%s0 + $0x48] sm:$0xe]
  %v850 = vld [vmem:[%s0 + $0x54] sm:$0xe]
  %v851 = vld [vmem:[%s0 + $0x60] sm:$0xe]
  %v852 = vld [vmem:[%s0 + $0x6c] sm:$0xe]
  %v853 = vld [vmem:[%s0 + $0x78] sm:$0xe]
  %v854 = vld [vmem:[%s0 + $0x84] sm:$0xe]
  %v855 = vld [vmem:[%s0 + $0x90] sm:$0xe]
  %v856 = vld [vmem:[%s0 + $0x9c] sm:$0xe]
  %v857 = vld [vmem:[%s0 + $0xa8] sm:$0xe]
  %v858 = vld [vmem:[%s0 + $0xb4] sm:$0xe]
  %v859 = vld [vmem:[%s0 + $0xc0] sm:$0xe]
  %v860 = vld [vmem:[%s0 + $0xcc] sm:$0xe]
  %v861 = vld [vmem:[%s0 + $0xd8] sm:$0xe]
  %v862 = vld [vmem:[%s0 + $0xe4] sm:$0xe]
  %v863 = vld [vmem:[%s0 + $0xf0] sm:$0xe]
  %v864 = vld [vmem:[%s0 + $0xfc] sm:$0xe]
  %v865 = vld [vmem:[%s0 + $0x108] sm:$0xe]
  %v866 = vld [vmem:[%s0 + $0x114] sm:$0xe]
  %v867 = vld [vmem:[%s0 + $0x120] sm:$0xe]
  %v868 = vld [vmem:[%s0 + $0x12c] sm:$0xe]
  %v869 = vld [vmem:[%s0 + $0x138] sm:$0xe]
  %v870 = vld [vmem:[%s0 + $0x144] sm:$0xe]
  %v871 = vld [vmem:[%s0 + $0x150] sm:$0xe]
  %v872 = vld [vmem:[%s0 + $0x15c] sm:$0xe]
  %v873 = vld [vmem:[%s0 + $0x168] sm:$0xe]
  %v874 = vld [vmem:[%s0 + $0x174] sm:$0xe]
  %v875 = vunpack.c.l.bf16 %v843
  %v876 = vunpack.c.l.bf16 %v844
  %v877 = vunpack.c.l.bf16 %v845
  %v878 = vunpack.c.l.bf16 %v846
  %v879 = vunpack.c.l.bf16 %v847
  %v880 = vunpack.c.l.bf16 %v848
  %v881 = vunpack.c.l.bf16 %v849
  %v882 = vunpack.c.l.bf16 %v850
  %v883 = vunpack.c.l.bf16 %v851
  %v884 = vunpack.c.l.bf16 %v852
  %v885 = vunpack.c.l.bf16 %v853
  %v886 = vunpack.c.l.bf16 %v854
  %v887 = vunpack.c.l.bf16 %v855
  %v888 = vunpack.c.l.bf16 %v856
  %v889 = vunpack.c.l.bf16 %v857
  %v890 = vunpack.c.l.bf16 %v858
  %v891 = vunpack.c.l.bf16 %v859
  %v892 = vunpack.c.l.bf16 %v860
  %v893 = vunpack.c.l.bf16 %v861
  %v894 = vunpack.c.l.bf16 %v862
  %v895 = vunpack.c.l.bf16 %v863
  %v896 = vunpack.c.l.bf16 %v864
  %v897 = vunpack.c.l.bf16 %v865
  %v898 = vunpack.c.l.bf16 %v866
  %v899 = vunpack.c.l.bf16 %v867
  %v900 = vunpack.c.l.bf16 %v868
  %v901 = vunpack.c.l.bf16 %v869
  %v902 = vunpack.c.l.bf16 %v870
  %v903 = vunpack.c.l.bf16 %v871
  %v904 = vunpack.c.l.bf16 %v872
  %v905 = vunpack.c.l.bf16 %v873
  %v906 = vunpack.c.l.bf16 %v874
  %s907 = scalar_lea.vmem %s3, 2
  %v908 = vld [vmem:[%s907] sm:$0x1]
  %v910 = vlaneseq
  %v911 = vshrl.u32 %v910, 7
  %v912 = vsub.s32 0, %v911
  %v913 = vrot.slane %v908, %v912
  %v915 = vmul.f32 %v875, %v913
  %v916 = vmul.f32 %v92, %v913
  %v917 = vmul.f32 %v322, %v913
  %v918 = vmul.f32 %v876, %v913
  %v919 = vmul.f32 %v94, %v913
  %v920 = vmul.f32 %v323, %v913
  %v921 = vmul.f32 %v877, %v913
  %v922 = vmul.f32 %v96, %v913
  %v923 = vmul.f32 %v324, %v913
  %v924 = vmul.f32 %v878, %v913
  %v925 = vmul.f32 %v98, %v913
  %v926 = vmul.f32 %v325, %v913
  %v927 = vmul.f32 %v879, %v913
  %v928 = vmul.f32 %v100, %v913
  %v929 = vmul.f32 %v326, %v913
  %v930 = vmul.f32 %v880, %v913
  %v931 = vmul.f32 %v102, %v913
  %v932 = vmul.f32 %v327, %v913
  %v933 = vmul.f32 %v881, %v913
  %v934 = vmul.f32 %v104, %v913
  %v935 = vmul.f32 %v328, %v913
  %v936 = vmul.f32 %v882, %v913
  %v937 = vmul.f32 %v106, %v913
  %v938 = vmul.f32 %v329, %v913
  %v939 = vmul.f32 %v883, %v913
  %v940 = vmul.f32 %v108, %v913
  %v941 = vmul.f32 %v330, %v913
  %v942 = vmul.f32 %v884, %v913
  %v943 = vmul.f32 %v110, %v913
  %v944 = vmul.f32 %v331, %v913
  %v945 = vmul.f32 %v885, %v913
  %v946 = vmul.f32 %v112, %v913
  %v947 = vmul.f32 %v332, %v913
  %v948 = vmul.f32 %v886, %v913
  %v949 = vmul.f32 %v114, %v913
  %v950 = vmul.f32 %v333, %v913
  %v951 = vmul.f32 %v887, %v913
  %v952 = vmul.f32 %v116, %v913
  %v953 = vmul.f32 %v334, %v913
  %v954 = vmul.f32 %v888, %v913
  %v955 = vmul.f32 %v118, %v913
  %v956 = vmul.f32 %v335, %v913
  %v957 = vmul.f32 %v889, %v913
  %v958 = vmul.f32 %v120, %v913
  %v959 = vmul.f32 %v336, %v913
  %v960 = vmul.f32 %v890, %v913
  %v961 = vmul.f32 %v122, %v913
  %v962 = vmul.f32 %v337, %v913
  %v963 = vmul.f32 %v891, %v913
  %v964 = vmul.f32 %v124, %v913
  %v965 = vmul.f32 %v338, %v913
  %v966 = vmul.f32 %v892, %v913
  %v967 = vmul.f32 %v126, %v913
  %v968 = vmul.f32 %v339, %v913
  %v969 = vmul.f32 %v893, %v913
  %v970 = vmul.f32 %v128, %v913
  %v971 = vmul.f32 %v340, %v913
  %v972 = vmul.f32 %v894, %v913
  %v973 = vmul.f32 %v130, %v913
  %v974 = vmul.f32 %v341, %v913
  %v975 = vmul.f32 %v895, %v913
  %v976 = vmul.f32 %v132, %v913
  %v977 = vmul.f32 %v342, %v913
  %v978 = vmul.f32 %v896, %v913
  %v979 = vmul.f32 %v134, %v913
  %v980 = vmul.f32 %v343, %v913
  %v981 = vmul.f32 %v897, %v913
  %v982 = vmul.f32 %v136, %v913
  %v983 = vmul.f32 %v344, %v913
  %v984 = vmul.f32 %v898, %v913
  %v985 = vmul.f32 %v138, %v913
  %v986 = vmul.f32 %v345, %v913
  %v987 = vmul.f32 %v899, %v913
  %v988 = vmul.f32 %v140, %v913
  %v989 = vmul.f32 %v346, %v913
  %v990 = vmul.f32 %v900, %v913
  %v991 = vmul.f32 %v142, %v913
  %v992 = vmul.f32 %v347, %v913
  %v993 = vmul.f32 %v901, %v913
  %v994 = vmul.f32 %v144, %v913
  %v995 = vmul.f32 %v348, %v913
  %v996 = vmul.f32 %v902, %v913
  %v997 = vmul.f32 %v146, %v913
  %v998 = vmul.f32 %v349, %v913
  %v999 = vmul.f32 %v903, %v913
  %v1000 = vmul.f32 %v148, %v913
  %v1001 = vmul.f32 %v350, %v913
  %v1002 = vmul.f32 %v904, %v913
  %v1003 = vmul.f32 %v150, %v913
  %v1004 = vmul.f32 %v351, %v913
  %v1005 = vmul.f32 %v905, %v913
  %v1006 = vmul.f32 %v152, %v913
  %v1007 = vmul.f32 %v352, %v913
  %v1008 = vmul.f32 %v906, %v913
  %v1009 = vmul.f32 %v154, %v913
  %v1010 = vmul.f32 %v353, %v913
  %vm1107 = vcmask 1045504
  %v1108 = vrot.slane %v915, 2
  %v1109 = vrot.slane %v916, 2
  %v1110 = vsel %vm1107, %v1108, %v1109
  %v1111 = vrot.slane %v917, 2
  %v1112 = vsel %vm1107, %v1109, %v1111
  %v1113 = vrot.slane %v918, 2
  %v1114 = vrot.slane %v919, 2
  %v1115 = vsel %vm1107, %v1113, %v1114
  %v1116 = vrot.slane %v920, 2
  %v1117 = vsel %vm1107, %v1114, %v1116
  %v1118 = vrot.slane %v921, 2
  %v1119 = vrot.slane %v922, 2
  %v1120 = vsel %vm1107, %v1118, %v1119
  %v1121 = vrot.slane %v923, 2
  %v1122 = vsel %vm1107, %v1119, %v1121
  %v1123 = vrot.slane %v924, 2
  %v1124 = vrot.slane %v925, 2
  %v1125 = vsel %vm1107, %v1123, %v1124
  %v1126 = vrot.slane %v926, 2
  %v1127 = vsel %vm1107, %v1124, %v1126
  %v1128 = vrot.slane %v927, 2
  %v1129 = vrot.slane %v928, 2
  %v1130 = vsel %vm1107, %v1128, %v1129
  %v1131 = vrot.slane %v929, 2
  %v1132 = vsel %vm1107, %v1129, %v1131
  %v1133 = vrot.slane %v930, 2
  %v1134 = vrot.slane %v931, 2
  %v1135 = vsel %vm1107, %v1133, %v1134
  %v1136 = vrot.slane %v932, 2
  %v1137 = vsel %vm1107, %v1134, %v1136
  %v1138 = vrot.slane %v933, 2
  %v1139 = vrot.slane %v934, 2
  %v1140 = vsel %vm1107, %v1138, %v1139
  %v1141 = vrot.slane %v935, 2
  %v1142 = vsel %vm1107, %v1139, %v1141
  %v1143 = vrot.slane %v936, 2
  %v1144 = vrot.slane %v937, 2
  %v1145 = vsel %vm1107, %v1143, %v1144
  %v1146 = vrot.slane %v938, 2
  %v1147 = vsel %vm1107, %v1144, %v1146
  %v1148 = vrot.slane %v939, 2
  %v1149 = vrot.slane %v940, 2
  %v1150 = vsel %vm1107, %v1148, %v1149
  %v1151 = vrot.slane %v941, 2
  %v1152 = vsel %vm1107, %v1149, %v1151
  %v1153 = vrot.slane %v942, 2
  %v1154 = vrot.slane %v943, 2
  %v1155 = vsel %vm1107, %v1153, %v1154
  %v1156 = vrot.slane %v944, 2
  %v1157 = vsel %vm1107, %v1154, %v1156
  %v1158 = vrot.slane %v945, 2
  %v1159 = vrot.slane %v946, 2
  %v1160 = vsel %vm1107, %v1158, %v1159
  %v1161 = vrot.slane %v947, 2
  %v1162 = vsel %vm1107, %v1159, %v1161
  %v1163 = vrot.slane %v948, 2
  %v1164 = vrot.slane %v949, 2
  %v1165 = vsel %vm1107, %v1163, %v1164
  %v1166 = vrot.slane %v950, 2
  %v1167 = vsel %vm1107, %v1164, %v1166
  %v1168 = vrot.slane %v951, 2
  %v1169 = vrot.slane %v952, 2
  %v1170 = vsel %vm1107, %v1168, %v1169
  %v1171 = vrot.slane %v953, 2
  %v1172 = vsel %vm1107, %v1169, %v1171
  %v1173 = vrot.slane %v954, 2
  %v1174 = vrot.slane %v955, 2
  %v1175 = vsel %vm1107, %v1173, %v1174
  %v1176 = vrot.slane %v956, 2
  %v1177 = vsel %vm1107, %v1174, %v1176
  %v1178 = vrot.slane %v957, 2
  %v1179 = vrot.slane %v958, 2
  %v1180 = vsel %vm1107, %v1178, %v1179
  %v1181 = vrot.slane %v959, 2
  %v1182 = vsel %vm1107, %v1179, %v1181
  %v1183 = vrot.slane %v960, 2
  %v1184 = vrot.slane %v961, 2
  %v1185 = vsel %vm1107, %v1183, %v1184
  %v1186 = vrot.slane %v962, 2
  %v1187 = vsel %vm1107, %v1184, %v1186
  %v1188 = vrot.slane %v963, 2
  %v1189 = vrot.slane %v964, 2
  %v1190 = vsel %vm1107, %v1188, %v1189
  %v1191 = vrot.slane %v965, 2
  %v1192 = vsel %vm1107, %v1189, %v1191
  %v1193 = vrot.slane %v966, 2
  %v1194 = vrot.slane %v967, 2
  %v1195 = vsel %vm1107, %v1193, %v1194
  %v1196 = vrot.slane %v968, 2
  %v1197 = vsel %vm1107, %v1194, %v1196
  %v1198 = vrot.slane %v969, 2
  %v1199 = vrot.slane %v970, 2
  %v1200 = vsel %vm1107, %v1198, %v1199
  %v1201 = vrot.slane %v971, 2
  %v1202 = vsel %vm1107, %v1199, %v1201
  %v1203 = vrot.slane %v972, 2
  %v1204 = vrot.slane %v973, 2
  %v1205 = vsel %vm1107, %v1203, %v1204
  %v1206 = vrot.slane %v974, 2
  %v1207 = vsel %vm1107, %v1204, %v1206
  %v1208 = vrot.slane %v975, 2
  %v1209 = vrot.slane %v976, 2
  %v1210 = vsel %vm1107, %v1208, %v1209
  %v1211 = vrot.slane %v977, 2
  %v1212 = vsel %vm1107, %v1209, %v1211
  %v1213 = vrot.slane %v978, 2
  %v1214 = vrot.slane %v979, 2
  %v1215 = vsel %vm1107, %v1213, %v1214
  %v1216 = vrot.slane %v980, 2
  %v1217 = vsel %vm1107, %v1214, %v1216
  %v1218 = vrot.slane %v981, 2
  %v1219 = vrot.slane %v982, 2
  %v1220 = vsel %vm1107, %v1218, %v1219
  %v1221 = vrot.slane %v983, 2
  %v1222 = vsel %vm1107, %v1219, %v1221
  %v1223 = vrot.slane %v984, 2
  %v1224 = vrot.slane %v985, 2
  %v1225 = vsel %vm1107, %v1223, %v1224
  %v1226 = vrot.slane %v986, 2
  %v1227 = vsel %vm1107, %v1224, %v1226
  %v1228 = vrot.slane %v987, 2
  %v1229 = vrot.slane %v988, 2
  %v1230 = vsel %vm1107, %v1228, %v1229
  %v1231 = vrot.slane %v989, 2
  %v1232 = vsel %vm1107, %v1229, %v1231
  %v1233 = vrot.slane %v990, 2
  %v1234 = vrot.slane %v991, 2
  %v1235 = vsel %vm1107, %v1233, %v1234
  %v1236 = vrot.slane %v992, 2
  %v1237 = vsel %vm1107, %v1234, %v1236
  %v1238 = vrot.slane %v993, 2
  %v1239 = vrot.slane %v994, 2
  %v1240 = vsel %vm1107, %v1238, %v1239
  %v1241 = vrot.slane %v995, 2
  %v1242 = vsel %vm1107, %v1239, %v1241
  %v1243 = vrot.slane %v996, 2
  %v1244 = vrot.slane %v997, 2
  %v1245 = vsel %vm1107, %v1243, %v1244
  %v1246 = vrot.slane %v998, 2
  %v1247 = vsel %vm1107, %v1244, %v1246
  %v1248 = vrot.slane %v999, 2
  %v1249 = vrot.slane %v1000, 2
  %v1250 = vsel %vm1107, %v1248, %v1249
  %v1251 = vrot.slane %v1001, 2
  %v1252 = vsel %vm1107, %v1249, %v1251
  %v1253 = vrot.slane %v1002, 2
  %v1254 = vrot.slane %v1003, 2
  %v1255 = vsel %vm1107, %v1253, %v1254
  %v1256 = vrot.slane %v1004, 2
  %v1257 = vsel %vm1107, %v1254, %v1256
  %v1258 = vrot.slane %v1005, 2
  %v1259 = vrot.slane %v1006, 2
  %v1260 = vsel %vm1107, %v1258, %v1259
  %v1261 = vrot.slane %v1007, 2
  %v1262 = vsel %vm1107, %v1259, %v1261
  %v1263 = vrot.slane %v1008, 2
  %v1264 = vrot.slane %v1009, 2
  %v1265 = vsel %vm1107, %v1263, %v1264
  %v1266 = vrot.slane %v1010, 2
  %v1267 = vsel %vm1107, %v1264, %v1266
  %v1332 = vadd.f32 %v779, %v1110
  %v1333 = vadd.f32 %v780, %v1112
  %v1334 = vadd.f32 %v781, %v1115
  %v1335 = vadd.f32 %v782, %v1117
  %v1336 = vadd.f32 %v783, %v1120
  %v1337 = vadd.f32 %v784, %v1122
  %v1338 = vadd.f32 %v785, %v1125
  %v1339 = vadd.f32 %v786, %v1127
  %v1340 = vadd.f32 %v787, %v1130
  %v1341 = vadd.f32 %v788, %v1132
  %v1342 = vadd.f32 %v789, %v1135
  %v1343 = vadd.f32 %v790, %v1137
  %v1344 = vadd.f32 %v791, %v1140
  %v1345 = vadd.f32 %v792, %v1142
  %v1346 = vadd.f32 %v793, %v1145
  %v1347 = vadd.f32 %v794, %v1147
  %v1348 = vadd.f32 %v795, %v1150
  %v1349 = vadd.f32 %v796, %v1152
  %v1350 = vadd.f32 %v797, %v1155
  %v1351 = vadd.f32 %v798, %v1157
  %v1352 = vadd.f32 %v799, %v1160
  %v1353 = vadd.f32 %v800, %v1162
  %v1354 = vadd.f32 %v801, %v1165
  %v1355 = vadd.f32 %v802, %v1167
  %v1356 = vadd.f32 %v803, %v1170
  %v1357 = vadd.f32 %v804, %v1172
  %v1358 = vadd.f32 %v805, %v1175
  %v1359 = vadd.f32 %v806, %v1177
  %v1360 = vadd.f32 %v807, %v1180
  %v1361 = vadd.f32 %v808, %v1182
  %v1362 = vadd.f32 %v809, %v1185
  %v1363 = vadd.f32 %v810, %v1187
  %v1364 = vadd.f32 %v811, %v1190
  %v1365 = vadd.f32 %v812, %v1192
  %v1366 = vadd.f32 %v813, %v1195
  %v1367 = vadd.f32 %v814, %v1197
  %v1368 = vadd.f32 %v815, %v1200
  %v1369 = vadd.f32 %v816, %v1202
  %v1370 = vadd.f32 %v817, %v1205
  %v1371 = vadd.f32 %v818, %v1207
  %v1372 = vadd.f32 %v819, %v1210
  %v1373 = vadd.f32 %v820, %v1212
  %v1374 = vadd.f32 %v821, %v1215
  %v1375 = vadd.f32 %v822, %v1217
  %v1376 = vadd.f32 %v823, %v1220
  %v1377 = vadd.f32 %v824, %v1222
  %v1378 = vadd.f32 %v825, %v1225
  %v1379 = vadd.f32 %v826, %v1227
  %v1380 = vadd.f32 %v827, %v1230
  %v1381 = vadd.f32 %v828, %v1232
  %v1382 = vadd.f32 %v829, %v1235
  %v1383 = vadd.f32 %v830, %v1237
  %v1384 = vadd.f32 %v831, %v1240
  %v1385 = vadd.f32 %v832, %v1242
  %v1386 = vadd.f32 %v833, %v1245
  %v1387 = vadd.f32 %v834, %v1247
  %v1388 = vadd.f32 %v835, %v1250
  %v1389 = vadd.f32 %v836, %v1252
  %v1390 = vadd.f32 %v837, %v1255
  %v1391 = vadd.f32 %v838, %v1257
  %v1392 = vadd.f32 %v839, %v1260
  %v1393 = vadd.f32 %v840, %v1262
  %v1394 = vadd.f32 %v841, %v1265
  %v1395 = vadd.f32 %v842, %v1267
  %v1396 = vld [vmem:[%s1] sm:$0xf]
  %v1397 = vld [vmem:[%s1 + $0x4] sm:$0xf]
  %v1398 = vld [vmem:[%s1 + $0xc] sm:$0xf]
  %v1399 = vld [vmem:[%s1 + $0x10] sm:$0xf]
  %v1400 = vld [vmem:[%s1 + $0x18] sm:$0xf]
  %v1401 = vld [vmem:[%s1 + $0x1c] sm:$0xf]
  %v1402 = vld [vmem:[%s1 + $0x24] sm:$0xf]
  %v1403 = vld [vmem:[%s1 + $0x28] sm:$0xf]
  %v1404 = vld [vmem:[%s1 + $0x30] sm:$0xf]
  %v1405 = vld [vmem:[%s1 + $0x34] sm:$0xf]
  %v1406 = vld [vmem:[%s1 + $0x3c] sm:$0xf]
  %v1407 = vld [vmem:[%s1 + $0x40] sm:$0xf]
  %v1408 = vld [vmem:[%s1 + $0x48] sm:$0xf]
  %v1409 = vld [vmem:[%s1 + $0x4c] sm:$0xf]
  %v1410 = vld [vmem:[%s1 + $0x54] sm:$0xf]
  %v1411 = vld [vmem:[%s1 + $0x58] sm:$0xf]
  %v1412 = vld [vmem:[%s1 + $0x60] sm:$0xf]
  %v1413 = vld [vmem:[%s1 + $0x64] sm:$0xf]
  %v1414 = vld [vmem:[%s1 + $0x6c] sm:$0xf]
  %v1415 = vld [vmem:[%s1 + $0x70] sm:$0xf]
  %v1416 = vld [vmem:[%s1 + $0x78] sm:$0xf]
  %v1417 = vld [vmem:[%s1 + $0x7c] sm:$0xf]
  %v1418 = vld [vmem:[%s1 + $0x84] sm:$0xf]
  %v1419 = vld [vmem:[%s1 + $0x88] sm:$0xf]
  %v1420 = vld [vmem:[%s1 + $0x90] sm:$0xf]
  %v1421 = vld [vmem:[%s1 + $0x94] sm:$0xf]
  %v1422 = vld [vmem:[%s1 + $0x9c] sm:$0xf]
  %v1423 = vld [vmem:[%s1 + $0xa0] sm:$0xf]
  %v1424 = vld [vmem:[%s1 + $0xa8] sm:$0xf]
  %v1425 = vld [vmem:[%s1 + $0xac] sm:$0xf]
  %v1426 = vld [vmem:[%s1 + $0xb4] sm:$0xf]
  %v1427 = vld [vmem:[%s1 + $0xb8] sm:$0xf]
  %v1428 = vld [vmem:[%s1 + $0xc0] sm:$0xf]
  %v1429 = vld [vmem:[%s1 + $0xc4] sm:$0xf]
  %v1430 = vld [vmem:[%s1 + $0xcc] sm:$0xf]
  %v1431 = vld [vmem:[%s1 + $0xd0] sm:$0xf]
  %v1432 = vld [vmem:[%s1 + $0xd8] sm:$0xf]
  %v1433 = vld [vmem:[%s1 + $0xdc] sm:$0xf]
  %v1434 = vld [vmem:[%s1 + $0xe4] sm:$0xf]
  %v1435 = vld [vmem:[%s1 + $0xe8] sm:$0xf]
  %v1436 = vld [vmem:[%s1 + $0xf0] sm:$0xf]
  %v1437 = vld [vmem:[%s1 + $0xf4] sm:$0xf]
  %v1438 = vld [vmem:[%s1 + $0xfc] sm:$0xf]
  %v1439 = vld [vmem:[%s1 + $0x100] sm:$0xf]
  %v1440 = vld [vmem:[%s1 + $0x108] sm:$0xf]
  %v1441 = vld [vmem:[%s1 + $0x10c] sm:$0xf]
  %v1442 = vld [vmem:[%s1 + $0x114] sm:$0xf]
  %v1443 = vld [vmem:[%s1 + $0x118] sm:$0xf]
  %v1444 = vld [vmem:[%s1 + $0x120] sm:$0xf]
  %v1445 = vld [vmem:[%s1 + $0x124] sm:$0xf]
  %v1446 = vld [vmem:[%s1 + $0x12c] sm:$0xf]
  %v1447 = vld [vmem:[%s1 + $0x130] sm:$0xf]
  %v1448 = vld [vmem:[%s1 + $0x138] sm:$0xf]
  %v1449 = vld [vmem:[%s1 + $0x13c] sm:$0xf]
  %v1450 = vld [vmem:[%s1 + $0x144] sm:$0xf]
  %v1451 = vld [vmem:[%s1 + $0x148] sm:$0xf]
  %v1452 = vld [vmem:[%s1 + $0x150] sm:$0xf]
  %v1453 = vld [vmem:[%s1 + $0x154] sm:$0xf]
  %v1454 = vld [vmem:[%s1 + $0x15c] sm:$0xf]
  %v1455 = vld [vmem:[%s1 + $0x160] sm:$0xf]
  %v1456 = vld [vmem:[%s1 + $0x168] sm:$0xf]
  %v1457 = vld [vmem:[%s1 + $0x16c] sm:$0xf]
  %v1458 = vld [vmem:[%s1 + $0x174] sm:$0xf]
  %v1459 = vld [vmem:[%s1 + $0x178] sm:$0xf]
  %v1460 = vunpack.c.l.bf16 %v1396
  %v1461 = vunpack.c.l.bf16 %v1397
  %v1462 = vunpack.c.l.bf16 %v1398
  %v1463 = vunpack.c.l.bf16 %v1399
  %v1464 = vunpack.c.l.bf16 %v1400
  %v1465 = vunpack.c.l.bf16 %v1401
  %v1466 = vunpack.c.l.bf16 %v1402
  %v1467 = vunpack.c.l.bf16 %v1403
  %v1468 = vunpack.c.l.bf16 %v1404
  %v1469 = vunpack.c.l.bf16 %v1405
  %v1470 = vunpack.c.l.bf16 %v1406
  %v1471 = vunpack.c.l.bf16 %v1407
  %v1472 = vunpack.c.l.bf16 %v1408
  %v1473 = vunpack.c.l.bf16 %v1409
  %v1474 = vunpack.c.l.bf16 %v1410
  %v1475 = vunpack.c.l.bf16 %v1411
  %v1476 = vunpack.c.l.bf16 %v1412
  %v1477 = vunpack.c.l.bf16 %v1413
  %v1478 = vunpack.c.l.bf16 %v1414
  %v1479 = vunpack.c.l.bf16 %v1415
  %v1480 = vunpack.c.l.bf16 %v1416
  %v1481 = vunpack.c.l.bf16 %v1417
  %v1482 = vunpack.c.l.bf16 %v1418
  %v1483 = vunpack.c.l.bf16 %v1419
  %v1484 = vunpack.c.l.bf16 %v1420
  %v1485 = vunpack.c.l.bf16 %v1421
  %v1486 = vunpack.c.l.bf16 %v1422
  %v1487 = vunpack.c.l.bf16 %v1423
  %v1488 = vunpack.c.l.bf16 %v1424
  %v1489 = vunpack.c.l.bf16 %v1425
  %v1490 = vunpack.c.l.bf16 %v1426
  %v1491 = vunpack.c.l.bf16 %v1427
  %v1492 = vunpack.c.l.bf16 %v1428
  %v1493 = vunpack.c.l.bf16 %v1429
  %v1494 = vunpack.c.l.bf16 %v1430
  %v1495 = vunpack.c.l.bf16 %v1431
  %v1496 = vunpack.c.l.bf16 %v1432
  %v1497 = vunpack.c.l.bf16 %v1433
  %v1498 = vunpack.c.l.bf16 %v1434
  %v1499 = vunpack.c.l.bf16 %v1435
  %v1500 = vunpack.c.l.bf16 %v1436
  %v1501 = vunpack.c.l.bf16 %v1437
  %v1502 = vunpack.c.l.bf16 %v1438
  %v1503 = vunpack.c.l.bf16 %v1439
  %v1504 = vunpack.c.l.bf16 %v1440
  %v1505 = vunpack.c.l.bf16 %v1441
  %v1506 = vunpack.c.l.bf16 %v1442
  %v1507 = vunpack.c.l.bf16 %v1443
  %v1508 = vunpack.c.l.bf16 %v1444
  %v1509 = vunpack.c.l.bf16 %v1445
  %v1510 = vunpack.c.l.bf16 %v1446
  %v1511 = vunpack.c.l.bf16 %v1447
  %v1512 = vunpack.c.l.bf16 %v1448
  %v1513 = vunpack.c.l.bf16 %v1449
  %v1514 = vunpack.c.l.bf16 %v1450
  %v1515 = vunpack.c.l.bf16 %v1451
  %v1516 = vunpack.c.l.bf16 %v1452
  %v1517 = vunpack.c.l.bf16 %v1453
  %v1518 = vunpack.c.l.bf16 %v1454
  %v1519 = vunpack.c.l.bf16 %v1455
  %v1520 = vunpack.c.l.bf16 %v1456
  %v1521 = vunpack.c.l.bf16 %v1457
  %v1522 = vunpack.c.l.bf16 %v1458
  %v1523 = vunpack.c.l.bf16 %v1459
  %s1524 = scalar_lea.vmem %s3, 3
  %v1525 = vld [vmem:[%s1524] sm:$0x1]
  %v1527 = vlaneseq
  %v1528 = vshrl.u32 %v1527, 7
  %v1529 = vsub.s32 0, %v1528
  %v1530 = vrot.slane %v1525, %v1529
  %v1532 = vmul.f32 %v1460, %v1530
  %v1533 = vmul.f32 %v1461, %v1530
  %v1534 = vmul.f32 %v1462, %v1530
  %v1535 = vmul.f32 %v1463, %v1530
  %v1536 = vmul.f32 %v1464, %v1530
  %v1537 = vmul.f32 %v1465, %v1530
  %v1538 = vmul.f32 %v1466, %v1530
  %v1539 = vmul.f32 %v1467, %v1530
  %v1540 = vmul.f32 %v1468, %v1530
  %v1541 = vmul.f32 %v1469, %v1530
  %v1542 = vmul.f32 %v1470, %v1530
  %v1543 = vmul.f32 %v1471, %v1530
  %v1544 = vmul.f32 %v1472, %v1530
  %v1545 = vmul.f32 %v1473, %v1530
  %v1546 = vmul.f32 %v1474, %v1530
  %v1547 = vmul.f32 %v1475, %v1530
  %v1548 = vmul.f32 %v1476, %v1530
  %v1549 = vmul.f32 %v1477, %v1530
  %v1550 = vmul.f32 %v1478, %v1530
  %v1551 = vmul.f32 %v1479, %v1530
  %v1552 = vmul.f32 %v1480, %v1530
  %v1553 = vmul.f32 %v1481, %v1530
  %v1554 = vmul.f32 %v1482, %v1530
  %v1555 = vmul.f32 %v1483, %v1530
  %v1556 = vmul.f32 %v1484, %v1530
  %v1557 = vmul.f32 %v1485, %v1530
  %v1558 = vmul.f32 %v1486, %v1530
  %v1559 = vmul.f32 %v1487, %v1530
  %v1560 = vmul.f32 %v1488, %v1530
  %v1561 = vmul.f32 %v1489, %v1530
  %v1562 = vmul.f32 %v1490, %v1530
  %v1563 = vmul.f32 %v1491, %v1530
  %v1564 = vmul.f32 %v1492, %v1530
  %v1565 = vmul.f32 %v1493, %v1530
  %v1566 = vmul.f32 %v1494, %v1530
  %v1567 = vmul.f32 %v1495, %v1530
  %v1568 = vmul.f32 %v1496, %v1530
  %v1569 = vmul.f32 %v1497, %v1530
  %v1570 = vmul.f32 %v1498, %v1530
  %v1571 = vmul.f32 %v1499, %v1530
  %v1572 = vmul.f32 %v1500, %v1530
  %v1573 = vmul.f32 %v1501, %v1530
  %v1574 = vmul.f32 %v1502, %v1530
  %v1575 = vmul.f32 %v1503, %v1530
  %v1576 = vmul.f32 %v1504, %v1530
  %v1577 = vmul.f32 %v1505, %v1530
  %v1578 = vmul.f32 %v1506, %v1530
  %v1579 = vmul.f32 %v1507, %v1530
  %v1580 = vmul.f32 %v1508, %v1530
  %v1581 = vmul.f32 %v1509, %v1530
  %v1582 = vmul.f32 %v1510, %v1530
  %v1583 = vmul.f32 %v1511, %v1530
  %v1584 = vmul.f32 %v1512, %v1530
  %v1585 = vmul.f32 %v1513, %v1530
  %v1586 = vmul.f32 %v1514, %v1530
  %v1587 = vmul.f32 %v1515, %v1530
  %v1588 = vmul.f32 %v1516, %v1530
  %v1589 = vmul.f32 %v1517, %v1530
  %v1590 = vmul.f32 %v1518, %v1530
  %v1591 = vmul.f32 %v1519, %v1530
  %v1592 = vmul.f32 %v1520, %v1530
  %v1593 = vmul.f32 %v1521, %v1530
  %v1594 = vmul.f32 %v1522, %v1530
  %v1595 = vmul.f32 %v1523, %v1530
  %v1596 = vadd.f32 %v1332, %v1532
  %v1597 = vadd.f32 %v1333, %v1533
  %v1598 = vadd.f32 %v1334, %v1534
  %v1599 = vadd.f32 %v1335, %v1535
  %v1600 = vadd.f32 %v1336, %v1536
  %v1601 = vadd.f32 %v1337, %v1537
  %v1602 = vadd.f32 %v1338, %v1538
  %v1603 = vadd.f32 %v1339, %v1539
  %v1604 = vadd.f32 %v1340, %v1540
  %v1605 = vadd.f32 %v1341, %v1541
  %v1606 = vadd.f32 %v1342, %v1542
  %v1607 = vadd.f32 %v1343, %v1543
  %v1608 = vadd.f32 %v1344, %v1544
  %v1609 = vadd.f32 %v1345, %v1545
  %v1610 = vadd.f32 %v1346, %v1546
  %v1611 = vadd.f32 %v1347, %v1547
  %v1612 = vadd.f32 %v1348, %v1548
  %v1613 = vadd.f32 %v1349, %v1549
  %v1614 = vadd.f32 %v1350, %v1550
  %v1615 = vadd.f32 %v1351, %v1551
  %v1616 = vadd.f32 %v1352, %v1552
  %v1617 = vadd.f32 %v1353, %v1553
  %v1618 = vadd.f32 %v1354, %v1554
  %v1619 = vadd.f32 %v1355, %v1555
  %v1620 = vadd.f32 %v1356, %v1556
  %v1621 = vadd.f32 %v1357, %v1557
  %v1622 = vadd.f32 %v1358, %v1558
  %v1623 = vadd.f32 %v1359, %v1559
  %v1624 = vadd.f32 %v1360, %v1560
  %v1625 = vadd.f32 %v1361, %v1561
  %v1626 = vadd.f32 %v1362, %v1562
  %v1627 = vadd.f32 %v1363, %v1563
  %v1628 = vadd.f32 %v1364, %v1564
  %v1629 = vadd.f32 %v1365, %v1565
  %v1630 = vadd.f32 %v1366, %v1566
  %v1631 = vadd.f32 %v1367, %v1567
  %v1632 = vadd.f32 %v1368, %v1568
  %v1633 = vadd.f32 %v1369, %v1569
  %v1634 = vadd.f32 %v1370, %v1570
  %v1635 = vadd.f32 %v1371, %v1571
  %v1636 = vadd.f32 %v1372, %v1572
  %v1637 = vadd.f32 %v1373, %v1573
  %v1638 = vadd.f32 %v1374, %v1574
  %v1639 = vadd.f32 %v1375, %v1575
  %v1640 = vadd.f32 %v1376, %v1576
  %v1641 = vadd.f32 %v1377, %v1577
  %v1642 = vadd.f32 %v1378, %v1578
  %v1643 = vadd.f32 %v1379, %v1579
  %v1644 = vadd.f32 %v1380, %v1580
  %v1645 = vadd.f32 %v1381, %v1581
  %v1646 = vadd.f32 %v1382, %v1582
  %v1647 = vadd.f32 %v1383, %v1583
  %v1648 = vadd.f32 %v1384, %v1584
  %v1649 = vadd.f32 %v1385, %v1585
  %v1650 = vadd.f32 %v1386, %v1586
  %v1651 = vadd.f32 %v1387, %v1587
  %v1652 = vadd.f32 %v1388, %v1588
  %v1653 = vadd.f32 %v1389, %v1589
  %v1654 = vadd.f32 %v1390, %v1590
  %v1655 = vadd.f32 %v1391, %v1591
  %v1656 = vadd.f32 %v1392, %v1592
  %v1657 = vadd.f32 %v1393, %v1593
  %v1658 = vadd.f32 %v1394, %v1594
  %v1659 = vadd.f32 %v1395, %v1595
  %v1660 = vld [vmem:[%s1 + $0x8] sm:$0x1]
  %v1661 = vld [vmem:[%s1 + $0x14] sm:$0x1]
  %v1662 = vld [vmem:[%s1 + $0x20] sm:$0x1]
  %v1663 = vld [vmem:[%s1 + $0x2c] sm:$0x1]
  %v1664 = vld [vmem:[%s1 + $0x38] sm:$0x1]
  %v1665 = vld [vmem:[%s1 + $0x44] sm:$0x1]
  %v1666 = vld [vmem:[%s1 + $0x50] sm:$0x1]
  %v1667 = vld [vmem:[%s1 + $0x5c] sm:$0x1]
  %v1668 = vld [vmem:[%s1 + $0x68] sm:$0x1]
  %v1669 = vld [vmem:[%s1 + $0x74] sm:$0x1]
  %v1670 = vld [vmem:[%s1 + $0x80] sm:$0x1]
  %v1671 = vld [vmem:[%s1 + $0x8c] sm:$0x1]
  %v1672 = vld [vmem:[%s1 + $0x98] sm:$0x1]
  %v1673 = vld [vmem:[%s1 + $0xa4] sm:$0x1]
  %v1674 = vld [vmem:[%s1 + $0xb0] sm:$0x1]
  %v1675 = vld [vmem:[%s1 + $0xbc] sm:$0x1]
  %v1676 = vld [vmem:[%s1 + $0xc8] sm:$0x1]
  %v1677 = vld [vmem:[%s1 + $0xd4] sm:$0x1]
  %v1678 = vld [vmem:[%s1 + $0xe0] sm:$0x1]
  %v1679 = vld [vmem:[%s1 + $0xec] sm:$0x1]
  %v1680 = vld [vmem:[%s1 + $0xf8] sm:$0x1]
  %v1681 = vld [vmem:[%s1 + $0x104] sm:$0x1]
  %v1682 = vld [vmem:[%s1 + $0x110] sm:$0x1]
  %v1683 = vld [vmem:[%s1 + $0x11c] sm:$0x1]
  %v1684 = vld [vmem:[%s1 + $0x128] sm:$0x1]
  %v1685 = vld [vmem:[%s1 + $0x134] sm:$0x1]
  %v1686 = vld [vmem:[%s1 + $0x140] sm:$0x1]
  %v1687 = vld [vmem:[%s1 + $0x14c] sm:$0x1]
  %v1688 = vld [vmem:[%s1 + $0x158] sm:$0x1]
  %v1689 = vld [vmem:[%s1 + $0x164] sm:$0x1]
  %v1690 = vld [vmem:[%s1 + $0x170] sm:$0x1]
  %v1691 = vld [vmem:[%s1 + $0x17c] sm:$0x1]
  %v1692 = vunpack.c.l.bf16 %v1660
  %v1693 = vunpack.c.l.bf16 %v1661
  %v1694 = vunpack.c.l.bf16 %v1662
  %v1695 = vunpack.c.l.bf16 %v1663
  %v1696 = vunpack.c.l.bf16 %v1664
  %v1697 = vunpack.c.l.bf16 %v1665
  %v1698 = vunpack.c.l.bf16 %v1666
  %v1699 = vunpack.c.l.bf16 %v1667
  %v1700 = vunpack.c.l.bf16 %v1668
  %v1701 = vunpack.c.l.bf16 %v1669
  %v1702 = vunpack.c.l.bf16 %v1670
  %v1703 = vunpack.c.l.bf16 %v1671
  %v1704 = vunpack.c.l.bf16 %v1672
  %v1705 = vunpack.c.l.bf16 %v1673
  %v1706 = vunpack.c.l.bf16 %v1674
  %v1707 = vunpack.c.l.bf16 %v1675
  %v1708 = vunpack.c.l.bf16 %v1676
  %v1709 = vunpack.c.l.bf16 %v1677
  %v1710 = vunpack.c.l.bf16 %v1678
  %v1711 = vunpack.c.l.bf16 %v1679
  %v1712 = vunpack.c.l.bf16 %v1680
  %v1713 = vunpack.c.l.bf16 %v1681
  %v1714 = vunpack.c.l.bf16 %v1682
  %v1715 = vunpack.c.l.bf16 %v1683
  %v1716 = vunpack.c.l.bf16 %v1684
  %v1717 = vunpack.c.l.bf16 %v1685
  %v1718 = vunpack.c.l.bf16 %v1686
  %v1719 = vunpack.c.l.bf16 %v1687
  %v1720 = vunpack.c.l.bf16 %v1688
  %v1721 = vunpack.c.l.bf16 %v1689
  %v1722 = vunpack.c.l.bf16 %v1690
  %v1723 = vunpack.c.l.bf16 %v1691
  %s1724 = scalar_lea.vmem %s3, 4
  %v1725 = vld [vmem:[%s1724] sm:$0x1]
  %v1727 = vlaneseq
  %v1728 = vshrl.u32 %v1727, 7
  %v1729 = vsub.s32 0, %v1728
  %v1730 = vrot.slane %v1725, %v1729
  %v1732 = vmul.f32 %v1460, %v1730
  %v1733 = vmul.f32 %v1461, %v1730
  %v1734 = vmul.f32 %v1692, %v1730
  %v1735 = vmul.f32 %v1462, %v1730
  %v1736 = vmul.f32 %v1463, %v1730
  %v1737 = vmul.f32 %v1693, %v1730
  %v1738 = vmul.f32 %v1464, %v1730
  %v1739 = vmul.f32 %v1465, %v1730
  %v1740 = vmul.f32 %v1694, %v1730
  %v1741 = vmul.f32 %v1466, %v1730
  %v1742 = vmul.f32 %v1467, %v1730
  %v1743 = vmul.f32 %v1695, %v1730
  %v1744 = vmul.f32 %v1468, %v1730
  %v1745 = vmul.f32 %v1469, %v1730
  %v1746 = vmul.f32 %v1696, %v1730
  %v1747 = vmul.f32 %v1470, %v1730
  %v1748 = vmul.f32 %v1471, %v1730
  %v1749 = vmul.f32 %v1697, %v1730
  %v1750 = vmul.f32 %v1472, %v1730
  %v1751 = vmul.f32 %v1473, %v1730
  %v1752 = vmul.f32 %v1698, %v1730
  %v1753 = vmul.f32 %v1474, %v1730
  %v1754 = vmul.f32 %v1475, %v1730
  %v1755 = vmul.f32 %v1699, %v1730
  %v1756 = vmul.f32 %v1476, %v1730
  %v1757 = vmul.f32 %v1477, %v1730
  %v1758 = vmul.f32 %v1700, %v1730
  %v1759 = vmul.f32 %v1478, %v1730
  %v1760 = vmul.f32 %v1479, %v1730
  %v1761 = vmul.f32 %v1701, %v1730
  %v1762 = vmul.f32 %v1480, %v1730
  %v1763 = vmul.f32 %v1481, %v1730
  %v1764 = vmul.f32 %v1702, %v1730
  %v1765 = vmul.f32 %v1482, %v1730
  %v1766 = vmul.f32 %v1483, %v1730
  %v1767 = vmul.f32 %v1703, %v1730
  %v1768 = vmul.f32 %v1484, %v1730
  %v1769 = vmul.f32 %v1485, %v1730
  %v1770 = vmul.f32 %v1704, %v1730
  %v1771 = vmul.f32 %v1486, %v1730
  %v1772 = vmul.f32 %v1487, %v1730
  %v1773 = vmul.f32 %v1705, %v1730
  %v1774 = vmul.f32 %v1488, %v1730
  %v1775 = vmul.f32 %v1489, %v1730
  %v1776 = vmul.f32 %v1706, %v1730
  %v1777 = vmul.f32 %v1490, %v1730
  %v1778 = vmul.f32 %v1491, %v1730
  %v1779 = vmul.f32 %v1707, %v1730
  %v1780 = vmul.f32 %v1492, %v1730
  %v1781 = vmul.f32 %v1493, %v1730
  %v1782 = vmul.f32 %v1708, %v1730
  %v1783 = vmul.f32 %v1494, %v1730
  %v1784 = vmul.f32 %v1495, %v1730
  %v1785 = vmul.f32 %v1709, %v1730
  %v1786 = vmul.f32 %v1496, %v1730
  %v1787 = vmul.f32 %v1497, %v1730
  %v1788 = vmul.f32 %v1710, %v1730
  %v1789 = vmul.f32 %v1498, %v1730
  %v1790 = vmul.f32 %v1499, %v1730
  %v1791 = vmul.f32 %v1711, %v1730
  %v1792 = vmul.f32 %v1500, %v1730
  %v1793 = vmul.f32 %v1501, %v1730
  %v1794 = vmul.f32 %v1712, %v1730
  %v1795 = vmul.f32 %v1502, %v1730
  %v1796 = vmul.f32 %v1503, %v1730
  %v1797 = vmul.f32 %v1713, %v1730
  %v1798 = vmul.f32 %v1504, %v1730
  %v1799 = vmul.f32 %v1505, %v1730
  %v1800 = vmul.f32 %v1714, %v1730
  %v1801 = vmul.f32 %v1506, %v1730
  %v1802 = vmul.f32 %v1507, %v1730
  %v1803 = vmul.f32 %v1715, %v1730
  %v1804 = vmul.f32 %v1508, %v1730
  %v1805 = vmul.f32 %v1509, %v1730
  %v1806 = vmul.f32 %v1716, %v1730
  %v1807 = vmul.f32 %v1510, %v1730
  %v1808 = vmul.f32 %v1511, %v1730
  %v1809 = vmul.f32 %v1717, %v1730
  %v1810 = vmul.f32 %v1512, %v1730
  %v1811 = vmul.f32 %v1513, %v1730
  %v1812 = vmul.f32 %v1718, %v1730
  %v1813 = vmul.f32 %v1514, %v1730
  %v1814 = vmul.f32 %v1515, %v1730
  %v1815 = vmul.f32 %v1719, %v1730
  %v1816 = vmul.f32 %v1516, %v1730
  %v1817 = vmul.f32 %v1517, %v1730
  %v1818 = vmul.f32 %v1720, %v1730
  %v1819 = vmul.f32 %v1518, %v1730
  %v1820 = vmul.f32 %v1519, %v1730
  %v1821 = vmul.f32 %v1721, %v1730
  %v1822 = vmul.f32 %v1520, %v1730
  %v1823 = vmul.f32 %v1521, %v1730
  %v1824 = vmul.f32 %v1722, %v1730
  %v1825 = vmul.f32 %v1522, %v1730
  %v1826 = vmul.f32 %v1523, %v1730
  %v1827 = vmul.f32 %v1723, %v1730
  %v1924 = vrot.slane %v1732, 1
  %v1925 = vrot.slane %v1733, 1
  %v1926 = vsel %vm554, %v1924, %v1925
  %v1927 = vrot.slane %v1734, 1
  %v1928 = vsel %vm554, %v1925, %v1927
  %v1929 = vrot.slane %v1735, 1
  %v1930 = vrot.slane %v1736, 1
  %v1931 = vsel %vm554, %v1929, %v1930
  %v1932 = vrot.slane %v1737, 1
  %v1933 = vsel %vm554, %v1930, %v1932
  %v1934 = vrot.slane %v1738, 1
  %v1935 = vrot.slane %v1739, 1
  %v1936 = vsel %vm554, %v1934, %v1935
  %v1937 = vrot.slane %v1740, 1
  %v1938 = vsel %vm554, %v1935, %v1937
  %v1939 = vrot.slane %v1741, 1
  %v1940 = vrot.slane %v1742, 1
  %v1941 = vsel %vm554, %v1939, %v1940
  %v1942 = vrot.slane %v1743, 1
  %v1943 = vsel %vm554, %v1940, %v1942
  %v1944 = vrot.slane %v1744, 1
  %v1945 = vrot.slane %v1745, 1
  %v1946 = vsel %vm554, %v1944, %v1945
  %v1947 = vrot.slane %v1746, 1
  %v1948 = vsel %vm554, %v1945, %v1947
  %v1949 = vrot.slane %v1747, 1
  %v1950 = vrot.slane %v1748, 1
  %v1951 = vsel %vm554, %v1949, %v1950
  %v1952 = vrot.slane %v1749, 1
  %v1953 = vsel %vm554, %v1950, %v1952
  %v1954 = vrot.slane %v1750, 1
  %v1955 = vrot.slane %v1751, 1
  %v1956 = vsel %vm554, %v1954, %v1955
  %v1957 = vrot.slane %v1752, 1
  %v1958 = vsel %vm554, %v1955, %v1957
  %v1959 = vrot.slane %v1753, 1
  %v1960 = vrot.slane %v1754, 1
  %v1961 = vsel %vm554, %v1959, %v1960
  %v1962 = vrot.slane %v1755, 1
  %v1963 = vsel %vm554, %v1960, %v1962
  %v1964 = vrot.slane %v1756, 1
  %v1965 = vrot.slane %v1757, 1
  %v1966 = vsel %vm554, %v1964, %v1965
  %v1967 = vrot.slane %v1758, 1
  %v1968 = vsel %vm554, %v1965, %v1967
  %v1969 = vrot.slane %v1759, 1
  %v1970 = vrot.slane %v1760, 1
  %v1971 = vsel %vm554, %v1969, %v1970
  %v1972 = vrot.slane %v1761, 1
  %v1973 = vsel %vm554, %v1970, %v1972
  %v1974 = vrot.slane %v1762, 1
  %v1975 = vrot.slane %v1763, 1
  %v1976 = vsel %vm554, %v1974, %v1975
  %v1977 = vrot.slane %v1764, 1
  %v1978 = vsel %vm554, %v1975, %v1977
  %v1979 = vrot.slane %v1765, 1
  %v1980 = vrot.slane %v1766, 1
  %v1981 = vsel %vm554, %v1979, %v1980
  %v1982 = vrot.slane %v1767, 1
  %v1983 = vsel %vm554, %v1980, %v1982
  %v1984 = vrot.slane %v1768, 1
  %v1985 = vrot.slane %v1769, 1
  %v1986 = vsel %vm554, %v1984, %v1985
  %v1987 = vrot.slane %v1770, 1
  %v1988 = vsel %vm554, %v1985, %v1987
  %v1989 = vrot.slane %v1771, 1
  %v1990 = vrot.slane %v1772, 1
  %v1991 = vsel %vm554, %v1989, %v1990
  %v1992 = vrot.slane %v1773, 1
  %v1993 = vsel %vm554, %v1990, %v1992
  %v1994 = vrot.slane %v1774, 1
  %v1995 = vrot.slane %v1775, 1
  %v1996 = vsel %vm554, %v1994, %v1995
  %v1997 = vrot.slane %v1776, 1
  %v1998 = vsel %vm554, %v1995, %v1997
  %v1999 = vrot.slane %v1777, 1
  %v2000 = vrot.slane %v1778, 1
  %v2001 = vsel %vm554, %v1999, %v2000
  %v2002 = vrot.slane %v1779, 1
  %v2003 = vsel %vm554, %v2000, %v2002
  %v2004 = vrot.slane %v1780, 1
  %v2005 = vrot.slane %v1781, 1
  %v2006 = vsel %vm554, %v2004, %v2005
  %v2007 = vrot.slane %v1782, 1
  %v2008 = vsel %vm554, %v2005, %v2007
  %v2009 = vrot.slane %v1783, 1
  %v2010 = vrot.slane %v1784, 1
  %v2011 = vsel %vm554, %v2009, %v2010
  %v2012 = vrot.slane %v1785, 1
  %v2013 = vsel %vm554, %v2010, %v2012
  %v2014 = vrot.slane %v1786, 1
  %v2015 = vrot.slane %v1787, 1
  %v2016 = vsel %vm554, %v2014, %v2015
  %v2017 = vrot.slane %v1788, 1
  %v2018 = vsel %vm554, %v2015, %v2017
  %v2019 = vrot.slane %v1789, 1
  %v2020 = vrot.slane %v1790, 1
  %v2021 = vsel %vm554, %v2019, %v2020
  %v2022 = vrot.slane %v1791, 1
  %v2023 = vsel %vm554, %v2020, %v2022
  %v2024 = vrot.slane %v1792, 1
  %v2025 = vrot.slane %v1793, 1
  %v2026 = vsel %vm554, %v2024, %v2025
  %v2027 = vrot.slane %v1794, 1
  %v2028 = vsel %vm554, %v2025, %v2027
  %v2029 = vrot.slane %v1795, 1
  %v2030 = vrot.slane %v1796, 1
  %v2031 = vsel %vm554, %v2029, %v2030
  %v2032 = vrot.slane %v1797, 1
  %v2033 = vsel %vm554, %v2030, %v2032
  %v2034 = vrot.slane %v1798, 1
  %v2035 = vrot.slane %v1799, 1
  %v2036 = vsel %vm554, %v2034, %v2035
  %v2037 = vrot.slane %v1800, 1
  %v2038 = vsel %vm554, %v2035, %v2037
  %v2039 = vrot.slane %v1801, 1
  %v2040 = vrot.slane %v1802, 1
  %v2041 = vsel %vm554, %v2039, %v2040
  %v2042 = vrot.slane %v1803, 1
  %v2043 = vsel %vm554, %v2040, %v2042
  %v2044 = vrot.slane %v1804, 1
  %v2045 = vrot.slane %v1805, 1
  %v2046 = vsel %vm554, %v2044, %v2045
  %v2047 = vrot.slane %v1806, 1
  %v2048 = vsel %vm554, %v2045, %v2047
  %v2049 = vrot.slane %v1807, 1
  %v2050 = vrot.slane %v1808, 1
  %v2051 = vsel %vm554, %v2049, %v2050
  %v2052 = vrot.slane %v1809, 1
  %v2053 = vsel %vm554, %v2050, %v2052
  %v2054 = vrot.slane %v1810, 1
  %v2055 = vrot.slane %v1811, 1
  %v2056 = vsel %vm554, %v2054, %v2055
  %v2057 = vrot.slane %v1812, 1
  %v2058 = vsel %vm554, %v2055, %v2057
  %v2059 = vrot.slane %v1813, 1
  %v2060 = vrot.slane %v1814, 1
  %v2061 = vsel %vm554, %v2059, %v2060
  %v2062 = vrot.slane %v1815, 1
  %v2063 = vsel %vm554, %v2060, %v2062
  %v2064 = vrot.slane %v1816, 1
  %v2065 = vrot.slane %v1817, 1
  %v2066 = vsel %vm554, %v2064, %v2065
  %v2067 = vrot.slane %v1818, 1
  %v2068 = vsel %vm554, %v2065, %v2067
  %v2069 = vrot.slane %v1819, 1
  %v2070 = vrot.slane %v1820, 1
  %v2071 = vsel %vm554, %v2069, %v2070
  %v2072 = vrot.slane %v1821, 1
  %v2073 = vsel %vm554, %v2070, %v2072
  %v2074 = vrot.slane %v1822, 1
  %v2075 = vrot.slane %v1823, 1
  %v2076 = vsel %vm554, %v2074, %v2075
  %v2077 = vrot.slane %v1824, 1
  %v2078 = vsel %vm554, %v2075, %v2077
  %v2079 = vrot.slane %v1825, 1
  %v2080 = vrot.slane %v1826, 1
  %v2081 = vsel %vm554, %v2079, %v2080
  %v2082 = vrot.slane %v1827, 1
  %v2083 = vsel %vm554, %v2080, %v2082
  %v2148 = vadd.f32 %v1596, %v1926
  %v2149 = vadd.f32 %v1597, %v1928
  %v2150 = vadd.f32 %v1598, %v1931
  %v2151 = vadd.f32 %v1599, %v1933
  %v2152 = vadd.f32 %v1600, %v1936
  %v2153 = vadd.f32 %v1601, %v1938
  %v2154 = vadd.f32 %v1602, %v1941
  %v2155 = vadd.f32 %v1603, %v1943
  %v2156 = vadd.f32 %v1604, %v1946
  %v2157 = vadd.f32 %v1605, %v1948
  %v2158 = vadd.f32 %v1606, %v1951
  %v2159 = vadd.f32 %v1607, %v1953
  %v2160 = vadd.f32 %v1608, %v1956
  %v2161 = vadd.f32 %v1609, %v1958
  %v2162 = vadd.f32 %v1610, %v1961
  %v2163 = vadd.f32 %v1611, %v1963
  %v2164 = vadd.f32 %v1612, %v1966
  %v2165 = vadd.f32 %v1613, %v1968
  %v2166 = vadd.f32 %v1614, %v1971
  %v2167 = vadd.f32 %v1615, %v1973
  %v2168 = vadd.f32 %v1616, %v1976
  %v2169 = vadd.f32 %v1617, %v1978
  %v2170 = vadd.f32 %v1618, %v1981
  %v2171 = vadd.f32 %v1619, %v1983
  %v2172 = vadd.f32 %v1620, %v1986
  %v2173 = vadd.f32 %v1621, %v1988
  %v2174 = vadd.f32 %v1622, %v1991
  %v2175 = vadd.f32 %v1623, %v1993
  %v2176 = vadd.f32 %v1624, %v1996
  %v2177 = vadd.f32 %v1625, %v1998
  %v2178 = vadd.f32 %v1626, %v2001
  %v2179 = vadd.f32 %v1627, %v2003
  %v2180 = vadd.f32 %v1628, %v2006
  %v2181 = vadd.f32 %v1629, %v2008
  %v2182 = vadd.f32 %v1630, %v2011
  %v2183 = vadd.f32 %v1631, %v2013
  %v2184 = vadd.f32 %v1632, %v2016
  %v2185 = vadd.f32 %v1633, %v2018
  %v2186 = vadd.f32 %v1634, %v2021
  %v2187 = vadd.f32 %v1635, %v2023
  %v2188 = vadd.f32 %v1636, %v2026
  %v2189 = vadd.f32 %v1637, %v2028
  %v2190 = vadd.f32 %v1638, %v2031
  %v2191 = vadd.f32 %v1639, %v2033
  %v2192 = vadd.f32 %v1640, %v2036
  %v2193 = vadd.f32 %v1641, %v2038
  %v2194 = vadd.f32 %v1642, %v2041
  %v2195 = vadd.f32 %v1643, %v2043
  %v2196 = vadd.f32 %v1644, %v2046
  %v2197 = vadd.f32 %v1645, %v2048
  %v2198 = vadd.f32 %v1646, %v2051
  %v2199 = vadd.f32 %v1647, %v2053
  %v2200 = vadd.f32 %v1648, %v2056
  %v2201 = vadd.f32 %v1649, %v2058
  %v2202 = vadd.f32 %v1650, %v2061
  %v2203 = vadd.f32 %v1651, %v2063
  %v2204 = vadd.f32 %v1652, %v2066
  %v2205 = vadd.f32 %v1653, %v2068
  %v2206 = vadd.f32 %v1654, %v2071
  %v2207 = vadd.f32 %v1655, %v2073
  %v2208 = vadd.f32 %v1656, %v2076
  %v2209 = vadd.f32 %v1657, %v2078
  %v2210 = vadd.f32 %v1658, %v2081
  %v2211 = vadd.f32 %v1659, %v2083
  %v2212 = vld [vmem:[%s1] sm:$0xe]
  %v2213 = vld [vmem:[%s1 + $0xc] sm:$0xe]
  %v2214 = vld [vmem:[%s1 + $0x18] sm:$0xe]
  %v2215 = vld [vmem:[%s1 + $0x24] sm:$0xe]
  %v2216 = vld [vmem:[%s1 + $0x30] sm:$0xe]
  %v2217 = vld [vmem:[%s1 + $0x3c] sm:$0xe]
  %v2218 = vld [vmem:[%s1 + $0x48] sm:$0xe]
  %v2219 = vld [vmem:[%s1 + $0x54] sm:$0xe]
  %v2220 = vld [vmem:[%s1 + $0x60] sm:$0xe]
  %v2221 = vld [vmem:[%s1 + $0x6c] sm:$0xe]
  %v2222 = vld [vmem:[%s1 + $0x78] sm:$0xe]
  %v2223 = vld [vmem:[%s1 + $0x84] sm:$0xe]
  %v2224 = vld [vmem:[%s1 + $0x90] sm:$0xe]
  %v2225 = vld [vmem:[%s1 + $0x9c] sm:$0xe]
  %v2226 = vld [vmem:[%s1 + $0xa8] sm:$0xe]
  %v2227 = vld [vmem:[%s1 + $0xb4] sm:$0xe]
  %v2228 = vld [vmem:[%s1 + $0xc0] sm:$0xe]
  %v2229 = vld [vmem:[%s1 + $0xcc] sm:$0xe]
  %v2230 = vld [vmem:[%s1 + $0xd8] sm:$0xe]
  %v2231 = vld [vmem:[%s1 + $0xe4] sm:$0xe]
  %v2232 = vld [vmem:[%s1 + $0xf0] sm:$0xe]
  %v2233 = vld [vmem:[%s1 + $0xfc] sm:$0xe]
  %v2234 = vld [vmem:[%s1 + $0x108] sm:$0xe]
  %v2235 = vld [vmem:[%s1 + $0x114] sm:$0xe]
  %v2236 = vld [vmem:[%s1 + $0x120] sm:$0xe]
  %v2237 = vld [vmem:[%s1 + $0x12c] sm:$0xe]
  %v2238 = vld [vmem:[%s1 + $0x138] sm:$0xe]
  %v2239 = vld [vmem:[%s1 + $0x144] sm:$0xe]
  %v2240 = vld [vmem:[%s1 + $0x150] sm:$0xe]
  %v2241 = vld [vmem:[%s1 + $0x15c] sm:$0xe]
  %v2242 = vld [vmem:[%s1 + $0x168] sm:$0xe]
  %v2243 = vld [vmem:[%s1 + $0x174] sm:$0xe]
  %v2244 = vunpack.c.l.bf16 %v2212
  %v2245 = vunpack.c.l.bf16 %v2213
  %v2246 = vunpack.c.l.bf16 %v2214
  %v2247 = vunpack.c.l.bf16 %v2215
  %v2248 = vunpack.c.l.bf16 %v2216
  %v2249 = vunpack.c.l.bf16 %v2217
  %v2250 = vunpack.c.l.bf16 %v2218
  %v2251 = vunpack.c.l.bf16 %v2219
  %v2252 = vunpack.c.l.bf16 %v2220
  %v2253 = vunpack.c.l.bf16 %v2221
  %v2254 = vunpack.c.l.bf16 %v2222
  %v2255 = vunpack.c.l.bf16 %v2223
  %v2256 = vunpack.c.l.bf16 %v2224
  %v2257 = vunpack.c.l.bf16 %v2225
  %v2258 = vunpack.c.l.bf16 %v2226
  %v2259 = vunpack.c.l.bf16 %v2227
  %v2260 = vunpack.c.l.bf16 %v2228
  %v2261 = vunpack.c.l.bf16 %v2229
  %v2262 = vunpack.c.l.bf16 %v2230
  %v2263 = vunpack.c.l.bf16 %v2231
  %v2264 = vunpack.c.l.bf16 %v2232
  %v2265 = vunpack.c.l.bf16 %v2233
  %v2266 = vunpack.c.l.bf16 %v2234
  %v2267 = vunpack.c.l.bf16 %v2235
  %v2268 = vunpack.c.l.bf16 %v2236
  %v2269 = vunpack.c.l.bf16 %v2237
  %v2270 = vunpack.c.l.bf16 %v2238
  %v2271 = vunpack.c.l.bf16 %v2239
  %v2272 = vunpack.c.l.bf16 %v2240
  %v2273 = vunpack.c.l.bf16 %v2241
  %v2274 = vunpack.c.l.bf16 %v2242
  %v2275 = vunpack.c.l.bf16 %v2243
  %s2276 = scalar_lea.vmem %s3, 5
  %v2277 = vld [vmem:[%s2276] sm:$0x1]
  %v2279 = vlaneseq
  %v2280 = vshrl.u32 %v2279, 7
  %v2281 = vsub.s32 0, %v2280
  %v2282 = vrot.slane %v2277, %v2281
  %v2284 = vmul.f32 %v2244, %v2282
  %v2285 = vmul.f32 %v1461, %v2282
  %v2286 = vmul.f32 %v1692, %v2282
  %v2287 = vmul.f32 %v2245, %v2282
  %v2288 = vmul.f32 %v1463, %v2282
  %v2289 = vmul.f32 %v1693, %v2282
  %v2290 = vmul.f32 %v2246, %v2282
  %v2291 = vmul.f32 %v1465, %v2282
  %v2292 = vmul.f32 %v1694, %v2282
  %v2293 = vmul.f32 %v2247, %v2282
  %v2294 = vmul.f32 %v1467, %v2282
  %v2295 = vmul.f32 %v1695, %v2282
  %v2296 = vmul.f32 %v2248, %v2282
  %v2297 = vmul.f32 %v1469, %v2282
  %v2298 = vmul.f32 %v1696, %v2282
  %v2299 = vmul.f32 %v2249, %v2282
  %v2300 = vmul.f32 %v1471, %v2282
  %v2301 = vmul.f32 %v1697, %v2282
  %v2302 = vmul.f32 %v2250, %v2282
  %v2303 = vmul.f32 %v1473, %v2282
  %v2304 = vmul.f32 %v1698, %v2282
  %v2305 = vmul.f32 %v2251, %v2282
  %v2306 = vmul.f32 %v1475, %v2282
  %v2307 = vmul.f32 %v1699, %v2282
  %v2308 = vmul.f32 %v2252, %v2282
  %v2309 = vmul.f32 %v1477, %v2282
  %v2310 = vmul.f32 %v1700, %v2282
  %v2311 = vmul.f32 %v2253, %v2282
  %v2312 = vmul.f32 %v1479, %v2282
  %v2313 = vmul.f32 %v1701, %v2282
  %v2314 = vmul.f32 %v2254, %v2282
  %v2315 = vmul.f32 %v1481, %v2282
  %v2316 = vmul.f32 %v1702, %v2282
  %v2317 = vmul.f32 %v2255, %v2282
  %v2318 = vmul.f32 %v1483, %v2282
  %v2319 = vmul.f32 %v1703, %v2282
  %v2320 = vmul.f32 %v2256, %v2282
  %v2321 = vmul.f32 %v1485, %v2282
  %v2322 = vmul.f32 %v1704, %v2282
  %v2323 = vmul.f32 %v2257, %v2282
  %v2324 = vmul.f32 %v1487, %v2282
  %v2325 = vmul.f32 %v1705, %v2282
  %v2326 = vmul.f32 %v2258, %v2282
  %v2327 = vmul.f32 %v1489, %v2282
  %v2328 = vmul.f32 %v1706, %v2282
  %v2329 = vmul.f32 %v2259, %v2282
  %v2330 = vmul.f32 %v1491, %v2282
  %v2331 = vmul.f32 %v1707, %v2282
  %v2332 = vmul.f32 %v2260, %v2282
  %v2333 = vmul.f32 %v1493, %v2282
  %v2334 = vmul.f32 %v1708, %v2282
  %v2335 = vmul.f32 %v2261, %v2282
  %v2336 = vmul.f32 %v1495, %v2282
  %v2337 = vmul.f32 %v1709, %v2282
  %v2338 = vmul.f32 %v2262, %v2282
  %v2339 = vmul.f32 %v1497, %v2282
  %v2340 = vmul.f32 %v1710, %v2282
  %v2341 = vmul.f32 %v2263, %v2282
  %v2342 = vmul.f32 %v1499, %v2282
  %v2343 = vmul.f32 %v1711, %v2282
  %v2344 = vmul.f32 %v2264, %v2282
  %v2345 = vmul.f32 %v1501, %v2282
  %v2346 = vmul.f32 %v1712, %v2282
  %v2347 = vmul.f32 %v2265, %v2282
  %v2348 = vmul.f32 %v1503, %v2282
  %v2349 = vmul.f32 %v1713, %v2282
  %v2350 = vmul.f32 %v2266, %v2282
  %v2351 = vmul.f32 %v1505, %v2282
  %v2352 = vmul.f32 %v1714, %v2282
  %v2353 = vmul.f32 %v2267, %v2282
  %v2354 = vmul.f32 %v1507, %v2282
  %v2355 = vmul.f32 %v1715, %v2282
  %v2356 = vmul.f32 %v2268, %v2282
  %v2357 = vmul.f32 %v1509, %v2282
  %v2358 = vmul.f32 %v1716, %v2282
  %v2359 = vmul.f32 %v2269, %v2282
  %v2360 = vmul.f32 %v1511, %v2282
  %v2361 = vmul.f32 %v1717, %v2282
  %v2362 = vmul.f32 %v2270, %v2282
  %v2363 = vmul.f32 %v1513, %v2282
  %v2364 = vmul.f32 %v1718, %v2282
  %v2365 = vmul.f32 %v2271, %v2282
  %v2366 = vmul.f32 %v1515, %v2282
  %v2367 = vmul.f32 %v1719, %v2282
  %v2368 = vmul.f32 %v2272, %v2282
  %v2369 = vmul.f32 %v1517, %v2282
  %v2370 = vmul.f32 %v1720, %v2282
  %v2371 = vmul.f32 %v2273, %v2282
  %v2372 = vmul.f32 %v1519, %v2282
  %v2373 = vmul.f32 %v1721, %v2282
  %v2374 = vmul.f32 %v2274, %v2282
  %v2375 = vmul.f32 %v1521, %v2282
  %v2376 = vmul.f32 %v1722, %v2282
  %v2377 = vmul.f32 %v2275, %v2282
  %v2378 = vmul.f32 %v1523, %v2282
  %v2379 = vmul.f32 %v1723, %v2282
  %v2476 = vrot.slane %v2284, 2
  %v2477 = vrot.slane %v2285, 2
  %v2478 = vsel %vm1107, %v2476, %v2477
  %v2479 = vrot.slane %v2286, 2
  %v2480 = vsel %vm1107, %v2477, %v2479
  %v2481 = vrot.slane %v2287, 2
  %v2482 = vrot.slane %v2288, 2
  %v2483 = vsel %vm1107, %v2481, %v2482
  %v2484 = vrot.slane %v2289, 2
  %v2485 = vsel %vm1107, %v2482, %v2484
  %v2486 = vrot.slane %v2290, 2
  %v2487 = vrot.slane %v2291, 2
  %v2488 = vsel %vm1107, %v2486, %v2487
  %v2489 = vrot.slane %v2292, 2
  %v2490 = vsel %vm1107, %v2487, %v2489
  %v2491 = vrot.slane %v2293, 2
  %v2492 = vrot.slane %v2294, 2
  %v2493 = vsel %vm1107, %v2491, %v2492
  %v2494 = vrot.slane %v2295, 2
  %v2495 = vsel %vm1107, %v2492, %v2494
  %v2496 = vrot.slane %v2296, 2
  %v2497 = vrot.slane %v2297, 2
  %v2498 = vsel %vm1107, %v2496, %v2497
  %v2499 = vrot.slane %v2298, 2
  %v2500 = vsel %vm1107, %v2497, %v2499
  %v2501 = vrot.slane %v2299, 2
  %v2502 = vrot.slane %v2300, 2
  %v2503 = vsel %vm1107, %v2501, %v2502
  %v2504 = vrot.slane %v2301, 2
  %v2505 = vsel %vm1107, %v2502, %v2504
  %v2506 = vrot.slane %v2302, 2
  %v2507 = vrot.slane %v2303, 2
  %v2508 = vsel %vm1107, %v2506, %v2507
  %v2509 = vrot.slane %v2304, 2
  %v2510 = vsel %vm1107, %v2507, %v2509
  %v2511 = vrot.slane %v2305, 2
  %v2512 = vrot.slane %v2306, 2
  %v2513 = vsel %vm1107, %v2511, %v2512
  %v2514 = vrot.slane %v2307, 2
  %v2515 = vsel %vm1107, %v2512, %v2514
  %v2516 = vrot.slane %v2308, 2
  %v2517 = vrot.slane %v2309, 2
  %v2518 = vsel %vm1107, %v2516, %v2517
  %v2519 = vrot.slane %v2310, 2
  %v2520 = vsel %vm1107, %v2517, %v2519
  %v2521 = vrot.slane %v2311, 2
  %v2522 = vrot.slane %v2312, 2
  %v2523 = vsel %vm1107, %v2521, %v2522
  %v2524 = vrot.slane %v2313, 2
  %v2525 = vsel %vm1107, %v2522, %v2524
  %v2526 = vrot.slane %v2314, 2
  %v2527 = vrot.slane %v2315, 2
  %v2528 = vsel %vm1107, %v2526, %v2527
  %v2529 = vrot.slane %v2316, 2
  %v2530 = vsel %vm1107, %v2527, %v2529
  %v2531 = vrot.slane %v2317, 2
  %v2532 = vrot.slane %v2318, 2
  %v2533 = vsel %vm1107, %v2531, %v2532
  %v2534 = vrot.slane %v2319, 2
  %v2535 = vsel %vm1107, %v2532, %v2534
  %v2536 = vrot.slane %v2320, 2
  %v2537 = vrot.slane %v2321, 2
  %v2538 = vsel %vm1107, %v2536, %v2537
  %v2539 = vrot.slane %v2322, 2
  %v2540 = vsel %vm1107, %v2537, %v2539
  %v2541 = vrot.slane %v2323, 2
  %v2542 = vrot.slane %v2324, 2
  %v2543 = vsel %vm1107, %v2541, %v2542
  %v2544 = vrot.slane %v2325, 2
  %v2545 = vsel %vm1107, %v2542, %v2544
  %v2546 = vrot.slane %v2326, 2
  %v2547 = vrot.slane %v2327, 2
  %v2548 = vsel %vm1107, %v2546, %v2547
  %v2549 = vrot.slane %v2328, 2
  %v2550 = vsel %vm1107, %v2547, %v2549
  %v2551 = vrot.slane %v2329, 2
  %v2552 = vrot.slane %v2330, 2
  %v2553 = vsel %vm1107, %v2551, %v2552
  %v2554 = vrot.slane %v2331, 2
  %v2555 = vsel %vm1107, %v2552, %v2554
  %v2556 = vrot.slane %v2332, 2
  %v2557 = vrot.slane %v2333, 2
  %v2558 = vsel %vm1107, %v2556, %v2557
  %v2559 = vrot.slane %v2334, 2
  %v2560 = vsel %vm1107, %v2557, %v2559
  %v2561 = vrot.slane %v2335, 2
  %v2562 = vrot.slane %v2336, 2
  %v2563 = vsel %vm1107, %v2561, %v2562
  %v2564 = vrot.slane %v2337, 2
  %v2565 = vsel %vm1107, %v2562, %v2564
  %v2566 = vrot.slane %v2338, 2
  %v2567 = vrot.slane %v2339, 2
  %v2568 = vsel %vm1107, %v2566, %v2567
  %v2569 = vrot.slane %v2340, 2
  %v2570 = vsel %vm1107, %v2567, %v2569
  %v2571 = vrot.slane %v2341, 2
  %v2572 = vrot.slane %v2342, 2
  %v2573 = vsel %vm1107, %v2571, %v2572
  %v2574 = vrot.slane %v2343, 2
  %v2575 = vsel %vm1107, %v2572, %v2574
  %v2576 = vrot.slane %v2344, 2
  %v2577 = vrot.slane %v2345, 2
  %v2578 = vsel %vm1107, %v2576, %v2577
  %v2579 = vrot.slane %v2346, 2
  %v2580 = vsel %vm1107, %v2577, %v2579
  %v2581 = vrot.slane %v2347, 2
  %v2582 = vrot.slane %v2348, 2
  %v2583 = vsel %vm1107, %v2581, %v2582
  %v2584 = vrot.slane %v2349, 2
  %v2585 = vsel %vm1107, %v2582, %v2584
  %v2586 = vrot.slane %v2350, 2
  %v2587 = vrot.slane %v2351, 2
  %v2588 = vsel %vm1107, %v2586, %v2587
  %v2589 = vrot.slane %v2352, 2
  %v2590 = vsel %vm1107, %v2587, %v2589
  %v2591 = vrot.slane %v2353, 2
  %v2592 = vrot.slane %v2354, 2
  %v2593 = vsel %vm1107, %v2591, %v2592
  %v2594 = vrot.slane %v2355, 2
  %v2595 = vsel %vm1107, %v2592, %v2594
  %v2596 = vrot.slane %v2356, 2
  %v2597 = vrot.slane %v2357, 2
  %v2598 = vsel %vm1107, %v2596, %v2597
  %v2599 = vrot.slane %v2358, 2
  %v2600 = vsel %vm1107, %v2597, %v2599
  %v2601 = vrot.slane %v2359, 2
  %v2602 = vrot.slane %v2360, 2
  %v2603 = vsel %vm1107, %v2601, %v2602
  %v2604 = vrot.slane %v2361, 2
  %v2605 = vsel %vm1107, %v2602, %v2604
  %v2606 = vrot.slane %v2362, 2
  %v2607 = vrot.slane %v2363, 2
  %v2608 = vsel %vm1107, %v2606, %v2607
  %v2609 = vrot.slane %v2364, 2
  %v2610 = vsel %vm1107, %v2607, %v2609
  %v2611 = vrot.slane %v2365, 2
  %v2612 = vrot.slane %v2366, 2
  %v2613 = vsel %vm1107, %v2611, %v2612
  %v2614 = vrot.slane %v2367, 2
  %v2615 = vsel %vm1107, %v2612, %v2614
  %v2616 = vrot.slane %v2368, 2
  %v2617 = vrot.slane %v2369, 2
  %v2618 = vsel %vm1107, %v2616, %v2617
  %v2619 = vrot.slane %v2370, 2
  %v2620 = vsel %vm1107, %v2617, %v2619
  %v2621 = vrot.slane %v2371, 2
  %v2622 = vrot.slane %v2372, 2
  %v2623 = vsel %vm1107, %v2621, %v2622
  %v2624 = vrot.slane %v2373, 2
  %v2625 = vsel %vm1107, %v2622, %v2624
  %v2626 = vrot.slane %v2374, 2
  %v2627 = vrot.slane %v2375, 2
  %v2628 = vsel %vm1107, %v2626, %v2627
  %v2629 = vrot.slane %v2376, 2
  %v2630 = vsel %vm1107, %v2627, %v2629
  %v2631 = vrot.slane %v2377, 2
  %v2632 = vrot.slane %v2378, 2
  %v2633 = vsel %vm1107, %v2631, %v2632
  %v2634 = vrot.slane %v2379, 2
  %v2635 = vsel %vm1107, %v2632, %v2634
  %v2700 = vadd.f32 %v2148, %v2478
  %v2701 = vadd.f32 %v2149, %v2480
  %v2702 = vadd.f32 %v2150, %v2483
  %v2703 = vadd.f32 %v2151, %v2485
  %v2704 = vadd.f32 %v2152, %v2488
  %v2705 = vadd.f32 %v2153, %v2490
  %v2706 = vadd.f32 %v2154, %v2493
  %v2707 = vadd.f32 %v2155, %v2495
  %v2708 = vadd.f32 %v2156, %v2498
  %v2709 = vadd.f32 %v2157, %v2500
  %v2710 = vadd.f32 %v2158, %v2503
  %v2711 = vadd.f32 %v2159, %v2505
  %v2712 = vadd.f32 %v2160, %v2508
  %v2713 = vadd.f32 %v2161, %v2510
  %v2714 = vadd.f32 %v2162, %v2513
  %v2715 = vadd.f32 %v2163, %v2515
  %v2716 = vadd.f32 %v2164, %v2518
  %v2717 = vadd.f32 %v2165, %v2520
  %v2718 = vadd.f32 %v2166, %v2523
  %v2719 = vadd.f32 %v2167, %v2525
  %v2720 = vadd.f32 %v2168, %v2528
  %v2721 = vadd.f32 %v2169, %v2530
  %v2722 = vadd.f32 %v2170, %v2533
  %v2723 = vadd.f32 %v2171, %v2535
  %v2724 = vadd.f32 %v2172, %v2538
  %v2725 = vadd.f32 %v2173, %v2540
  %v2726 = vadd.f32 %v2174, %v2543
  %v2727 = vadd.f32 %v2175, %v2545
  %v2728 = vadd.f32 %v2176, %v2548
  %v2729 = vadd.f32 %v2177, %v2550
  %v2730 = vadd.f32 %v2178, %v2553
  %v2731 = vadd.f32 %v2179, %v2555
  %v2732 = vadd.f32 %v2180, %v2558
  %v2733 = vadd.f32 %v2181, %v2560
  %v2734 = vadd.f32 %v2182, %v2563
  %v2735 = vadd.f32 %v2183, %v2565
  %v2736 = vadd.f32 %v2184, %v2568
  %v2737 = vadd.f32 %v2185, %v2570
  %v2738 = vadd.f32 %v2186, %v2573
  %v2739 = vadd.f32 %v2187, %v2575
  %v2740 = vadd.f32 %v2188, %v2578
  %v2741 = vadd.f32 %v2189, %v2580
  %v2742 = vadd.f32 %v2190, %v2583
  %v2743 = vadd.f32 %v2191, %v2585
  %v2744 = vadd.f32 %v2192, %v2588
  %v2745 = vadd.f32 %v2193, %v2590
  %v2746 = vadd.f32 %v2194, %v2593
  %v2747 = vadd.f32 %v2195, %v2595
  %v2748 = vadd.f32 %v2196, %v2598
  %v2749 = vadd.f32 %v2197, %v2600
  %v2750 = vadd.f32 %v2198, %v2603
  %v2751 = vadd.f32 %v2199, %v2605
  %v2752 = vadd.f32 %v2200, %v2608
  %v2753 = vadd.f32 %v2201, %v2610
  %v2754 = vadd.f32 %v2202, %v2613
  %v2755 = vadd.f32 %v2203, %v2615
  %v2756 = vadd.f32 %v2204, %v2618
  %v2757 = vadd.f32 %v2205, %v2620
  %v2758 = vadd.f32 %v2206, %v2623
  %v2759 = vadd.f32 %v2207, %v2625
  %v2760 = vadd.f32 %v2208, %v2628
  %v2761 = vadd.f32 %v2209, %v2630
  %v2762 = vadd.f32 %v2210, %v2633
  %v2763 = vadd.f32 %v2211, %v2635
  %v2764 = vld [vmem:[%s2] sm:$0xf]
  %v2765 = vld [vmem:[%s2 + $0x4] sm:$0xf]
  %v2766 = vld [vmem:[%s2 + $0xc] sm:$0xf]
  %v2767 = vld [vmem:[%s2 + $0x10] sm:$0xf]
  %v2768 = vld [vmem:[%s2 + $0x18] sm:$0xf]
  %v2769 = vld [vmem:[%s2 + $0x1c] sm:$0xf]
  %v2770 = vld [vmem:[%s2 + $0x24] sm:$0xf]
  %v2771 = vld [vmem:[%s2 + $0x28] sm:$0xf]
  %v2772 = vld [vmem:[%s2 + $0x30] sm:$0xf]
  %v2773 = vld [vmem:[%s2 + $0x34] sm:$0xf]
  %v2774 = vld [vmem:[%s2 + $0x3c] sm:$0xf]
  %v2775 = vld [vmem:[%s2 + $0x40] sm:$0xf]
  %v2776 = vld [vmem:[%s2 + $0x48] sm:$0xf]
  %v2777 = vld [vmem:[%s2 + $0x4c] sm:$0xf]
  %v2778 = vld [vmem:[%s2 + $0x54] sm:$0xf]
  %v2779 = vld [vmem:[%s2 + $0x58] sm:$0xf]
  %v2780 = vld [vmem:[%s2 + $0x60] sm:$0xf]
  %v2781 = vld [vmem:[%s2 + $0x64] sm:$0xf]
  %v2782 = vld [vmem:[%s2 + $0x6c] sm:$0xf]
  %v2783 = vld [vmem:[%s2 + $0x70] sm:$0xf]
  %v2784 = vld [vmem:[%s2 + $0x78] sm:$0xf]
  %v2785 = vld [vmem:[%s2 + $0x7c] sm:$0xf]
  %v2786 = vld [vmem:[%s2 + $0x84] sm:$0xf]
  %v2787 = vld [vmem:[%s2 + $0x88] sm:$0xf]
  %v2788 = vld [vmem:[%s2 + $0x90] sm:$0xf]
  %v2789 = vld [vmem:[%s2 + $0x94] sm:$0xf]
  %v2790 = vld [vmem:[%s2 + $0x9c] sm:$0xf]
  %v2791 = vld [vmem:[%s2 + $0xa0] sm:$0xf]
  %v2792 = vld [vmem:[%s2 + $0xa8] sm:$0xf]
  %v2793 = vld [vmem:[%s2 + $0xac] sm:$0xf]
  %v2794 = vld [vmem:[%s2 + $0xb4] sm:$0xf]
  %v2795 = vld [vmem:[%s2 + $0xb8] sm:$0xf]
  %v2796 = vld [vmem:[%s2 + $0xc0] sm:$0xf]
  %v2797 = vld [vmem:[%s2 + $0xc4] sm:$0xf]
  %v2798 = vld [vmem:[%s2 + $0xcc] sm:$0xf]
  %v2799 = vld [vmem:[%s2 + $0xd0] sm:$0xf]
  %v2800 = vld [vmem:[%s2 + $0xd8] sm:$0xf]
  %v2801 = vld [vmem:[%s2 + $0xdc] sm:$0xf]
  %v2802 = vld [vmem:[%s2 + $0xe4] sm:$0xf]
  %v2803 = vld [vmem:[%s2 + $0xe8] sm:$0xf]
  %v2804 = vld [vmem:[%s2 + $0xf0] sm:$0xf]
  %v2805 = vld [vmem:[%s2 + $0xf4] sm:$0xf]
  %v2806 = vld [vmem:[%s2 + $0xfc] sm:$0xf]
  %v2807 = vld [vmem:[%s2 + $0x100] sm:$0xf]
  %v2808 = vld [vmem:[%s2 + $0x108] sm:$0xf]
  %v2809 = vld [vmem:[%s2 + $0x10c] sm:$0xf]
  %v2810 = vld [vmem:[%s2 + $0x114] sm:$0xf]
  %v2811 = vld [vmem:[%s2 + $0x118] sm:$0xf]
  %v2812 = vld [vmem:[%s2 + $0x120] sm:$0xf]
  %v2813 = vld [vmem:[%s2 + $0x124] sm:$0xf]
  %v2814 = vld [vmem:[%s2 + $0x12c] sm:$0xf]
  %v2815 = vld [vmem:[%s2 + $0x130] sm:$0xf]
  %v2816 = vld [vmem:[%s2 + $0x138] sm:$0xf]
  %v2817 = vld [vmem:[%s2 + $0x13c] sm:$0xf]
  %v2818 = vld [vmem:[%s2 + $0x144] sm:$0xf]
  %v2819 = vld [vmem:[%s2 + $0x148] sm:$0xf]
  %v2820 = vld [vmem:[%s2 + $0x150] sm:$0xf]
  %v2821 = vld [vmem:[%s2 + $0x154] sm:$0xf]
  %v2822 = vld [vmem:[%s2 + $0x15c] sm:$0xf]
  %v2823 = vld [vmem:[%s2 + $0x160] sm:$0xf]
  %v2824 = vld [vmem:[%s2 + $0x168] sm:$0xf]
  %v2825 = vld [vmem:[%s2 + $0x16c] sm:$0xf]
  %v2826 = vld [vmem:[%s2 + $0x174] sm:$0xf]
  %v2827 = vld [vmem:[%s2 + $0x178] sm:$0xf]
  %v2828 = vunpack.c.l.bf16 %v2764
  %v2829 = vunpack.c.l.bf16 %v2765
  %v2830 = vunpack.c.l.bf16 %v2766
  %v2831 = vunpack.c.l.bf16 %v2767
  %v2832 = vunpack.c.l.bf16 %v2768
  %v2833 = vunpack.c.l.bf16 %v2769
  %v2834 = vunpack.c.l.bf16 %v2770
  %v2835 = vunpack.c.l.bf16 %v2771
  %v2836 = vunpack.c.l.bf16 %v2772
  %v2837 = vunpack.c.l.bf16 %v2773
  %v2838 = vunpack.c.l.bf16 %v2774
  %v2839 = vunpack.c.l.bf16 %v2775
  %v2840 = vunpack.c.l.bf16 %v2776
  %v2841 = vunpack.c.l.bf16 %v2777
  %v2842 = vunpack.c.l.bf16 %v2778
  %v2843 = vunpack.c.l.bf16 %v2779
  %v2844 = vunpack.c.l.bf16 %v2780
  %v2845 = vunpack.c.l.bf16 %v2781
  %v2846 = vunpack.c.l.bf16 %v2782
  %v2847 = vunpack.c.l.bf16 %v2783
  %v2848 = vunpack.c.l.bf16 %v2784
  %v2849 = vunpack.c.l.bf16 %v2785
  %v2850 = vunpack.c.l.bf16 %v2786
  %v2851 = vunpack.c.l.bf16 %v2787
  %v2852 = vunpack.c.l.bf16 %v2788
  %v2853 = vunpack.c.l.bf16 %v2789
  %v2854 = vunpack.c.l.bf16 %v2790
  %v2855 = vunpack.c.l.bf16 %v2791
  %v2856 = vunpack.c.l.bf16 %v2792
  %v2857 = vunpack.c.l.bf16 %v2793
  %v2858 = vunpack.c.l.bf16 %v2794
  %v2859 = vunpack.c.l.bf16 %v2795
  %v2860 = vunpack.c.l.bf16 %v2796
  %v2861 = vunpack.c.l.bf16 %v2797
  %v2862 = vunpack.c.l.bf16 %v2798
  %v2863 = vunpack.c.l.bf16 %v2799
  %v2864 = vunpack.c.l.bf16 %v2800
  %v2865 = vunpack.c.l.bf16 %v2801
  %v2866 = vunpack.c.l.bf16 %v2802
  %v2867 = vunpack.c.l.bf16 %v2803
  %v2868 = vunpack.c.l.bf16 %v2804
  %v2869 = vunpack.c.l.bf16 %v2805
  %v2870 = vunpack.c.l.bf16 %v2806
  %v2871 = vunpack.c.l.bf16 %v2807
  %v2872 = vunpack.c.l.bf16 %v2808
  %v2873 = vunpack.c.l.bf16 %v2809
  %v2874 = vunpack.c.l.bf16 %v2810
  %v2875 = vunpack.c.l.bf16 %v2811
  %v2876 = vunpack.c.l.bf16 %v2812
  %v2877 = vunpack.c.l.bf16 %v2813
  %v2878 = vunpack.c.l.bf16 %v2814
  %v2879 = vunpack.c.l.bf16 %v2815
  %v2880 = vunpack.c.l.bf16 %v2816
  %v2881 = vunpack.c.l.bf16 %v2817
  %v2882 = vunpack.c.l.bf16 %v2818
  %v2883 = vunpack.c.l.bf16 %v2819
  %v2884 = vunpack.c.l.bf16 %v2820
  %v2885 = vunpack.c.l.bf16 %v2821
  %v2886 = vunpack.c.l.bf16 %v2822
  %v2887 = vunpack.c.l.bf16 %v2823
  %v2888 = vunpack.c.l.bf16 %v2824
  %v2889 = vunpack.c.l.bf16 %v2825
  %v2890 = vunpack.c.l.bf16 %v2826
  %v2891 = vunpack.c.l.bf16 %v2827
  %s2892 = scalar_lea.vmem %s3, 6
  %v2893 = vld [vmem:[%s2892] sm:$0x1]
  %v2895 = vlaneseq
  %v2896 = vshrl.u32 %v2895, 7
  %v2897 = vsub.s32 0, %v2896
  %v2898 = vrot.slane %v2893, %v2897
  %v2900 = vmul.f32 %v2828, %v2898
  %v2901 = vmul.f32 %v2829, %v2898
  %v2902 = vmul.f32 %v2830, %v2898
  %v2903 = vmul.f32 %v2831, %v2898
  %v2904 = vmul.f32 %v2832, %v2898
  %v2905 = vmul.f32 %v2833, %v2898
  %v2906 = vmul.f32 %v2834, %v2898
  %v2907 = vmul.f32 %v2835, %v2898
  %v2908 = vmul.f32 %v2836, %v2898
  %v2909 = vmul.f32 %v2837, %v2898
  %v2910 = vmul.f32 %v2838, %v2898
  %v2911 = vmul.f32 %v2839, %v2898
  %v2912 = vmul.f32 %v2840, %v2898
  %v2913 = vmul.f32 %v2841, %v2898
  %v2914 = vmul.f32 %v2842, %v2898
  %v2915 = vmul.f32 %v2843, %v2898
  %v2916 = vmul.f32 %v2844, %v2898
  %v2917 = vmul.f32 %v2845, %v2898
  %v2918 = vmul.f32 %v2846, %v2898
  %v2919 = vmul.f32 %v2847, %v2898
  %v2920 = vmul.f32 %v2848, %v2898
  %v2921 = vmul.f32 %v2849, %v2898
  %v2922 = vmul.f32 %v2850, %v2898
  %v2923 = vmul.f32 %v2851, %v2898
  %v2924 = vmul.f32 %v2852, %v2898
  %v2925 = vmul.f32 %v2853, %v2898
  %v2926 = vmul.f32 %v2854, %v2898
  %v2927 = vmul.f32 %v2855, %v2898
  %v2928 = vmul.f32 %v2856, %v2898
  %v2929 = vmul.f32 %v2857, %v2898
  %v2930 = vmul.f32 %v2858, %v2898
  %v2931 = vmul.f32 %v2859, %v2898
  %v2932 = vmul.f32 %v2860, %v2898
  %v2933 = vmul.f32 %v2861, %v2898
  %v2934 = vmul.f32 %v2862, %v2898
  %v2935 = vmul.f32 %v2863, %v2898
  %v2936 = vmul.f32 %v2864, %v2898
  %v2937 = vmul.f32 %v2865, %v2898
  %v2938 = vmul.f32 %v2866, %v2898
  %v2939 = vmul.f32 %v2867, %v2898
  %v2940 = vmul.f32 %v2868, %v2898
  %v2941 = vmul.f32 %v2869, %v2898
  %v2942 = vmul.f32 %v2870, %v2898
  %v2943 = vmul.f32 %v2871, %v2898
  %v2944 = vmul.f32 %v2872, %v2898
  %v2945 = vmul.f32 %v2873, %v2898
  %v2946 = vmul.f32 %v2874, %v2898
  %v2947 = vmul.f32 %v2875, %v2898
  %v2948 = vmul.f32 %v2876, %v2898
  %v2949 = vmul.f32 %v2877, %v2898
  %v2950 = vmul.f32 %v2878, %v2898
  %v2951 = vmul.f32 %v2879, %v2898
  %v2952 = vmul.f32 %v2880, %v2898
  %v2953 = vmul.f32 %v2881, %v2898
  %v2954 = vmul.f32 %v2882, %v2898
  %v2955 = vmul.f32 %v2883, %v2898
  %v2956 = vmul.f32 %v2884, %v2898
  %v2957 = vmul.f32 %v2885, %v2898
  %v2958 = vmul.f32 %v2886, %v2898
  %v2959 = vmul.f32 %v2887, %v2898
  %v2960 = vmul.f32 %v2888, %v2898
  %v2961 = vmul.f32 %v2889, %v2898
  %v2962 = vmul.f32 %v2890, %v2898
  %v2963 = vmul.f32 %v2891, %v2898
  %v2964 = vadd.f32 %v2700, %v2900
  %v2965 = vadd.f32 %v2701, %v2901
  %v2966 = vadd.f32 %v2702, %v2902
  %v2967 = vadd.f32 %v2703, %v2903
  %v2968 = vadd.f32 %v2704, %v2904
  %v2969 = vadd.f32 %v2705, %v2905
  %v2970 = vadd.f32 %v2706, %v2906
  %v2971 = vadd.f32 %v2707, %v2907
  %v2972 = vadd.f32 %v2708, %v2908
  %v2973 = vadd.f32 %v2709, %v2909
  %v2974 = vadd.f32 %v2710, %v2910
  %v2975 = vadd.f32 %v2711, %v2911
  %v2976 = vadd.f32 %v2712, %v2912
  %v2977 = vadd.f32 %v2713, %v2913
  %v2978 = vadd.f32 %v2714, %v2914
  %v2979 = vadd.f32 %v2715, %v2915
  %v2980 = vadd.f32 %v2716, %v2916
  %v2981 = vadd.f32 %v2717, %v2917
  %v2982 = vadd.f32 %v2718, %v2918
  %v2983 = vadd.f32 %v2719, %v2919
  %v2984 = vadd.f32 %v2720, %v2920
  %v2985 = vadd.f32 %v2721, %v2921
  %v2986 = vadd.f32 %v2722, %v2922
  %v2987 = vadd.f32 %v2723, %v2923
  %v2988 = vadd.f32 %v2724, %v2924
  %v2989 = vadd.f32 %v2725, %v2925
  %v2990 = vadd.f32 %v2726, %v2926
  %v2991 = vadd.f32 %v2727, %v2927
  %v2992 = vadd.f32 %v2728, %v2928
  %v2993 = vadd.f32 %v2729, %v2929
  %v2994 = vadd.f32 %v2730, %v2930
  %v2995 = vadd.f32 %v2731, %v2931
  %v2996 = vadd.f32 %v2732, %v2932
  %v2997 = vadd.f32 %v2733, %v2933
  %v2998 = vadd.f32 %v2734, %v2934
  %v2999 = vadd.f32 %v2735, %v2935
  %v3000 = vadd.f32 %v2736, %v2936
  %v3001 = vadd.f32 %v2737, %v2937
  %v3002 = vadd.f32 %v2738, %v2938
  %v3003 = vadd.f32 %v2739, %v2939
  %v3004 = vadd.f32 %v2740, %v2940
  %v3005 = vadd.f32 %v2741, %v2941
  %v3006 = vadd.f32 %v2742, %v2942
  %v3007 = vadd.f32 %v2743, %v2943
  %v3008 = vadd.f32 %v2744, %v2944
  %v3009 = vadd.f32 %v2745, %v2945
  %v3010 = vadd.f32 %v2746, %v2946
  %v3011 = vadd.f32 %v2747, %v2947
  %v3012 = vadd.f32 %v2748, %v2948
  %v3013 = vadd.f32 %v2749, %v2949
  %v3014 = vadd.f32 %v2750, %v2950
  %v3015 = vadd.f32 %v2751, %v2951
  %v3016 = vadd.f32 %v2752, %v2952
  %v3017 = vadd.f32 %v2753, %v2953
  %v3018 = vadd.f32 %v2754, %v2954
  %v3019 = vadd.f32 %v2755, %v2955
  %v3020 = vadd.f32 %v2756, %v2956
  %v3021 = vadd.f32 %v2757, %v2957
  %v3022 = vadd.f32 %v2758, %v2958
  %v3023 = vadd.f32 %v2759, %v2959
  %v3024 = vadd.f32 %v2760, %v2960
  %v3025 = vadd.f32 %v2761, %v2961
  %v3026 = vadd.f32 %v2762, %v2962
  %v3027 = vadd.f32 %v2763, %v2963
  %v3028 = vld [vmem:[%s2 + $0x8] sm:$0x1]
  %v3029 = vld [vmem:[%s2 + $0x14] sm:$0x1]
  %v3030 = vld [vmem:[%s2 + $0x20] sm:$0x1]
  %v3031 = vld [vmem:[%s2 + $0x2c] sm:$0x1]
  %v3032 = vld [vmem:[%s2 + $0x38] sm:$0x1]
  %v3033 = vld [vmem:[%s2 + $0x44] sm:$0x1]
  %v3034 = vld [vmem:[%s2 + $0x50] sm:$0x1]
  %v3035 = vld [vmem:[%s2 + $0x5c] sm:$0x1]
  %v3036 = vld [vmem:[%s2 + $0x68] sm:$0x1]
  %v3037 = vld [vmem:[%s2 + $0x74] sm:$0x1]
  %v3038 = vld [vmem:[%s2 + $0x80] sm:$0x1]
  %v3039 = vld [vmem:[%s2 + $0x8c] sm:$0x1]
  %v3040 = vld [vmem:[%s2 + $0x98] sm:$0x1]
  %v3041 = vld [vmem:[%s2 + $0xa4] sm:$0x1]
  %v3042 = vld [vmem:[%s2 + $0xb0] sm:$0x1]
  %v3043 = vld [vmem:[%s2 + $0xbc] sm:$0x1]
  %v3044 = vld [vmem:[%s2 + $0xc8] sm:$0x1]
  %v3045 = vld [vmem:[%s2 + $0xd4] sm:$0x1]
  %v3046 = vld [vmem:[%s2 + $0xe0] sm:$0x1]
  %v3047 = vld [vmem:[%s2 + $0xec] sm:$0x1]
  %v3048 = vld [vmem:[%s2 + $0xf8] sm:$0x1]
  %v3049 = vld [vmem:[%s2 + $0x104] sm:$0x1]
  %v3050 = vld [vmem:[%s2 + $0x110] sm:$0x1]
  %v3051 = vld [vmem:[%s2 + $0x11c] sm:$0x1]
  %v3052 = vld [vmem:[%s2 + $0x128] sm:$0x1]
  %v3053 = vld [vmem:[%s2 + $0x134] sm:$0x1]
  %v3054 = vld [vmem:[%s2 + $0x140] sm:$0x1]
  %v3055 = vld [vmem:[%s2 + $0x14c] sm:$0x1]
  %v3056 = vld [vmem:[%s2 + $0x158] sm:$0x1]
  %v3057 = vld [vmem:[%s2 + $0x164] sm:$0x1]
  %v3058 = vld [vmem:[%s2 + $0x170] sm:$0x1]
  %v3059 = vld [vmem:[%s2 + $0x17c] sm:$0x1]
  %v3060 = vunpack.c.l.bf16 %v3028
  %v3061 = vunpack.c.l.bf16 %v3029
  %v3062 = vunpack.c.l.bf16 %v3030
  %v3063 = vunpack.c.l.bf16 %v3031
  %v3064 = vunpack.c.l.bf16 %v3032
  %v3065 = vunpack.c.l.bf16 %v3033
  %v3066 = vunpack.c.l.bf16 %v3034
  %v3067 = vunpack.c.l.bf16 %v3035
  %v3068 = vunpack.c.l.bf16 %v3036
  %v3069 = vunpack.c.l.bf16 %v3037
  %v3070 = vunpack.c.l.bf16 %v3038
  %v3071 = vunpack.c.l.bf16 %v3039
  %v3072 = vunpack.c.l.bf16 %v3040
  %v3073 = vunpack.c.l.bf16 %v3041
  %v3074 = vunpack.c.l.bf16 %v3042
  %v3075 = vunpack.c.l.bf16 %v3043
  %v3076 = vunpack.c.l.bf16 %v3044
  %v3077 = vunpack.c.l.bf16 %v3045
  %v3078 = vunpack.c.l.bf16 %v3046
  %v3079 = vunpack.c.l.bf16 %v3047
  %v3080 = vunpack.c.l.bf16 %v3048
  %v3081 = vunpack.c.l.bf16 %v3049
  %v3082 = vunpack.c.l.bf16 %v3050
  %v3083 = vunpack.c.l.bf16 %v3051
  %v3084 = vunpack.c.l.bf16 %v3052
  %v3085 = vunpack.c.l.bf16 %v3053
  %v3086 = vunpack.c.l.bf16 %v3054
  %v3087 = vunpack.c.l.bf16 %v3055
  %v3088 = vunpack.c.l.bf16 %v3056
  %v3089 = vunpack.c.l.bf16 %v3057
  %v3090 = vunpack.c.l.bf16 %v3058
  %v3091 = vunpack.c.l.bf16 %v3059
  %s3092 = scalar_lea.vmem %s3, 7
  %v3093 = vld [vmem:[%s3092] sm:$0x1]
  %v3095 = vlaneseq
  %v3096 = vshrl.u32 %v3095, 7
  %v3097 = vsub.s32 0, %v3096
  %v3098 = vrot.slane %v3093, %v3097
  %v3100 = vmul.f32 %v2828, %v3098
  %v3101 = vmul.f32 %v2829, %v3098
  %v3102 = vmul.f32 %v3060, %v3098
  %v3103 = vmul.f32 %v2830, %v3098
  %v3104 = vmul.f32 %v2831, %v3098
  %v3105 = vmul.f32 %v3061, %v3098
  %v3106 = vmul.f32 %v2832, %v3098
  %v3107 = vmul.f32 %v2833, %v3098
  %v3108 = vmul.f32 %v3062, %v3098
  %v3109 = vmul.f32 %v2834, %v3098
  %v3110 = vmul.f32 %v2835, %v3098
  %v3111 = vmul.f32 %v3063, %v3098
  %v3112 = vmul.f32 %v2836, %v3098
  %v3113 = vmul.f32 %v2837, %v3098
  %v3114 = vmul.f32 %v3064, %v3098
  %v3115 = vmul.f32 %v2838, %v3098
  %v3116 = vmul.f32 %v2839, %v3098
  %v3117 = vmul.f32 %v3065, %v3098
  %v3118 = vmul.f32 %v2840, %v3098
  %v3119 = vmul.f32 %v2841, %v3098
  %v3120 = vmul.f32 %v3066, %v3098
  %v3121 = vmul.f32 %v2842, %v3098
  %v3122 = vmul.f32 %v2843, %v3098
  %v3123 = vmul.f32 %v3067, %v3098
  %v3124 = vmul.f32 %v2844, %v3098
  %v3125 = vmul.f32 %v2845, %v3098
  %v3126 = vmul.f32 %v3068, %v3098
  %v3127 = vmul.f32 %v2846, %v3098
  %v3128 = vmul.f32 %v2847, %v3098
  %v3129 = vmul.f32 %v3069, %v3098
  %v3130 = vmul.f32 %v2848, %v3098
  %v3131 = vmul.f32 %v2849, %v3098
  %v3132 = vmul.f32 %v3070, %v3098
  %v3133 = vmul.f32 %v2850, %v3098
  %v3134 = vmul.f32 %v2851, %v3098
  %v3135 = vmul.f32 %v3071, %v3098
  %v3136 = vmul.f32 %v2852, %v3098
  %v3137 = vmul.f32 %v2853, %v3098
  %v3138 = vmul.f32 %v3072, %v3098
  %v3139 = vmul.f32 %v2854, %v3098
  %v3140 = vmul.f32 %v2855, %v3098
  %v3141 = vmul.f32 %v3073, %v3098
  %v3142 = vmul.f32 %v2856, %v3098
  %v3143 = vmul.f32 %v2857, %v3098
  %v3144 = vmul.f32 %v3074, %v3098
  %v3145 = vmul.f32 %v2858, %v3098
  %v3146 = vmul.f32 %v2859, %v3098
  %v3147 = vmul.f32 %v3075, %v3098
  %v3148 = vmul.f32 %v2860, %v3098
  %v3149 = vmul.f32 %v2861, %v3098
  %v3150 = vmul.f32 %v3076, %v3098
  %v3151 = vmul.f32 %v2862, %v3098
  %v3152 = vmul.f32 %v2863, %v3098
  %v3153 = vmul.f32 %v3077, %v3098
  %v3154 = vmul.f32 %v2864, %v3098
  %v3155 = vmul.f32 %v2865, %v3098
  %v3156 = vmul.f32 %v3078, %v3098
  %v3157 = vmul.f32 %v2866, %v3098
  %v3158 = vmul.f32 %v2867, %v3098
  %v3159 = vmul.f32 %v3079, %v3098
  %v3160 = vmul.f32 %v2868, %v3098
  %v3161 = vmul.f32 %v2869, %v3098
  %v3162 = vmul.f32 %v3080, %v3098
  %v3163 = vmul.f32 %v2870, %v3098
  %v3164 = vmul.f32 %v2871, %v3098
  %v3165 = vmul.f32 %v3081, %v3098
  %v3166 = vmul.f32 %v2872, %v3098
  %v3167 = vmul.f32 %v2873, %v3098
  %v3168 = vmul.f32 %v3082, %v3098
  %v3169 = vmul.f32 %v2874, %v3098
  %v3170 = vmul.f32 %v2875, %v3098
  %v3171 = vmul.f32 %v3083, %v3098
  %v3172 = vmul.f32 %v2876, %v3098
  %v3173 = vmul.f32 %v2877, %v3098
  %v3174 = vmul.f32 %v3084, %v3098
  %v3175 = vmul.f32 %v2878, %v3098
  %v3176 = vmul.f32 %v2879, %v3098
  %v3177 = vmul.f32 %v3085, %v3098
  %v3178 = vmul.f32 %v2880, %v3098
  %v3179 = vmul.f32 %v2881, %v3098
  %v3180 = vmul.f32 %v3086, %v3098
  %v3181 = vmul.f32 %v2882, %v3098
  %v3182 = vmul.f32 %v2883, %v3098
  %v3183 = vmul.f32 %v3087, %v3098
  %v3184 = vmul.f32 %v2884, %v3098
  %v3185 = vmul.f32 %v2885, %v3098
  %v3186 = vmul.f32 %v3088, %v3098
  %v3187 = vmul.f32 %v2886, %v3098
  %v3188 = vmul.f32 %v2887, %v3098
  %v3189 = vmul.f32 %v3089, %v3098
  %v3190 = vmul.f32 %v2888, %v3098
  %v3191 = vmul.f32 %v2889, %v3098
  %v3192 = vmul.f32 %v3090, %v3098
  %v3193 = vmul.f32 %v2890, %v3098
  %v3194 = vmul.f32 %v2891, %v3098
  %v3195 = vmul.f32 %v3091, %v3098
  %v3292 = vrot.slane %v3100, 1
  %v3293 = vrot.slane %v3101, 1
  %v3294 = vsel %vm554, %v3292, %v3293
  %v3295 = vrot.slane %v3102, 1
  %v3296 = vsel %vm554, %v3293, %v3295
  %v3297 = vrot.slane %v3103, 1
  %v3298 = vrot.slane %v3104, 1
  %v3299 = vsel %vm554, %v3297, %v3298
  %v3300 = vrot.slane %v3105, 1
  %v3301 = vsel %vm554, %v3298, %v3300
  %v3302 = vrot.slane %v3106, 1
  %v3303 = vrot.slane %v3107, 1
  %v3304 = vsel %vm554, %v3302, %v3303
  %v3305 = vrot.slane %v3108, 1
  %v3306 = vsel %vm554, %v3303, %v3305
  %v3307 = vrot.slane %v3109, 1
  %v3308 = vrot.slane %v3110, 1
  %v3309 = vsel %vm554, %v3307, %v3308
  %v3310 = vrot.slane %v3111, 1
  %v3311 = vsel %vm554, %v3308, %v3310
  %v3312 = vrot.slane %v3112, 1
  %v3313 = vrot.slane %v3113, 1
  %v3314 = vsel %vm554, %v3312, %v3313
  %v3315 = vrot.slane %v3114, 1
  %v3316 = vsel %vm554, %v3313, %v3315
  %v3317 = vrot.slane %v3115, 1
  %v3318 = vrot.slane %v3116, 1
  %v3319 = vsel %vm554, %v3317, %v3318
  %v3320 = vrot.slane %v3117, 1
  %v3321 = vsel %vm554, %v3318, %v3320
  %v3322 = vrot.slane %v3118, 1
  %v3323 = vrot.slane %v3119, 1
  %v3324 = vsel %vm554, %v3322, %v3323
  %v3325 = vrot.slane %v3120, 1
  %v3326 = vsel %vm554, %v3323, %v3325
  %v3327 = vrot.slane %v3121, 1
  %v3328 = vrot.slane %v3122, 1
  %v3329 = vsel %vm554, %v3327, %v3328
  %v3330 = vrot.slane %v3123, 1
  %v3331 = vsel %vm554, %v3328, %v3330
  %v3332 = vrot.slane %v3124, 1
  %v3333 = vrot.slane %v3125, 1
  %v3334 = vsel %vm554, %v3332, %v3333
  %v3335 = vrot.slane %v3126, 1
  %v3336 = vsel %vm554, %v3333, %v3335
  %v3337 = vrot.slane %v3127, 1
  %v3338 = vrot.slane %v3128, 1
  %v3339 = vsel %vm554, %v3337, %v3338
  %v3340 = vrot.slane %v3129, 1
  %v3341 = vsel %vm554, %v3338, %v3340
  %v3342 = vrot.slane %v3130, 1
  %v3343 = vrot.slane %v3131, 1
  %v3344 = vsel %vm554, %v3342, %v3343
  %v3345 = vrot.slane %v3132, 1
  %v3346 = vsel %vm554, %v3343, %v3345
  %v3347 = vrot.slane %v3133, 1
  %v3348 = vrot.slane %v3134, 1
  %v3349 = vsel %vm554, %v3347, %v3348
  %v3350 = vrot.slane %v3135, 1
  %v3351 = vsel %vm554, %v3348, %v3350
  %v3352 = vrot.slane %v3136, 1
  %v3353 = vrot.slane %v3137, 1
  %v3354 = vsel %vm554, %v3352, %v3353
  %v3355 = vrot.slane %v3138, 1
  %v3356 = vsel %vm554, %v3353, %v3355
  %v3357 = vrot.slane %v3139, 1
  %v3358 = vrot.slane %v3140, 1
  %v3359 = vsel %vm554, %v3357, %v3358
  %v3360 = vrot.slane %v3141, 1
  %v3361 = vsel %vm554, %v3358, %v3360
  %v3362 = vrot.slane %v3142, 1
  %v3363 = vrot.slane %v3143, 1
  %v3364 = vsel %vm554, %v3362, %v3363
  %v3365 = vrot.slane %v3144, 1
  %v3366 = vsel %vm554, %v3363, %v3365
  %v3367 = vrot.slane %v3145, 1
  %v3368 = vrot.slane %v3146, 1
  %v3369 = vsel %vm554, %v3367, %v3368
  %v3370 = vrot.slane %v3147, 1
  %v3371 = vsel %vm554, %v3368, %v3370
  %v3372 = vrot.slane %v3148, 1
  %v3373 = vrot.slane %v3149, 1
  %v3374 = vsel %vm554, %v3372, %v3373
  %v3375 = vrot.slane %v3150, 1
  %v3376 = vsel %vm554, %v3373, %v3375
  %v3377 = vrot.slane %v3151, 1
  %v3378 = vrot.slane %v3152, 1
  %v3379 = vsel %vm554, %v3377, %v3378
  %v3380 = vrot.slane %v3153, 1
  %v3381 = vsel %vm554, %v3378, %v3380
  %v3382 = vrot.slane %v3154, 1
  %v3383 = vrot.slane %v3155, 1
  %v3384 = vsel %vm554, %v3382, %v3383
  %v3385 = vrot.slane %v3156, 1
  %v3386 = vsel %vm554, %v3383, %v3385
  %v3387 = vrot.slane %v3157, 1
  %v3388 = vrot.slane %v3158, 1
  %v3389 = vsel %vm554, %v3387, %v3388
  %v3390 = vrot.slane %v3159, 1
  %v3391 = vsel %vm554, %v3388, %v3390
  %v3392 = vrot.slane %v3160, 1
  %v3393 = vrot.slane %v3161, 1
  %v3394 = vsel %vm554, %v3392, %v3393
  %v3395 = vrot.slane %v3162, 1
  %v3396 = vsel %vm554, %v3393, %v3395
  %v3397 = vrot.slane %v3163, 1
  %v3398 = vrot.slane %v3164, 1
  %v3399 = vsel %vm554, %v3397, %v3398
  %v3400 = vrot.slane %v3165, 1
  %v3401 = vsel %vm554, %v3398, %v3400
  %v3402 = vrot.slane %v3166, 1
  %v3403 = vrot.slane %v3167, 1
  %v3404 = vsel %vm554, %v3402, %v3403
  %v3405 = vrot.slane %v3168, 1
  %v3406 = vsel %vm554, %v3403, %v3405
  %v3407 = vrot.slane %v3169, 1
  %v3408 = vrot.slane %v3170, 1
  %v3409 = vsel %vm554, %v3407, %v3408
  %v3410 = vrot.slane %v3171, 1
  %v3411 = vsel %vm554, %v3408, %v3410
  %v3412 = vrot.slane %v3172, 1
  %v3413 = vrot.slane %v3173, 1
  %v3414 = vsel %vm554, %v3412, %v3413
  %v3415 = vrot.slane %v3174, 1
  %v3416 = vsel %vm554, %v3413, %v3415
  %v3417 = vrot.slane %v3175, 1
  %v3418 = vrot.slane %v3176, 1
  %v3419 = vsel %vm554, %v3417, %v3418
  %v3420 = vrot.slane %v3177, 1
  %v3421 = vsel %vm554, %v3418, %v3420
  %v3422 = vrot.slane %v3178, 1
  %v3423 = vrot.slane %v3179, 1
  %v3424 = vsel %vm554, %v3422, %v3423
  %v3425 = vrot.slane %v3180, 1
  %v3426 = vsel %vm554, %v3423, %v3425
  %v3427 = vrot.slane %v3181, 1
  %v3428 = vrot.slane %v3182, 1
  %v3429 = vsel %vm554, %v3427, %v3428
  %v3430 = vrot.slane %v3183, 1
  %v3431 = vsel %vm554, %v3428, %v3430
  %v3432 = vrot.slane %v3184, 1
  %v3433 = vrot.slane %v3185, 1
  %v3434 = vsel %vm554, %v3432, %v3433
  %v3435 = vrot.slane %v3186, 1
  %v3436 = vsel %vm554, %v3433, %v3435
  %v3437 = vrot.slane %v3187, 1
  %v3438 = vrot.slane %v3188, 1
  %v3439 = vsel %vm554, %v3437, %v3438
  %v3440 = vrot.slane %v3189, 1
  %v3441 = vsel %vm554, %v3438, %v3440
  %v3442 = vrot.slane %v3190, 1
  %v3443 = vrot.slane %v3191, 1
  %v3444 = vsel %vm554, %v3442, %v3443
  %v3445 = vrot.slane %v3192, 1
  %v3446 = vsel %vm554, %v3443, %v3445
  %v3447 = vrot.slane %v3193, 1
  %v3448 = vrot.slane %v3194, 1
  %v3449 = vsel %vm554, %v3447, %v3448
  %v3450 = vrot.slane %v3195, 1
  %v3451 = vsel %vm554, %v3448, %v3450
  %v3516 = vadd.f32 %v2964, %v3294
  %v3517 = vadd.f32 %v2965, %v3296
  %v3518 = vadd.f32 %v2966, %v3299
  %v3519 = vadd.f32 %v2967, %v3301
  %v3520 = vadd.f32 %v2968, %v3304
  %v3521 = vadd.f32 %v2969, %v3306
  %v3522 = vadd.f32 %v2970, %v3309
  %v3523 = vadd.f32 %v2971, %v3311
  %v3524 = vadd.f32 %v2972, %v3314
  %v3525 = vadd.f32 %v2973, %v3316
  %v3526 = vadd.f32 %v2974, %v3319
  %v3527 = vadd.f32 %v2975, %v3321
  %v3528 = vadd.f32 %v2976, %v3324
  %v3529 = vadd.f32 %v2977, %v3326
  %v3530 = vadd.f32 %v2978, %v3329
  %v3531 = vadd.f32 %v2979, %v3331
  %v3532 = vadd.f32 %v2980, %v3334
  %v3533 = vadd.f32 %v2981, %v3336
  %v3534 = vadd.f32 %v2982, %v3339
  %v3535 = vadd.f32 %v2983, %v3341
  %v3536 = vadd.f32 %v2984, %v3344
  %v3537 = vadd.f32 %v2985, %v3346
  %v3538 = vadd.f32 %v2986, %v3349
  %v3539 = vadd.f32 %v2987, %v3351
  %v3540 = vadd.f32 %v2988, %v3354
  %v3541 = vadd.f32 %v2989, %v3356
  %v3542 = vadd.f32 %v2990, %v3359
  %v3543 = vadd.f32 %v2991, %v3361
  %v3544 = vadd.f32 %v2992, %v3364
  %v3545 = vadd.f32 %v2993, %v3366
  %v3546 = vadd.f32 %v2994, %v3369
  %v3547 = vadd.f32 %v2995, %v3371
  %v3548 = vadd.f32 %v2996, %v3374
  %v3549 = vadd.f32 %v2997, %v3376
  %v3550 = vadd.f32 %v2998, %v3379
  %v3551 = vadd.f32 %v2999, %v3381
  %v3552 = vadd.f32 %v3000, %v3384
  %v3553 = vadd.f32 %v3001, %v3386
  %v3554 = vadd.f32 %v3002, %v3389
  %v3555 = vadd.f32 %v3003, %v3391
  %v3556 = vadd.f32 %v3004, %v3394
  %v3557 = vadd.f32 %v3005, %v3396
  %v3558 = vadd.f32 %v3006, %v3399
  %v3559 = vadd.f32 %v3007, %v3401
  %v3560 = vadd.f32 %v3008, %v3404
  %v3561 = vadd.f32 %v3009, %v3406
  %v3562 = vadd.f32 %v3010, %v3409
  %v3563 = vadd.f32 %v3011, %v3411
  %v3564 = vadd.f32 %v3012, %v3414
  %v3565 = vadd.f32 %v3013, %v3416
  %v3566 = vadd.f32 %v3014, %v3419
  %v3567 = vadd.f32 %v3015, %v3421
  %v3568 = vadd.f32 %v3016, %v3424
  %v3569 = vadd.f32 %v3017, %v3426
  %v3570 = vadd.f32 %v3018, %v3429
  %v3571 = vadd.f32 %v3019, %v3431
  %v3572 = vadd.f32 %v3020, %v3434
  %v3573 = vadd.f32 %v3021, %v3436
  %v3574 = vadd.f32 %v3022, %v3439
  %v3575 = vadd.f32 %v3023, %v3441
  %v3576 = vadd.f32 %v3024, %v3444
  %v3577 = vadd.f32 %v3025, %v3446
  %v3578 = vadd.f32 %v3026, %v3449
  %v3579 = vadd.f32 %v3027, %v3451
  %v3580 = vld [vmem:[%s2] sm:$0xe]
  %v3581 = vld [vmem:[%s2 + $0xc] sm:$0xe]
  %v3582 = vld [vmem:[%s2 + $0x18] sm:$0xe]
  %v3583 = vld [vmem:[%s2 + $0x24] sm:$0xe]
  %v3584 = vld [vmem:[%s2 + $0x30] sm:$0xe]
  %v3585 = vld [vmem:[%s2 + $0x3c] sm:$0xe]
  %v3586 = vld [vmem:[%s2 + $0x48] sm:$0xe]
  %v3587 = vld [vmem:[%s2 + $0x54] sm:$0xe]
  %v3588 = vld [vmem:[%s2 + $0x60] sm:$0xe]
  %v3589 = vld [vmem:[%s2 + $0x6c] sm:$0xe]
  %v3590 = vld [vmem:[%s2 + $0x78] sm:$0xe]
  %v3591 = vld [vmem:[%s2 + $0x84] sm:$0xe]
  %v3592 = vld [vmem:[%s2 + $0x90] sm:$0xe]
  %v3593 = vld [vmem:[%s2 + $0x9c] sm:$0xe]
  %v3594 = vld [vmem:[%s2 + $0xa8] sm:$0xe]
  %v3595 = vld [vmem:[%s2 + $0xb4] sm:$0xe]
  %v3596 = vld [vmem:[%s2 + $0xc0] sm:$0xe]
  %v3597 = vld [vmem:[%s2 + $0xcc] sm:$0xe]
  %v3598 = vld [vmem:[%s2 + $0xd8] sm:$0xe]
  %v3599 = vld [vmem:[%s2 + $0xe4] sm:$0xe]
  %v3600 = vld [vmem:[%s2 + $0xf0] sm:$0xe]
  %v3601 = vld [vmem:[%s2 + $0xfc] sm:$0xe]
  %v3602 = vld [vmem:[%s2 + $0x108] sm:$0xe]
  %v3603 = vld [vmem:[%s2 + $0x114] sm:$0xe]
  %v3604 = vld [vmem:[%s2 + $0x120] sm:$0xe]
  %v3605 = vld [vmem:[%s2 + $0x12c] sm:$0xe]
  %v3606 = vld [vmem:[%s2 + $0x138] sm:$0xe]
  %v3607 = vld [vmem:[%s2 + $0x144] sm:$0xe]
  %v3608 = vld [vmem:[%s2 + $0x150] sm:$0xe]
  %v3609 = vld [vmem:[%s2 + $0x15c] sm:$0xe]
  %v3610 = vld [vmem:[%s2 + $0x168] sm:$0xe]
  %v3611 = vld [vmem:[%s2 + $0x174] sm:$0xe]
  %v3612 = vunpack.c.l.bf16 %v3580
  %v3613 = vunpack.c.l.bf16 %v3581
  %v3614 = vunpack.c.l.bf16 %v3582
  %v3615 = vunpack.c.l.bf16 %v3583
  %v3616 = vunpack.c.l.bf16 %v3584
  %v3617 = vunpack.c.l.bf16 %v3585
  %v3618 = vunpack.c.l.bf16 %v3586
  %v3619 = vunpack.c.l.bf16 %v3587
  %v3620 = vunpack.c.l.bf16 %v3588
  %v3621 = vunpack.c.l.bf16 %v3589
  %v3622 = vunpack.c.l.bf16 %v3590
  %v3623 = vunpack.c.l.bf16 %v3591
  %v3624 = vunpack.c.l.bf16 %v3592
  %v3625 = vunpack.c.l.bf16 %v3593
  %v3626 = vunpack.c.l.bf16 %v3594
  %v3627 = vunpack.c.l.bf16 %v3595
  %v3628 = vunpack.c.l.bf16 %v3596
  %v3629 = vunpack.c.l.bf16 %v3597
  %v3630 = vunpack.c.l.bf16 %v3598
  %v3631 = vunpack.c.l.bf16 %v3599
  %v3632 = vunpack.c.l.bf16 %v3600
  %v3633 = vunpack.c.l.bf16 %v3601
  %v3634 = vunpack.c.l.bf16 %v3602
  %v3635 = vunpack.c.l.bf16 %v3603
  %v3636 = vunpack.c.l.bf16 %v3604
  %v3637 = vunpack.c.l.bf16 %v3605
  %v3638 = vunpack.c.l.bf16 %v3606
  %v3639 = vunpack.c.l.bf16 %v3607
  %v3640 = vunpack.c.l.bf16 %v3608
  %v3641 = vunpack.c.l.bf16 %v3609
  %v3642 = vunpack.c.l.bf16 %v3610
  %v3643 = vunpack.c.l.bf16 %v3611
  %s3644 = scalar_lea.vmem %s3, 8
  %v3645 = vld [vmem:[%s3644] sm:$0x1]
  %v3647 = vlaneseq
  %v3648 = vshrl.u32 %v3647, 7
  %v3649 = vsub.s32 0, %v3648
  %v3650 = vrot.slane %v3645, %v3649
  %v3652 = vmul.f32 %v3612, %v3650
  %v3653 = vmul.f32 %v2829, %v3650
  %v3654 = vmul.f32 %v3060, %v3650
  %v3655 = vmul.f32 %v3613, %v3650
  %v3656 = vmul.f32 %v2831, %v3650
  %v3657 = vmul.f32 %v3061, %v3650
  %v3658 = vmul.f32 %v3614, %v3650
  %v3659 = vmul.f32 %v2833, %v3650
  %v3660 = vmul.f32 %v3062, %v3650
  %v3661 = vmul.f32 %v3615, %v3650
  %v3662 = vmul.f32 %v2835, %v3650
  %v3663 = vmul.f32 %v3063, %v3650
  %v3664 = vmul.f32 %v3616, %v3650
  %v3665 = vmul.f32 %v2837, %v3650
  %v3666 = vmul.f32 %v3064, %v3650
  %v3667 = vmul.f32 %v3617, %v3650
  %v3668 = vmul.f32 %v2839, %v3650
  %v3669 = vmul.f32 %v3065, %v3650
  %v3670 = vmul.f32 %v3618, %v3650
  %v3671 = vmul.f32 %v2841, %v3650
  %v3672 = vmul.f32 %v3066, %v3650
  %v3673 = vmul.f32 %v3619, %v3650
  %v3674 = vmul.f32 %v2843, %v3650
  %v3675 = vmul.f32 %v3067, %v3650
  %v3676 = vmul.f32 %v3620, %v3650
  %v3677 = vmul.f32 %v2845, %v3650
  %v3678 = vmul.f32 %v3068, %v3650
  %v3679 = vmul.f32 %v3621, %v3650
  %v3680 = vmul.f32 %v2847, %v3650
  %v3681 = vmul.f32 %v3069, %v3650
  %v3682 = vmul.f32 %v3622, %v3650
  %v3683 = vmul.f32 %v2849, %v3650
  %v3684 = vmul.f32 %v3070, %v3650
  %v3685 = vmul.f32 %v3623, %v3650
  %v3686 = vmul.f32 %v2851, %v3650
  %v3687 = vmul.f32 %v3071, %v3650
  %v3688 = vmul.f32 %v3624, %v3650
  %v3689 = vmul.f32 %v2853, %v3650
  %v3690 = vmul.f32 %v3072, %v3650
  %v3691 = vmul.f32 %v3625, %v3650
  %v3692 = vmul.f32 %v2855, %v3650
  %v3693 = vmul.f32 %v3073, %v3650
  %v3694 = vmul.f32 %v3626, %v3650
  %v3695 = vmul.f32 %v2857, %v3650
  %v3696 = vmul.f32 %v3074, %v3650
  %v3697 = vmul.f32 %v3627, %v3650
  %v3698 = vmul.f32 %v2859, %v3650
  %v3699 = vmul.f32 %v3075, %v3650
  %v3700 = vmul.f32 %v3628, %v3650
  %v3701 = vmul.f32 %v2861, %v3650
  %v3702 = vmul.f32 %v3076, %v3650
  %v3703 = vmul.f32 %v3629, %v3650
  %v3704 = vmul.f32 %v2863, %v3650
  %v3705 = vmul.f32 %v3077, %v3650
  %v3706 = vmul.f32 %v3630, %v3650
  %v3707 = vmul.f32 %v2865, %v3650
  %v3708 = vmul.f32 %v3078, %v3650
  %v3709 = vmul.f32 %v3631, %v3650
  %v3710 = vmul.f32 %v2867, %v3650
  %v3711 = vmul.f32 %v3079, %v3650
  %v3712 = vmul.f32 %v3632, %v3650
  %v3713 = vmul.f32 %v2869, %v3650
  %v3714 = vmul.f32 %v3080, %v3650
  %v3715 = vmul.f32 %v3633, %v3650
  %v3716 = vmul.f32 %v2871, %v3650
  %v3717 = vmul.f32 %v3081, %v3650
  %v3718 = vmul.f32 %v3634, %v3650
  %v3719 = vmul.f32 %v2873, %v3650
  %v3720 = vmul.f32 %v3082, %v3650
  %v3721 = vmul.f32 %v3635, %v3650
  %v3722 = vmul.f32 %v2875, %v3650
  %v3723 = vmul.f32 %v3083, %v3650
  %v3724 = vmul.f32 %v3636, %v3650
  %v3725 = vmul.f32 %v2877, %v3650
  %v3726 = vmul.f32 %v3084, %v3650
  %v3727 = vmul.f32 %v3637, %v3650
  %v3728 = vmul.f32 %v2879, %v3650
  %v3729 = vmul.f32 %v3085, %v3650
  %v3730 = vmul.f32 %v3638, %v3650
  %v3731 = vmul.f32 %v2881, %v3650
  %v3732 = vmul.f32 %v3086, %v3650
  %v3733 = vmul.f32 %v3639, %v3650
  %v3734 = vmul.f32 %v2883, %v3650
  %v3735 = vmul.f32 %v3087, %v3650
  %v3736 = vmul.f32 %v3640, %v3650
  %v3737 = vmul.f32 %v2885, %v3650
  %v3738 = vmul.f32 %v3088, %v3650
  %v3739 = vmul.f32 %v3641, %v3650
  %v3740 = vmul.f32 %v2887, %v3650
  %v3741 = vmul.f32 %v3089, %v3650
  %v3742 = vmul.f32 %v3642, %v3650
  %v3743 = vmul.f32 %v2889, %v3650
  %v3744 = vmul.f32 %v3090, %v3650
  %v3745 = vmul.f32 %v3643, %v3650
  %v3746 = vmul.f32 %v2891, %v3650
  %v3747 = vmul.f32 %v3091, %v3650
  %v3844 = vrot.slane %v3652, 2
  %v3845 = vrot.slane %v3653, 2
  %v3846 = vsel %vm1107, %v3844, %v3845
  %v3847 = vrot.slane %v3654, 2
  %v3848 = vsel %vm1107, %v3845, %v3847
  %v3849 = vrot.slane %v3655, 2
  %v3850 = vrot.slane %v3656, 2
  %v3851 = vsel %vm1107, %v3849, %v3850
  %v3852 = vrot.slane %v3657, 2
  %v3853 = vsel %vm1107, %v3850, %v3852
  %v3854 = vrot.slane %v3658, 2
  %v3855 = vrot.slane %v3659, 2
  %v3856 = vsel %vm1107, %v3854, %v3855
  %v3857 = vrot.slane %v3660, 2
  %v3858 = vsel %vm1107, %v3855, %v3857
  %v3859 = vrot.slane %v3661, 2
  %v3860 = vrot.slane %v3662, 2
  %v3861 = vsel %vm1107, %v3859, %v3860
  %v3862 = vrot.slane %v3663, 2
  %v3863 = vsel %vm1107, %v3860, %v3862
  %v3864 = vrot.slane %v3664, 2
  %v3865 = vrot.slane %v3665, 2
  %v3866 = vsel %vm1107, %v3864, %v3865
  %v3867 = vrot.slane %v3666, 2
  %v3868 = vsel %vm1107, %v3865, %v3867
  %v3869 = vrot.slane %v3667, 2
  %v3870 = vrot.slane %v3668, 2
  %v3871 = vsel %vm1107, %v3869, %v3870
  %v3872 = vrot.slane %v3669, 2
  %v3873 = vsel %vm1107, %v3870, %v3872
  %v3874 = vrot.slane %v3670, 2
  %v3875 = vrot.slane %v3671, 2
  %v3876 = vsel %vm1107, %v3874, %v3875
  %v3877 = vrot.slane %v3672, 2
  %v3878 = vsel %vm1107, %v3875, %v3877
  %v3879 = vrot.slane %v3673, 2
  %v3880 = vrot.slane %v3674, 2
  %v3881 = vsel %vm1107, %v3879, %v3880
  %v3882 = vrot.slane %v3675, 2
  %v3883 = vsel %vm1107, %v3880, %v3882
  %v3884 = vrot.slane %v3676, 2
  %v3885 = vrot.slane %v3677, 2
  %v3886 = vsel %vm1107, %v3884, %v3885
  %v3887 = vrot.slane %v3678, 2
  %v3888 = vsel %vm1107, %v3885, %v3887
  %v3889 = vrot.slane %v3679, 2
  %v3890 = vrot.slane %v3680, 2
  %v3891 = vsel %vm1107, %v3889, %v3890
  %v3892 = vrot.slane %v3681, 2
  %v3893 = vsel %vm1107, %v3890, %v3892
  %v3894 = vrot.slane %v3682, 2
  %v3895 = vrot.slane %v3683, 2
  %v3896 = vsel %vm1107, %v3894, %v3895
  %v3897 = vrot.slane %v3684, 2
  %v3898 = vsel %vm1107, %v3895, %v3897
  %v3899 = vrot.slane %v3685, 2
  %v3900 = vrot.slane %v3686, 2
  %v3901 = vsel %vm1107, %v3899, %v3900
  %v3902 = vrot.slane %v3687, 2
  %v3903 = vsel %vm1107, %v3900, %v3902
  %v3904 = vrot.slane %v3688, 2
  %v3905 = vrot.slane %v3689, 2
  %v3906 = vsel %vm1107, %v3904, %v3905
  %v3907 = vrot.slane %v3690, 2
  %v3908 = vsel %vm1107, %v3905, %v3907
  %v3909 = vrot.slane %v3691, 2
  %v3910 = vrot.slane %v3692, 2
  %v3911 = vsel %vm1107, %v3909, %v3910
  %v3912 = vrot.slane %v3693, 2
  %v3913 = vsel %vm1107, %v3910, %v3912
  %v3914 = vrot.slane %v3694, 2
  %v3915 = vrot.slane %v3695, 2
  %v3916 = vsel %vm1107, %v3914, %v3915
  %v3917 = vrot.slane %v3696, 2
  %v3918 = vsel %vm1107, %v3915, %v3917
  %v3919 = vrot.slane %v3697, 2
  %v3920 = vrot.slane %v3698, 2
  %v3921 = vsel %vm1107, %v3919, %v3920
  %v3922 = vrot.slane %v3699, 2
  %v3923 = vsel %vm1107, %v3920, %v3922
  %v3924 = vrot.slane %v3700, 2
  %v3925 = vrot.slane %v3701, 2
  %v3926 = vsel %vm1107, %v3924, %v3925
  %v3927 = vrot.slane %v3702, 2
  %v3928 = vsel %vm1107, %v3925, %v3927
  %v3929 = vrot.slane %v3703, 2
  %v3930 = vrot.slane %v3704, 2
  %v3931 = vsel %vm1107, %v3929, %v3930
  %v3932 = vrot.slane %v3705, 2
  %v3933 = vsel %vm1107, %v3930, %v3932
  %v3934 = vrot.slane %v3706, 2
  %v3935 = vrot.slane %v3707, 2
  %v3936 = vsel %vm1107, %v3934, %v3935
  %v3937 = vrot.slane %v3708, 2
  %v3938 = vsel %vm1107, %v3935, %v3937
  %v3939 = vrot.slane %v3709, 2
  %v3940 = vrot.slane %v3710, 2
  %v3941 = vsel %vm1107, %v3939, %v3940
  %v3942 = vrot.slane %v3711, 2
  %v3943 = vsel %vm1107, %v3940, %v3942
  %v3944 = vrot.slane %v3712, 2
  %v3945 = vrot.slane %v3713, 2
  %v3946 = vsel %vm1107, %v3944, %v3945
  %v3947 = vrot.slane %v3714, 2
  %v3948 = vsel %vm1107, %v3945, %v3947
  %v3949 = vrot.slane %v3715, 2
  %v3950 = vrot.slane %v3716, 2
  %v3951 = vsel %vm1107, %v3949, %v3950
  %v3952 = vrot.slane %v3717, 2
  %v3953 = vsel %vm1107, %v3950, %v3952
  %v3954 = vrot.slane %v3718, 2
  %v3955 = vrot.slane %v3719, 2
  %v3956 = vsel %vm1107, %v3954, %v3955
  %v3957 = vrot.slane %v3720, 2
  %v3958 = vsel %vm1107, %v3955, %v3957
  %v3959 = vrot.slane %v3721, 2
  %v3960 = vrot.slane %v3722, 2
  %v3961 = vsel %vm1107, %v3959, %v3960
  %v3962 = vrot.slane %v3723, 2
  %v3963 = vsel %vm1107, %v3960, %v3962
  %v3964 = vrot.slane %v3724, 2
  %v3965 = vrot.slane %v3725, 2
  %v3966 = vsel %vm1107, %v3964, %v3965
  %v3967 = vrot.slane %v3726, 2
  %v3968 = vsel %vm1107, %v3965, %v3967
  %v3969 = vrot.slane %v3727, 2
  %v3970 = vrot.slane %v3728, 2
  %v3971 = vsel %vm1107, %v3969, %v3970
  %v3972 = vrot.slane %v3729, 2
  %v3973 = vsel %vm1107, %v3970, %v3972
  %v3974 = vrot.slane %v3730, 2
  %v3975 = vrot.slane %v3731, 2
  %v3976 = vsel %vm1107, %v3974, %v3975
  %v3977 = vrot.slane %v3732, 2
  %v3978 = vsel %vm1107, %v3975, %v3977
  %v3979 = vrot.slane %v3733, 2
  %v3980 = vrot.slane %v3734, 2
  %v3981 = vsel %vm1107, %v3979, %v3980
  %v3982 = vrot.slane %v3735, 2
  %v3983 = vsel %vm1107, %v3980, %v3982
  %v3984 = vrot.slane %v3736, 2
  %v3985 = vrot.slane %v3737, 2
  %v3986 = vsel %vm1107, %v3984, %v3985
  %v3987 = vrot.slane %v3738, 2
  %v3988 = vsel %vm1107, %v3985, %v3987
  %v3989 = vrot.slane %v3739, 2
  %v3990 = vrot.slane %v3740, 2
  %v3991 = vsel %vm1107, %v3989, %v3990
  %v3992 = vrot.slane %v3741, 2
  %v3993 = vsel %vm1107, %v3990, %v3992
  %v3994 = vrot.slane %v3742, 2
  %v3995 = vrot.slane %v3743, 2
  %v3996 = vsel %vm1107, %v3994, %v3995
  %v3997 = vrot.slane %v3744, 2
  %v3998 = vsel %vm1107, %v3995, %v3997
  %v3999 = vrot.slane %v3745, 2
  %v4000 = vrot.slane %v3746, 2
  %v4001 = vsel %vm1107, %v3999, %v4000
  %v4002 = vrot.slane %v3747, 2
  %v4003 = vsel %vm1107, %v4000, %v4002
  %v4068 = vadd.f32 %v3516, %v3846
  %v4069 = vadd.f32 %v3517, %v3848
  %v4070 = vadd.f32 %v3518, %v3851
  %v4071 = vadd.f32 %v3519, %v3853
  %v4072 = vadd.f32 %v3520, %v3856
  %v4073 = vadd.f32 %v3521, %v3858
  %v4074 = vadd.f32 %v3522, %v3861
  %v4075 = vadd.f32 %v3523, %v3863
  %v4076 = vadd.f32 %v3524, %v3866
  %v4077 = vadd.f32 %v3525, %v3868
  %v4078 = vadd.f32 %v3526, %v3871
  %v4079 = vadd.f32 %v3527, %v3873
  %v4080 = vadd.f32 %v3528, %v3876
  %v4081 = vadd.f32 %v3529, %v3878
  %v4082 = vadd.f32 %v3530, %v3881
  %v4083 = vadd.f32 %v3531, %v3883
  %v4084 = vadd.f32 %v3532, %v3886
  %v4085 = vadd.f32 %v3533, %v3888
  %v4086 = vadd.f32 %v3534, %v3891
  %v4087 = vadd.f32 %v3535, %v3893
  %v4088 = vadd.f32 %v3536, %v3896
  %v4089 = vadd.f32 %v3537, %v3898
  %v4090 = vadd.f32 %v3538, %v3901
  %v4091 = vadd.f32 %v3539, %v3903
  %v4092 = vadd.f32 %v3540, %v3906
  %v4093 = vadd.f32 %v3541, %v3908
  %v4094 = vadd.f32 %v3542, %v3911
  %v4095 = vadd.f32 %v3543, %v3913
  %v4096 = vadd.f32 %v3544, %v3916
  %v4097 = vadd.f32 %v3545, %v3918
  %v4098 = vadd.f32 %v3546, %v3921
  %v4099 = vadd.f32 %v3547, %v3923
  %v4100 = vadd.f32 %v3548, %v3926
  %v4101 = vadd.f32 %v3549, %v3928
  %v4102 = vadd.f32 %v3550, %v3931
  %v4103 = vadd.f32 %v3551, %v3933
  %v4104 = vadd.f32 %v3552, %v3936
  %v4105 = vadd.f32 %v3553, %v3938
  %v4106 = vadd.f32 %v3554, %v3941
  %v4107 = vadd.f32 %v3555, %v3943
  %v4108 = vadd.f32 %v3556, %v3946
  %v4109 = vadd.f32 %v3557, %v3948
  %v4110 = vadd.f32 %v3558, %v3951
  %v4111 = vadd.f32 %v3559, %v3953
  %v4112 = vadd.f32 %v3560, %v3956
  %v4113 = vadd.f32 %v3561, %v3958
  %v4114 = vadd.f32 %v3562, %v3961
  %v4115 = vadd.f32 %v3563, %v3963
  %v4116 = vadd.f32 %v3564, %v3966
  %v4117 = vadd.f32 %v3565, %v3968
  %v4118 = vadd.f32 %v3566, %v3971
  %v4119 = vadd.f32 %v3567, %v3973
  %v4120 = vadd.f32 %v3568, %v3976
  %v4121 = vadd.f32 %v3569, %v3978
  %v4122 = vadd.f32 %v3570, %v3981
  %v4123 = vadd.f32 %v3571, %v3983
  %v4124 = vadd.f32 %v3572, %v3986
  %v4125 = vadd.f32 %v3573, %v3988
  %v4126 = vadd.f32 %v3574, %v3991
  %v4127 = vadd.f32 %v3575, %v3993
  %v4128 = vadd.f32 %v3576, %v3996
  %v4129 = vadd.f32 %v3577, %v3998
  %v4130 = vadd.f32 %v3578, %v4001
  %v4131 = vadd.f32 %v3579, %v4003
  %v4132 = vld [vmem:[%s4] sm:$0x1]
  %v4134 = vlaneseq
  %v4135 = vshrl.u32 %v4134, 7
  %v4136 = vsub.s32 0, %v4135
  %v4137 = vrot.slane %v4132, %v4136
  %v4139 = vadd.f32 %v4068, %v4137
  %v4140 = vadd.f32 %v4069, %v4137
  %v4141 = vadd.f32 %v4070, %v4137
  %v4142 = vadd.f32 %v4071, %v4137
  %v4143 = vadd.f32 %v4072, %v4137
  %v4144 = vadd.f32 %v4073, %v4137
  %v4145 = vadd.f32 %v4074, %v4137
  %v4146 = vadd.f32 %v4075, %v4137
  %v4147 = vadd.f32 %v4076, %v4137
  %v4148 = vadd.f32 %v4077, %v4137
  %v4149 = vadd.f32 %v4078, %v4137
  %v4150 = vadd.f32 %v4079, %v4137
  %v4151 = vadd.f32 %v4080, %v4137
  %v4152 = vadd.f32 %v4081, %v4137
  %v4153 = vadd.f32 %v4082, %v4137
  %v4154 = vadd.f32 %v4083, %v4137
  %v4155 = vadd.f32 %v4084, %v4137
  %v4156 = vadd.f32 %v4085, %v4137
  %v4157 = vadd.f32 %v4086, %v4137
  %v4158 = vadd.f32 %v4087, %v4137
  %v4159 = vadd.f32 %v4088, %v4137
  %v4160 = vadd.f32 %v4089, %v4137
  %v4161 = vadd.f32 %v4090, %v4137
  %v4162 = vadd.f32 %v4091, %v4137
  %v4163 = vadd.f32 %v4092, %v4137
  %v4164 = vadd.f32 %v4093, %v4137
  %v4165 = vadd.f32 %v4094, %v4137
  %v4166 = vadd.f32 %v4095, %v4137
  %v4167 = vadd.f32 %v4096, %v4137
  %v4168 = vadd.f32 %v4097, %v4137
  %v4169 = vadd.f32 %v4098, %v4137
  %v4170 = vadd.f32 %v4099, %v4137
  %v4171 = vadd.f32 %v4100, %v4137
  %v4172 = vadd.f32 %v4101, %v4137
  %v4173 = vadd.f32 %v4102, %v4137
  %v4174 = vadd.f32 %v4103, %v4137
  %v4175 = vadd.f32 %v4104, %v4137
  %v4176 = vadd.f32 %v4105, %v4137
  %v4177 = vadd.f32 %v4106, %v4137
  %v4178 = vadd.f32 %v4107, %v4137
  %v4179 = vadd.f32 %v4108, %v4137
  %v4180 = vadd.f32 %v4109, %v4137
  %v4181 = vadd.f32 %v4110, %v4137
  %v4182 = vadd.f32 %v4111, %v4137
  %v4183 = vadd.f32 %v4112, %v4137
  %v4184 = vadd.f32 %v4113, %v4137
  %v4185 = vadd.f32 %v4114, %v4137
  %v4186 = vadd.f32 %v4115, %v4137
  %v4187 = vadd.f32 %v4116, %v4137
  %v4188 = vadd.f32 %v4117, %v4137
  %v4189 = vadd.f32 %v4118, %v4137
  %v4190 = vadd.f32 %v4119, %v4137
  %v4191 = vadd.f32 %v4120, %v4137
  %v4192 = vadd.f32 %v4121, %v4137
  %v4193 = vadd.f32 %v4122, %v4137
  %v4194 = vadd.f32 %v4123, %v4137
  %v4195 = vadd.f32 %v4124, %v4137
  %v4196 = vadd.f32 %v4125, %v4137
  %v4197 = vadd.f32 %v4126, %v4137
  %v4198 = vadd.f32 %v4127, %v4137
  %v4199 = vadd.f32 %v4128, %v4137
  %v4200 = vadd.f32 %v4129, %v4137
  %v4201 = vadd.f32 %v4130, %v4137
  %v4202 = vadd.f32 %v4131, %v4137
  %v4203 = vmax.f32 %v4139, 0.0
  %v4204 = vmax.f32 %v4140, 0.0
  %v4205 = vmax.f32 %v4141, 0.0
  %v4206 = vmax.f32 %v4142, 0.0
  %v4207 = vmax.f32 %v4143, 0.0
  %v4208 = vmax.f32 %v4144, 0.0
  %v4209 = vmax.f32 %v4145, 0.0
  %v4210 = vmax.f32 %v4146, 0.0
  %v4211 = vmax.f32 %v4147, 0.0
  %v4212 = vmax.f32 %v4148, 0.0
  %v4213 = vmax.f32 %v4149, 0.0
  %v4214 = vmax.f32 %v4150, 0.0
  %v4215 = vmax.f32 %v4151, 0.0
  %v4216 = vmax.f32 %v4152, 0.0
  %v4217 = vmax.f32 %v4153, 0.0
  %v4218 = vmax.f32 %v4154, 0.0
  %v4219 = vmax.f32 %v4155, 0.0
  %v4220 = vmax.f32 %v4156, 0.0
  %v4221 = vmax.f32 %v4157, 0.0
  %v4222 = vmax.f32 %v4158, 0.0
  %v4223 = vmax.f32 %v4159, 0.0
  %v4224 = vmax.f32 %v4160, 0.0
  %v4225 = vmax.f32 %v4161, 0.0
  %v4226 = vmax.f32 %v4162, 0.0
  %v4227 = vmax.f32 %v4163, 0.0
  %v4228 = vmax.f32 %v4164, 0.0
  %v4229 = vmax.f32 %v4165, 0.0
  %v4230 = vmax.f32 %v4166, 0.0
  %v4231 = vmax.f32 %v4167, 0.0
  %v4232 = vmax.f32 %v4168, 0.0
  %v4233 = vmax.f32 %v4169, 0.0
  %v4234 = vmax.f32 %v4170, 0.0
  %v4235 = vmax.f32 %v4171, 0.0
  %v4236 = vmax.f32 %v4172, 0.0
  %v4237 = vmax.f32 %v4173, 0.0
  %v4238 = vmax.f32 %v4174, 0.0
  %v4239 = vmax.f32 %v4175, 0.0
  %v4240 = vmax.f32 %v4176, 0.0
  %v4241 = vmax.f32 %v4177, 0.0
  %v4242 = vmax.f32 %v4178, 0.0
  %v4243 = vmax.f32 %v4179, 0.0
  %v4244 = vmax.f32 %v4180, 0.0
  %v4245 = vmax.f32 %v4181, 0.0
  %v4246 = vmax.f32 %v4182, 0.0
  %v4247 = vmax.f32 %v4183, 0.0
  %v4248 = vmax.f32 %v4184, 0.0
  %v4249 = vmax.f32 %v4185, 0.0
  %v4250 = vmax.f32 %v4186, 0.0
  %v4251 = vmax.f32 %v4187, 0.0
  %v4252 = vmax.f32 %v4188, 0.0
  %v4253 = vmax.f32 %v4189, 0.0
  %v4254 = vmax.f32 %v4190, 0.0
  %v4255 = vmax.f32 %v4191, 0.0
  %v4256 = vmax.f32 %v4192, 0.0
  %v4257 = vmax.f32 %v4193, 0.0
  %v4258 = vmax.f32 %v4194, 0.0
  %v4259 = vmax.f32 %v4195, 0.0
  %v4260 = vmax.f32 %v4196, 0.0
  %v4261 = vmax.f32 %v4197, 0.0
  %v4262 = vmax.f32 %v4198, 0.0
  %v4263 = vmax.f32 %v4199, 0.0
  %v4264 = vmax.f32 %v4200, 0.0
  %v4265 = vmax.f32 %v4201, 0.0
  %v4266 = vmax.f32 %v4202, 0.0
  %v4267 = vmin.f32 %v4203, 6.0
  %v4268 = vmin.f32 %v4204, 6.0
  %v4269 = vmin.f32 %v4205, 6.0
  %v4270 = vmin.f32 %v4206, 6.0
  %v4271 = vmin.f32 %v4207, 6.0
  %v4272 = vmin.f32 %v4208, 6.0
  %v4273 = vmin.f32 %v4209, 6.0
  %v4274 = vmin.f32 %v4210, 6.0
  %v4275 = vmin.f32 %v4211, 6.0
  %v4276 = vmin.f32 %v4212, 6.0
  %v4277 = vmin.f32 %v4213, 6.0
  %v4278 = vmin.f32 %v4214, 6.0
  %v4279 = vmin.f32 %v4215, 6.0
  %v4280 = vmin.f32 %v4216, 6.0
  %v4281 = vmin.f32 %v4217, 6.0
  %v4282 = vmin.f32 %v4218, 6.0
  %v4283 = vmin.f32 %v4219, 6.0
  %v4284 = vmin.f32 %v4220, 6.0
  %v4285 = vmin.f32 %v4221, 6.0
  %v4286 = vmin.f32 %v4222, 6.0
  %v4287 = vmin.f32 %v4223, 6.0
  %v4288 = vmin.f32 %v4224, 6.0
  %v4289 = vmin.f32 %v4225, 6.0
  %v4290 = vmin.f32 %v4226, 6.0
  %v4291 = vmin.f32 %v4227, 6.0
  %v4292 = vmin.f32 %v4228, 6.0
  %v4293 = vmin.f32 %v4229, 6.0
  %v4294 = vmin.f32 %v4230, 6.0
  %v4295 = vmin.f32 %v4231, 6.0
  %v4296 = vmin.f32 %v4232, 6.0
  %v4297 = vmin.f32 %v4233, 6.0
  %v4298 = vmin.f32 %v4234, 6.0
  %v4299 = vmin.f32 %v4235, 6.0
  %v4300 = vmin.f32 %v4236, 6.0
  %v4301 = vmin.f32 %v4237, 6.0
  %v4302 = vmin.f32 %v4238, 6.0
  %v4303 = vmin.f32 %v4239, 6.0
  %v4304 = vmin.f32 %v4240, 6.0
  %v4305 = vmin.f32 %v4241, 6.0
  %v4306 = vmin.f32 %v4242, 6.0
  %v4307 = vmin.f32 %v4243, 6.0
  %v4308 = vmin.f32 %v4244, 6.0
  %v4309 = vmin.f32 %v4245, 6.0
  %v4310 = vmin.f32 %v4246, 6.0
  %v4311 = vmin.f32 %v4247, 6.0
  %v4312 = vmin.f32 %v4248, 6.0
  %v4313 = vmin.f32 %v4249, 6.0
  %v4314 = vmin.f32 %v4250, 6.0
  %v4315 = vmin.f32 %v4251, 6.0
  %v4316 = vmin.f32 %v4252, 6.0
  %v4317 = vmin.f32 %v4253, 6.0
  %v4318 = vmin.f32 %v4254, 6.0
  %v4319 = vmin.f32 %v4255, 6.0
  %v4320 = vmin.f32 %v4256, 6.0
  %v4321 = vmin.f32 %v4257, 6.0
  %v4322 = vmin.f32 %v4258, 6.0
  %v4323 = vmin.f32 %v4259, 6.0
  %v4324 = vmin.f32 %v4260, 6.0
  %v4325 = vmin.f32 %v4261, 6.0
  %v4326 = vmin.f32 %v4262, 6.0
  %v4327 = vmin.f32 %v4263, 6.0
  %v4328 = vmin.f32 %v4264, 6.0
  %v4329 = vmin.f32 %v4265, 6.0
  %v4330 = vmin.f32 %v4266, 6.0
  %v4331 = vpack.c.bf16 %v4268, %v4267
  %v4332 = vpack.c.bf16 %v4270, %v4269
  %v4333 = vpack.c.bf16 %v4272, %v4271
  %v4334 = vpack.c.bf16 %v4274, %v4273
  %v4335 = vpack.c.bf16 %v4276, %v4275
  %v4336 = vpack.c.bf16 %v4278, %v4277
  %v4337 = vpack.c.bf16 %v4280, %v4279
  %v4338 = vpack.c.bf16 %v4282, %v4281
  %v4339 = vpack.c.bf16 %v4284, %v4283
  %v4340 = vpack.c.bf16 %v4286, %v4285
  %v4341 = vpack.c.bf16 %v4288, %v4287
  %v4342 = vpack.c.bf16 %v4290, %v4289
  %v4343 = vpack.c.bf16 %v4292, %v4291
  %v4344 = vpack.c.bf16 %v4294, %v4293
  %v4345 = vpack.c.bf16 %v4296, %v4295
  %v4346 = vpack.c.bf16 %v4298, %v4297
  %v4347 = vpack.c.bf16 %v4300, %v4299
  %v4348 = vpack.c.bf16 %v4302, %v4301
  %v4349 = vpack.c.bf16 %v4304, %v4303
  %v4350 = vpack.c.bf16 %v4306, %v4305
  %v4351 = vpack.c.bf16 %v4308, %v4307
  %v4352 = vpack.c.bf16 %v4310, %v4309
  %v4353 = vpack.c.bf16 %v4312, %v4311
  %v4354 = vpack.c.bf16 %v4314, %v4313
  %v4355 = vpack.c.bf16 %v4316, %v4315
  %v4356 = vpack.c.bf16 %v4318, %v4317
  %v4357 = vpack.c.bf16 %v4320, %v4319
  %v4358 = vpack.c.bf16 %v4322, %v4321
  %v4359 = vpack.c.bf16 %v4324, %v4323
  %v4360 = vpack.c.bf16 %v4326, %v4325
  %v4361 = vpack.c.bf16 %v4328, %v4327
  %v4362 = vpack.c.bf16 %v4330, %v4329
  %v4363 = vld [vmem:[%s5] sm:$0xf]
  %v4364 = vld [vmem:[%s5 + $0x4] sm:$0xf]
  %v4365 = vld [vmem:[%s5 + $0x8] sm:$0xf]
  %v4366 = vld [vmem:[%s5 + $0xc] sm:$0xf]
  %v4367 = vld [vmem:[%s6] sm:$0x1]
  %v4369 = vlaneseq
  %v4370 = vshrl.u32 %v4369, 7
  %v4371 = vsub.s32 0, %v4370
  %v4372 = vrot.slane %v4367, %v4371
  %v4378 = vunpack.c.l.b16 %v4363
  %v4379 = vunpack.c.l.b16 %v4364
  %v4380 = vunpack.c.l.b16 %v4365
  %v4381 = vunpack.c.l.b16 %v4366
  %v4382 = vpack.c.b16 %v4379, %v4378
  %v4383 = vpack.c.b16 %v4381, %v4380
  %vm4386 = vcmask 261120
  %v4388 = vsel %vm4386, %v4331, 0
  %v4391 = vsel %vm4386, %v4332, 0
  %v4394 = vsel %vm4386, %v4333, 0
  %v4397 = vsel %vm4386, %v4334, 0
  %v4400 = vsel %vm4386, %v4335, 0
  %v4403 = vsel %vm4386, %v4336, 0
  %v4406 = vsel %vm4386, %v4337, 0
  %v4409 = vsel %vm4386, %v4338, 0
  %v4412 = vsel %vm4386, %v4339, 0
  %v4415 = vsel %vm4386, %v4340, 0
  %v4418 = vsel %vm4386, %v4341, 0
  %v4421 = vsel %vm4386, %v4342, 0
  %v4424 = vsel %vm4386, %v4343, 0
  %v4427 = vsel %vm4386, %v4344, 0
  %v4430 = vsel %vm4386, %v4345, 0
  %v4433 = vsel %vm4386, %v4346, 0
  %v4436 = vsel %vm4386, %v4347, 0
  %v4439 = vsel %vm4386, %v4348, 0
  %v4442 = vsel %vm4386, %v4349, 0
  %v4445 = vsel %vm4386, %v4350, 0
  %v4448 = vsel %vm4386, %v4351, 0
  %v4451 = vsel %vm4386, %v4352, 0
  %v4454 = vsel %vm4386, %v4353, 0
  %v4457 = vsel %vm4386, %v4354, 0
  %v4460 = vsel %vm4386, %v4355, 0
  %v4463 = vsel %vm4386, %v4356, 0
  %v4466 = vsel %vm4386, %v4357, 0
  %v4469 = vsel %vm4386, %v4358, 0
  %v4472 = vsel %vm4386, %v4359, 0
  %v4475 = vsel %vm4386, %v4360, 0
  %v4478 = vsel %vm4386, %v4361, 0
  %v4481 = vsel %vm4386, %v4362, 0
  %4483 = vmatprep.subr.bf16.mxu0 0
  %4484 = vmatpush1.bf16.msra.mxu0 %v4382
  %4485 = vmatprep.subr.bf16.mxu0 0
  %4486 = vmatpush1.bf16.msra.mxu0 %v4383
  %4487 = vmatprep.subr.bf16.mxu0 0
  %4488 = vmatpush1.bf16.msra.mxu0 0
  %4489 = vmatprep.subr.bf16.mxu0 0
  %4490 = vmatpush1.bf16.msra.mxu0 0
  %4491 = vmatprep.subr.bf16.mxu0 0
  %4492 = vmatpush1.bf16.msra.mxu0 0
  %4493 = vmatprep.subr.bf16.mxu0 0
  %4494 = vmatpush1.bf16.msra.mxu0 0
  %4495 = vmatprep.subr.bf16.mxu0 0
  %4496 = vmatpush1.bf16.msra.mxu0 0
  %4497 = vmatprep.subr.bf16.mxu0 0
  %4498 = vmatpush1.bf16.msra.mxu0 0
  %4499 = vmatprep.subr.bf16.mxu0 0
  %4500 = vmatpush1.bf16.msra.mxu0 0
  %4501 = vmatprep.subr.bf16.mxu0 0
  %4502 = vmatpush1.bf16.msra.mxu0 0
  %4503 = vmatprep.subr.bf16.mxu0 0
  %4504 = vmatpush1.bf16.msra.mxu0 0
  %4505 = vmatprep.subr.bf16.mxu0 0
  %4506 = vmatpush1.bf16.msra.mxu0 0
  %4507 = vmatprep.subr.bf16.mxu0 0
  %4508 = vmatpush1.bf16.msra.mxu0 0
  %4509 = vmatprep.subr.bf16.mxu0 0
  %4510 = vmatpush1.bf16.msra.mxu0 0
  %4511 = vmatprep.subr.bf16.mxu0 0
  %4512 = vmatpush1.bf16.msra.mxu0 0
  %4513 = vmatprep.subr.bf16.mxu0 0
  %4514 = vmatpush1.bf16.msra.mxu0 0
  %4515 = vmatprep.mubr.bf16.mxu0 0
  %4516 = vmatmul.mubr.bf16.gmra.mrb[0].mxu0 %v4388
  %v4517 = vpop.f32.mrb[0].mxu0
  %v4518 = vadd.f32 %v4372, %v4517
  %v4519 = vpop.f32.mrb[0].mxu0
  %v4520 = vpop.f32.mrb[0].mxu0
  %v4521 = vadd.f32 %v4372, %v4520
  %v4522 = vpop.f32.mrb[0].mxu0
  %4523 = vmatprep.mubr.bf16.mxu0 0
  %4524 = vmatmul.mubr.bf16.gmra.mrb[0].mxu0 %v4391
  %v4525 = vpop.f32.mrb[0].mxu0
  %v4526 = vadd.f32 %v4372, %v4525
  %v4527 = vpop.f32.mrb[0].mxu0
  %v4528 = vpop.f32.mrb[0].mxu0
  %v4529 = vadd.f32 %v4372, %v4528
  %v4530 = vpop.f32.mrb[0].mxu0
  %4531 = vmatprep.mubr.bf16.mxu0 0
  %4532 = vmatmul.mubr.bf16.gmra.mrb[0].mxu0 %v4394
  %v4533 = vpop.f32.mrb[0].mxu0
  %v4534 = vadd.f32 %v4372, %v4533
  %v4535 = vpop.f32.mrb[0].mxu0
  %v4536 = vpop.f32.mrb[0].mxu0
  %v4537 = vadd.f32 %v4372, %v4536
  %v4538 = vpop.f32.mrb[0].mxu0
  %4539 = vmatprep.mubr.bf16.mxu0 0
  %4540 = vmatmul.mubr.bf16.gmra.mrb[0].mxu0 %v4397
  %v4541 = vpop.f32.mrb[0].mxu0
  %v4542 = vadd.f32 %v4372, %v4541
  %v4543 = vpop.f32.mrb[0].mxu0
  %v4544 = vpop.f32.mrb[0].mxu0
  %v4545 = vadd.f32 %v4372, %v4544
  %v4546 = vpop.f32.mrb[0].mxu0
  %4547 = vmatprep.mubr.bf16.mxu0 0
  %4548 = vmatmul.mubr.bf16.gmra.mrb[0].mxu0 %v4400
  %v4549 = vpop.f32.mrb[0].mxu0
  %v4550 = vadd.f32 %v4372, %v4549
  %v4551 = vpop.f32.mrb[0].mxu0
  %v4552 = vpop.f32.mrb[0].mxu0
  %v4553 = vadd.f32 %v4372, %v4552
  %v4554 = vpop.f32.mrb[0].mxu0
  %4555 = vmatprep.mubr.bf16.mxu0 0
  %4556 = vmatmul.mubr.bf16.gmra.mrb[0].mxu0 %v4403
  %v4557 = vpop.f32.mrb[0].mxu0
  %v4558 = vadd.f32 %v4372, %v4557
  %v4559 = vpop.f32.mrb[0].mxu0
  %v4560 = vpop.f32.mrb[0].mxu0
  %v4561 = vadd.f32 %v4372, %v4560
  %v4562 = vpop.f32.mrb[0].mxu0
  %4563 = vmatprep.mubr.bf16.mxu0 0
  %4564 = vmatmul.mubr.bf16.gmra.mrb[0].mxu0 %v4406
  %v4565 = vpop.f32.mrb[0].mxu0
  %v4566 = vadd.f32 %v4372, %v4565
  %v4567 = vpop.f32.mrb[0].mxu0
  %v4568 = vpop.f32.mrb[0].mxu0
  %v4569 = vadd.f32 %v4372, %v4568
  %v4570 = vpop.f32.mrb[0].mxu0
  %4571 = vmatprep.mubr.bf16.mxu0 0
  %4572 = vmatmul.mubr.bf16.gmra.mrb[0].mxu0 %v4409
  %v4573 = vpop.f32.mrb[0].mxu0
  %v4574 = vadd.f32 %v4372, %v4573
  %v4575 = vpop.f32.mrb[0].mxu0
  %v4576 = vpop.f32.mrb[0].mxu0
  %v4577 = vadd.f32 %v4372, %v4576
  %v4578 = vpop.f32.mrb[0].mxu0
  %4579 = vmatprep.mubr.bf16.mxu0 0
  %4580 = vmatmul.mubr.bf16.gmra.mrb[0].mxu0 %v4412
  %v4581 = vpop.f32.mrb[0].mxu0
  %v4582 = vadd.f32 %v4372, %v4581
  %v4583 = vpop.f32.mrb[0].mxu0
  %v4584 = vpop.f32.mrb[0].mxu0
  %v4585 = vadd.f32 %v4372, %v4584
  %v4586 = vpop.f32.mrb[0].mxu0
  %4587 = vmatprep.mubr.bf16.mxu0 0
  %4588 = vmatmul.mubr.bf16.gmra.mrb[0].mxu0 %v4415
  %v4589 = vpop.f32.mrb[0].mxu0
  %v4590 = vadd.f32 %v4372, %v4589
  %v4591 = vpop.f32.mrb[0].mxu0
  %v4592 = vpop.f32.mrb[0].mxu0
  %v4593 = vadd.f32 %v4372, %v4592
  %v4594 = vpop.f32.mrb[0].mxu0
  %4595 = vmatprep.mubr.bf16.mxu0 0
  %4596 = vmatmul.mubr.bf16.gmra.mrb[0].mxu0 %v4418
  %v4597 = vpop.f32.mrb[0].mxu0
  %v4598 = vadd.f32 %v4372, %v4597
  %v4599 = vpop.f32.mrb[0].mxu0
  %v4600 = vpop.f32.mrb[0].mxu0
  %v4601 = vadd.f32 %v4372, %v4600
  %v4602 = vpop.f32.mrb[0].mxu0
  %4603 = vmatprep.mubr.bf16.mxu0 0
  %4604 = vmatmul.mubr.bf16.gmra.mrb[0].mxu0 %v4421
  %v4605 = vpop.f32.mrb[0].mxu0
  %v4606 = vadd.f32 %v4372, %v4605
  %v4607 = vpop.f32.mrb[0].mxu0
  %v4608 = vpop.f32.mrb[0].mxu0
  %v4609 = vadd.f32 %v4372, %v4608
  %v4610 = vpop.f32.mrb[0].mxu0
  %4611 = vmatprep.mubr.bf16.mxu0 0
  %4612 = vmatmul.mubr.bf16.gmra.mrb[0].mxu0 %v4424
  %v4613 = vpop.f32.mrb[0].mxu0
  %v4614 = vadd.f32 %v4372, %v4613
  %v4615 = vpop.f32.mrb[0].mxu0
  %v4616 = vpop.f32.mrb[0].mxu0
  %v4617 = vadd.f32 %v4372, %v4616
  %v4618 = vpop.f32.mrb[0].mxu0
  %4619 = vmatprep.mubr.bf16.mxu0 0
  %4620 = vmatmul.mubr.bf16.gmra.mrb[0].mxu0 %v4427
  %v4621 = vpop.f32.mrb[0].mxu0
  %v4622 = vadd.f32 %v4372, %v4621
  %v4623 = vpop.f32.mrb[0].mxu0
  %v4624 = vpop.f32.mrb[0].mxu0
  %v4625 = vadd.f32 %v4372, %v4624
  %v4626 = vpop.f32.mrb[0].mxu0
  %4627 = vmatprep.mubr.bf16.mxu0 0
  %4628 = vmatmul.mubr.bf16.gmra.mrb[0].mxu0 %v4430
  %v4629 = vpop.f32.mrb[0].mxu0
  %v4630 = vadd.f32 %v4372, %v4629
  %v4631 = vpop.f32.mrb[0].mxu0
  %v4632 = vpop.f32.mrb[0].mxu0
  %v4633 = vadd.f32 %v4372, %v4632
  %v4634 = vpop.f32.mrb[0].mxu0
  %4635 = vmatprep.mubr.bf16.mxu0 0
  %4636 = vmatmul.mubr.bf16.gmra.mrb[0].mxu0 %v4433
  %v4637 = vpop.f32.mrb[0].mxu0
  %v4638 = vadd.f32 %v4372, %v4637
  %v4639 = vpop.f32.mrb[0].mxu0
  %v4640 = vpop.f32.mrb[0].mxu0
  %v4641 = vadd.f32 %v4372, %v4640
  %v4642 = vpop.f32.mrb[0].mxu0
  %4643 = vmatprep.mubr.bf16.mxu0 0
  %4644 = vmatmul.mubr.bf16.gmra.mrb[0].mxu0 %v4436
  %v4645 = vpop.f32.mrb[0].mxu0
  %v4646 = vadd.f32 %v4372, %v4645
  %v4647 = vpop.f32.mrb[0].mxu0
  %v4648 = vpop.f32.mrb[0].mxu0
  %v4649 = vadd.f32 %v4372, %v4648
  %v4650 = vpop.f32.mrb[0].mxu0
  %4651 = vmatprep.mubr.bf16.mxu0 0
  %4652 = vmatmul.mubr.bf16.gmra.mrb[0].mxu0 %v4439
  %v4653 = vpop.f32.mrb[0].mxu0
  %v4654 = vadd.f32 %v4372, %v4653
  %v4655 = vpop.f32.mrb[0].mxu0
  %v4656 = vpop.f32.mrb[0].mxu0
  %v4657 = vadd.f32 %v4372, %v4656
  %v4658 = vpop.f32.mrb[0].mxu0
  %4659 = vmatprep.mubr.bf16.mxu0 0
  %4660 = vmatmul.mubr.bf16.gmra.mrb[0].mxu0 %v4442
  %v4661 = vpop.f32.mrb[0].mxu0
  %v4662 = vadd.f32 %v4372, %v4661
  %v4663 = vpop.f32.mrb[0].mxu0
  %v4664 = vpop.f32.mrb[0].mxu0
  %v4665 = vadd.f32 %v4372, %v4664
  %v4666 = vpop.f32.mrb[0].mxu0
  %4667 = vmatprep.mubr.bf16.mxu0 0
  %4668 = vmatmul.mubr.bf16.gmra.mrb[0].mxu0 %v4445
  %v4669 = vpop.f32.mrb[0].mxu0
  %v4670 = vadd.f32 %v4372, %v4669
  %v4671 = vpop.f32.mrb[0].mxu0
  %v4672 = vpop.f32.mrb[0].mxu0
  %v4673 = vadd.f32 %v4372, %v4672
  %v4674 = vpop.f32.mrb[0].mxu0
  %4675 = vmatprep.mubr.bf16.mxu0 0
  %4676 = vmatmul.mubr.bf16.gmra.mrb[0].mxu0 %v4448
  %v4677 = vpop.f32.mrb[0].mxu0
  %v4678 = vadd.f32 %v4372, %v4677
  %v4679 = vpop.f32.mrb[0].mxu0
  %v4680 = vpop.f32.mrb[0].mxu0
  %v4681 = vadd.f32 %v4372, %v4680
  %v4682 = vpop.f32.mrb[0].mxu0
  %4683 = vmatprep.mubr.bf16.mxu0 0
  %4684 = vmatmul.mubr.bf16.gmra.mrb[0].mxu0 %v4451
  %v4685 = vpop.f32.mrb[0].mxu0
  %v4686 = vadd.f32 %v4372, %v4685
  %v4687 = vpop.f32.mrb[0].mxu0
  %v4688 = vpop.f32.mrb[0].mxu0
  %v4689 = vadd.f32 %v4372, %v4688
  %v4690 = vpop.f32.mrb[0].mxu0
  %4691 = vmatprep.mubr.bf16.mxu0 0
  %4692 = vmatmul.mubr.bf16.gmra.mrb[0].mxu0 %v4454
  %v4693 = vpop.f32.mrb[0].mxu0
  %v4694 = vadd.f32 %v4372, %v4693
  %v4695 = vpop.f32.mrb[0].mxu0
  %v4696 = vpop.f32.mrb[0].mxu0
  %v4697 = vadd.f32 %v4372, %v4696
  %v4698 = vpop.f32.mrb[0].mxu0
  %4699 = vmatprep.mubr.bf16.mxu0 0
  %4700 = vmatmul.mubr.bf16.gmra.mrb[0].mxu0 %v4457
  %v4701 = vpop.f32.mrb[0].mxu0
  %v4702 = vadd.f32 %v4372, %v4701
  %v4703 = vpop.f32.mrb[0].mxu0
  %v4704 = vpop.f32.mrb[0].mxu0
  %v4705 = vadd.f32 %v4372, %v4704
  %v4706 = vpop.f32.mrb[0].mxu0
  %4707 = vmatprep.mubr.bf16.mxu0 0
  %4708 = vmatmul.mubr.bf16.gmra.mrb[0].mxu0 %v4460
  %v4709 = vpop.f32.mrb[0].mxu0
  %v4710 = vadd.f32 %v4372, %v4709
  %v4711 = vpop.f32.mrb[0].mxu0
  %v4712 = vpop.f32.mrb[0].mxu0
  %v4713 = vadd.f32 %v4372, %v4712
  %v4714 = vpop.f32.mrb[0].mxu0
  %4715 = vmatprep.mubr.bf16.mxu0 0
  %4716 = vmatmul.mubr.bf16.gmra.mrb[0].mxu0 %v4463
  %v4717 = vpop.f32.mrb[0].mxu0
  %v4718 = vadd.f32 %v4372, %v4717
  %v4719 = vpop.f32.mrb[0].mxu0
  %v4720 = vpop.f32.mrb[0].mxu0
  %v4721 = vadd.f32 %v4372, %v4720
  %v4722 = vpop.f32.mrb[0].mxu0
  %4723 = vmatprep.mubr.bf16.mxu0 0
  %4724 = vmatmul.mubr.bf16.gmra.mrb[0].mxu0 %v4466
  %v4725 = vpop.f32.mrb[0].mxu0
  %v4726 = vadd.f32 %v4372, %v4725
  %v4727 = vpop.f32.mrb[0].mxu0
  %v4728 = vpop.f32.mrb[0].mxu0
  %v4729 = vadd.f32 %v4372, %v4728
  %v4730 = vpop.f32.mrb[0].mxu0
  %4731 = vmatprep.mubr.bf16.mxu0 0
  %4732 = vmatmul.mubr.bf16.gmra.mrb[0].mxu0 %v4469
  %v4733 = vpop.f32.mrb[0].mxu0
  %v4734 = vadd.f32 %v4372, %v4733
  %v4735 = vpop.f32.mrb[0].mxu0
  %v4736 = vpop.f32.mrb[0].mxu0
  %v4737 = vadd.f32 %v4372, %v4736
  %v4738 = vpop.f32.mrb[0].mxu0
  %4739 = vmatprep.mubr.bf16.mxu0 0
  %4740 = vmatmul.mubr.bf16.gmra.mrb[0].mxu0 %v4472
  %v4741 = vpop.f32.mrb[0].mxu0
  %v4742 = vadd.f32 %v4372, %v4741
  %v4743 = vpop.f32.mrb[0].mxu0
  %v4744 = vpop.f32.mrb[0].mxu0
  %v4745 = vadd.f32 %v4372, %v4744
  %v4746 = vpop.f32.mrb[0].mxu0
  %4747 = vmatprep.mubr.bf16.mxu0 0
  %4748 = vmatmul.mubr.bf16.gmra.mrb[0].mxu0 %v4475
  %v4749 = vpop.f32.mrb[0].mxu0
  %v4750 = vadd.f32 %v4372, %v4749
  %v4751 = vpop.f32.mrb[0].mxu0
  %v4752 = vpop.f32.mrb[0].mxu0
  %v4753 = vadd.f32 %v4372, %v4752
  %v4754 = vpop.f32.mrb[0].mxu0
  %4755 = vmatprep.mubr.bf16.mxu0 0
  %4756 = vmatmul.mubr.bf16.gmra.mrb[0].mxu0 %v4478
  %v4757 = vpop.f32.mrb[0].mxu0
  %v4758 = vadd.f32 %v4372, %v4757
  %v4759 = vpop.f32.mrb[0].mxu0
  %v4760 = vpop.f32.mrb[0].mxu0
  %v4761 = vadd.f32 %v4372, %v4760
  %v4762 = vpop.f32.mrb[0].mxu0
  %4763 = vmatprep.mubr.bf16.mxu0 0
  %4764 = vmatmul.mubr.bf16.gmra.mrb[0].mxu0 %v4481
  %v4765 = vpop.f32.mrb[0].mxu0
  %v4766 = vadd.f32 %v4372, %v4765
  %v4767 = vpop.f32.mrb[0].mxu0
  %v4768 = vpop.f32.mrb[0].mxu0
  %v4769 = vadd.f32 %v4372, %v4768
  %v4770 = vpop.f32.mrb[0].mxu0
  %4771 = vdwg.mxu0
  %v4772 = vmax.f32 %v4518, 0.0
  %v4773 = vmax.f32 %v4521, 0.0
  %v4774 = vmax.f32 %v4526, 0.0
  %v4775 = vmax.f32 %v4529, 0.0
  %v4776 = vmax.f32 %v4534, 0.0
  %v4777 = vmax.f32 %v4537, 0.0
  %v4778 = vmax.f32 %v4542, 0.0
  %v4779 = vmax.f32 %v4545, 0.0
  %v4780 = vmax.f32 %v4550, 0.0
  %v4781 = vmax.f32 %v4553, 0.0
  %v4782 = vmax.f32 %v4558, 0.0
  %v4783 = vmax.f32 %v4561, 0.0
  %v4784 = vmax.f32 %v4566, 0.0
  %v4785 = vmax.f32 %v4569, 0.0
  %v4786 = vmax.f32 %v4574, 0.0
  %v4787 = vmax.f32 %v4577, 0.0
  %v4788 = vmax.f32 %v4582, 0.0
  %v4789 = vmax.f32 %v4585, 0.0
  %v4790 = vmax.f32 %v4590, 0.0
  %v4791 = vmax.f32 %v4593, 0.0
  %v4792 = vmax.f32 %v4598, 0.0
  %v4793 = vmax.f32 %v4601, 0.0
  %v4794 = vmax.f32 %v4606, 0.0
  %v4795 = vmax.f32 %v4609, 0.0
  %v4796 = vmax.f32 %v4614, 0.0
  %v4797 = vmax.f32 %v4617, 0.0
  %v4798 = vmax.f32 %v4622, 0.0
  %v4799 = vmax.f32 %v4625, 0.0
  %v4800 = vmax.f32 %v4630, 0.0
  %v4801 = vmax.f32 %v4633, 0.0
  %v4802 = vmax.f32 %v4638, 0.0
  %v4803 = vmax.f32 %v4641, 0.0
  %v4804 = vmax.f32 %v4646, 0.0
  %v4805 = vmax.f32 %v4649, 0.0
  %v4806 = vmax.f32 %v4654, 0.0
  %v4807 = vmax.f32 %v4657, 0.0
  %v4808 = vmax.f32 %v4662, 0.0
  %v4809 = vmax.f32 %v4665, 0.0
  %v4810 = vmax.f32 %v4670, 0.0
  %v4811 = vmax.f32 %v4673, 0.0
  %v4812 = vmax.f32 %v4678, 0.0
  %v4813 = vmax.f32 %v4681, 0.0
  %v4814 = vmax.f32 %v4686, 0.0
  %v4815 = vmax.f32 %v4689, 0.0
  %v4816 = vmax.f32 %v4694, 0.0
  %v4817 = vmax.f32 %v4697, 0.0
  %v4818 = vmax.f32 %v4702, 0.0
  %v4819 = vmax.f32 %v4705, 0.0
  %v4820 = vmax.f32 %v4710, 0.0
  %v4821 = vmax.f32 %v4713, 0.0
  %v4822 = vmax.f32 %v4718, 0.0
  %v4823 = vmax.f32 %v4721, 0.0
  %v4824 = vmax.f32 %v4726, 0.0
  %v4825 = vmax.f32 %v4729, 0.0
  %v4826 = vmax.f32 %v4734, 0.0
  %v4827 = vmax.f32 %v4737, 0.0
  %v4828 = vmax.f32 %v4742, 0.0
  %v4829 = vmax.f32 %v4745, 0.0
  %v4830 = vmax.f32 %v4750, 0.0
  %v4831 = vmax.f32 %v4753, 0.0
  %v4832 = vmax.f32 %v4758, 0.0
  %v4833 = vmax.f32 %v4761, 0.0
  %v4834 = vmax.f32 %v4766, 0.0
  %v4835 = vmax.f32 %v4769, 0.0
  %v4836 = vmin.f32 %v4772, 6.0
  %v4837 = vmin.f32 %v4773, 6.0
  %v4838 = vmin.f32 %v4774, 6.0
  %v4839 = vmin.f32 %v4775, 6.0
  %v4840 = vmin.f32 %v4776, 6.0
  %v4841 = vmin.f32 %v4777, 6.0
  %v4842 = vmin.f32 %v4778, 6.0
  %v4843 = vmin.f32 %v4779, 6.0
  %v4844 = vmin.f32 %v4780, 6.0
  %v4845 = vmin.f32 %v4781, 6.0
  %v4846 = vmin.f32 %v4782, 6.0
  %v4847 = vmin.f32 %v4783, 6.0
  %v4848 = vmin.f32 %v4784, 6.0
  %v4849 = vmin.f32 %v4785, 6.0
  %v4850 = vmin.f32 %v4786, 6.0
  %v4851 = vmin.f32 %v4787, 6.0
  %v4852 = vmin.f32 %v4788, 6.0
  %v4853 = vmin.f32 %v4789, 6.0
  %v4854 = vmin.f32 %v4790, 6.0
  %v4855 = vmin.f32 %v4791, 6.0
  %v4856 = vmin.f32 %v4792, 6.0
  %v4857 = vmin.f32 %v4793, 6.0
  %v4858 = vmin.f32 %v4794, 6.0
  %v4859 = vmin.f32 %v4795, 6.0
  %v4860 = vmin.f32 %v4796, 6.0
  %v4861 = vmin.f32 %v4797, 6.0
  %v4862 = vmin.f32 %v4798, 6.0
  %v4863 = vmin.f32 %v4799, 6.0
  %v4864 = vmin.f32 %v4800, 6.0
  %v4865 = vmin.f32 %v4801, 6.0
  %v4866 = vmin.f32 %v4802, 6.0
  %v4867 = vmin.f32 %v4803, 6.0
  %v4868 = vmin.f32 %v4804, 6.0
  %v4869 = vmin.f32 %v4805, 6.0
  %v4870 = vmin.f32 %v4806, 6.0
  %v4871 = vmin.f32 %v4807, 6.0
  %v4872 = vmin.f32 %v4808, 6.0
  %v4873 = vmin.f32 %v4809, 6.0
  %v4874 = vmin.f32 %v4810, 6.0
  %v4875 = vmin.f32 %v4811, 6.0
  %v4876 = vmin.f32 %v4812, 6.0
  %v4877 = vmin.f32 %v4813, 6.0
  %v4878 = vmin.f32 %v4814, 6.0
  %v4879 = vmin.f32 %v4815, 6.0
  %v4880 = vmin.f32 %v4816, 6.0
  %v4881 = vmin.f32 %v4817, 6.0
  %v4882 = vmin.f32 %v4818, 6.0
  %v4883 = vmin.f32 %v4819, 6.0
  %v4884 = vmin.f32 %v4820, 6.0
  %v4885 = vmin.f32 %v4821, 6.0
  %v4886 = vmin.f32 %v4822, 6.0
  %v4887 = vmin.f32 %v4823, 6.0
  %v4888 = vmin.f32 %v4824, 6.0
  %v4889 = vmin.f32 %v4825, 6.0
  %v4890 = vmin.f32 %v4826, 6.0
  %v4891 = vmin.f32 %v4827, 6.0
  %v4892 = vmin.f32 %v4828, 6.0
  %v4893 = vmin.f32 %v4829, 6.0
  %v4894 = vmin.f32 %v4830, 6.0
  %v4895 = vmin.f32 %v4831, 6.0
  %v4896 = vmin.f32 %v4832, 6.0
  %v4897 = vmin.f32 %v4833, 6.0
  %v4898 = vmin.f32 %v4834, 6.0
  %v4899 = vmin.f32 %v4835, 6.0
  %v4900 = vpack.c.bf16 %v4837, %v4836
  %v4901 = vpack.c.bf16 %v4839, %v4838
  %v4902 = vpack.c.bf16 %v4841, %v4840
  %v4903 = vpack.c.bf16 %v4843, %v4842
  %v4904 = vpack.c.bf16 %v4845, %v4844
  %v4905 = vpack.c.bf16 %v4847, %v4846
  %v4906 = vpack.c.bf16 %v4849, %v4848
  %v4907 = vpack.c.bf16 %v4851, %v4850
  %v4908 = vpack.c.bf16 %v4853, %v4852
  %v4909 = vpack.c.bf16 %v4855, %v4854
  %v4910 = vpack.c.bf16 %v4857, %v4856
  %v4911 = vpack.c.bf16 %v4859, %v4858
  %v4912 = vpack.c.bf16 %v4861, %v4860
  %v4913 = vpack.c.bf16 %v4863, %v4862
  %v4914 = vpack.c.bf16 %v4865, %v4864
  %v4915 = vpack.c.bf16 %v4867, %v4866
  %v4916 = vpack.c.bf16 %v4869, %v4868
  %v4917 = vpack.c.bf16 %v4871, %v4870
  %v4918 = vpack.c.bf16 %v4873, %v4872
  %v4919 = vpack.c.bf16 %v4875, %v4874
  %v4920 = vpack.c.bf16 %v4877, %v4876
  %v4921 = vpack.c.bf16 %v4879, %v4878
  %v4922 = vpack.c.bf16 %v4881, %v4880
  %v4923 = vpack.c.bf16 %v4883, %v4882
  %v4924 = vpack.c.bf16 %v4885, %v4884
  %v4925 = vpack.c.bf16 %v4887, %v4886
  %v4926 = vpack.c.bf16 %v4889, %v4888
  %v4927 = vpack.c.bf16 %v4891, %v4890
  %v4928 = vpack.c.bf16 %v4893, %v4892
  %v4929 = vpack.c.bf16 %v4895, %v4894
  %v4930 = vpack.c.bf16 %v4897, %v4896
  %v4931 = vpack.c.bf16 %v4899, %v4898
  %v4964 = vunpack.c.l.b16 %v4900
  %v4965 = vunpack.c.h.b16 %v4900
  %v4966 = vunpack.c.l.b16 %v4901
  %v4967 = vunpack.c.h.b16 %v4901
  %v4968 = vunpack.c.l.b16 %v4902
  %v4969 = vunpack.c.h.b16 %v4902
  %v4970 = vunpack.c.l.b16 %v4903
  %v4971 = vunpack.c.h.b16 %v4903
  %v4972 = vunpack.c.l.b16 %v4904
  %v4973 = vunpack.c.h.b16 %v4904
  %v4974 = vunpack.c.l.b16 %v4905
  %v4975 = vunpack.c.h.b16 %v4905
  %v4976 = vunpack.c.l.b16 %v4906
  %v4977 = vunpack.c.h.b16 %v4906
  %v4978 = vunpack.c.l.b16 %v4907
  %v4979 = vunpack.c.h.b16 %v4907
  %v4980 = vunpack.c.l.b16 %v4908
  %v4981 = vunpack.c.h.b16 %v4908
  %v4982 = vunpack.c.l.b16 %v4909
  %v4983 = vunpack.c.h.b16 %v4909
  %v4984 = vunpack.c.l.b16 %v4910
  %v4985 = vunpack.c.h.b16 %v4910
  %v4986 = vunpack.c.l.b16 %v4911
  %v4987 = vunpack.c.h.b16 %v4911
  %v4988 = vunpack.c.l.b16 %v4912
  %v4989 = vunpack.c.h.b16 %v4912
  %v4990 = vunpack.c.l.b16 %v4913
  %v4991 = vunpack.c.h.b16 %v4913
  %v4992 = vunpack.c.l.b16 %v4914
  %v4993 = vunpack.c.h.b16 %v4914
  %v4994 = vunpack.c.l.b16 %v4915
  %v4995 = vunpack.c.h.b16 %v4915
  %v4996 = vunpack.c.l.b16 %v4916
  %v4997 = vunpack.c.h.b16 %v4916
  %v4998 = vunpack.c.l.b16 %v4917
  %v4999 = vunpack.c.h.b16 %v4917
  %v5000 = vunpack.c.l.b16 %v4918
  %v5001 = vunpack.c.h.b16 %v4918
  %v5002 = vunpack.c.l.b16 %v4919
  %v5003 = vunpack.c.h.b16 %v4919
  %v5004 = vunpack.c.l.b16 %v4920
  %v5005 = vunpack.c.h.b16 %v4920
  %v5006 = vunpack.c.l.b16 %v4921
  %v5007 = vunpack.c.h.b16 %v4921
  %v5008 = vunpack.c.l.b16 %v4922
  %v5009 = vunpack.c.h.b16 %v4922
  %v5010 = vunpack.c.l.b16 %v4923
  %v5011 = vunpack.c.h.b16 %v4923
  %v5012 = vunpack.c.l.b16 %v4924
  %v5013 = vunpack.c.h.b16 %v4924
  %v5014 = vunpack.c.l.b16 %v4925
  %v5015 = vunpack.c.h.b16 %v4925
  %v5016 = vunpack.c.l.b16 %v4926
  %v5017 = vunpack.c.h.b16 %v4926
  %v5018 = vunpack.c.l.b16 %v4927
  %v5019 = vunpack.c.h.b16 %v4927
  %v5020 = vunpack.c.l.b16 %v4928
  %v5021 = vunpack.c.h.b16 %v4928
  %v5022 = vunpack.c.l.b16 %v4929
  %v5023 = vunpack.c.h.b16 %v4929
  %v5024 = vunpack.c.l.b16 %v4930
  %v5025 = vunpack.c.h.b16 %v4930
  %v5026 = vunpack.c.l.b16 %v4931
  %v5027 = vunpack.c.h.b16 %v4931
  %v5028 = vpack.c.b16 %v4964, %v4964
  %v5029 = vpack.c.b16 %v4965, %v4965
  %v5030 = vpack.c.b16 %v4966, %v4966
  %v5031 = vpack.c.b16 %v4967, %v4967
  %v5032 = vpack.c.b16 %v4968, %v4968
  %v5033 = vpack.c.b16 %v4969, %v4969
  %v5034 = vpack.c.b16 %v4970, %v4970
  %v5035 = vpack.c.b16 %v4971, %v4971
  %v5036 = vpack.c.b16 %v4972, %v4972
  %v5037 = vpack.c.b16 %v4973, %v4973
  %v5038 = vpack.c.b16 %v4974, %v4974
  %v5039 = vpack.c.b16 %v4975, %v4975
  %v5040 = vpack.c.b16 %v4976, %v4976
  %v5041 = vpack.c.b16 %v4977, %v4977
  %v5042 = vpack.c.b16 %v4978, %v4978
  %v5043 = vpack.c.b16 %v4979, %v4979
  %v5044 = vpack.c.b16 %v4980, %v4980
  %v5045 = vpack.c.b16 %v4981, %v4981
  %v5046 = vpack.c.b16 %v4982, %v4982
  %v5047 = vpack.c.b16 %v4983, %v4983
  %v5048 = vpack.c.b16 %v4984, %v4984
  %v5049 = vpack.c.b16 %v4985, %v4985
  %v5050 = vpack.c.b16 %v4986, %v4986
  %v5051 = vpack.c.b16 %v4987, %v4987
  %v5052 = vpack.c.b16 %v4988, %v4988
  %v5053 = vpack.c.b16 %v4989, %v4989
  %v5054 = vpack.c.b16 %v4990, %v4990
  %v5055 = vpack.c.b16 %v4991, %v4991
  %v5056 = vpack.c.b16 %v4992, %v4992
  %v5057 = vpack.c.b16 %v4993, %v4993
  %v5058 = vpack.c.b16 %v4994, %v4994
  %v5059 = vpack.c.b16 %v4995, %v4995
  %v5060 = vpack.c.b16 %v4996, %v4996
  %v5061 = vpack.c.b16 %v4997, %v4997
  %v5062 = vpack.c.b16 %v4998, %v4998
  %v5063 = vpack.c.b16 %v4999, %v4999
  %v5064 = vpack.c.b16 %v5000, %v5000
  %v5065 = vpack.c.b16 %v5001, %v5001
  %v5066 = vpack.c.b16 %v5002, %v5002
  %v5067 = vpack.c.b16 %v5003, %v5003
  %v5068 = vpack.c.b16 %v5004, %v5004
  %v5069 = vpack.c.b16 %v5005, %v5005
  %v5070 = vpack.c.b16 %v5006, %v5006
  %v5071 = vpack.c.b16 %v5007, %v5007
  %v5072 = vpack.c.b16 %v5008, %v5008
  %v5073 = vpack.c.b16 %v5009, %v5009
  %v5074 = vpack.c.b16 %v5010, %v5010
  %v5075 = vpack.c.b16 %v5011, %v5011
  %v5076 = vpack.c.b16 %v5012, %v5012
  %v5077 = vpack.c.b16 %v5013, %v5013
  %v5078 = vpack.c.b16 %v5014, %v5014
  %v5079 = vpack.c.b16 %v5015, %v5015
  %v5080 = vpack.c.b16 %v5016, %v5016
  %v5081 = vpack.c.b16 %v5017, %v5017
  %v5082 = vpack.c.b16 %v5018, %v5018
  %v5083 = vpack.c.b16 %v5019, %v5019
  %v5084 = vpack.c.b16 %v5020, %v5020
  %v5085 = vpack.c.b16 %v5021, %v5021
  %v5086 = vpack.c.b16 %v5022, %v5022
  %v5087 = vpack.c.b16 %v5023, %v5023
  %v5088 = vpack.c.b16 %v5024, %v5024
  %v5089 = vpack.c.b16 %v5025, %v5025
  %v5090 = vpack.c.b16 %v5026, %v5026
  %v5091 = vpack.c.b16 %v5027, %v5027
  %vm5156 = vcmask 257024
  %5157 = vst.msk [vmem:[%s7] sm:$0xf] %vm5156, %v5028
  %5158 = vst.msk [vmem:[%s7 + $0x4] sm:$0xf] %vm5156, %v5029
  %5159 = vst.msk [vmem:[%s7 + $0x8] sm:$0xf] %vm5156, %v5030
  %5160 = vst.msk [vmem:[%s7 + $0xc] sm:$0xf] %vm5156, %v5031
  %5161 = vst.msk [vmem:[%s7 + $0x10] sm:$0xf] %vm5156, %v5032
  %5162 = vst.msk [vmem:[%s7 + $0x14] sm:$0xf] %vm5156, %v5033
  %5163 = vst.msk [vmem:[%s7 + $0x18] sm:$0xf] %vm5156, %v5034
  %5164 = vst.msk [vmem:[%s7 + $0x1c] sm:$0xf] %vm5156, %v5035
  %5165 = vst.msk [vmem:[%s7 + $0x20] sm:$0xf] %vm5156, %v5036
  %5166 = vst.msk [vmem:[%s7 + $0x24] sm:$0xf] %vm5156, %v5037
  %5167 = vst.msk [vmem:[%s7 + $0x28] sm:$0xf] %vm5156, %v5038
  %5168 = vst.msk [vmem:[%s7 + $0x2c] sm:$0xf] %vm5156, %v5039
  %5169 = vst.msk [vmem:[%s7 + $0x30] sm:$0xf] %vm5156, %v5040
  %5170 = vst.msk [vmem:[%s7 + $0x34] sm:$0xf] %vm5156, %v5041
  %5171 = vst.msk [vmem:[%s7 + $0x38] sm:$0xf] %vm5156, %v5042
  %5172 = vst.msk [vmem:[%s7 + $0x3c] sm:$0xf] %vm5156, %v5043
  %5173 = vst.msk [vmem:[%s7 + $0x40] sm:$0xf] %vm5156, %v5044
  %5174 = vst.msk [vmem:[%s7 + $0x44] sm:$0xf] %vm5156, %v5045
  %5175 = vst.msk [vmem:[%s7 + $0x48] sm:$0xf] %vm5156, %v5046
  %5176 = vst.msk [vmem:[%s7 + $0x4c] sm:$0xf] %vm5156, %v5047
  %5177 = vst.msk [vmem:[%s7 + $0x50] sm:$0xf] %vm5156, %v5048
  %5178 = vst.msk [vmem:[%s7 + $0x54] sm:$0xf] %vm5156, %v5049
  %5179 = vst.msk [vmem:[%s7 + $0x58] sm:$0xf] %vm5156, %v5050
  %5180 = vst.msk [vmem:[%s7 + $0x5c] sm:$0xf] %vm5156, %v5051
  %5181 = vst.msk [vmem:[%s7 + $0x60] sm:$0xf] %vm5156, %v5052
  %5182 = vst.msk [vmem:[%s7 + $0x64] sm:$0xf] %vm5156, %v5053
  %5183 = vst.msk [vmem:[%s7 + $0x68] sm:$0xf] %vm5156, %v5054
  %5184 = vst.msk [vmem:[%s7 + $0x6c] sm:$0xf] %vm5156, %v5055
  %5185 = vst.msk [vmem:[%s7 + $0x70] sm:$0xf] %vm5156, %v5056
  %5186 = vst.msk [vmem:[%s7 + $0x74] sm:$0xf] %vm5156, %v5057
  %5187 = vst.msk [vmem:[%s7 + $0x78] sm:$0xf] %vm5156, %v5058
  %5188 = vst.msk [vmem:[%s7 + $0x7c] sm:$0xf] %vm5156, %v5059
  %5189 = vst.msk [vmem:[%s7 + $0x80] sm:$0xf] %vm5156, %v5060
  %5190 = vst.msk [vmem:[%s7 + $0x84] sm:$0xf] %vm5156, %v5061
  %5191 = vst.msk [vmem:[%s7 + $0x88] sm:$0xf] %vm5156, %v5062
  %5192 = vst.msk [vmem:[%s7 + $0x8c] sm:$0xf] %vm5156, %v5063
  %5193 = vst.msk [vmem:[%s7 + $0x90] sm:$0xf] %vm5156, %v5064
  %5194 = vst.msk [vmem:[%s7 + $0x94] sm:$0xf] %vm5156, %v5065
  %5195 = vst.msk [vmem:[%s7 + $0x98] sm:$0xf] %vm5156, %v5066
  %5196 = vst.msk [vmem:[%s7 + $0x9c] sm:$0xf] %vm5156, %v5067
  %5197 = vst.msk [vmem:[%s7 + $0xa0] sm:$0xf] %vm5156, %v5068
  %5198 = vst.msk [vmem:[%s7 + $0xa4] sm:$0xf] %vm5156, %v5069
  %5199 = vst.msk [vmem:[%s7 + $0xa8] sm:$0xf] %vm5156, %v5070
  %5200 = vst.msk [vmem:[%s7 + $0xac] sm:$0xf] %vm5156, %v5071
  %5201 = vst.msk [vmem:[%s7 + $0xb0] sm:$0xf] %vm5156, %v5072
  %5202 = vst.msk [vmem:[%s7 + $0xb4] sm:$0xf] %vm5156, %v5073
  %5203 = vst.msk [vmem:[%s7 + $0xb8] sm:$0xf] %vm5156, %v5074
  %5204 = vst.msk [vmem:[%s7 + $0xbc] sm:$0xf] %vm5156, %v5075
  %5205 = vst.msk [vmem:[%s7 + $0xc0] sm:$0xf] %vm5156, %v5076
  %5206 = vst.msk [vmem:[%s7 + $0xc4] sm:$0xf] %vm5156, %v5077
  %5207 = vst.msk [vmem:[%s7 + $0xc8] sm:$0xf] %vm5156, %v5078
  %5208 = vst.msk [vmem:[%s7 + $0xcc] sm:$0xf] %vm5156, %v5079
  %5209 = vst.msk [vmem:[%s7 + $0xd0] sm:$0xf] %vm5156, %v5080
  %5210 = vst.msk [vmem:[%s7 + $0xd4] sm:$0xf] %vm5156, %v5081
  %5211 = vst.msk [vmem:[%s7 + $0xd8] sm:$0xf] %vm5156, %v5082
  %5212 = vst.msk [vmem:[%s7 + $0xdc] sm:$0xf] %vm5156, %v5083
  %5213 = vst.msk [vmem:[%s7 + $0xe0] sm:$0xf] %vm5156, %v5084
  %5214 = vst.msk [vmem:[%s7 + $0xe4] sm:$0xf] %vm5156, %v5085
  %5215 = vst.msk [vmem:[%s7 + $0xe8] sm:$0xf] %vm5156, %v5086
  %5216 = vst.msk [vmem:[%s7 + $0xec] sm:$0xf] %vm5156, %v5087
  %5217 = vst.msk [vmem:[%s7 + $0xf0] sm:$0xf] %vm5156, %v5088
  %5218 = vst.msk [vmem:[%s7 + $0xf4] sm:$0xf] %vm5156, %v5089
  %5219 = vst.msk [vmem:[%s7 + $0xf8] sm:$0xf] %vm5156, %v5090
  %5220 = vst.msk [vmem:[%s7 + $0xfc] sm:$0xf] %vm5156, %v5091
  // Predicated region
  $region30: #{mobilev1_residual_forward.2} parent=0 // pred_check
    _
  $region31: #{mobilev1_residual_forward.2} parent=0 // pred_check_branch
    %5222 = sbr.rel (0) target = $region33
  $region32: #{mobilev1_residual_forward.2} parent=0 // pred_region
    _
  $region33: #{mobilev1_residual_forward.2} parent=0 // pred_fallthru
    _
  // Predicated region
  $region34: #{mobilev1_residual_forward.2} parent=0 // pred_check
    _
  $region35: #{mobilev1_residual_forward.2} parent=0 // pred_check_branch
    %5224 = sbr.rel (0) target = $region37
  $region36: #{mobilev1_residual_forward.2} parent=0 // pred_region
    _
  $region37: #{mobilev1_residual_forward.2} parent=0 // pred_fallthru
    _

</llo_original>
